<compile_context>
chip_gen: v7x
topology: tpu7x:2x2x1
jax: 0.10.0
libtpu: 0.0.40
codegen_flags: <defaults>
</compile_context>

<pallas_src>
import functools
import math

import numpy as np
import jax
import jax.numpy as jnp
from jax.experimental import pallas as pl
from jax.experimental.pallas import tpu as pltpu


def _pos_embed_sine_kernel(y_ref, x_ref, invdim_ref, phase_ref, o_ref, *, npf):
    """Fused (embed * inv_freq + phase) -> sin -> lane-dense store.

    y_ref / x_ref : (bb, 1, HW)  f32  row/col cumsum embeddings, flat spatial dim
    invdim_ref    : (npf, 1)     f32  1 / dim_t[j]
    phase_ref     : (npf, 1)     f32  0 for even j, pi/2 for odd j (cos = sin(x+pi/2))
    o_ref         : (bb, 2*npf, HW)   output block, lane dim = HW (lane-dense)
    """
    inv_dim = invdim_ref[...]        # (npf, 1)
    phase = phase_ref[...]           # (npf, 1)
    y = y_ref[...]                   # (bb, 1, HW)
    x = x_ref[...]                   # (bb, 1, HW)

    # (bb,1,HW) * (npf,1) -> (bb, npf, HW); one sin covers both sin & cos chans.
    o_ref[:, 0:npf, :] = jnp.sin(y * inv_dim + phase).astype(o_ref.dtype)        # pos_y
    o_ref[:, npf:2 * npf, :] = jnp.sin(x * inv_dim + phase).astype(o_ref.dtype)  # pos_x


@functools.lru_cache(maxsize=None)
def _freq_constants(num_pos_feats, temperature):
    """(npf,1) inverse frequencies and phases; built once per config (numpy)."""
    j = np.arange(num_pos_feats, dtype=np.float64)
    inv_dim_t = temperature ** (-(2.0 * np.floor(j / 2.0)) / num_pos_feats)
    phase = (j % 2.0) * (math.pi / 2.0)
    return (jnp.asarray(inv_dim_t.reshape(num_pos_feats, 1), dtype=jnp.float32),
            jnp.asarray(phase.reshape(num_pos_feats, 1), dtype=jnp.float32))


def _default_batch_block(batch):
    """1 grid step on single-TC chips (v5e/v6e); 2 parallel steps on 2-TC chips."""
    try:
        kind = jax.devices()[0].device_kind.lower()
        two_cores = ("v7" in kind) or ("v4" in kind) or ("v5p" in kind)
    except Exception:  # pragma: no cover - defensive
        two_cores = False
    if two_cores and batch >= 2 and batch % 2 == 0:
        return batch // 2
    return batch


def position_embedding_sine(mask, *, num_pos_feats=64, temperature=10000.0,
                            normalize=False, scale=None, batch_block=None,
                            out_dtype=jnp.float32):
    """mask: (B, H, W) bool, True = padded.  Returns (B, 2*num_pos_feats, H, W)."""
    if scale is not None and normalize is False:
        raise ValueError("normalize should be True if scale is passed")
    if scale is None:
        scale = 2.0 * math.pi

    B, H, W = mask.shape
    HW = H * W
    npf = num_pos_feats

    # O(B*H*W) prework (1/(2*npf) of the output bytes): cumsums + optional
    # normalization, kept in plain XLA (see TODO(synk) in the header).
    not_mask = jnp.logical_not(mask).astype(jnp.float32)
    y_embed = jnp.cumsum(not_mask, axis=1)
    x_embed = jnp.cumsum(not_mask, axis=2)
    if normalize:
        eps = 1e-6
        y_embed = y_embed / (y_embed[:, -1:, :] + eps) * scale
        x_embed = x_embed / (x_embed[:, :, -1:] + eps) * scale
    y_flat = y_embed.reshape(B, 1, HW)   # contiguous -> free
    x_flat = x_embed.reshape(B, 1, HW)

    inv_dim_t, phase = _freq_constants(int(npf), float(temperature))

    if batch_block is None:
        batch_block = _default_batch_block(B)
    assert B % batch_block == 0, (B, batch_block)
    grid = (B // batch_block,)

    kernel = functools.partial(_pos_embed_sine_kernel, npf=npf)

    out_flat = pl.pallas_call(
        kernel,
        out_shape=jax.ShapeDtypeStruct((B, 2 * npf, HW), out_dtype),
        grid=grid,
        in_specs=[
            pl.BlockSpec((batch_block, 1, HW), lambda i: (i, 0, 0)),   # y_embed
            pl.BlockSpec((batch_block, 1, HW), lambda i: (i, 0, 0)),   # x_embed
            pl.BlockSpec((npf, 1), lambda i: (0, 0)),                  # inv_dim_t (resident)
            pl.BlockSpec((npf, 1), lambda i: (0, 0)),                  # phase     (resident)
        ],
        out_specs=pl.BlockSpec((batch_block, 2 * npf, HW), lambda i: (i, 0, 0)),
        compiler_params=pltpu.CompilerParams(dimension_semantics=("parallel",)),
    )(y_flat, x_flat, inv_dim_t, phase)

    # Contiguous trailing-dim split -> free; matches PyTorch (B, 2*npf, H, W).
    return out_flat.reshape(B, 2 * npf, H, W)


def position_embedding_sine_ref(mask, *, num_pos_feats=64, temperature=10000.0,
                                normalize=False, scale=None):
    """Pure-JAX transcription of the PyTorch forward (reference)."""
    if scale is None:
        scale = 2.0 * math.pi
    B, H, W = mask.shape
    not_mask = jnp.logical_not(mask).astype(jnp.float32)
    y_embed = jnp.cumsum(not_mask, axis=1)
    x_embed = jnp.cumsum(not_mask, axis=2)
    if normalize:
        eps = 1e-6
        y_embed = y_embed / (y_embed[:, -1:, :] + eps) * scale
        x_embed = x_embed / (x_embed[:, :, -1:] + eps) * scale
    dim_t = jnp.arange(num_pos_feats, dtype=jnp.float32)
    dim_t = temperature ** (2.0 * jnp.floor(dim_t / 2.0) / num_pos_feats)
    pos_x = x_embed[:, :, :, None] / dim_t
    pos_y = y_embed[:, :, :, None] / dim_t
    pos_x = jnp.stack((jnp.sin(pos_x[..., 0::2]), jnp.cos(pos_x[..., 1::2])),
                      axis=4).reshape(B, H, W, num_pos_feats)
    pos_y = jnp.stack((jnp.sin(pos_y[..., 0::2]), jnp.cos(pos_y[..., 1::2])),
                      axis=4).reshape(B, H, W, num_pos_feats)
    return jnp.concatenate((pos_y, pos_x), axis=3).transpose(0, 3, 1, 2)


if __name__ == "__main__":
    B, H, W = 2, 16, 16
    num_pos_feats = 64       # module default -> 128 output channels
    temperature = 10000.0

    # Deterministic NestedTensor-style padding mask: per-image valid (h, w) box.
    # (tensor_list.tensors is only used for .device in the PyTorch forward; the
    #  embedding depends on the mask alone.)
    key = jax.random.PRNGKey(0)
    kh, kw = jax.random.split(key)
    valid_h = jax.random.randint(kh, (B,), H // 2, H + 1)
    valid_w = jax.random.randint(kw, (B,), W // 2, W + 1)
    rows = jnp.arange(H)[None, :, None]
    cols = jnp.arange(W)[None, None, :]
    mask = (rows >= valid_h[:, None, None]) | (cols >= valid_w[:, None, None])

    for normalize in (False, True):   # False is the module default
        out = position_embedding_sine(
            mask, num_pos_feats=num_pos_feats, temperature=temperature,
            normalize=normalize)
        out = jax.block_until_ready(out)
        assert out.shape == (B, 2 * num_pos_feats, H, W), out.shape
        ref = position_embedding_sine_ref(
            mask, num_pos_feats=num_pos_feats, temperature=temperature,
            normalize=normalize)
        err = float(jnp.max(jnp.abs(out - ref)))
        assert err < 1e-4, f"normalize={normalize}: max abs err {err}"
    print("KERNEL_OK")
</pallas_src>

<mosaic_0001>
module attributes {stable_mosaic.version = 11 : i64} {
  func.func @_pos_embed_sine_kernel(%arg0: i32, %arg1: memref<2x1x256xf32, #tpu.memory_space<vmem>>, %arg2: memref<2x1x256xf32, #tpu.memory_space<vmem>>, %arg3: memref<64x1xf32, #tpu.memory_space<vmem>>, %arg4: memref<64x1xf32, #tpu.memory_space<vmem>>, %arg5: memref<2x128x256xf32, #tpu.memory_space<vmem>>) attributes {dimension_semantics = [#tpu.dimension_semantics<parallel>], iteration_bounds = array<i64: 1>, scalar_prefetch = 0 : i64, scratch_operands = 0 : i64, tpu.core_type = #tpu.core_type<tc>, window_params = [{transform_indices = @transform_0, window_bounds = array<i64: 2, 1, 256>}, {transform_indices = @transform_1, window_bounds = array<i64: 2, 1, 256>}, {pipeline_mode = #tpu.pipeline_mode<synchronous>, transform_indices = @transform_2, window_bounds = array<i64: 64, 1>}, {pipeline_mode = #tpu.pipeline_mode<synchronous>, transform_indices = @transform_3, window_bounds = array<i64: 64, 1>}, {transform_indices = @transform_4, window_bounds = array<i64: 2, 128, 256>}]} {
    %c0 = arith.constant 0 : index
    %c0_0 = arith.constant 0 : index
    %0 = vector.load %arg3[%c0, %c0_0] : memref<64x1xf32, #tpu.memory_space<vmem>>, vector<64x1xf32>
    %c0_1 = arith.constant 0 : index
    %c0_2 = arith.constant 0 : index
    %1 = vector.load %arg4[%c0_1, %c0_2] : memref<64x1xf32, #tpu.memory_space<vmem>>, vector<64x1xf32>
    %c0_3 = arith.constant 0 : index
    %c0_4 = arith.constant 0 : index
    %c0_5 = arith.constant 0 : index
    %2 = vector.load %arg1[%c0_3, %c0_4, %c0_5] : memref<2x1x256xf32, #tpu.memory_space<vmem>>, vector<2x1x256xf32>
    %c0_6 = arith.constant 0 : index
    %c0_7 = arith.constant 0 : index
    %c0_8 = arith.constant 0 : index
    %3 = vector.load %arg2[%c0_6, %c0_7, %c0_8] : memref<2x1x256xf32, #tpu.memory_space<vmem>>, vector<2x1x256xf32>
    %4 = vector.shape_cast %0 : vector<64x1xf32> to vector<1x64x1xf32>
    %5 = vector.broadcast %2 : vector<2x1x256xf32> to vector<2x64x256xf32>
    %6 = vector.broadcast %4 : vector<1x64x1xf32> to vector<2x64x256xf32>
    %7 = arith.mulf %5, %6 : vector<2x64x256xf32>
    %8 = vector.shape_cast %1 : vector<64x1xf32> to vector<1x64x1xf32>
    %9 = vector.broadcast %8 : vector<1x64x1xf32> to vector<2x64x256xf32>
    %10 = arith.addf %7, %9 : vector<2x64x256xf32>
    %11 = math.sin %10 : vector<2x64x256xf32>
    %c0_9 = arith.constant 0 : index
    %c0_10 = arith.constant 0 : index
    %c0_11 = arith.constant 0 : index
    %12 = vector.load %arg5[%c0_9, %c0_10, %c0_11] : memref<2x128x256xf32, #tpu.memory_space<vmem>>, vector<2x64x256xf32>
    tpu.vector_store %arg5[%c0_9, %c0_10, %c0_11], %11 {strides = array<i32>} : memref<2x128x256xf32, #tpu.memory_space<vmem>>, vector<2x64x256xf32>,
    %13 = vector.shape_cast %0 : vector<64x1xf32> to vector<1x64x1xf32>
    %14 = vector.broadcast %3 : vector<2x1x256xf32> to vector<2x64x256xf32>
    %15 = vector.broadcast %13 : vector<1x64x1xf32> to vector<2x64x256xf32>
    %16 = arith.mulf %14, %15 : vector<2x64x256xf32>
    %17 = vector.shape_cast %1 : vector<64x1xf32> to vector<1x64x1xf32>
    %18 = vector.broadcast %17 : vector<1x64x1xf32> to vector<2x64x256xf32>
    %19 = arith.addf %16, %18 : vector<2x64x256xf32>
    %20 = math.sin %19 : vector<2x64x256xf32>
    %c0_12 = arith.constant 0 : index
    %c64 = arith.constant 64 : index
    %c0_13 = arith.constant 0 : index
    %21 = vector.load %arg5[%c0_12, %c64, %c0_13] : memref<2x128x256xf32, #tpu.memory_space<vmem>>, vector<2x64x256xf32>
    tpu.vector_store %arg5[%c0_12, %c64, %c0_13], %20 {strides = array<i32>} : memref<2x128x256xf32, #tpu.memory_space<vmem>>, vector<2x64x256xf32>,
    return
  }
  func.func @transform_0(%arg0: i32) -> (i32, i32, i32) {
    %c0_i32 = arith.constant 0 : i32
    %c0_i32_0 = arith.constant 0 : i32
    %c0_i32_1 = arith.constant 0 : i32
    return %arg0, %c0_i32, %c0_i32_0 : i32, i32, i32
  }
  func.func @transform_1(%arg0: i32) -> (i32, i32, i32) {
    %c0_i32 = arith.constant 0 : i32
    %c0_i32_0 = arith.constant 0 : i32
    %c0_i32_1 = arith.constant 0 : i32
    return %arg0, %c0_i32, %c0_i32_0 : i32, i32, i32
  }
  func.func @transform_2(%arg0: i32) -> (i32, i32) {
    %c0_i32 = arith.constant 0 : i32
    %c0_i32_0 = arith.constant 0 : i32
    %c0_i32_1 = arith.constant 0 : i32
    return %c0_i32, %c0_i32_0 : i32, i32
  }
  func.func @transform_3(%arg0: i32) -> (i32, i32) {
    %c0_i32 = arith.constant 0 : i32
    %c0_i32_0 = arith.constant 0 : i32
    %c0_i32_1 = arith.constant 0 : i32
    return %c0_i32, %c0_i32_0 : i32, i32
  }
  func.func @transform_4(%arg0: i32) -> (i32, i32, i32) {
    %c0_i32 = arith.constant 0 : i32
    %c0_i32_0 = arith.constant 0 : i32
    %c0_i32_1 = arith.constant 0 : i32
    return %arg0, %c0_i32, %c0_i32_0 : i32, i32, i32
  }
}

</mosaic_0001>

<llo_original>
// kernel: tpu_custom_call.1
$region0: #{tpu_custom_call.1}
  #allocation0 [shape = 'u32[]', space=smem, size = 0x4, offset = 0x4, fixed_abs, tag = 'smem constant byte address 0x4 - core index']
  #allocation1 [shape = 'u32[144,128]{1,0:T(1,128)}', space=vmem, size = 0x12000, scoped, tag = 'internal scratch']
  %s0 = inlined_call_operand.vmem [shape: f32[2,1,256], index: 0, kind: input, shape index: {}]
  %s1 = inlined_call_operand.vmem [shape: f32[2,1,256], index: 1, kind: input, shape index: {}]
  %s2 = inlined_call_operand.vmem [shape: f32[64,1], index: 2, kind: input, shape index: {}]
  %s3 = inlined_call_operand.vmem [shape: f32[64,1], index: 3, kind: input, shape index: {}]
  %s4 = inlined_call_operand.hbm [shape: f32[2,128,256], index: 4, kind: output, shape index: {}]
  %s5 = sld [smem:[#allocation0]]
  $region26: #{tpu_custom_call.1} parent=0
    _
  %s7 = ssub.s32 1, %s5
  %s8 = scalar_select 0, %s7, %s5
  $region1: #{tpu_custom_call.1} parent=0
    #allocation2 [shape = 'u8[262144]{0}', space=vmem, size = 0x40000, scoped, tag = 'output window, operand 0, single buffered']
    #allocation3 [shape = 's32[1]{0}', space=sflag, size = 0x4, scoped, tag = 'scoped memory for tpu_custom_call.1']
    %9 = vsyncpa [#allocation3], 0
    // Predicated region
    $region2: #{tpu_custom_call.1} parent=1 // pred_check
      _
    $region3: #{tpu_custom_call.1} parent=1 // pred_check_branch
      %11 = sbr.rel (0) target = $region5
    $region4: #{tpu_custom_call.1} parent=1 // pred_region
      _
    $region5: #{tpu_custom_call.1} parent=1 // pred_fallthru
      _
    // Predicated region
    $region6: #{tpu_custom_call.1} parent=1 // pred_check
      _
    $region7: #{tpu_custom_call.1} parent=1 // pred_check_branch
      %13 = sbr.rel (0) target = $region9
    $region8: #{tpu_custom_call.1} parent=1 // pred_region
      _
    $region9: #{tpu_custom_call.1} parent=1 // pred_fallthru
      _
    // Predicated region
    $region10: #{tpu_custom_call.1} parent=1 // pred_check
      _
    $region11: #{tpu_custom_call.1} parent=1 // pred_check_branch
      %15 = sbr.rel (0) target = $region13
    $region12: #{tpu_custom_call.1} parent=1 // pred_region
      _
    $region13: #{tpu_custom_call.1} parent=1 // pred_fallthru
      _
    // Predicated region
    $region14: #{tpu_custom_call.1} parent=1 // pred_check
      _
    $region15: #{tpu_custom_call.1} parent=1 // pred_check_branch
      %17 = sbr.rel (0) target = $region17
    $region16: #{tpu_custom_call.1} parent=1 // pred_region
      _
    $region17: #{tpu_custom_call.1} parent=1 // pred_fallthru
      _
    %v18 = vld [vmem:[%s2] sm:$0xff]
    %v19 = vld [vmem:[%s2 + $0x8] sm:$0xff]
    %v20 = vld [vmem:[%s2 + $0x10] sm:$0xff]
    %v21 = vld [vmem:[%s2 + $0x18] sm:$0xff]
    %v22 = vld [vmem:[%s2 + $0x20] sm:$0xff]
    %v23 = vld [vmem:[%s2 + $0x28] sm:$0xff]
    %v24 = vld [vmem:[%s2 + $0x30] sm:$0xff]
    %v25 = vld [vmem:[%s2 + $0x38] sm:$0xff]
    %v26 = vld [vmem:[%s3] sm:$0xff]
    %v27 = vld [vmem:[%s3 + $0x8] sm:$0xff]
    %v28 = vld [vmem:[%s3 + $0x10] sm:$0xff]
    %v29 = vld [vmem:[%s3 + $0x18] sm:$0xff]
    %v30 = vld [vmem:[%s3 + $0x20] sm:$0xff]
    %v31 = vld [vmem:[%s3 + $0x28] sm:$0xff]
    %v32 = vld [vmem:[%s3 + $0x30] sm:$0xff]
    %v33 = vld [vmem:[%s3 + $0x38] sm:$0xff]
    %v34 = vld [vmem:[%s0] sm:$0x3]
    %v35 = vld [vmem:[%s0 + $0x2] sm:$0x3]
    %v36 = vld [vmem:[%s1] sm:$0x3]
    %v37 = vld [vmem:[%s1 + $0x2] sm:$0x3]
    %v40 = vlaneseq
    %v41 = vshrl.u32 %v40, 7
    %v42 = vsub.s32 0, %v41
    %v43 = vrot.slane %v34, %v42
    %v44 = vlaneseq
    %v45 = vshrl.u32 %v44, 7
    %v46 = vsub.s32 1, %v45
    %v47 = vrot.slane %v34, %v46
    %v48 = vlaneseq
    %v49 = vshrl.u32 %v48, 7
    %v50 = vsub.s32 0, %v49
    %v51 = vrot.slane %v35, %v50
    %v52 = vlaneseq
    %v53 = vshrl.u32 %v52, 7
    %v54 = vsub.s32 1, %v53
    %v55 = vrot.slane %v35, %v54
    %61 = vset.pattern.permute.xlu0 0
    %62 = vperm.xlu0 %61, %v18
    %v63 = vpop.permute.xlu0 %62
    %66 = vset.pattern.permute.xlu0 0
    %67 = vperm.xlu0 %66, %v19
    %v68 = vpop.permute.xlu0 %67
    %71 = vset.pattern.permute.xlu0 0
    %72 = vperm.xlu0 %71, %v20
    %v73 = vpop.permute.xlu0 %72
    %76 = vset.pattern.permute.xlu0 0
    %77 = vperm.xlu0 %76, %v21
    %v78 = vpop.permute.xlu0 %77
    %81 = vset.pattern.permute.xlu0 0
    %82 = vperm.xlu0 %81, %v22
    %v83 = vpop.permute.xlu0 %82
    %86 = vset.pattern.permute.xlu0 0
    %87 = vperm.xlu0 %86, %v23
    %v88 = vpop.permute.xlu0 %87
    %91 = vset.pattern.permute.xlu0 0
    %92 = vperm.xlu0 %91, %v24
    %v93 = vpop.permute.xlu0 %92
    %96 = vset.pattern.permute.xlu0 0
    %97 = vperm.xlu0 %96, %v25
    %v98 = vpop.permute.xlu0 %97
    %v100 = vmul.f32 %v43, %v63
    %v101 = vmul.f32 %v47, %v63
    %v102 = vmul.f32 %v43, %v68
    %v103 = vmul.f32 %v47, %v68
    %v104 = vmul.f32 %v43, %v73
    %v105 = vmul.f32 %v47, %v73
    %v106 = vmul.f32 %v43, %v78
    %v107 = vmul.f32 %v47, %v78
    %v108 = vmul.f32 %v43, %v83
    %v109 = vmul.f32 %v47, %v83
    %v110 = vmul.f32 %v43, %v88
    %v111 = vmul.f32 %v47, %v88
    %v112 = vmul.f32 %v43, %v93
    %v113 = vmul.f32 %v47, %v93
    %v114 = vmul.f32 %v43, %v98
    %v115 = vmul.f32 %v47, %v98
    %v116 = vmul.f32 %v51, %v63
    %v117 = vmul.f32 %v55, %v63
    %v118 = vmul.f32 %v51, %v68
    %v119 = vmul.f32 %v55, %v68
    %v120 = vmul.f32 %v51, %v73
    %v121 = vmul.f32 %v55, %v73
    %v122 = vmul.f32 %v51, %v78
    %v123 = vmul.f32 %v55, %v78
    %v124 = vmul.f32 %v51, %v83
    %v125 = vmul.f32 %v55, %v83
    %v126 = vmul.f32 %v51, %v88
    %v127 = vmul.f32 %v55, %v88
    %v128 = vmul.f32 %v51, %v93
    %v129 = vmul.f32 %v55, %v93
    %v130 = vmul.f32 %v51, %v98
    %v131 = vmul.f32 %v55, %v98
    %133 = vset.pattern.permute.xlu0 0
    %134 = vperm.xlu0 %133, %v26
    %v135 = vpop.permute.xlu0 %134
    %138 = vset.pattern.permute.xlu0 0
    %139 = vperm.xlu0 %138, %v27
    %v140 = vpop.permute.xlu0 %139
    %143 = vset.pattern.permute.xlu0 0
    %144 = vperm.xlu0 %143, %v28
    %v145 = vpop.permute.xlu0 %144
    %148 = vset.pattern.permute.xlu0 0
    %149 = vperm.xlu0 %148, %v29
    %v150 = vpop.permute.xlu0 %149
    %153 = vset.pattern.permute.xlu0 0
    %154 = vperm.xlu0 %153, %v30
    %v155 = vpop.permute.xlu0 %154
    %158 = vset.pattern.permute.xlu0 0
    %159 = vperm.xlu0 %158, %v31
    %v160 = vpop.permute.xlu0 %159
    %163 = vset.pattern.permute.xlu0 0
    %164 = vperm.xlu0 %163, %v32
    %v165 = vpop.permute.xlu0 %164
    %168 = vset.pattern.permute.xlu0 0
    %169 = vperm.xlu0 %168, %v33
    %v170 = vpop.permute.xlu0 %169
    %v172 = vadd.f32 %v100, %v135
    %v173 = vadd.f32 %v101, %v135
    %v174 = vadd.f32 %v102, %v140
    %v175 = vadd.f32 %v103, %v140
    %v176 = vadd.f32 %v104, %v145
    %v177 = vadd.f32 %v105, %v145
    %v178 = vadd.f32 %v106, %v150
    %v179 = vadd.f32 %v107, %v150
    %v180 = vadd.f32 %v108, %v155
    %v181 = vadd.f32 %v109, %v155
    %v182 = vadd.f32 %v110, %v160
    %v183 = vadd.f32 %v111, %v160
    %v184 = vadd.f32 %v112, %v165
    %v185 = vadd.f32 %v113, %v165
    %v186 = vadd.f32 %v114, %v170
    %v187 = vadd.f32 %v115, %v170
    %v188 = vadd.f32 %v116, %v135
    %v189 = vadd.f32 %v117, %v135
    %v190 = vadd.f32 %v118, %v140
    %v191 = vadd.f32 %v119, %v140
    %v192 = vadd.f32 %v120, %v145
    %v193 = vadd.f32 %v121, %v145
    %v194 = vadd.f32 %v122, %v150
    %v195 = vadd.f32 %v123, %v150
    %v196 = vadd.f32 %v124, %v155
    %v197 = vadd.f32 %v125, %v155
    %v198 = vadd.f32 %v126, %v160
    %v199 = vadd.f32 %v127, %v160
    %v200 = vadd.f32 %v128, %v165
    %v201 = vadd.f32 %v129, %v165
    %v202 = vadd.f32 %v130, %v170
    %v203 = vadd.f32 %v131, %v170
    %v204 = vand.u32 2147483647, %v172
    %vm205 = vcmp.le.f32.partialorder %v204, 0.7853982
    %vm206 = vcmp.lt.s32.totalorder %v172, 0
    %v207 = vand.u32 %v172, 2139095040
    %v208 = vshrl.u32 %v207, 23
    %v209 = vsub.s32 %v208, 127
    %v210 = vand.u32 2147483647, %v172
    %v211 = vand.u32 %v210, 8388607
    %v212 = vor.u32 %v211, 8388608
    %v213 = vsub.s32 0, %v212
    %v214 = vadd.s32 %v209, 1
    %vm215 = vcmp.gt.s32.totalorder %v214, 0
    %v216 = vsel %vm215, %v214, 0
    %v217 = vshrl.u32 %v216, 5
    %v218 = vand.u32 %v216, 31
    %v219 = vsub.s32 32, %v218
    %v220 = vshrl.u32 683565275, %v219
    %v221 = vshll.u32 683565275, %v218
    %v222 = vshrl.u32 2475754826, %v219
    %v223 = vor.u32 %v221, %v222
    %v224 = vshll.u32 2475754826, %v218
    %v225 = vshrl.u32 2131351028, %v219
    %v226 = vor.u32 %v224, %v225
    %v227 = vshll.u32 2131351028, %v218
    %v228 = vshrl.u32 2102212464, %v219
    %v229 = vor.u32 %v227, %v228
    %v230 = vshll.u32 2102212464, %v218
    %v231 = vshrl.u32 920167782, %v219
    %v232 = vor.u32 %v230, %v231
    %v233 = vshll.u32 920167782, %v218
    %v234 = vshrl.u32 1326507024, %v219
    %v235 = vor.u32 %v233, %v234
    %vm236 = vcmp.lt.s32.totalorder %v217, 1
    %vm237 = vcmp.lt.s32.totalorder %v217, 2
    %vm238 = vcmp.lt.s32.totalorder %v217, 3
    %vm239 = vcmp.lt.s32.totalorder %v217, 4
    %v240 = vsel %vm236, %v220, %v223
    %v241 = vsel %vm239, %v229, 2102212464
    %v242 = vsel %vm238, %v226, %v241
    %v243 = vsel %vm237, %v240, %v242
    %v244 = vsel %vm236, %v223, %v226
    %v245 = vsel %vm239, %v232, 920167782
    %v246 = vsel %vm238, %v229, %v245
    %v247 = vsel %vm237, %v244, %v246
    %v248 = vsel %vm236, %v226, %v229
    %v249 = vsel %vm239, %v235, 1326507024
    %v250 = vsel %vm238, %v232, %v249
    %v251 = vsel %vm237, %v248, %v250
    %v252 = vshll.u32 %v212, 8
    %v253 = vmul.u32.u64.compose %v252, %v251
    %v254 = vextract.low.u32 %v253
    %v255 = vextract.high.u32 %v253
    %v256 = vmul.u32.u64.compose %v252, %v247
    %v257 = vextract.low.u32 %v256
    %v258 = vextract.high.u32 %v256
    %v259 = vmul.u32 %v252, %v243
    %v260 = vadd.s32 %v255, %v257
    %vm261 = vc.u32 %v255, %v257
    %v262 = vadd.s32 %v258, 1
    %v263 = vsel %vm261, %v262, %v258
    %v264 = vadd.s32 %v259, %v263
    %v265 = vadd.s32 %v264, 536870912
    %v266 = vshrl.u32 %v265, 30
    %v267 = vshll.u32 %v266, 30
    %v268 = vsub.s32 %v264, %v267
    %vm269 = vcmp.lt.s32.totalorder %v268, 0
    %v270 = vsub.s32 0, %v268
    %v271 = vsel %vm269, %v270, %v268
    %v272 = vclz %v271
    %v273 = vsub.s32 %v272, 2
    %vm274 = vcmp.gt.s32.totalorder 0, %v273
    %v275 = vsel %vm274, 0, %v273
    %v276 = vsub.s32 32, %v275
    %v277 = vshll.u32 %v268, %v275
    %v278 = vshrl.u32 %v260, %v276
    %v279 = vor.u32 %v277, %v278
    %v280 = vsub.s32 4294967266, %v275
    %v281 = vadd.s32 %v280, 127
    %v282 = vshll.u32 %v281, 23
    %v283 = vor.u32 4788187, %v282
    %v284 = vand.u32 2147483647, %v283
    %v286 = vcvt.s32.f32 %v279
    %v287 = vmul.f32 %v286, %v284
    %v288 = vxor.u32 %v287, 2147483648
    %v289 = vsel %vm206, %v288, %v287
    %v290 = vsub.s32 4, %v266
    %v291 = vsel %vm206, %v290, %v266
    %v292 = vsel %vm205, %v172, %v289
    %v293 = vsel %vm205, 0, %v291
    %v294 = vcosq.f32.pop %v292
    %v295 = vsinq.f32.pop %v292
    %vm296 = vweird.f32 %v172
    %v297 = vadd.s32 %v293, 3
    %v298 = vand.u32 %v297, 3
    %vm299 = vcmp.lt.s32.totalorder %v298, 2
    %vm300 = vcmp.eq.s32.totalorder %v298, 0
    %v301 = vxor.u32 %v295, 2147483648
    %v302 = vsel %vm300, %v294, %v301
    %vm303 = vcmp.eq.s32.totalorder %v298, 2
    %v304 = vxor.u32 %v294, 2147483648
    %v305 = vsel %vm303, %v304, %v295
    %v306 = vsel %vm299, %v302, %v305
    %v307 = vsel %vm296, nan, %v306
    %v308 = vand.u32 2147483647, %v173
    %vm309 = vcmp.le.f32.partialorder %v308, 0.7853982
    %vm310 = vcmp.lt.s32.totalorder %v173, 0
    %v311 = vand.u32 %v173, 2139095040
    %v312 = vshrl.u32 %v311, 23
    %v313 = vsub.s32 %v312, 127
    %v314 = vand.u32 2147483647, %v173
    %v315 = vand.u32 %v314, 8388607
    %v316 = vor.u32 %v315, 8388608
    %v317 = vsub.s32 0, %v316
    %v318 = vadd.s32 %v313, 1
    %vm319 = vcmp.gt.s32.totalorder %v318, 0
    %v320 = vsel %vm319, %v318, 0
    %v321 = vshrl.u32 %v320, 5
    %v322 = vand.u32 %v320, 31
    %v323 = vsub.s32 32, %v322
    %v324 = vshrl.u32 683565275, %v323
    %v325 = vshll.u32 683565275, %v322
    %v326 = vshrl.u32 2475754826, %v323
    %v327 = vor.u32 %v325, %v326
    %v328 = vshll.u32 2475754826, %v322
    %v329 = vshrl.u32 2131351028, %v323
    %v330 = vor.u32 %v328, %v329
    %v331 = vshll.u32 2131351028, %v322
    %v332 = vshrl.u32 2102212464, %v323
    %v333 = vor.u32 %v331, %v332
    %v334 = vshll.u32 2102212464, %v322
    %v335 = vshrl.u32 920167782, %v323
    %v336 = vor.u32 %v334, %v335
    %v337 = vshll.u32 920167782, %v322
    %v338 = vshrl.u32 1326507024, %v323
    %v339 = vor.u32 %v337, %v338
    %vm340 = vcmp.lt.s32.totalorder %v321, 1
    %vm341 = vcmp.lt.s32.totalorder %v321, 2
    %vm342 = vcmp.lt.s32.totalorder %v321, 3
    %vm343 = vcmp.lt.s32.totalorder %v321, 4
    %v344 = vsel %vm340, %v324, %v327
    %v345 = vsel %vm343, %v333, 2102212464
    %v346 = vsel %vm342, %v330, %v345
    %v347 = vsel %vm341, %v344, %v346
    %v348 = vsel %vm340, %v327, %v330
    %v349 = vsel %vm343, %v336, 920167782
    %v350 = vsel %vm342, %v333, %v349
    %v351 = vsel %vm341, %v348, %v350
    %v352 = vsel %vm340, %v330, %v333
    %v353 = vsel %vm343, %v339, 1326507024
    %v354 = vsel %vm342, %v336, %v353
    %v355 = vsel %vm341, %v352, %v354
    %v356 = vshll.u32 %v316, 8
    %v357 = vmul.u32.u64.compose %v356, %v355
    %v358 = vextract.low.u32 %v357
    %v359 = vextract.high.u32 %v357
    %v360 = vmul.u32.u64.compose %v356, %v351
    %v361 = vextract.low.u32 %v360
    %v362 = vextract.high.u32 %v360
    %v363 = vmul.u32 %v356, %v347
    %v364 = vadd.s32 %v359, %v361
    %vm365 = vc.u32 %v359, %v361
    %v366 = vadd.s32 %v362, 1
    %v367 = vsel %vm365, %v366, %v362
    %v368 = vadd.s32 %v363, %v367
    %v369 = vadd.s32 %v368, 536870912
    %v370 = vshrl.u32 %v369, 30
    %v371 = vshll.u32 %v370, 30
    %v372 = vsub.s32 %v368, %v371
    %vm373 = vcmp.lt.s32.totalorder %v372, 0
    %v374 = vsub.s32 0, %v372
    %v375 = vsel %vm373, %v374, %v372
    %v376 = vclz %v375
    %v377 = vsub.s32 %v376, 2
    %vm378 = vcmp.gt.s32.totalorder 0, %v377
    %v379 = vsel %vm378, 0, %v377
    %v380 = vsub.s32 32, %v379
    %v381 = vshll.u32 %v372, %v379
    %v382 = vshrl.u32 %v364, %v380
    %v383 = vor.u32 %v381, %v382
    %v384 = vsub.s32 4294967266, %v379
    %v385 = vadd.s32 %v384, 127
    %v386 = vshll.u32 %v385, 23
    %v387 = vor.u32 4788187, %v386
    %v388 = vand.u32 2147483647, %v387
    %v390 = vcvt.s32.f32 %v383
    %v391 = vmul.f32 %v390, %v388
    %v392 = vxor.u32 %v391, 2147483648
    %v393 = vsel %vm310, %v392, %v391
    %v394 = vsub.s32 4, %v370
    %v395 = vsel %vm310, %v394, %v370
    %v396 = vsel %vm309, %v173, %v393
    %v397 = vsel %vm309, 0, %v395
    %v398 = vcosq.f32.pop %v396
    %v399 = vsinq.f32.pop %v396
    %vm400 = vweird.f32 %v173
    %v401 = vadd.s32 %v397, 3
    %v402 = vand.u32 %v401, 3
    %vm403 = vcmp.lt.s32.totalorder %v402, 2
    %vm404 = vcmp.eq.s32.totalorder %v402, 0
    %v405 = vxor.u32 %v399, 2147483648
    %v406 = vsel %vm404, %v398, %v405
    %vm407 = vcmp.eq.s32.totalorder %v402, 2
    %v408 = vxor.u32 %v398, 2147483648
    %v409 = vsel %vm407, %v408, %v399
    %v410 = vsel %vm403, %v406, %v409
    %v411 = vsel %vm400, nan, %v410
    %v412 = vand.u32 2147483647, %v174
    %vm413 = vcmp.le.f32.partialorder %v412, 0.7853982
    %vm414 = vcmp.lt.s32.totalorder %v174, 0
    %v415 = vand.u32 %v174, 2139095040
    %v416 = vshrl.u32 %v415, 23
    %v417 = vsub.s32 %v416, 127
    %v418 = vand.u32 2147483647, %v174
    %v419 = vand.u32 %v418, 8388607
    %v420 = vor.u32 %v419, 8388608
    %v421 = vsub.s32 0, %v420
    %v422 = vadd.s32 %v417, 1
    %vm423 = vcmp.gt.s32.totalorder %v422, 0
    %v424 = vsel %vm423, %v422, 0
    %v425 = vshrl.u32 %v424, 5
    %v426 = vand.u32 %v424, 31
    %v427 = vsub.s32 32, %v426
    %v428 = vshrl.u32 683565275, %v427
    %v429 = vshll.u32 683565275, %v426
    %v430 = vshrl.u32 2475754826, %v427
    %v431 = vor.u32 %v429, %v430
    %v432 = vshll.u32 2475754826, %v426
    %v433 = vshrl.u32 2131351028, %v427
    %v434 = vor.u32 %v432, %v433
    %v435 = vshll.u32 2131351028, %v426
    %v436 = vshrl.u32 2102212464, %v427
    %v437 = vor.u32 %v435, %v436
    %v438 = vshll.u32 2102212464, %v426
    %v439 = vshrl.u32 920167782, %v427
    %v440 = vor.u32 %v438, %v439
    %v441 = vshll.u32 920167782, %v426
    %v442 = vshrl.u32 1326507024, %v427
    %v443 = vor.u32 %v441, %v442
    %vm444 = vcmp.lt.s32.totalorder %v425, 1
    %vm445 = vcmp.lt.s32.totalorder %v425, 2
    %vm446 = vcmp.lt.s32.totalorder %v425, 3
    %vm447 = vcmp.lt.s32.totalorder %v425, 4
    %v448 = vsel %vm444, %v428, %v431
    %v449 = vsel %vm447, %v437, 2102212464
    %v450 = vsel %vm446, %v434, %v449
    %v451 = vsel %vm445, %v448, %v450
    %v452 = vsel %vm444, %v431, %v434
    %v453 = vsel %vm447, %v440, 920167782
    %v454 = vsel %vm446, %v437, %v453
    %v455 = vsel %vm445, %v452, %v454
    %v456 = vsel %vm444, %v434, %v437
    %v457 = vsel %vm447, %v443, 1326507024
    %v458 = vsel %vm446, %v440, %v457
    %v459 = vsel %vm445, %v456, %v458
    %v460 = vshll.u32 %v420, 8
    %v461 = vmul.u32.u64.compose %v460, %v459
    %v462 = vextract.low.u32 %v461
    %v463 = vextract.high.u32 %v461
    %v464 = vmul.u32.u64.compose %v460, %v455
    %v465 = vextract.low.u32 %v464
    %v466 = vextract.high.u32 %v464
    %v467 = vmul.u32 %v460, %v451
    %v468 = vadd.s32 %v463, %v465
    %vm469 = vc.u32 %v463, %v465
    %v470 = vadd.s32 %v466, 1
    %v471 = vsel %vm469, %v470, %v466
    %v472 = vadd.s32 %v467, %v471
    %v473 = vadd.s32 %v472, 536870912
    %v474 = vshrl.u32 %v473, 30
    %v475 = vshll.u32 %v474, 30
    %v476 = vsub.s32 %v472, %v475
    %vm477 = vcmp.lt.s32.totalorder %v476, 0
    %v478 = vsub.s32 0, %v476
    %v479 = vsel %vm477, %v478, %v476
    %v480 = vclz %v479
    %v481 = vsub.s32 %v480, 2
    %vm482 = vcmp.gt.s32.totalorder 0, %v481
    %v483 = vsel %vm482, 0, %v481
    %v484 = vsub.s32 32, %v483
    %v485 = vshll.u32 %v476, %v483
    %v486 = vshrl.u32 %v468, %v484
    %v487 = vor.u32 %v485, %v486
    %v488 = vsub.s32 4294967266, %v483
    %v489 = vadd.s32 %v488, 127
    %v490 = vshll.u32 %v489, 23
    %v491 = vor.u32 4788187, %v490
    %v492 = vand.u32 2147483647, %v491
    %v494 = vcvt.s32.f32 %v487
    %v495 = vmul.f32 %v494, %v492
    %v496 = vxor.u32 %v495, 2147483648
    %v497 = vsel %vm414, %v496, %v495
    %v498 = vsub.s32 4, %v474
    %v499 = vsel %vm414, %v498, %v474
    %v500 = vsel %vm413, %v174, %v497
    %v501 = vsel %vm413, 0, %v499
    %v502 = vcosq.f32.pop %v500
    %v503 = vsinq.f32.pop %v500
    %vm504 = vweird.f32 %v174
    %v505 = vadd.s32 %v501, 3
    %v506 = vand.u32 %v505, 3
    %vm507 = vcmp.lt.s32.totalorder %v506, 2
    %vm508 = vcmp.eq.s32.totalorder %v506, 0
    %v509 = vxor.u32 %v503, 2147483648
    %v510 = vsel %vm508, %v502, %v509
    %vm511 = vcmp.eq.s32.totalorder %v506, 2
    %v512 = vxor.u32 %v502, 2147483648
    %v513 = vsel %vm511, %v512, %v503
    %v514 = vsel %vm507, %v510, %v513
    %v515 = vsel %vm504, nan, %v514
    %v516 = vand.u32 2147483647, %v175
    %vm517 = vcmp.le.f32.partialorder %v516, 0.7853982
    %vm518 = vcmp.lt.s32.totalorder %v175, 0
    %v519 = vand.u32 %v175, 2139095040
    %v520 = vshrl.u32 %v519, 23
    %v521 = vsub.s32 %v520, 127
    %v522 = vand.u32 2147483647, %v175
    %v523 = vand.u32 %v522, 8388607
    %v524 = vor.u32 %v523, 8388608
    %v525 = vsub.s32 0, %v524
    %v526 = vadd.s32 %v521, 1
    %vm527 = vcmp.gt.s32.totalorder %v526, 0
    %v528 = vsel %vm527, %v526, 0
    %v529 = vshrl.u32 %v528, 5
    %v530 = vand.u32 %v528, 31
    %v531 = vsub.s32 32, %v530
    %v532 = vshrl.u32 683565275, %v531
    %v533 = vshll.u32 683565275, %v530
    %v534 = vshrl.u32 2475754826, %v531
    %v535 = vor.u32 %v533, %v534
    %v536 = vshll.u32 2475754826, %v530
    %v537 = vshrl.u32 2131351028, %v531
    %v538 = vor.u32 %v536, %v537
    %v539 = vshll.u32 2131351028, %v530
    %v540 = vshrl.u32 2102212464, %v531
    %v541 = vor.u32 %v539, %v540
    %v542 = vshll.u32 2102212464, %v530
    %v543 = vshrl.u32 920167782, %v531
    %v544 = vor.u32 %v542, %v543
    %v545 = vshll.u32 920167782, %v530
    %v546 = vshrl.u32 1326507024, %v531
    %v547 = vor.u32 %v545, %v546
    %vm548 = vcmp.lt.s32.totalorder %v529, 1
    %vm549 = vcmp.lt.s32.totalorder %v529, 2
    %vm550 = vcmp.lt.s32.totalorder %v529, 3
    %vm551 = vcmp.lt.s32.totalorder %v529, 4
    %v552 = vsel %vm548, %v532, %v535
    %v553 = vsel %vm551, %v541, 2102212464
    %v554 = vsel %vm550, %v538, %v553
    %v555 = vsel %vm549, %v552, %v554
    %v556 = vsel %vm548, %v535, %v538
    %v557 = vsel %vm551, %v544, 920167782
    %v558 = vsel %vm550, %v541, %v557
    %v559 = vsel %vm549, %v556, %v558
    %v560 = vsel %vm548, %v538, %v541
    %v561 = vsel %vm551, %v547, 1326507024
    %v562 = vsel %vm550, %v544, %v561
    %v563 = vsel %vm549, %v560, %v562
    %v564 = vshll.u32 %v524, 8
    %v565 = vmul.u32.u64.compose %v564, %v563
    %v566 = vextract.low.u32 %v565
    %v567 = vextract.high.u32 %v565
    %v568 = vmul.u32.u64.compose %v564, %v559
    %v569 = vextract.low.u32 %v568
    %v570 = vextract.high.u32 %v568
    %v571 = vmul.u32 %v564, %v555
    %v572 = vadd.s32 %v567, %v569
    %vm573 = vc.u32 %v567, %v569
    %v574 = vadd.s32 %v570, 1
    %v575 = vsel %vm573, %v574, %v570
    %v576 = vadd.s32 %v571, %v575
    %v577 = vadd.s32 %v576, 536870912
    %v578 = vshrl.u32 %v577, 30
    %v579 = vshll.u32 %v578, 30
    %v580 = vsub.s32 %v576, %v579
    %vm581 = vcmp.lt.s32.totalorder %v580, 0
    %v582 = vsub.s32 0, %v580
    %v583 = vsel %vm581, %v582, %v580
    %v584 = vclz %v583
    %v585 = vsub.s32 %v584, 2
    %vm586 = vcmp.gt.s32.totalorder 0, %v585
    %v587 = vsel %vm586, 0, %v585
    %v588 = vsub.s32 32, %v587
    %v589 = vshll.u32 %v580, %v587
    %v590 = vshrl.u32 %v572, %v588
    %v591 = vor.u32 %v589, %v590
    %v592 = vsub.s32 4294967266, %v587
    %v593 = vadd.s32 %v592, 127
    %v594 = vshll.u32 %v593, 23
    %v595 = vor.u32 4788187, %v594
    %v596 = vand.u32 2147483647, %v595
    %v598 = vcvt.s32.f32 %v591
    %v599 = vmul.f32 %v598, %v596
    %v600 = vxor.u32 %v599, 2147483648
    %v601 = vsel %vm518, %v600, %v599
    %v602 = vsub.s32 4, %v578
    %v603 = vsel %vm518, %v602, %v578
    %v604 = vsel %vm517, %v175, %v601
    %v605 = vsel %vm517, 0, %v603
    %v606 = vcosq.f32.pop %v604
    %v607 = vsinq.f32.pop %v604
    %vm608 = vweird.f32 %v175
    %v609 = vadd.s32 %v605, 3
    %v610 = vand.u32 %v609, 3
    %vm611 = vcmp.lt.s32.totalorder %v610, 2
    %vm612 = vcmp.eq.s32.totalorder %v610, 0
    %v613 = vxor.u32 %v607, 2147483648
    %v614 = vsel %vm612, %v606, %v613
    %vm615 = vcmp.eq.s32.totalorder %v610, 2
    %v616 = vxor.u32 %v606, 2147483648
    %v617 = vsel %vm615, %v616, %v607
    %v618 = vsel %vm611, %v614, %v617
    %v619 = vsel %vm608, nan, %v618
    %v620 = vand.u32 2147483647, %v176
    %vm621 = vcmp.le.f32.partialorder %v620, 0.7853982
    %vm622 = vcmp.lt.s32.totalorder %v176, 0
    %v623 = vand.u32 %v176, 2139095040
    %v624 = vshrl.u32 %v623, 23
    %v625 = vsub.s32 %v624, 127
    %v626 = vand.u32 2147483647, %v176
    %v627 = vand.u32 %v626, 8388607
    %v628 = vor.u32 %v627, 8388608
    %v629 = vsub.s32 0, %v628
    %v630 = vadd.s32 %v625, 1
    %vm631 = vcmp.gt.s32.totalorder %v630, 0
    %v632 = vsel %vm631, %v630, 0
    %v633 = vshrl.u32 %v632, 5
    %v634 = vand.u32 %v632, 31
    %v635 = vsub.s32 32, %v634
    %v636 = vshrl.u32 683565275, %v635
    %v637 = vshll.u32 683565275, %v634
    %v638 = vshrl.u32 2475754826, %v635
    %v639 = vor.u32 %v637, %v638
    %v640 = vshll.u32 2475754826, %v634
    %v641 = vshrl.u32 2131351028, %v635
    %v642 = vor.u32 %v640, %v641
    %v643 = vshll.u32 2131351028, %v634
    %v644 = vshrl.u32 2102212464, %v635
    %v645 = vor.u32 %v643, %v644
    %v646 = vshll.u32 2102212464, %v634
    %v647 = vshrl.u32 920167782, %v635
    %v648 = vor.u32 %v646, %v647
    %v649 = vshll.u32 920167782, %v634
    %v650 = vshrl.u32 1326507024, %v635
    %v651 = vor.u32 %v649, %v650
    %vm652 = vcmp.lt.s32.totalorder %v633, 1
    %vm653 = vcmp.lt.s32.totalorder %v633, 2
    %vm654 = vcmp.lt.s32.totalorder %v633, 3
    %vm655 = vcmp.lt.s32.totalorder %v633, 4
    %v656 = vsel %vm652, %v636, %v639
    %v657 = vsel %vm655, %v645, 2102212464
    %v658 = vsel %vm654, %v642, %v657
    %v659 = vsel %vm653, %v656, %v658
    %v660 = vsel %vm652, %v639, %v642
    %v661 = vsel %vm655, %v648, 920167782
    %v662 = vsel %vm654, %v645, %v661
    %v663 = vsel %vm653, %v660, %v662
    %v664 = vsel %vm652, %v642, %v645
    %v665 = vsel %vm655, %v651, 1326507024
    %v666 = vsel %vm654, %v648, %v665
    %v667 = vsel %vm653, %v664, %v666
    %v668 = vshll.u32 %v628, 8
    %v669 = vmul.u32.u64.compose %v668, %v667
    %v670 = vextract.low.u32 %v669
    %v671 = vextract.high.u32 %v669
    %v672 = vmul.u32.u64.compose %v668, %v663
    %v673 = vextract.low.u32 %v672
    %v674 = vextract.high.u32 %v672
    %v675 = vmul.u32 %v668, %v659
    %v676 = vadd.s32 %v671, %v673
    %vm677 = vc.u32 %v671, %v673
    %v678 = vadd.s32 %v674, 1
    %v679 = vsel %vm677, %v678, %v674
    %v680 = vadd.s32 %v675, %v679
    %v681 = vadd.s32 %v680, 536870912
    %v682 = vshrl.u32 %v681, 30
    %v683 = vshll.u32 %v682, 30
    %v684 = vsub.s32 %v680, %v683
    %vm685 = vcmp.lt.s32.totalorder %v684, 0
    %v686 = vsub.s32 0, %v684
    %v687 = vsel %vm685, %v686, %v684
    %v688 = vclz %v687
    %v689 = vsub.s32 %v688, 2
    %vm690 = vcmp.gt.s32.totalorder 0, %v689
    %v691 = vsel %vm690, 0, %v689
    %v692 = vsub.s32 32, %v691
    %v693 = vshll.u32 %v684, %v691
    %v694 = vshrl.u32 %v676, %v692
    %v695 = vor.u32 %v693, %v694
    %v696 = vsub.s32 4294967266, %v691
    %v697 = vadd.s32 %v696, 127
    %v698 = vshll.u32 %v697, 23
    %v699 = vor.u32 4788187, %v698
    %v700 = vand.u32 2147483647, %v699
    %v702 = vcvt.s32.f32 %v695
    %v703 = vmul.f32 %v702, %v700
    %v704 = vxor.u32 %v703, 2147483648
    %v705 = vsel %vm622, %v704, %v703
    %v706 = vsub.s32 4, %v682
    %v707 = vsel %vm622, %v706, %v682
    %v708 = vsel %vm621, %v176, %v705
    %v709 = vsel %vm621, 0, %v707
    %v710 = vcosq.f32.pop %v708
    %v711 = vsinq.f32.pop %v708
    %vm712 = vweird.f32 %v176
    %v713 = vadd.s32 %v709, 3
    %v714 = vand.u32 %v713, 3
    %vm715 = vcmp.lt.s32.totalorder %v714, 2
    %vm716 = vcmp.eq.s32.totalorder %v714, 0
    %v717 = vxor.u32 %v711, 2147483648
    %v718 = vsel %vm716, %v710, %v717
    %vm719 = vcmp.eq.s32.totalorder %v714, 2
    %v720 = vxor.u32 %v710, 2147483648
    %v721 = vsel %vm719, %v720, %v711
    %v722 = vsel %vm715, %v718, %v721
    %v723 = vsel %vm712, nan, %v722
    %v724 = vand.u32 2147483647, %v177
    %vm725 = vcmp.le.f32.partialorder %v724, 0.7853982
    %vm726 = vcmp.lt.s32.totalorder %v177, 0
    %v727 = vand.u32 %v177, 2139095040
    %v728 = vshrl.u32 %v727, 23
    %v729 = vsub.s32 %v728, 127
    %v730 = vand.u32 2147483647, %v177
    %v731 = vand.u32 %v730, 8388607
    %v732 = vor.u32 %v731, 8388608
    %v733 = vsub.s32 0, %v732
    %v734 = vadd.s32 %v729, 1
    %vm735 = vcmp.gt.s32.totalorder %v734, 0
    %v736 = vsel %vm735, %v734, 0
    %v737 = vshrl.u32 %v736, 5
    %v738 = vand.u32 %v736, 31
    %v739 = vsub.s32 32, %v738
    %v740 = vshrl.u32 683565275, %v739
    %v741 = vshll.u32 683565275, %v738
    %v742 = vshrl.u32 2475754826, %v739
    %v743 = vor.u32 %v741, %v742
    %v744 = vshll.u32 2475754826, %v738
    %v745 = vshrl.u32 2131351028, %v739
    %v746 = vor.u32 %v744, %v745
    %v747 = vshll.u32 2131351028, %v738
    %v748 = vshrl.u32 2102212464, %v739
    %v749 = vor.u32 %v747, %v748
    %v750 = vshll.u32 2102212464, %v738
    %v751 = vshrl.u32 920167782, %v739
    %v752 = vor.u32 %v750, %v751
    %v753 = vshll.u32 920167782, %v738
    %v754 = vshrl.u32 1326507024, %v739
    %v755 = vor.u32 %v753, %v754
    %vm756 = vcmp.lt.s32.totalorder %v737, 1
    %vm757 = vcmp.lt.s32.totalorder %v737, 2
    %vm758 = vcmp.lt.s32.totalorder %v737, 3
    %vm759 = vcmp.lt.s32.totalorder %v737, 4
    %v760 = vsel %vm756, %v740, %v743
    %v761 = vsel %vm759, %v749, 2102212464
    %v762 = vsel %vm758, %v746, %v761
    %v763 = vsel %vm757, %v760, %v762
    %v764 = vsel %vm756, %v743, %v746
    %v765 = vsel %vm759, %v752, 920167782
    %v766 = vsel %vm758, %v749, %v765
    %v767 = vsel %vm757, %v764, %v766
    %v768 = vsel %vm756, %v746, %v749
    %v769 = vsel %vm759, %v755, 1326507024
    %v770 = vsel %vm758, %v752, %v769
    %v771 = vsel %vm757, %v768, %v770
    %v772 = vshll.u32 %v732, 8
    %v773 = vmul.u32.u64.compose %v772, %v771
    %v774 = vextract.low.u32 %v773
    %v775 = vextract.high.u32 %v773
    %v776 = vmul.u32.u64.compose %v772, %v767
    %v777 = vextract.low.u32 %v776
    %v778 = vextract.high.u32 %v776
    %v779 = vmul.u32 %v772, %v763
    %v780 = vadd.s32 %v775, %v777
    %vm781 = vc.u32 %v775, %v777
    %v782 = vadd.s32 %v778, 1
    %v783 = vsel %vm781, %v782, %v778
    %v784 = vadd.s32 %v779, %v783
    %v785 = vadd.s32 %v784, 536870912
    %v786 = vshrl.u32 %v785, 30
    %v787 = vshll.u32 %v786, 30
    %v788 = vsub.s32 %v784, %v787
    %vm789 = vcmp.lt.s32.totalorder %v788, 0
    %v790 = vsub.s32 0, %v788
    %v791 = vsel %vm789, %v790, %v788
    %v792 = vclz %v791
    %v793 = vsub.s32 %v792, 2
    %vm794 = vcmp.gt.s32.totalorder 0, %v793
    %v795 = vsel %vm794, 0, %v793
    %v796 = vsub.s32 32, %v795
    %v797 = vshll.u32 %v788, %v795
    %v798 = vshrl.u32 %v780, %v796
    %v799 = vor.u32 %v797, %v798
    %v800 = vsub.s32 4294967266, %v795
    %v801 = vadd.s32 %v800, 127
    %v802 = vshll.u32 %v801, 23
    %v803 = vor.u32 4788187, %v802
    %v804 = vand.u32 2147483647, %v803
    %v806 = vcvt.s32.f32 %v799
    %v807 = vmul.f32 %v806, %v804
    %v808 = vxor.u32 %v807, 2147483648
    %v809 = vsel %vm726, %v808, %v807
    %v810 = vsub.s32 4, %v786
    %v811 = vsel %vm726, %v810, %v786
    %v812 = vsel %vm725, %v177, %v809
    %v813 = vsel %vm725, 0, %v811
    %v814 = vcosq.f32.pop %v812
    %v815 = vsinq.f32.pop %v812
    %vm816 = vweird.f32 %v177
    %v817 = vadd.s32 %v813, 3
    %v818 = vand.u32 %v817, 3
    %vm819 = vcmp.lt.s32.totalorder %v818, 2
    %vm820 = vcmp.eq.s32.totalorder %v818, 0
    %v821 = vxor.u32 %v815, 2147483648
    %v822 = vsel %vm820, %v814, %v821
    %vm823 = vcmp.eq.s32.totalorder %v818, 2
    %v824 = vxor.u32 %v814, 2147483648
    %v825 = vsel %vm823, %v824, %v815
    %v826 = vsel %vm819, %v822, %v825
    %v827 = vsel %vm816, nan, %v826
    %v828 = vand.u32 2147483647, %v178
    %vm829 = vcmp.le.f32.partialorder %v828, 0.7853982
    %vm830 = vcmp.lt.s32.totalorder %v178, 0
    %v831 = vand.u32 %v178, 2139095040
    %v832 = vshrl.u32 %v831, 23
    %v833 = vsub.s32 %v832, 127
    %v834 = vand.u32 2147483647, %v178
    %v835 = vand.u32 %v834, 8388607
    %v836 = vor.u32 %v835, 8388608
    %v837 = vsub.s32 0, %v836
    %v838 = vadd.s32 %v833, 1
    %vm839 = vcmp.gt.s32.totalorder %v838, 0
    %v840 = vsel %vm839, %v838, 0
    %v841 = vshrl.u32 %v840, 5
    %v842 = vand.u32 %v840, 31
    %v843 = vsub.s32 32, %v842
    %v844 = vshrl.u32 683565275, %v843
    %v845 = vshll.u32 683565275, %v842
    %v846 = vshrl.u32 2475754826, %v843
    %v847 = vor.u32 %v845, %v846
    %v848 = vshll.u32 2475754826, %v842
    %v849 = vshrl.u32 2131351028, %v843
    %v850 = vor.u32 %v848, %v849
    %v851 = vshll.u32 2131351028, %v842
    %v852 = vshrl.u32 2102212464, %v843
    %v853 = vor.u32 %v851, %v852
    %v854 = vshll.u32 2102212464, %v842
    %v855 = vshrl.u32 920167782, %v843
    %v856 = vor.u32 %v854, %v855
    %v857 = vshll.u32 920167782, %v842
    %v858 = vshrl.u32 1326507024, %v843
    %v859 = vor.u32 %v857, %v858
    %vm860 = vcmp.lt.s32.totalorder %v841, 1
    %vm861 = vcmp.lt.s32.totalorder %v841, 2
    %vm862 = vcmp.lt.s32.totalorder %v841, 3
    %vm863 = vcmp.lt.s32.totalorder %v841, 4
    %v864 = vsel %vm860, %v844, %v847
    %v865 = vsel %vm863, %v853, 2102212464
    %v866 = vsel %vm862, %v850, %v865
    %v867 = vsel %vm861, %v864, %v866
    %v868 = vsel %vm860, %v847, %v850
    %v869 = vsel %vm863, %v856, 920167782
    %v870 = vsel %vm862, %v853, %v869
    %v871 = vsel %vm861, %v868, %v870
    %v872 = vsel %vm860, %v850, %v853
    %v873 = vsel %vm863, %v859, 1326507024
    %v874 = vsel %vm862, %v856, %v873
    %v875 = vsel %vm861, %v872, %v874
    %v876 = vshll.u32 %v836, 8
    %v877 = vmul.u32.u64.compose %v876, %v875
    %v878 = vextract.low.u32 %v877
    %v879 = vextract.high.u32 %v877
    %v880 = vmul.u32.u64.compose %v876, %v871
    %v881 = vextract.low.u32 %v880
    %v882 = vextract.high.u32 %v880
    %v883 = vmul.u32 %v876, %v867
    %v884 = vadd.s32 %v879, %v881
    %vm885 = vc.u32 %v879, %v881
    %v886 = vadd.s32 %v882, 1
    %v887 = vsel %vm885, %v886, %v882
    %v888 = vadd.s32 %v883, %v887
    %v889 = vadd.s32 %v888, 536870912
    %v890 = vshrl.u32 %v889, 30
    %v891 = vshll.u32 %v890, 30
    %v892 = vsub.s32 %v888, %v891
    %vm893 = vcmp.lt.s32.totalorder %v892, 0
    %v894 = vsub.s32 0, %v892
    %v895 = vsel %vm893, %v894, %v892
    %v896 = vclz %v895
    %v897 = vsub.s32 %v896, 2
    %vm898 = vcmp.gt.s32.totalorder 0, %v897
    %v899 = vsel %vm898, 0, %v897
    %v900 = vsub.s32 32, %v899
    %v901 = vshll.u32 %v892, %v899
    %v902 = vshrl.u32 %v884, %v900
    %v903 = vor.u32 %v901, %v902
    %v904 = vsub.s32 4294967266, %v899
    %v905 = vadd.s32 %v904, 127
    %v906 = vshll.u32 %v905, 23
    %v907 = vor.u32 4788187, %v906
    %v908 = vand.u32 2147483647, %v907
    %v910 = vcvt.s32.f32 %v903
    %v911 = vmul.f32 %v910, %v908
    %v912 = vxor.u32 %v911, 2147483648
    %v913 = vsel %vm830, %v912, %v911
    %v914 = vsub.s32 4, %v890
    %v915 = vsel %vm830, %v914, %v890
    %v916 = vsel %vm829, %v178, %v913
    %v917 = vsel %vm829, 0, %v915
    %v918 = vcosq.f32.pop %v916
    %v919 = vsinq.f32.pop %v916
    %vm920 = vweird.f32 %v178
    %v921 = vadd.s32 %v917, 3
    %v922 = vand.u32 %v921, 3
    %vm923 = vcmp.lt.s32.totalorder %v922, 2
    %vm924 = vcmp.eq.s32.totalorder %v922, 0
    %v925 = vxor.u32 %v919, 2147483648
    %v926 = vsel %vm924, %v918, %v925
    %vm927 = vcmp.eq.s32.totalorder %v922, 2
    %v928 = vxor.u32 %v918, 2147483648
    %v929 = vsel %vm927, %v928, %v919
    %v930 = vsel %vm923, %v926, %v929
    %v931 = vsel %vm920, nan, %v930
    %v932 = vand.u32 2147483647, %v179
    %vm933 = vcmp.le.f32.partialorder %v932, 0.7853982
    %vm934 = vcmp.lt.s32.totalorder %v179, 0
    %v935 = vand.u32 %v179, 2139095040
    %v936 = vshrl.u32 %v935, 23
    %v937 = vsub.s32 %v936, 127
    %v938 = vand.u32 2147483647, %v179
    %v939 = vand.u32 %v938, 8388607
    %v940 = vor.u32 %v939, 8388608
    %v941 = vsub.s32 0, %v940
    %v942 = vadd.s32 %v937, 1
    %vm943 = vcmp.gt.s32.totalorder %v942, 0
    %v944 = vsel %vm943, %v942, 0
    %v945 = vshrl.u32 %v944, 5
    %v946 = vand.u32 %v944, 31
    %v947 = vsub.s32 32, %v946
    %v948 = vshrl.u32 683565275, %v947
    %v949 = vshll.u32 683565275, %v946
    %v950 = vshrl.u32 2475754826, %v947
    %v951 = vor.u32 %v949, %v950
    %v952 = vshll.u32 2475754826, %v946
    %v953 = vshrl.u32 2131351028, %v947
    %v954 = vor.u32 %v952, %v953
    %v955 = vshll.u32 2131351028, %v946
    %v956 = vshrl.u32 2102212464, %v947
    %v957 = vor.u32 %v955, %v956
    %v958 = vshll.u32 2102212464, %v946
    %v959 = vshrl.u32 920167782, %v947
    %v960 = vor.u32 %v958, %v959
    %v961 = vshll.u32 920167782, %v946
    %v962 = vshrl.u32 1326507024, %v947
    %v963 = vor.u32 %v961, %v962
    %vm964 = vcmp.lt.s32.totalorder %v945, 1
    %vm965 = vcmp.lt.s32.totalorder %v945, 2
    %vm966 = vcmp.lt.s32.totalorder %v945, 3
    %vm967 = vcmp.lt.s32.totalorder %v945, 4
    %v968 = vsel %vm964, %v948, %v951
    %v969 = vsel %vm967, %v957, 2102212464
    %v970 = vsel %vm966, %v954, %v969
    %v971 = vsel %vm965, %v968, %v970
    %v972 = vsel %vm964, %v951, %v954
    %v973 = vsel %vm967, %v960, 920167782
    %v974 = vsel %vm966, %v957, %v973
    %v975 = vsel %vm965, %v972, %v974
    %v976 = vsel %vm964, %v954, %v957
    %v977 = vsel %vm967, %v963, 1326507024
    %v978 = vsel %vm966, %v960, %v977
    %v979 = vsel %vm965, %v976, %v978
    %v980 = vshll.u32 %v940, 8
    %v981 = vmul.u32.u64.compose %v980, %v979
    %v982 = vextract.low.u32 %v981
    %v983 = vextract.high.u32 %v981
    %v984 = vmul.u32.u64.compose %v980, %v975
    %v985 = vextract.low.u32 %v984
    %v986 = vextract.high.u32 %v984
    %v987 = vmul.u32 %v980, %v971
    %v988 = vadd.s32 %v983, %v985
    %vm989 = vc.u32 %v983, %v985
    %v990 = vadd.s32 %v986, 1
    %v991 = vsel %vm989, %v990, %v986
    %v992 = vadd.s32 %v987, %v991
    %v993 = vadd.s32 %v992, 536870912
    %v994 = vshrl.u32 %v993, 30
    %v995 = vshll.u32 %v994, 30
    %v996 = vsub.s32 %v992, %v995
    %vm997 = vcmp.lt.s32.totalorder %v996, 0
    %v998 = vsub.s32 0, %v996
    %v999 = vsel %vm997, %v998, %v996
    %v1000 = vclz %v999
    %v1001 = vsub.s32 %v1000, 2
    %vm1002 = vcmp.gt.s32.totalorder 0, %v1001
    %v1003 = vsel %vm1002, 0, %v1001
    %v1004 = vsub.s32 32, %v1003
    %v1005 = vshll.u32 %v996, %v1003
    %v1006 = vshrl.u32 %v988, %v1004
    %v1007 = vor.u32 %v1005, %v1006
    %v1008 = vsub.s32 4294967266, %v1003
    %v1009 = vadd.s32 %v1008, 127
    %v1010 = vshll.u32 %v1009, 23
    %v1011 = vor.u32 4788187, %v1010
    %v1012 = vand.u32 2147483647, %v1011
    %v1014 = vcvt.s32.f32 %v1007
    %v1015 = vmul.f32 %v1014, %v1012
    %v1016 = vxor.u32 %v1015, 2147483648
    %v1017 = vsel %vm934, %v1016, %v1015
    %v1018 = vsub.s32 4, %v994
    %v1019 = vsel %vm934, %v1018, %v994
    %v1020 = vsel %vm933, %v179, %v1017
    %v1021 = vsel %vm933, 0, %v1019
    %v1022 = vcosq.f32.pop %v1020
    %v1023 = vsinq.f32.pop %v1020
    %vm1024 = vweird.f32 %v179
    %v1025 = vadd.s32 %v1021, 3
    %v1026 = vand.u32 %v1025, 3
    %vm1027 = vcmp.lt.s32.totalorder %v1026, 2
    %vm1028 = vcmp.eq.s32.totalorder %v1026, 0
    %v1029 = vxor.u32 %v1023, 2147483648
    %v1030 = vsel %vm1028, %v1022, %v1029
    %vm1031 = vcmp.eq.s32.totalorder %v1026, 2
    %v1032 = vxor.u32 %v1022, 2147483648
    %v1033 = vsel %vm1031, %v1032, %v1023
    %v1034 = vsel %vm1027, %v1030, %v1033
    %v1035 = vsel %vm1024, nan, %v1034
    %v1036 = vand.u32 2147483647, %v180
    %vm1037 = vcmp.le.f32.partialorder %v1036, 0.7853982
    %vm1038 = vcmp.lt.s32.totalorder %v180, 0
    %v1039 = vand.u32 %v180, 2139095040
    %v1040 = vshrl.u32 %v1039, 23
    %v1041 = vsub.s32 %v1040, 127
    %v1042 = vand.u32 2147483647, %v180
    %v1043 = vand.u32 %v1042, 8388607
    %v1044 = vor.u32 %v1043, 8388608
    %v1045 = vsub.s32 0, %v1044
    %v1046 = vadd.s32 %v1041, 1
    %vm1047 = vcmp.gt.s32.totalorder %v1046, 0
    %v1048 = vsel %vm1047, %v1046, 0
    %v1049 = vshrl.u32 %v1048, 5
    %v1050 = vand.u32 %v1048, 31
    %v1051 = vsub.s32 32, %v1050
    %v1052 = vshrl.u32 683565275, %v1051
    %v1053 = vshll.u32 683565275, %v1050
    %v1054 = vshrl.u32 2475754826, %v1051
    %v1055 = vor.u32 %v1053, %v1054
    %v1056 = vshll.u32 2475754826, %v1050
    %v1057 = vshrl.u32 2131351028, %v1051
    %v1058 = vor.u32 %v1056, %v1057
    %v1059 = vshll.u32 2131351028, %v1050
    %v1060 = vshrl.u32 2102212464, %v1051
    %v1061 = vor.u32 %v1059, %v1060
    %v1062 = vshll.u32 2102212464, %v1050
    %v1063 = vshrl.u32 920167782, %v1051
    %v1064 = vor.u32 %v1062, %v1063
    %v1065 = vshll.u32 920167782, %v1050
    %v1066 = vshrl.u32 1326507024, %v1051
    %v1067 = vor.u32 %v1065, %v1066
    %vm1068 = vcmp.lt.s32.totalorder %v1049, 1
    %vm1069 = vcmp.lt.s32.totalorder %v1049, 2
    %vm1070 = vcmp.lt.s32.totalorder %v1049, 3
    %vm1071 = vcmp.lt.s32.totalorder %v1049, 4
    %v1072 = vsel %vm1068, %v1052, %v1055
    %v1073 = vsel %vm1071, %v1061, 2102212464
    %v1074 = vsel %vm1070, %v1058, %v1073
    %v1075 = vsel %vm1069, %v1072, %v1074
    %v1076 = vsel %vm1068, %v1055, %v1058
    %v1077 = vsel %vm1071, %v1064, 920167782
    %v1078 = vsel %vm1070, %v1061, %v1077
    %v1079 = vsel %vm1069, %v1076, %v1078
    %v1080 = vsel %vm1068, %v1058, %v1061
    %v1081 = vsel %vm1071, %v1067, 1326507024
    %v1082 = vsel %vm1070, %v1064, %v1081
    %v1083 = vsel %vm1069, %v1080, %v1082
    %v1084 = vshll.u32 %v1044, 8
    %v1085 = vmul.u32.u64.compose %v1084, %v1083
    %v1086 = vextract.low.u32 %v1085
    %v1087 = vextract.high.u32 %v1085
    %v1088 = vmul.u32.u64.compose %v1084, %v1079
    %v1089 = vextract.low.u32 %v1088
    %v1090 = vextract.high.u32 %v1088
    %v1091 = vmul.u32 %v1084, %v1075
    %v1092 = vadd.s32 %v1087, %v1089
    %vm1093 = vc.u32 %v1087, %v1089
    %v1094 = vadd.s32 %v1090, 1
    %v1095 = vsel %vm1093, %v1094, %v1090
    %v1096 = vadd.s32 %v1091, %v1095
    %v1097 = vadd.s32 %v1096, 536870912
    %v1098 = vshrl.u32 %v1097, 30
    %v1099 = vshll.u32 %v1098, 30
    %v1100 = vsub.s32 %v1096, %v1099
    %vm1101 = vcmp.lt.s32.totalorder %v1100, 0
    %v1102 = vsub.s32 0, %v1100
    %v1103 = vsel %vm1101, %v1102, %v1100
    %v1104 = vclz %v1103
    %v1105 = vsub.s32 %v1104, 2
    %vm1106 = vcmp.gt.s32.totalorder 0, %v1105
    %v1107 = vsel %vm1106, 0, %v1105
    %v1108 = vsub.s32 32, %v1107
    %v1109 = vshll.u32 %v1100, %v1107
    %v1110 = vshrl.u32 %v1092, %v1108
    %v1111 = vor.u32 %v1109, %v1110
    %v1112 = vsub.s32 4294967266, %v1107
    %v1113 = vadd.s32 %v1112, 127
    %v1114 = vshll.u32 %v1113, 23
    %v1115 = vor.u32 4788187, %v1114
    %v1116 = vand.u32 2147483647, %v1115
    %v1118 = vcvt.s32.f32 %v1111
    %v1119 = vmul.f32 %v1118, %v1116
    %v1120 = vxor.u32 %v1119, 2147483648
    %v1121 = vsel %vm1038, %v1120, %v1119
    %v1122 = vsub.s32 4, %v1098
    %v1123 = vsel %vm1038, %v1122, %v1098
    %v1124 = vsel %vm1037, %v180, %v1121
    %v1125 = vsel %vm1037, 0, %v1123
    %v1126 = vcosq.f32.pop %v1124
    %v1127 = vsinq.f32.pop %v1124
    %vm1128 = vweird.f32 %v180
    %v1129 = vadd.s32 %v1125, 3
    %v1130 = vand.u32 %v1129, 3
    %vm1131 = vcmp.lt.s32.totalorder %v1130, 2
    %vm1132 = vcmp.eq.s32.totalorder %v1130, 0
    %v1133 = vxor.u32 %v1127, 2147483648
    %v1134 = vsel %vm1132, %v1126, %v1133
    %vm1135 = vcmp.eq.s32.totalorder %v1130, 2
    %v1136 = vxor.u32 %v1126, 2147483648
    %v1137 = vsel %vm1135, %v1136, %v1127
    %v1138 = vsel %vm1131, %v1134, %v1137
    %v1139 = vsel %vm1128, nan, %v1138
    %v1140 = vand.u32 2147483647, %v181
    %vm1141 = vcmp.le.f32.partialorder %v1140, 0.7853982
    %vm1142 = vcmp.lt.s32.totalorder %v181, 0
    %v1143 = vand.u32 %v181, 2139095040
    %v1144 = vshrl.u32 %v1143, 23
    %v1145 = vsub.s32 %v1144, 127
    %v1146 = vand.u32 2147483647, %v181
    %v1147 = vand.u32 %v1146, 8388607
    %v1148 = vor.u32 %v1147, 8388608
    %v1149 = vsub.s32 0, %v1148
    %v1150 = vadd.s32 %v1145, 1
    %vm1151 = vcmp.gt.s32.totalorder %v1150, 0
    %v1152 = vsel %vm1151, %v1150, 0
    %v1153 = vshrl.u32 %v1152, 5
    %v1154 = vand.u32 %v1152, 31
    %v1155 = vsub.s32 32, %v1154
    %v1156 = vshrl.u32 683565275, %v1155
    %v1157 = vshll.u32 683565275, %v1154
    %v1158 = vshrl.u32 2475754826, %v1155
    %v1159 = vor.u32 %v1157, %v1158
    %v1160 = vshll.u32 2475754826, %v1154
    %v1161 = vshrl.u32 2131351028, %v1155
    %v1162 = vor.u32 %v1160, %v1161
    %v1163 = vshll.u32 2131351028, %v1154
    %v1164 = vshrl.u32 2102212464, %v1155
    %v1165 = vor.u32 %v1163, %v1164
    %v1166 = vshll.u32 2102212464, %v1154
    %v1167 = vshrl.u32 920167782, %v1155
    %v1168 = vor.u32 %v1166, %v1167
    %v1169 = vshll.u32 920167782, %v1154
    %v1170 = vshrl.u32 1326507024, %v1155
    %v1171 = vor.u32 %v1169, %v1170
    %vm1172 = vcmp.lt.s32.totalorder %v1153, 1
    %vm1173 = vcmp.lt.s32.totalorder %v1153, 2
    %vm1174 = vcmp.lt.s32.totalorder %v1153, 3
    %vm1175 = vcmp.lt.s32.totalorder %v1153, 4
    %v1176 = vsel %vm1172, %v1156, %v1159
    %v1177 = vsel %vm1175, %v1165, 2102212464
    %v1178 = vsel %vm1174, %v1162, %v1177
    %v1179 = vsel %vm1173, %v1176, %v1178
    %v1180 = vsel %vm1172, %v1159, %v1162
    %v1181 = vsel %vm1175, %v1168, 920167782
    %v1182 = vsel %vm1174, %v1165, %v1181
    %v1183 = vsel %vm1173, %v1180, %v1182
    %v1184 = vsel %vm1172, %v1162, %v1165
    %v1185 = vsel %vm1175, %v1171, 1326507024
    %v1186 = vsel %vm1174, %v1168, %v1185
    %v1187 = vsel %vm1173, %v1184, %v1186
    %v1188 = vshll.u32 %v1148, 8
    %v1189 = vmul.u32.u64.compose %v1188, %v1187
    %v1190 = vextract.low.u32 %v1189
    %v1191 = vextract.high.u32 %v1189
    %v1192 = vmul.u32.u64.compose %v1188, %v1183
    %v1193 = vextract.low.u32 %v1192
    %v1194 = vextract.high.u32 %v1192
    %v1195 = vmul.u32 %v1188, %v1179
    %v1196 = vadd.s32 %v1191, %v1193
    %vm1197 = vc.u32 %v1191, %v1193
    %v1198 = vadd.s32 %v1194, 1
    %v1199 = vsel %vm1197, %v1198, %v1194
    %v1200 = vadd.s32 %v1195, %v1199
    %v1201 = vadd.s32 %v1200, 536870912
    %v1202 = vshrl.u32 %v1201, 30
    %v1203 = vshll.u32 %v1202, 30
    %v1204 = vsub.s32 %v1200, %v1203
    %vm1205 = vcmp.lt.s32.totalorder %v1204, 0
    %v1206 = vsub.s32 0, %v1204
    %v1207 = vsel %vm1205, %v1206, %v1204
    %v1208 = vclz %v1207
    %v1209 = vsub.s32 %v1208, 2
    %vm1210 = vcmp.gt.s32.totalorder 0, %v1209
    %v1211 = vsel %vm1210, 0, %v1209
    %v1212 = vsub.s32 32, %v1211
    %v1213 = vshll.u32 %v1204, %v1211
    %v1214 = vshrl.u32 %v1196, %v1212
    %v1215 = vor.u32 %v1213, %v1214
    %v1216 = vsub.s32 4294967266, %v1211
    %v1217 = vadd.s32 %v1216, 127
    %v1218 = vshll.u32 %v1217, 23
    %v1219 = vor.u32 4788187, %v1218
    %v1220 = vand.u32 2147483647, %v1219
    %v1222 = vcvt.s32.f32 %v1215
    %v1223 = vmul.f32 %v1222, %v1220
    %v1224 = vxor.u32 %v1223, 2147483648
    %v1225 = vsel %vm1142, %v1224, %v1223
    %v1226 = vsub.s32 4, %v1202
    %v1227 = vsel %vm1142, %v1226, %v1202
    %v1228 = vsel %vm1141, %v181, %v1225
    %v1229 = vsel %vm1141, 0, %v1227
    %v1230 = vcosq.f32.pop %v1228
    %v1231 = vsinq.f32.pop %v1228
    %vm1232 = vweird.f32 %v181
    %v1233 = vadd.s32 %v1229, 3
    %v1234 = vand.u32 %v1233, 3
    %vm1235 = vcmp.lt.s32.totalorder %v1234, 2
    %vm1236 = vcmp.eq.s32.totalorder %v1234, 0
    %v1237 = vxor.u32 %v1231, 2147483648
    %v1238 = vsel %vm1236, %v1230, %v1237
    %vm1239 = vcmp.eq.s32.totalorder %v1234, 2
    %v1240 = vxor.u32 %v1230, 2147483648
    %v1241 = vsel %vm1239, %v1240, %v1231
    %v1242 = vsel %vm1235, %v1238, %v1241
    %v1243 = vsel %vm1232, nan, %v1242
    %v1244 = vand.u32 2147483647, %v182
    %vm1245 = vcmp.le.f32.partialorder %v1244, 0.7853982
    %vm1246 = vcmp.lt.s32.totalorder %v182, 0
    %v1247 = vand.u32 %v182, 2139095040
    %v1248 = vshrl.u32 %v1247, 23
    %v1249 = vsub.s32 %v1248, 127
    %v1250 = vand.u32 2147483647, %v182
    %v1251 = vand.u32 %v1250, 8388607
    %v1252 = vor.u32 %v1251, 8388608
    %v1253 = vsub.s32 0, %v1252
    %v1254 = vadd.s32 %v1249, 1
    %vm1255 = vcmp.gt.s32.totalorder %v1254, 0
    %v1256 = vsel %vm1255, %v1254, 0
    %v1257 = vshrl.u32 %v1256, 5
    %v1258 = vand.u32 %v1256, 31
    %v1259 = vsub.s32 32, %v1258
    %v1260 = vshrl.u32 683565275, %v1259
    %v1261 = vshll.u32 683565275, %v1258
    %v1262 = vshrl.u32 2475754826, %v1259
    %v1263 = vor.u32 %v1261, %v1262
    %v1264 = vshll.u32 2475754826, %v1258
    %v1265 = vshrl.u32 2131351028, %v1259
    %v1266 = vor.u32 %v1264, %v1265
    %v1267 = vshll.u32 2131351028, %v1258
    %v1268 = vshrl.u32 2102212464, %v1259
    %v1269 = vor.u32 %v1267, %v1268
    %v1270 = vshll.u32 2102212464, %v1258
    %v1271 = vshrl.u32 920167782, %v1259
    %v1272 = vor.u32 %v1270, %v1271
    %v1273 = vshll.u32 920167782, %v1258
    %v1274 = vshrl.u32 1326507024, %v1259
    %v1275 = vor.u32 %v1273, %v1274
    %vm1276 = vcmp.lt.s32.totalorder %v1257, 1
    %vm1277 = vcmp.lt.s32.totalorder %v1257, 2
    %vm1278 = vcmp.lt.s32.totalorder %v1257, 3
    %vm1279 = vcmp.lt.s32.totalorder %v1257, 4
    %v1280 = vsel %vm1276, %v1260, %v1263
    %v1281 = vsel %vm1279, %v1269, 2102212464
    %v1282 = vsel %vm1278, %v1266, %v1281
    %v1283 = vsel %vm1277, %v1280, %v1282
    %v1284 = vsel %vm1276, %v1263, %v1266
    %v1285 = vsel %vm1279, %v1272, 920167782
    %v1286 = vsel %vm1278, %v1269, %v1285
    %v1287 = vsel %vm1277, %v1284, %v1286
    %v1288 = vsel %vm1276, %v1266, %v1269
    %v1289 = vsel %vm1279, %v1275, 1326507024
    %v1290 = vsel %vm1278, %v1272, %v1289
    %v1291 = vsel %vm1277, %v1288, %v1290
    %v1292 = vshll.u32 %v1252, 8
    %v1293 = vmul.u32.u64.compose %v1292, %v1291
    %v1294 = vextract.low.u32 %v1293
    %v1295 = vextract.high.u32 %v1293
    %v1296 = vmul.u32.u64.compose %v1292, %v1287
    %v1297 = vextract.low.u32 %v1296
    %v1298 = vextract.high.u32 %v1296
    %v1299 = vmul.u32 %v1292, %v1283
    %v1300 = vadd.s32 %v1295, %v1297
    %vm1301 = vc.u32 %v1295, %v1297
    %v1302 = vadd.s32 %v1298, 1
    %v1303 = vsel %vm1301, %v1302, %v1298
    %v1304 = vadd.s32 %v1299, %v1303
    %v1305 = vadd.s32 %v1304, 536870912
    %v1306 = vshrl.u32 %v1305, 30
    %v1307 = vshll.u32 %v1306, 30
    %v1308 = vsub.s32 %v1304, %v1307
    %vm1309 = vcmp.lt.s32.totalorder %v1308, 0
    %v1310 = vsub.s32 0, %v1308
    %v1311 = vsel %vm1309, %v1310, %v1308
    %v1312 = vclz %v1311
    %v1313 = vsub.s32 %v1312, 2
    %vm1314 = vcmp.gt.s32.totalorder 0, %v1313
    %v1315 = vsel %vm1314, 0, %v1313
    %v1316 = vsub.s32 32, %v1315
    %v1317 = vshll.u32 %v1308, %v1315
    %v1318 = vshrl.u32 %v1300, %v1316
    %v1319 = vor.u32 %v1317, %v1318
    %v1320 = vsub.s32 4294967266, %v1315
    %v1321 = vadd.s32 %v1320, 127
    %v1322 = vshll.u32 %v1321, 23
    %v1323 = vor.u32 4788187, %v1322
    %v1324 = vand.u32 2147483647, %v1323
    %v1326 = vcvt.s32.f32 %v1319
    %v1327 = vmul.f32 %v1326, %v1324
    %v1328 = vxor.u32 %v1327, 2147483648
    %v1329 = vsel %vm1246, %v1328, %v1327
    %v1330 = vsub.s32 4, %v1306
    %v1331 = vsel %vm1246, %v1330, %v1306
    %v1332 = vsel %vm1245, %v182, %v1329
    %v1333 = vsel %vm1245, 0, %v1331
    %v1334 = vcosq.f32.pop %v1332
    %v1335 = vsinq.f32.pop %v1332
    %vm1336 = vweird.f32 %v182
    %v1337 = vadd.s32 %v1333, 3
    %v1338 = vand.u32 %v1337, 3
    %vm1339 = vcmp.lt.s32.totalorder %v1338, 2
    %vm1340 = vcmp.eq.s32.totalorder %v1338, 0
    %v1341 = vxor.u32 %v1335, 2147483648
    %v1342 = vsel %vm1340, %v1334, %v1341
    %vm1343 = vcmp.eq.s32.totalorder %v1338, 2
    %v1344 = vxor.u32 %v1334, 2147483648
    %v1345 = vsel %vm1343, %v1344, %v1335
    %v1346 = vsel %vm1339, %v1342, %v1345
    %v1347 = vsel %vm1336, nan, %v1346
    %v1348 = vand.u32 2147483647, %v183
    %vm1349 = vcmp.le.f32.partialorder %v1348, 0.7853982
    %vm1350 = vcmp.lt.s32.totalorder %v183, 0
    %v1351 = vand.u32 %v183, 2139095040
    %v1352 = vshrl.u32 %v1351, 23
    %v1353 = vsub.s32 %v1352, 127
    %v1354 = vand.u32 2147483647, %v183
    %v1355 = vand.u32 %v1354, 8388607
    %v1356 = vor.u32 %v1355, 8388608
    %v1357 = vsub.s32 0, %v1356
    %v1358 = vadd.s32 %v1353, 1
    %vm1359 = vcmp.gt.s32.totalorder %v1358, 0
    %v1360 = vsel %vm1359, %v1358, 0
    %v1361 = vshrl.u32 %v1360, 5
    %v1362 = vand.u32 %v1360, 31
    %v1363 = vsub.s32 32, %v1362
    %v1364 = vshrl.u32 683565275, %v1363
    %v1365 = vshll.u32 683565275, %v1362
    %v1366 = vshrl.u32 2475754826, %v1363
    %v1367 = vor.u32 %v1365, %v1366
    %v1368 = vshll.u32 2475754826, %v1362
    %v1369 = vshrl.u32 2131351028, %v1363
    %v1370 = vor.u32 %v1368, %v1369
    %v1371 = vshll.u32 2131351028, %v1362
    %v1372 = vshrl.u32 2102212464, %v1363
    %v1373 = vor.u32 %v1371, %v1372
    %v1374 = vshll.u32 2102212464, %v1362
    %v1375 = vshrl.u32 920167782, %v1363
    %v1376 = vor.u32 %v1374, %v1375
    %v1377 = vshll.u32 920167782, %v1362
    %v1378 = vshrl.u32 1326507024, %v1363
    %v1379 = vor.u32 %v1377, %v1378
    %vm1380 = vcmp.lt.s32.totalorder %v1361, 1
    %vm1381 = vcmp.lt.s32.totalorder %v1361, 2
    %vm1382 = vcmp.lt.s32.totalorder %v1361, 3
    %vm1383 = vcmp.lt.s32.totalorder %v1361, 4
    %v1384 = vsel %vm1380, %v1364, %v1367
    %v1385 = vsel %vm1383, %v1373, 2102212464
    %v1386 = vsel %vm1382, %v1370, %v1385
    %v1387 = vsel %vm1381, %v1384, %v1386
    %v1388 = vsel %vm1380, %v1367, %v1370
    %v1389 = vsel %vm1383, %v1376, 920167782
    %v1390 = vsel %vm1382, %v1373, %v1389
    %v1391 = vsel %vm1381, %v1388, %v1390
    %v1392 = vsel %vm1380, %v1370, %v1373
    %v1393 = vsel %vm1383, %v1379, 1326507024
    %v1394 = vsel %vm1382, %v1376, %v1393
    %v1395 = vsel %vm1381, %v1392, %v1394
    %v1396 = vshll.u32 %v1356, 8
    %v1397 = vmul.u32.u64.compose %v1396, %v1395
    %v1398 = vextract.low.u32 %v1397
    %v1399 = vextract.high.u32 %v1397
    %v1400 = vmul.u32.u64.compose %v1396, %v1391
    %v1401 = vextract.low.u32 %v1400
    %v1402 = vextract.high.u32 %v1400
    %v1403 = vmul.u32 %v1396, %v1387
    %v1404 = vadd.s32 %v1399, %v1401
    %vm1405 = vc.u32 %v1399, %v1401
    %v1406 = vadd.s32 %v1402, 1
    %v1407 = vsel %vm1405, %v1406, %v1402
    %v1408 = vadd.s32 %v1403, %v1407
    %v1409 = vadd.s32 %v1408, 536870912
    %v1410 = vshrl.u32 %v1409, 30
    %v1411 = vshll.u32 %v1410, 30
    %v1412 = vsub.s32 %v1408, %v1411
    %vm1413 = vcmp.lt.s32.totalorder %v1412, 0
    %v1414 = vsub.s32 0, %v1412
    %v1415 = vsel %vm1413, %v1414, %v1412
    %v1416 = vclz %v1415
    %v1417 = vsub.s32 %v1416, 2
    %vm1418 = vcmp.gt.s32.totalorder 0, %v1417
    %v1419 = vsel %vm1418, 0, %v1417
    %v1420 = vsub.s32 32, %v1419
    %v1421 = vshll.u32 %v1412, %v1419
    %v1422 = vshrl.u32 %v1404, %v1420
    %v1423 = vor.u32 %v1421, %v1422
    %v1424 = vsub.s32 4294967266, %v1419
    %v1425 = vadd.s32 %v1424, 127
    %v1426 = vshll.u32 %v1425, 23
    %v1427 = vor.u32 4788187, %v1426
    %v1428 = vand.u32 2147483647, %v1427
    %v1430 = vcvt.s32.f32 %v1423
    %v1431 = vmul.f32 %v1430, %v1428
    %v1432 = vxor.u32 %v1431, 2147483648
    %v1433 = vsel %vm1350, %v1432, %v1431
    %v1434 = vsub.s32 4, %v1410
    %v1435 = vsel %vm1350, %v1434, %v1410
    %v1436 = vsel %vm1349, %v183, %v1433
    %v1437 = vsel %vm1349, 0, %v1435
    %v1438 = vcosq.f32.pop %v1436
    %v1439 = vsinq.f32.pop %v1436
    %vm1440 = vweird.f32 %v183
    %v1441 = vadd.s32 %v1437, 3
    %v1442 = vand.u32 %v1441, 3
    %vm1443 = vcmp.lt.s32.totalorder %v1442, 2
    %vm1444 = vcmp.eq.s32.totalorder %v1442, 0
    %v1445 = vxor.u32 %v1439, 2147483648
    %v1446 = vsel %vm1444, %v1438, %v1445
    %vm1447 = vcmp.eq.s32.totalorder %v1442, 2
    %v1448 = vxor.u32 %v1438, 2147483648
    %v1449 = vsel %vm1447, %v1448, %v1439
    %v1450 = vsel %vm1443, %v1446, %v1449
    %v1451 = vsel %vm1440, nan, %v1450
    %v1452 = vand.u32 2147483647, %v184
    %vm1453 = vcmp.le.f32.partialorder %v1452, 0.7853982
    %vm1454 = vcmp.lt.s32.totalorder %v184, 0
    %v1455 = vand.u32 %v184, 2139095040
    %v1456 = vshrl.u32 %v1455, 23
    %v1457 = vsub.s32 %v1456, 127
    %v1458 = vand.u32 2147483647, %v184
    %v1459 = vand.u32 %v1458, 8388607
    %v1460 = vor.u32 %v1459, 8388608
    %v1461 = vsub.s32 0, %v1460
    %v1462 = vadd.s32 %v1457, 1
    %vm1463 = vcmp.gt.s32.totalorder %v1462, 0
    %v1464 = vsel %vm1463, %v1462, 0
    %v1465 = vshrl.u32 %v1464, 5
    %v1466 = vand.u32 %v1464, 31
    %v1467 = vsub.s32 32, %v1466
    %v1468 = vshrl.u32 683565275, %v1467
    %v1469 = vshll.u32 683565275, %v1466
    %v1470 = vshrl.u32 2475754826, %v1467
    %v1471 = vor.u32 %v1469, %v1470
    %v1472 = vshll.u32 2475754826, %v1466
    %v1473 = vshrl.u32 2131351028, %v1467
    %v1474 = vor.u32 %v1472, %v1473
    %v1475 = vshll.u32 2131351028, %v1466
    %v1476 = vshrl.u32 2102212464, %v1467
    %v1477 = vor.u32 %v1475, %v1476
    %v1478 = vshll.u32 2102212464, %v1466
    %v1479 = vshrl.u32 920167782, %v1467
    %v1480 = vor.u32 %v1478, %v1479
    %v1481 = vshll.u32 920167782, %v1466
    %v1482 = vshrl.u32 1326507024, %v1467
    %v1483 = vor.u32 %v1481, %v1482
    %vm1484 = vcmp.lt.s32.totalorder %v1465, 1
    %vm1485 = vcmp.lt.s32.totalorder %v1465, 2
    %vm1486 = vcmp.lt.s32.totalorder %v1465, 3
    %vm1487 = vcmp.lt.s32.totalorder %v1465, 4
    %v1488 = vsel %vm1484, %v1468, %v1471
    %v1489 = vsel %vm1487, %v1477, 2102212464
    %v1490 = vsel %vm1486, %v1474, %v1489
    %v1491 = vsel %vm1485, %v1488, %v1490
    %v1492 = vsel %vm1484, %v1471, %v1474
    %v1493 = vsel %vm1487, %v1480, 920167782
    %v1494 = vsel %vm1486, %v1477, %v1493
    %v1495 = vsel %vm1485, %v1492, %v1494
    %v1496 = vsel %vm1484, %v1474, %v1477
    %v1497 = vsel %vm1487, %v1483, 1326507024
    %v1498 = vsel %vm1486, %v1480, %v1497
    %v1499 = vsel %vm1485, %v1496, %v1498
    %v1500 = vshll.u32 %v1460, 8
    %v1501 = vmul.u32.u64.compose %v1500, %v1499
    %v1502 = vextract.low.u32 %v1501
    %v1503 = vextract.high.u32 %v1501
    %v1504 = vmul.u32.u64.compose %v1500, %v1495
    %v1505 = vextract.low.u32 %v1504
    %v1506 = vextract.high.u32 %v1504
    %v1507 = vmul.u32 %v1500, %v1491
    %v1508 = vadd.s32 %v1503, %v1505
    %vm1509 = vc.u32 %v1503, %v1505
    %v1510 = vadd.s32 %v1506, 1
    %v1511 = vsel %vm1509, %v1510, %v1506
    %v1512 = vadd.s32 %v1507, %v1511
    %v1513 = vadd.s32 %v1512, 536870912
    %v1514 = vshrl.u32 %v1513, 30
    %v1515 = vshll.u32 %v1514, 30
    %v1516 = vsub.s32 %v1512, %v1515
    %vm1517 = vcmp.lt.s32.totalorder %v1516, 0
    %v1518 = vsub.s32 0, %v1516
    %v1519 = vsel %vm1517, %v1518, %v1516
    %v1520 = vclz %v1519
    %v1521 = vsub.s32 %v1520, 2
    %vm1522 = vcmp.gt.s32.totalorder 0, %v1521
    %v1523 = vsel %vm1522, 0, %v1521
    %v1524 = vsub.s32 32, %v1523
    %v1525 = vshll.u32 %v1516, %v1523
    %v1526 = vshrl.u32 %v1508, %v1524
    %v1527 = vor.u32 %v1525, %v1526
    %v1528 = vsub.s32 4294967266, %v1523
    %v1529 = vadd.s32 %v1528, 127
    %v1530 = vshll.u32 %v1529, 23
    %v1531 = vor.u32 4788187, %v1530
    %v1532 = vand.u32 2147483647, %v1531
    %v1534 = vcvt.s32.f32 %v1527
    %v1535 = vmul.f32 %v1534, %v1532
    %v1536 = vxor.u32 %v1535, 2147483648
    %v1537 = vsel %vm1454, %v1536, %v1535
    %v1538 = vsub.s32 4, %v1514
    %v1539 = vsel %vm1454, %v1538, %v1514
    %v1540 = vsel %vm1453, %v184, %v1537
    %v1541 = vsel %vm1453, 0, %v1539
    %v1542 = vcosq.f32.pop %v1540
    %v1543 = vsinq.f32.pop %v1540
    %vm1544 = vweird.f32 %v184
    %v1545 = vadd.s32 %v1541, 3
    %v1546 = vand.u32 %v1545, 3
    %vm1547 = vcmp.lt.s32.totalorder %v1546, 2
    %vm1548 = vcmp.eq.s32.totalorder %v1546, 0
    %v1549 = vxor.u32 %v1543, 2147483648
    %v1550 = vsel %vm1548, %v1542, %v1549
    %vm1551 = vcmp.eq.s32.totalorder %v1546, 2
    %v1552 = vxor.u32 %v1542, 2147483648
    %v1553 = vsel %vm1551, %v1552, %v1543
    %v1554 = vsel %vm1547, %v1550, %v1553
    %v1555 = vsel %vm1544, nan, %v1554
    %v1556 = vand.u32 2147483647, %v185
    %vm1557 = vcmp.le.f32.partialorder %v1556, 0.7853982
    %vm1558 = vcmp.lt.s32.totalorder %v185, 0
    %v1559 = vand.u32 %v185, 2139095040
    %v1560 = vshrl.u32 %v1559, 23
    %v1561 = vsub.s32 %v1560, 127
    %v1562 = vand.u32 2147483647, %v185
    %v1563 = vand.u32 %v1562, 8388607
    %v1564 = vor.u32 %v1563, 8388608
    %v1565 = vsub.s32 0, %v1564
    %v1566 = vadd.s32 %v1561, 1
    %vm1567 = vcmp.gt.s32.totalorder %v1566, 0
    %v1568 = vsel %vm1567, %v1566, 0
    %v1569 = vshrl.u32 %v1568, 5
    %v1570 = vand.u32 %v1568, 31
    %v1571 = vsub.s32 32, %v1570
    %v1572 = vshrl.u32 683565275, %v1571
    %v1573 = vshll.u32 683565275, %v1570
    %v1574 = vshrl.u32 2475754826, %v1571
    %v1575 = vor.u32 %v1573, %v1574
    %v1576 = vshll.u32 2475754826, %v1570
    %v1577 = vshrl.u32 2131351028, %v1571
    %v1578 = vor.u32 %v1576, %v1577
    %v1579 = vshll.u32 2131351028, %v1570
    %v1580 = vshrl.u32 2102212464, %v1571
    %v1581 = vor.u32 %v1579, %v1580
    %v1582 = vshll.u32 2102212464, %v1570
    %v1583 = vshrl.u32 920167782, %v1571
    %v1584 = vor.u32 %v1582, %v1583
    %v1585 = vshll.u32 920167782, %v1570
    %v1586 = vshrl.u32 1326507024, %v1571
    %v1587 = vor.u32 %v1585, %v1586
    %vm1588 = vcmp.lt.s32.totalorder %v1569, 1
    %vm1589 = vcmp.lt.s32.totalorder %v1569, 2
    %vm1590 = vcmp.lt.s32.totalorder %v1569, 3
    %vm1591 = vcmp.lt.s32.totalorder %v1569, 4
    %v1592 = vsel %vm1588, %v1572, %v1575
    %v1593 = vsel %vm1591, %v1581, 2102212464
    %v1594 = vsel %vm1590, %v1578, %v1593
    %v1595 = vsel %vm1589, %v1592, %v1594
    %v1596 = vsel %vm1588, %v1575, %v1578
    %v1597 = vsel %vm1591, %v1584, 920167782
    %v1598 = vsel %vm1590, %v1581, %v1597
    %v1599 = vsel %vm1589, %v1596, %v1598
    %v1600 = vsel %vm1588, %v1578, %v1581
    %v1601 = vsel %vm1591, %v1587, 1326507024
    %v1602 = vsel %vm1590, %v1584, %v1601
    %v1603 = vsel %vm1589, %v1600, %v1602
    %v1604 = vshll.u32 %v1564, 8
    %v1605 = vmul.u32.u64.compose %v1604, %v1603
    %v1606 = vextract.low.u32 %v1605
    %v1607 = vextract.high.u32 %v1605
    %v1608 = vmul.u32.u64.compose %v1604, %v1599
    %v1609 = vextract.low.u32 %v1608
    %v1610 = vextract.high.u32 %v1608
    %v1611 = vmul.u32 %v1604, %v1595
    %v1612 = vadd.s32 %v1607, %v1609
    %vm1613 = vc.u32 %v1607, %v1609
    %v1614 = vadd.s32 %v1610, 1
    %v1615 = vsel %vm1613, %v1614, %v1610
    %v1616 = vadd.s32 %v1611, %v1615
    %v1617 = vadd.s32 %v1616, 536870912
    %v1618 = vshrl.u32 %v1617, 30
    %v1619 = vshll.u32 %v1618, 30
    %v1620 = vsub.s32 %v1616, %v1619
    %vm1621 = vcmp.lt.s32.totalorder %v1620, 0
    %v1622 = vsub.s32 0, %v1620
    %v1623 = vsel %vm1621, %v1622, %v1620
    %v1624 = vclz %v1623
    %v1625 = vsub.s32 %v1624, 2
    %vm1626 = vcmp.gt.s32.totalorder 0, %v1625
    %v1627 = vsel %vm1626, 0, %v1625
    %v1628 = vsub.s32 32, %v1627
    %v1629 = vshll.u32 %v1620, %v1627
    %v1630 = vshrl.u32 %v1612, %v1628
    %v1631 = vor.u32 %v1629, %v1630
    %v1632 = vsub.s32 4294967266, %v1627
    %v1633 = vadd.s32 %v1632, 127
    %v1634 = vshll.u32 %v1633, 23
    %v1635 = vor.u32 4788187, %v1634
    %v1636 = vand.u32 2147483647, %v1635
    %v1638 = vcvt.s32.f32 %v1631
    %v1639 = vmul.f32 %v1638, %v1636
    %v1640 = vxor.u32 %v1639, 2147483648
    %v1641 = vsel %vm1558, %v1640, %v1639
    %v1642 = vsub.s32 4, %v1618
    %v1643 = vsel %vm1558, %v1642, %v1618
    %v1644 = vsel %vm1557, %v185, %v1641
    %v1645 = vsel %vm1557, 0, %v1643
    %v1646 = vcosq.f32.pop %v1644
    %v1647 = vsinq.f32.pop %v1644
    %vm1648 = vweird.f32 %v185
    %v1649 = vadd.s32 %v1645, 3
    %v1650 = vand.u32 %v1649, 3
    %vm1651 = vcmp.lt.s32.totalorder %v1650, 2
    %vm1652 = vcmp.eq.s32.totalorder %v1650, 0
    %v1653 = vxor.u32 %v1647, 2147483648
    %v1654 = vsel %vm1652, %v1646, %v1653
    %vm1655 = vcmp.eq.s32.totalorder %v1650, 2
    %v1656 = vxor.u32 %v1646, 2147483648
    %v1657 = vsel %vm1655, %v1656, %v1647
    %v1658 = vsel %vm1651, %v1654, %v1657
    %v1659 = vsel %vm1648, nan, %v1658
    %v1660 = vand.u32 2147483647, %v186
    %vm1661 = vcmp.le.f32.partialorder %v1660, 0.7853982
    %vm1662 = vcmp.lt.s32.totalorder %v186, 0
    %v1663 = vand.u32 %v186, 2139095040
    %v1664 = vshrl.u32 %v1663, 23
    %v1665 = vsub.s32 %v1664, 127
    %v1666 = vand.u32 2147483647, %v186
    %v1667 = vand.u32 %v1666, 8388607
    %v1668 = vor.u32 %v1667, 8388608
    %v1669 = vsub.s32 0, %v1668
    %v1670 = vadd.s32 %v1665, 1
    %vm1671 = vcmp.gt.s32.totalorder %v1670, 0
    %v1672 = vsel %vm1671, %v1670, 0
    %v1673 = vshrl.u32 %v1672, 5
    %v1674 = vand.u32 %v1672, 31
    %v1675 = vsub.s32 32, %v1674
    %v1676 = vshrl.u32 683565275, %v1675
    %v1677 = vshll.u32 683565275, %v1674
    %v1678 = vshrl.u32 2475754826, %v1675
    %v1679 = vor.u32 %v1677, %v1678
    %v1680 = vshll.u32 2475754826, %v1674
    %v1681 = vshrl.u32 2131351028, %v1675
    %v1682 = vor.u32 %v1680, %v1681
    %v1683 = vshll.u32 2131351028, %v1674
    %v1684 = vshrl.u32 2102212464, %v1675
    %v1685 = vor.u32 %v1683, %v1684
    %v1686 = vshll.u32 2102212464, %v1674
    %v1687 = vshrl.u32 920167782, %v1675
    %v1688 = vor.u32 %v1686, %v1687
    %v1689 = vshll.u32 920167782, %v1674
    %v1690 = vshrl.u32 1326507024, %v1675
    %v1691 = vor.u32 %v1689, %v1690
    %vm1692 = vcmp.lt.s32.totalorder %v1673, 1
    %vm1693 = vcmp.lt.s32.totalorder %v1673, 2
    %vm1694 = vcmp.lt.s32.totalorder %v1673, 3
    %vm1695 = vcmp.lt.s32.totalorder %v1673, 4
    %v1696 = vsel %vm1692, %v1676, %v1679
    %v1697 = vsel %vm1695, %v1685, 2102212464
    %v1698 = vsel %vm1694, %v1682, %v1697
    %v1699 = vsel %vm1693, %v1696, %v1698
    %v1700 = vsel %vm1692, %v1679, %v1682
    %v1701 = vsel %vm1695, %v1688, 920167782
    %v1702 = vsel %vm1694, %v1685, %v1701
    %v1703 = vsel %vm1693, %v1700, %v1702
    %v1704 = vsel %vm1692, %v1682, %v1685
    %v1705 = vsel %vm1695, %v1691, 1326507024
    %v1706 = vsel %vm1694, %v1688, %v1705
    %v1707 = vsel %vm1693, %v1704, %v1706
    %v1708 = vshll.u32 %v1668, 8
    %v1709 = vmul.u32.u64.compose %v1708, %v1707
    %v1710 = vextract.low.u32 %v1709
    %v1711 = vextract.high.u32 %v1709
    %v1712 = vmul.u32.u64.compose %v1708, %v1703
    %v1713 = vextract.low.u32 %v1712
    %v1714 = vextract.high.u32 %v1712
    %v1715 = vmul.u32 %v1708, %v1699
    %v1716 = vadd.s32 %v1711, %v1713
    %vm1717 = vc.u32 %v1711, %v1713
    %v1718 = vadd.s32 %v1714, 1
    %v1719 = vsel %vm1717, %v1718, %v1714
    %v1720 = vadd.s32 %v1715, %v1719
    %v1721 = vadd.s32 %v1720, 536870912
    %v1722 = vshrl.u32 %v1721, 30
    %v1723 = vshll.u32 %v1722, 30
    %v1724 = vsub.s32 %v1720, %v1723
    %vm1725 = vcmp.lt.s32.totalorder %v1724, 0
    %v1726 = vsub.s32 0, %v1724
    %v1727 = vsel %vm1725, %v1726, %v1724
    %v1728 = vclz %v1727
    %v1729 = vsub.s32 %v1728, 2
    %vm1730 = vcmp.gt.s32.totalorder 0, %v1729
    %v1731 = vsel %vm1730, 0, %v1729
    %v1732 = vsub.s32 32, %v1731
    %v1733 = vshll.u32 %v1724, %v1731
    %v1734 = vshrl.u32 %v1716, %v1732
    %v1735 = vor.u32 %v1733, %v1734
    %v1736 = vsub.s32 4294967266, %v1731
    %v1737 = vadd.s32 %v1736, 127
    %v1738 = vshll.u32 %v1737, 23
    %v1739 = vor.u32 4788187, %v1738
    %v1740 = vand.u32 2147483647, %v1739
    %v1742 = vcvt.s32.f32 %v1735
    %v1743 = vmul.f32 %v1742, %v1740
    %v1744 = vxor.u32 %v1743, 2147483648
    %v1745 = vsel %vm1662, %v1744, %v1743
    %v1746 = vsub.s32 4, %v1722
    %v1747 = vsel %vm1662, %v1746, %v1722
    %v1748 = vsel %vm1661, %v186, %v1745
    %v1749 = vsel %vm1661, 0, %v1747
    %v1750 = vcosq.f32.pop %v1748
    %v1751 = vsinq.f32.pop %v1748
    %vm1752 = vweird.f32 %v186
    %v1753 = vadd.s32 %v1749, 3
    %v1754 = vand.u32 %v1753, 3
    %vm1755 = vcmp.lt.s32.totalorder %v1754, 2
    %vm1756 = vcmp.eq.s32.totalorder %v1754, 0
    %v1757 = vxor.u32 %v1751, 2147483648
    %v1758 = vsel %vm1756, %v1750, %v1757
    %vm1759 = vcmp.eq.s32.totalorder %v1754, 2
    %v1760 = vxor.u32 %v1750, 2147483648
    %v1761 = vsel %vm1759, %v1760, %v1751
    %v1762 = vsel %vm1755, %v1758, %v1761
    %v1763 = vsel %vm1752, nan, %v1762
    %v1764 = vand.u32 2147483647, %v187
    %vm1765 = vcmp.le.f32.partialorder %v1764, 0.7853982
    %vm1766 = vcmp.lt.s32.totalorder %v187, 0
    %v1767 = vand.u32 %v187, 2139095040
    %v1768 = vshrl.u32 %v1767, 23
    %v1769 = vsub.s32 %v1768, 127
    %v1770 = vand.u32 2147483647, %v187
    %v1771 = vand.u32 %v1770, 8388607
    %v1772 = vor.u32 %v1771, 8388608
    %v1773 = vsub.s32 0, %v1772
    %v1774 = vadd.s32 %v1769, 1
    %vm1775 = vcmp.gt.s32.totalorder %v1774, 0
    %v1776 = vsel %vm1775, %v1774, 0
    %v1777 = vshrl.u32 %v1776, 5
    %v1778 = vand.u32 %v1776, 31
    %v1779 = vsub.s32 32, %v1778
    %v1780 = vshrl.u32 683565275, %v1779
    %v1781 = vshll.u32 683565275, %v1778
    %v1782 = vshrl.u32 2475754826, %v1779
    %v1783 = vor.u32 %v1781, %v1782
    %v1784 = vshll.u32 2475754826, %v1778
    %v1785 = vshrl.u32 2131351028, %v1779
    %v1786 = vor.u32 %v1784, %v1785
    %v1787 = vshll.u32 2131351028, %v1778
    %v1788 = vshrl.u32 2102212464, %v1779
    %v1789 = vor.u32 %v1787, %v1788
    %v1790 = vshll.u32 2102212464, %v1778
    %v1791 = vshrl.u32 920167782, %v1779
    %v1792 = vor.u32 %v1790, %v1791
    %v1793 = vshll.u32 920167782, %v1778
    %v1794 = vshrl.u32 1326507024, %v1779
    %v1795 = vor.u32 %v1793, %v1794
    %vm1796 = vcmp.lt.s32.totalorder %v1777, 1
    %vm1797 = vcmp.lt.s32.totalorder %v1777, 2
    %vm1798 = vcmp.lt.s32.totalorder %v1777, 3
    %vm1799 = vcmp.lt.s32.totalorder %v1777, 4
    %v1800 = vsel %vm1796, %v1780, %v1783
    %v1801 = vsel %vm1799, %v1789, 2102212464
    %v1802 = vsel %vm1798, %v1786, %v1801
    %v1803 = vsel %vm1797, %v1800, %v1802
    %v1804 = vsel %vm1796, %v1783, %v1786
    %v1805 = vsel %vm1799, %v1792, 920167782
    %v1806 = vsel %vm1798, %v1789, %v1805
    %v1807 = vsel %vm1797, %v1804, %v1806
    %v1808 = vsel %vm1796, %v1786, %v1789
    %v1809 = vsel %vm1799, %v1795, 1326507024
    %v1810 = vsel %vm1798, %v1792, %v1809
    %v1811 = vsel %vm1797, %v1808, %v1810
    %v1812 = vshll.u32 %v1772, 8
    %v1813 = vmul.u32.u64.compose %v1812, %v1811
    %v1814 = vextract.low.u32 %v1813
    %v1815 = vextract.high.u32 %v1813
    %v1816 = vmul.u32.u64.compose %v1812, %v1807
    %v1817 = vextract.low.u32 %v1816
    %v1818 = vextract.high.u32 %v1816
    %v1819 = vmul.u32 %v1812, %v1803
    %v1820 = vadd.s32 %v1815, %v1817
    %vm1821 = vc.u32 %v1815, %v1817
    %v1822 = vadd.s32 %v1818, 1
    %v1823 = vsel %vm1821, %v1822, %v1818
    %v1824 = vadd.s32 %v1819, %v1823
    %v1825 = vadd.s32 %v1824, 536870912
    %v1826 = vshrl.u32 %v1825, 30
    %v1827 = vshll.u32 %v1826, 30
    %v1828 = vsub.s32 %v1824, %v1827
    %vm1829 = vcmp.lt.s32.totalorder %v1828, 0
    %v1830 = vsub.s32 0, %v1828
    %v1831 = vsel %vm1829, %v1830, %v1828
    %v1832 = vclz %v1831
    %v1833 = vsub.s32 %v1832, 2
    %vm1834 = vcmp.gt.s32.totalorder 0, %v1833
    %v1835 = vsel %vm1834, 0, %v1833
    %v1836 = vsub.s32 32, %v1835
    %v1837 = vshll.u32 %v1828, %v1835
    %v1838 = vshrl.u32 %v1820, %v1836
    %v1839 = vor.u32 %v1837, %v1838
    %v1840 = vsub.s32 4294967266, %v1835
    %v1841 = vadd.s32 %v1840, 127
    %v1842 = vshll.u32 %v1841, 23
    %v1843 = vor.u32 4788187, %v1842
    %v1844 = vand.u32 2147483647, %v1843
    %v1846 = vcvt.s32.f32 %v1839
    %v1847 = vmul.f32 %v1846, %v1844
    %v1848 = vxor.u32 %v1847, 2147483648
    %v1849 = vsel %vm1766, %v1848, %v1847
    %v1850 = vsub.s32 4, %v1826
    %v1851 = vsel %vm1766, %v1850, %v1826
    %v1852 = vsel %vm1765, %v187, %v1849
    %v1853 = vsel %vm1765, 0, %v1851
    %v1854 = vcosq.f32.pop %v1852
    %v1855 = vsinq.f32.pop %v1852
    %vm1856 = vweird.f32 %v187
    %v1857 = vadd.s32 %v1853, 3
    %v1858 = vand.u32 %v1857, 3
    %vm1859 = vcmp.lt.s32.totalorder %v1858, 2
    %vm1860 = vcmp.eq.s32.totalorder %v1858, 0
    %v1861 = vxor.u32 %v1855, 2147483648
    %v1862 = vsel %vm1860, %v1854, %v1861
    %vm1863 = vcmp.eq.s32.totalorder %v1858, 2
    %v1864 = vxor.u32 %v1854, 2147483648
    %v1865 = vsel %vm1863, %v1864, %v1855
    %v1866 = vsel %vm1859, %v1862, %v1865
    %v1867 = vsel %vm1856, nan, %v1866
    %v1868 = vand.u32 2147483647, %v188
    %vm1869 = vcmp.le.f32.partialorder %v1868, 0.7853982
    %vm1870 = vcmp.lt.s32.totalorder %v188, 0
    %v1871 = vand.u32 %v188, 2139095040
    %v1872 = vshrl.u32 %v1871, 23
    %v1873 = vsub.s32 %v1872, 127
    %v1874 = vand.u32 2147483647, %v188
    %v1875 = vand.u32 %v1874, 8388607
    %v1876 = vor.u32 %v1875, 8388608
    %v1877 = vsub.s32 0, %v1876
    %v1878 = vadd.s32 %v1873, 1
    %vm1879 = vcmp.gt.s32.totalorder %v1878, 0
    %v1880 = vsel %vm1879, %v1878, 0
    %v1881 = vshrl.u32 %v1880, 5
    %v1882 = vand.u32 %v1880, 31
    %v1883 = vsub.s32 32, %v1882
    %v1884 = vshrl.u32 683565275, %v1883
    %v1885 = vshll.u32 683565275, %v1882
    %v1886 = vshrl.u32 2475754826, %v1883
    %v1887 = vor.u32 %v1885, %v1886
    %v1888 = vshll.u32 2475754826, %v1882
    %v1889 = vshrl.u32 2131351028, %v1883
    %v1890 = vor.u32 %v1888, %v1889
    %v1891 = vshll.u32 2131351028, %v1882
    %v1892 = vshrl.u32 2102212464, %v1883
    %v1893 = vor.u32 %v1891, %v1892
    %v1894 = vshll.u32 2102212464, %v1882
    %v1895 = vshrl.u32 920167782, %v1883
    %v1896 = vor.u32 %v1894, %v1895
    %v1897 = vshll.u32 920167782, %v1882
    %v1898 = vshrl.u32 1326507024, %v1883
    %v1899 = vor.u32 %v1897, %v1898
    %vm1900 = vcmp.lt.s32.totalorder %v1881, 1
    %vm1901 = vcmp.lt.s32.totalorder %v1881, 2
    %vm1902 = vcmp.lt.s32.totalorder %v1881, 3
    %vm1903 = vcmp.lt.s32.totalorder %v1881, 4
    %v1904 = vsel %vm1900, %v1884, %v1887
    %v1905 = vsel %vm1903, %v1893, 2102212464
    %v1906 = vsel %vm1902, %v1890, %v1905
    %v1907 = vsel %vm1901, %v1904, %v1906
    %v1908 = vsel %vm1900, %v1887, %v1890
    %v1909 = vsel %vm1903, %v1896, 920167782
    %v1910 = vsel %vm1902, %v1893, %v1909
    %v1911 = vsel %vm1901, %v1908, %v1910
    %v1912 = vsel %vm1900, %v1890, %v1893
    %v1913 = vsel %vm1903, %v1899, 1326507024
    %v1914 = vsel %vm1902, %v1896, %v1913
    %v1915 = vsel %vm1901, %v1912, %v1914
    %v1916 = vshll.u32 %v1876, 8
    %v1917 = vmul.u32.u64.compose %v1916, %v1915
    %v1918 = vextract.low.u32 %v1917
    %v1919 = vextract.high.u32 %v1917
    %v1920 = vmul.u32.u64.compose %v1916, %v1911
    %v1921 = vextract.low.u32 %v1920
    %v1922 = vextract.high.u32 %v1920
    %v1923 = vmul.u32 %v1916, %v1907
    %v1924 = vadd.s32 %v1919, %v1921
    %vm1925 = vc.u32 %v1919, %v1921
    %v1926 = vadd.s32 %v1922, 1
    %v1927 = vsel %vm1925, %v1926, %v1922
    %v1928 = vadd.s32 %v1923, %v1927
    %v1929 = vadd.s32 %v1928, 536870912
    %v1930 = vshrl.u32 %v1929, 30
    %v1931 = vshll.u32 %v1930, 30
    %v1932 = vsub.s32 %v1928, %v1931
    %vm1933 = vcmp.lt.s32.totalorder %v1932, 0
    %v1934 = vsub.s32 0, %v1932
    %v1935 = vsel %vm1933, %v1934, %v1932
    %v1936 = vclz %v1935
    %v1937 = vsub.s32 %v1936, 2
    %vm1938 = vcmp.gt.s32.totalorder 0, %v1937
    %v1939 = vsel %vm1938, 0, %v1937
    %v1940 = vsub.s32 32, %v1939
    %v1941 = vshll.u32 %v1932, %v1939
    %v1942 = vshrl.u32 %v1924, %v1940
    %v1943 = vor.u32 %v1941, %v1942
    %v1944 = vsub.s32 4294967266, %v1939
    %v1945 = vadd.s32 %v1944, 127
    %v1946 = vshll.u32 %v1945, 23
    %v1947 = vor.u32 4788187, %v1946
    %v1948 = vand.u32 2147483647, %v1947
    %v1950 = vcvt.s32.f32 %v1943
    %v1951 = vmul.f32 %v1950, %v1948
    %v1952 = vxor.u32 %v1951, 2147483648
    %v1953 = vsel %vm1870, %v1952, %v1951
    %v1954 = vsub.s32 4, %v1930
    %v1955 = vsel %vm1870, %v1954, %v1930
    %v1956 = vsel %vm1869, %v188, %v1953
    %v1957 = vsel %vm1869, 0, %v1955
    %v1958 = vcosq.f32.pop %v1956
    %v1959 = vsinq.f32.pop %v1956
    %vm1960 = vweird.f32 %v188
    %v1961 = vadd.s32 %v1957, 3
    %v1962 = vand.u32 %v1961, 3
    %vm1963 = vcmp.lt.s32.totalorder %v1962, 2
    %vm1964 = vcmp.eq.s32.totalorder %v1962, 0
    %v1965 = vxor.u32 %v1959, 2147483648
    %v1966 = vsel %vm1964, %v1958, %v1965
    %vm1967 = vcmp.eq.s32.totalorder %v1962, 2
    %v1968 = vxor.u32 %v1958, 2147483648
    %v1969 = vsel %vm1967, %v1968, %v1959
    %v1970 = vsel %vm1963, %v1966, %v1969
    %v1971 = vsel %vm1960, nan, %v1970
    %v1972 = vand.u32 2147483647, %v189
    %vm1973 = vcmp.le.f32.partialorder %v1972, 0.7853982
    %vm1974 = vcmp.lt.s32.totalorder %v189, 0
    %v1975 = vand.u32 %v189, 2139095040
    %v1976 = vshrl.u32 %v1975, 23
    %v1977 = vsub.s32 %v1976, 127
    %v1978 = vand.u32 2147483647, %v189
    %v1979 = vand.u32 %v1978, 8388607
    %v1980 = vor.u32 %v1979, 8388608
    %v1981 = vsub.s32 0, %v1980
    %v1982 = vadd.s32 %v1977, 1
    %vm1983 = vcmp.gt.s32.totalorder %v1982, 0
    %v1984 = vsel %vm1983, %v1982, 0
    %v1985 = vshrl.u32 %v1984, 5
    %v1986 = vand.u32 %v1984, 31
    %v1987 = vsub.s32 32, %v1986
    %v1988 = vshrl.u32 683565275, %v1987
    %v1989 = vshll.u32 683565275, %v1986
    %v1990 = vshrl.u32 2475754826, %v1987
    %v1991 = vor.u32 %v1989, %v1990
    %v1992 = vshll.u32 2475754826, %v1986
    %v1993 = vshrl.u32 2131351028, %v1987
    %v1994 = vor.u32 %v1992, %v1993
    %v1995 = vshll.u32 2131351028, %v1986
    %v1996 = vshrl.u32 2102212464, %v1987
    %v1997 = vor.u32 %v1995, %v1996
    %v1998 = vshll.u32 2102212464, %v1986
    %v1999 = vshrl.u32 920167782, %v1987
    %v2000 = vor.u32 %v1998, %v1999
    %v2001 = vshll.u32 920167782, %v1986
    %v2002 = vshrl.u32 1326507024, %v1987
    %v2003 = vor.u32 %v2001, %v2002
    %vm2004 = vcmp.lt.s32.totalorder %v1985, 1
    %vm2005 = vcmp.lt.s32.totalorder %v1985, 2
    %vm2006 = vcmp.lt.s32.totalorder %v1985, 3
    %vm2007 = vcmp.lt.s32.totalorder %v1985, 4
    %v2008 = vsel %vm2004, %v1988, %v1991
    %v2009 = vsel %vm2007, %v1997, 2102212464
    %v2010 = vsel %vm2006, %v1994, %v2009
    %v2011 = vsel %vm2005, %v2008, %v2010
    %v2012 = vsel %vm2004, %v1991, %v1994
    %v2013 = vsel %vm2007, %v2000, 920167782
    %v2014 = vsel %vm2006, %v1997, %v2013
    %v2015 = vsel %vm2005, %v2012, %v2014
    %v2016 = vsel %vm2004, %v1994, %v1997
    %v2017 = vsel %vm2007, %v2003, 1326507024
    %v2018 = vsel %vm2006, %v2000, %v2017
    %v2019 = vsel %vm2005, %v2016, %v2018
    %v2020 = vshll.u32 %v1980, 8
    %v2021 = vmul.u32.u64.compose %v2020, %v2019
    %v2022 = vextract.low.u32 %v2021
    %v2023 = vextract.high.u32 %v2021
    %v2024 = vmul.u32.u64.compose %v2020, %v2015
    %v2025 = vextract.low.u32 %v2024
    %v2026 = vextract.high.u32 %v2024
    %v2027 = vmul.u32 %v2020, %v2011
    %v2028 = vadd.s32 %v2023, %v2025
    %vm2029 = vc.u32 %v2023, %v2025
    %v2030 = vadd.s32 %v2026, 1
    %v2031 = vsel %vm2029, %v2030, %v2026
    %v2032 = vadd.s32 %v2027, %v2031
    %v2033 = vadd.s32 %v2032, 536870912
    %v2034 = vshrl.u32 %v2033, 30
    %v2035 = vshll.u32 %v2034, 30
    %v2036 = vsub.s32 %v2032, %v2035
    %vm2037 = vcmp.lt.s32.totalorder %v2036, 0
    %v2038 = vsub.s32 0, %v2036
    %v2039 = vsel %vm2037, %v2038, %v2036
    %v2040 = vclz %v2039
    %v2041 = vsub.s32 %v2040, 2
    %vm2042 = vcmp.gt.s32.totalorder 0, %v2041
    %v2043 = vsel %vm2042, 0, %v2041
    %v2044 = vsub.s32 32, %v2043
    %v2045 = vshll.u32 %v2036, %v2043
    %v2046 = vshrl.u32 %v2028, %v2044
    %v2047 = vor.u32 %v2045, %v2046
    %v2048 = vsub.s32 4294967266, %v2043
    %v2049 = vadd.s32 %v2048, 127
    %v2050 = vshll.u32 %v2049, 23
    %v2051 = vor.u32 4788187, %v2050
    %v2052 = vand.u32 2147483647, %v2051
    %v2054 = vcvt.s32.f32 %v2047
    %v2055 = vmul.f32 %v2054, %v2052
    %v2056 = vxor.u32 %v2055, 2147483648
    %v2057 = vsel %vm1974, %v2056, %v2055
    %v2058 = vsub.s32 4, %v2034
    %v2059 = vsel %vm1974, %v2058, %v2034
    %v2060 = vsel %vm1973, %v189, %v2057
    %v2061 = vsel %vm1973, 0, %v2059
    %v2062 = vcosq.f32.pop %v2060
    %v2063 = vsinq.f32.pop %v2060
    %vm2064 = vweird.f32 %v189
    %v2065 = vadd.s32 %v2061, 3
    %v2066 = vand.u32 %v2065, 3
    %vm2067 = vcmp.lt.s32.totalorder %v2066, 2
    %vm2068 = vcmp.eq.s32.totalorder %v2066, 0
    %v2069 = vxor.u32 %v2063, 2147483648
    %v2070 = vsel %vm2068, %v2062, %v2069
    %vm2071 = vcmp.eq.s32.totalorder %v2066, 2
    %v2072 = vxor.u32 %v2062, 2147483648
    %v2073 = vsel %vm2071, %v2072, %v2063
    %v2074 = vsel %vm2067, %v2070, %v2073
    %v2075 = vsel %vm2064, nan, %v2074
    %v2076 = vand.u32 2147483647, %v190
    %vm2077 = vcmp.le.f32.partialorder %v2076, 0.7853982
    %vm2078 = vcmp.lt.s32.totalorder %v190, 0
    %v2079 = vand.u32 %v190, 2139095040
    %v2080 = vshrl.u32 %v2079, 23
    %v2081 = vsub.s32 %v2080, 127
    %v2082 = vand.u32 2147483647, %v190
    %v2083 = vand.u32 %v2082, 8388607
    %v2084 = vor.u32 %v2083, 8388608
    %v2085 = vsub.s32 0, %v2084
    %v2086 = vadd.s32 %v2081, 1
    %vm2087 = vcmp.gt.s32.totalorder %v2086, 0
    %v2088 = vsel %vm2087, %v2086, 0
    %v2089 = vshrl.u32 %v2088, 5
    %v2090 = vand.u32 %v2088, 31
    %v2091 = vsub.s32 32, %v2090
    %v2092 = vshrl.u32 683565275, %v2091
    %v2093 = vshll.u32 683565275, %v2090
    %v2094 = vshrl.u32 2475754826, %v2091
    %v2095 = vor.u32 %v2093, %v2094
    %v2096 = vshll.u32 2475754826, %v2090
    %v2097 = vshrl.u32 2131351028, %v2091
    %v2098 = vor.u32 %v2096, %v2097
    %v2099 = vshll.u32 2131351028, %v2090
    %v2100 = vshrl.u32 2102212464, %v2091
    %v2101 = vor.u32 %v2099, %v2100
    %v2102 = vshll.u32 2102212464, %v2090
    %v2103 = vshrl.u32 920167782, %v2091
    %v2104 = vor.u32 %v2102, %v2103
    %v2105 = vshll.u32 920167782, %v2090
    %v2106 = vshrl.u32 1326507024, %v2091
    %v2107 = vor.u32 %v2105, %v2106
    %vm2108 = vcmp.lt.s32.totalorder %v2089, 1
    %vm2109 = vcmp.lt.s32.totalorder %v2089, 2
    %vm2110 = vcmp.lt.s32.totalorder %v2089, 3
    %vm2111 = vcmp.lt.s32.totalorder %v2089, 4
    %v2112 = vsel %vm2108, %v2092, %v2095
    %v2113 = vsel %vm2111, %v2101, 2102212464
    %v2114 = vsel %vm2110, %v2098, %v2113
    %v2115 = vsel %vm2109, %v2112, %v2114
    %v2116 = vsel %vm2108, %v2095, %v2098
    %v2117 = vsel %vm2111, %v2104, 920167782
    %v2118 = vsel %vm2110, %v2101, %v2117
    %v2119 = vsel %vm2109, %v2116, %v2118
    %v2120 = vsel %vm2108, %v2098, %v2101
    %v2121 = vsel %vm2111, %v2107, 1326507024
    %v2122 = vsel %vm2110, %v2104, %v2121
    %v2123 = vsel %vm2109, %v2120, %v2122
    %v2124 = vshll.u32 %v2084, 8
    %v2125 = vmul.u32.u64.compose %v2124, %v2123
    %v2126 = vextract.low.u32 %v2125
    %v2127 = vextract.high.u32 %v2125
    %v2128 = vmul.u32.u64.compose %v2124, %v2119
    %v2129 = vextract.low.u32 %v2128
    %v2130 = vextract.high.u32 %v2128
    %v2131 = vmul.u32 %v2124, %v2115
    %v2132 = vadd.s32 %v2127, %v2129
    %vm2133 = vc.u32 %v2127, %v2129
    %v2134 = vadd.s32 %v2130, 1
    %v2135 = vsel %vm2133, %v2134, %v2130
    %v2136 = vadd.s32 %v2131, %v2135
    %v2137 = vadd.s32 %v2136, 536870912
    %v2138 = vshrl.u32 %v2137, 30
    %v2139 = vshll.u32 %v2138, 30
    %v2140 = vsub.s32 %v2136, %v2139
    %vm2141 = vcmp.lt.s32.totalorder %v2140, 0
    %v2142 = vsub.s32 0, %v2140
    %v2143 = vsel %vm2141, %v2142, %v2140
    %v2144 = vclz %v2143
    %v2145 = vsub.s32 %v2144, 2
    %vm2146 = vcmp.gt.s32.totalorder 0, %v2145
    %v2147 = vsel %vm2146, 0, %v2145
    %v2148 = vsub.s32 32, %v2147
    %v2149 = vshll.u32 %v2140, %v2147
    %v2150 = vshrl.u32 %v2132, %v2148
    %v2151 = vor.u32 %v2149, %v2150
    %v2152 = vsub.s32 4294967266, %v2147
    %v2153 = vadd.s32 %v2152, 127
    %v2154 = vshll.u32 %v2153, 23
    %v2155 = vor.u32 4788187, %v2154
    %v2156 = vand.u32 2147483647, %v2155
    %v2158 = vcvt.s32.f32 %v2151
    %v2159 = vmul.f32 %v2158, %v2156
    %v2160 = vxor.u32 %v2159, 2147483648
    %v2161 = vsel %vm2078, %v2160, %v2159
    %v2162 = vsub.s32 4, %v2138
    %v2163 = vsel %vm2078, %v2162, %v2138
    %v2164 = vsel %vm2077, %v190, %v2161
    %v2165 = vsel %vm2077, 0, %v2163
    %v2166 = vcosq.f32.pop %v2164
    %v2167 = vsinq.f32.pop %v2164
    %vm2168 = vweird.f32 %v190
    %v2169 = vadd.s32 %v2165, 3
    %v2170 = vand.u32 %v2169, 3
    %vm2171 = vcmp.lt.s32.totalorder %v2170, 2
    %vm2172 = vcmp.eq.s32.totalorder %v2170, 0
    %v2173 = vxor.u32 %v2167, 2147483648
    %v2174 = vsel %vm2172, %v2166, %v2173
    %vm2175 = vcmp.eq.s32.totalorder %v2170, 2
    %v2176 = vxor.u32 %v2166, 2147483648
    %v2177 = vsel %vm2175, %v2176, %v2167
    %v2178 = vsel %vm2171, %v2174, %v2177
    %v2179 = vsel %vm2168, nan, %v2178
    %v2180 = vand.u32 2147483647, %v191
    %vm2181 = vcmp.le.f32.partialorder %v2180, 0.7853982
    %vm2182 = vcmp.lt.s32.totalorder %v191, 0
    %v2183 = vand.u32 %v191, 2139095040
    %v2184 = vshrl.u32 %v2183, 23
    %v2185 = vsub.s32 %v2184, 127
    %v2186 = vand.u32 2147483647, %v191
    %v2187 = vand.u32 %v2186, 8388607
    %v2188 = vor.u32 %v2187, 8388608
    %v2189 = vsub.s32 0, %v2188
    %v2190 = vadd.s32 %v2185, 1
    %vm2191 = vcmp.gt.s32.totalorder %v2190, 0
    %v2192 = vsel %vm2191, %v2190, 0
    %v2193 = vshrl.u32 %v2192, 5
    %v2194 = vand.u32 %v2192, 31
    %v2195 = vsub.s32 32, %v2194
    %v2196 = vshrl.u32 683565275, %v2195
    %v2197 = vshll.u32 683565275, %v2194
    %v2198 = vshrl.u32 2475754826, %v2195
    %v2199 = vor.u32 %v2197, %v2198
    %v2200 = vshll.u32 2475754826, %v2194
    %v2201 = vshrl.u32 2131351028, %v2195
    %v2202 = vor.u32 %v2200, %v2201
    %v2203 = vshll.u32 2131351028, %v2194
    %v2204 = vshrl.u32 2102212464, %v2195
    %v2205 = vor.u32 %v2203, %v2204
    %v2206 = vshll.u32 2102212464, %v2194
    %v2207 = vshrl.u32 920167782, %v2195
    %v2208 = vor.u32 %v2206, %v2207
    %v2209 = vshll.u32 920167782, %v2194
    %v2210 = vshrl.u32 1326507024, %v2195
    %v2211 = vor.u32 %v2209, %v2210
    %vm2212 = vcmp.lt.s32.totalorder %v2193, 1
    %vm2213 = vcmp.lt.s32.totalorder %v2193, 2
    %vm2214 = vcmp.lt.s32.totalorder %v2193, 3
    %vm2215 = vcmp.lt.s32.totalorder %v2193, 4
    %v2216 = vsel %vm2212, %v2196, %v2199
    %v2217 = vsel %vm2215, %v2205, 2102212464
    %v2218 = vsel %vm2214, %v2202, %v2217
    %v2219 = vsel %vm2213, %v2216, %v2218
    %v2220 = vsel %vm2212, %v2199, %v2202
    %v2221 = vsel %vm2215, %v2208, 920167782
    %v2222 = vsel %vm2214, %v2205, %v2221
    %v2223 = vsel %vm2213, %v2220, %v2222
    %v2224 = vsel %vm2212, %v2202, %v2205
    %v2225 = vsel %vm2215, %v2211, 1326507024
    %v2226 = vsel %vm2214, %v2208, %v2225
    %v2227 = vsel %vm2213, %v2224, %v2226
    %v2228 = vshll.u32 %v2188, 8
    %v2229 = vmul.u32.u64.compose %v2228, %v2227
    %v2230 = vextract.low.u32 %v2229
    %v2231 = vextract.high.u32 %v2229
    %v2232 = vmul.u32.u64.compose %v2228, %v2223
    %v2233 = vextract.low.u32 %v2232
    %v2234 = vextract.high.u32 %v2232
    %v2235 = vmul.u32 %v2228, %v2219
    %v2236 = vadd.s32 %v2231, %v2233
    %vm2237 = vc.u32 %v2231, %v2233
    %v2238 = vadd.s32 %v2234, 1
    %v2239 = vsel %vm2237, %v2238, %v2234
    %v2240 = vadd.s32 %v2235, %v2239
    %v2241 = vadd.s32 %v2240, 536870912
    %v2242 = vshrl.u32 %v2241, 30
    %v2243 = vshll.u32 %v2242, 30
    %v2244 = vsub.s32 %v2240, %v2243
    %vm2245 = vcmp.lt.s32.totalorder %v2244, 0
    %v2246 = vsub.s32 0, %v2244
    %v2247 = vsel %vm2245, %v2246, %v2244
    %v2248 = vclz %v2247
    %v2249 = vsub.s32 %v2248, 2
    %vm2250 = vcmp.gt.s32.totalorder 0, %v2249
    %v2251 = vsel %vm2250, 0, %v2249
    %v2252 = vsub.s32 32, %v2251
    %v2253 = vshll.u32 %v2244, %v2251
    %v2254 = vshrl.u32 %v2236, %v2252
    %v2255 = vor.u32 %v2253, %v2254
    %v2256 = vsub.s32 4294967266, %v2251
    %v2257 = vadd.s32 %v2256, 127
    %v2258 = vshll.u32 %v2257, 23
    %v2259 = vor.u32 4788187, %v2258
    %v2260 = vand.u32 2147483647, %v2259
    %v2262 = vcvt.s32.f32 %v2255
    %v2263 = vmul.f32 %v2262, %v2260
    %v2264 = vxor.u32 %v2263, 2147483648
    %v2265 = vsel %vm2182, %v2264, %v2263
    %v2266 = vsub.s32 4, %v2242
    %v2267 = vsel %vm2182, %v2266, %v2242
    %v2268 = vsel %vm2181, %v191, %v2265
    %v2269 = vsel %vm2181, 0, %v2267
    %v2270 = vcosq.f32.pop %v2268
    %v2271 = vsinq.f32.pop %v2268
    %vm2272 = vweird.f32 %v191
    %v2273 = vadd.s32 %v2269, 3
    %v2274 = vand.u32 %v2273, 3
    %vm2275 = vcmp.lt.s32.totalorder %v2274, 2
    %vm2276 = vcmp.eq.s32.totalorder %v2274, 0
    %v2277 = vxor.u32 %v2271, 2147483648
    %v2278 = vsel %vm2276, %v2270, %v2277
    %vm2279 = vcmp.eq.s32.totalorder %v2274, 2
    %v2280 = vxor.u32 %v2270, 2147483648
    %v2281 = vsel %vm2279, %v2280, %v2271
    %v2282 = vsel %vm2275, %v2278, %v2281
    %v2283 = vsel %vm2272, nan, %v2282
    %v2284 = vand.u32 2147483647, %v192
    %vm2285 = vcmp.le.f32.partialorder %v2284, 0.7853982
    %vm2286 = vcmp.lt.s32.totalorder %v192, 0
    %v2287 = vand.u32 %v192, 2139095040
    %v2288 = vshrl.u32 %v2287, 23
    %v2289 = vsub.s32 %v2288, 127
    %v2290 = vand.u32 2147483647, %v192
    %v2291 = vand.u32 %v2290, 8388607
    %v2292 = vor.u32 %v2291, 8388608
    %v2293 = vsub.s32 0, %v2292
    %v2294 = vadd.s32 %v2289, 1
    %vm2295 = vcmp.gt.s32.totalorder %v2294, 0
    %v2296 = vsel %vm2295, %v2294, 0
    %v2297 = vshrl.u32 %v2296, 5
    %v2298 = vand.u32 %v2296, 31
    %v2299 = vsub.s32 32, %v2298
    %v2300 = vshrl.u32 683565275, %v2299
    %v2301 = vshll.u32 683565275, %v2298
    %v2302 = vshrl.u32 2475754826, %v2299
    %v2303 = vor.u32 %v2301, %v2302
    %v2304 = vshll.u32 2475754826, %v2298
    %v2305 = vshrl.u32 2131351028, %v2299
    %v2306 = vor.u32 %v2304, %v2305
    %v2307 = vshll.u32 2131351028, %v2298
    %v2308 = vshrl.u32 2102212464, %v2299
    %v2309 = vor.u32 %v2307, %v2308
    %v2310 = vshll.u32 2102212464, %v2298
    %v2311 = vshrl.u32 920167782, %v2299
    %v2312 = vor.u32 %v2310, %v2311
    %v2313 = vshll.u32 920167782, %v2298
    %v2314 = vshrl.u32 1326507024, %v2299
    %v2315 = vor.u32 %v2313, %v2314
    %vm2316 = vcmp.lt.s32.totalorder %v2297, 1
    %vm2317 = vcmp.lt.s32.totalorder %v2297, 2
    %vm2318 = vcmp.lt.s32.totalorder %v2297, 3
    %vm2319 = vcmp.lt.s32.totalorder %v2297, 4
    %v2320 = vsel %vm2316, %v2300, %v2303
    %v2321 = vsel %vm2319, %v2309, 2102212464
    %v2322 = vsel %vm2318, %v2306, %v2321
    %v2323 = vsel %vm2317, %v2320, %v2322
    %v2324 = vsel %vm2316, %v2303, %v2306
    %v2325 = vsel %vm2319, %v2312, 920167782
    %v2326 = vsel %vm2318, %v2309, %v2325
    %v2327 = vsel %vm2317, %v2324, %v2326
    %v2328 = vsel %vm2316, %v2306, %v2309
    %v2329 = vsel %vm2319, %v2315, 1326507024
    %v2330 = vsel %vm2318, %v2312, %v2329
    %v2331 = vsel %vm2317, %v2328, %v2330
    %v2332 = vshll.u32 %v2292, 8
    %v2333 = vmul.u32.u64.compose %v2332, %v2331
    %v2334 = vextract.low.u32 %v2333
    %v2335 = vextract.high.u32 %v2333
    %v2336 = vmul.u32.u64.compose %v2332, %v2327
    %v2337 = vextract.low.u32 %v2336
    %v2338 = vextract.high.u32 %v2336
    %v2339 = vmul.u32 %v2332, %v2323
    %v2340 = vadd.s32 %v2335, %v2337
    %vm2341 = vc.u32 %v2335, %v2337
    %v2342 = vadd.s32 %v2338, 1
    %v2343 = vsel %vm2341, %v2342, %v2338
    %v2344 = vadd.s32 %v2339, %v2343
    %v2345 = vadd.s32 %v2344, 536870912
    %v2346 = vshrl.u32 %v2345, 30
    %v2347 = vshll.u32 %v2346, 30
    %v2348 = vsub.s32 %v2344, %v2347
    %vm2349 = vcmp.lt.s32.totalorder %v2348, 0
    %v2350 = vsub.s32 0, %v2348
    %v2351 = vsel %vm2349, %v2350, %v2348
    %v2352 = vclz %v2351
    %v2353 = vsub.s32 %v2352, 2
    %vm2354 = vcmp.gt.s32.totalorder 0, %v2353
    %v2355 = vsel %vm2354, 0, %v2353
    %v2356 = vsub.s32 32, %v2355
    %v2357 = vshll.u32 %v2348, %v2355
    %v2358 = vshrl.u32 %v2340, %v2356
    %v2359 = vor.u32 %v2357, %v2358
    %v2360 = vsub.s32 4294967266, %v2355
    %v2361 = vadd.s32 %v2360, 127
    %v2362 = vshll.u32 %v2361, 23
    %v2363 = vor.u32 4788187, %v2362
    %v2364 = vand.u32 2147483647, %v2363
    %v2366 = vcvt.s32.f32 %v2359
    %v2367 = vmul.f32 %v2366, %v2364
    %v2368 = vxor.u32 %v2367, 2147483648
    %v2369 = vsel %vm2286, %v2368, %v2367
    %v2370 = vsub.s32 4, %v2346
    %v2371 = vsel %vm2286, %v2370, %v2346
    %v2372 = vsel %vm2285, %v192, %v2369
    %v2373 = vsel %vm2285, 0, %v2371
    %v2374 = vcosq.f32.pop %v2372
    %v2375 = vsinq.f32.pop %v2372
    %vm2376 = vweird.f32 %v192
    %v2377 = vadd.s32 %v2373, 3
    %v2378 = vand.u32 %v2377, 3
    %vm2379 = vcmp.lt.s32.totalorder %v2378, 2
    %vm2380 = vcmp.eq.s32.totalorder %v2378, 0
    %v2381 = vxor.u32 %v2375, 2147483648
    %v2382 = vsel %vm2380, %v2374, %v2381
    %vm2383 = vcmp.eq.s32.totalorder %v2378, 2
    %v2384 = vxor.u32 %v2374, 2147483648
    %v2385 = vsel %vm2383, %v2384, %v2375
    %v2386 = vsel %vm2379, %v2382, %v2385
    %v2387 = vsel %vm2376, nan, %v2386
    %v2388 = vand.u32 2147483647, %v193
    %vm2389 = vcmp.le.f32.partialorder %v2388, 0.7853982
    %vm2390 = vcmp.lt.s32.totalorder %v193, 0
    %v2391 = vand.u32 %v193, 2139095040
    %v2392 = vshrl.u32 %v2391, 23
    %v2393 = vsub.s32 %v2392, 127
    %v2394 = vand.u32 2147483647, %v193
    %v2395 = vand.u32 %v2394, 8388607
    %v2396 = vor.u32 %v2395, 8388608
    %v2397 = vsub.s32 0, %v2396
    %v2398 = vadd.s32 %v2393, 1
    %vm2399 = vcmp.gt.s32.totalorder %v2398, 0
    %v2400 = vsel %vm2399, %v2398, 0
    %v2401 = vshrl.u32 %v2400, 5
    %v2402 = vand.u32 %v2400, 31
    %v2403 = vsub.s32 32, %v2402
    %v2404 = vshrl.u32 683565275, %v2403
    %v2405 = vshll.u32 683565275, %v2402
    %v2406 = vshrl.u32 2475754826, %v2403
    %v2407 = vor.u32 %v2405, %v2406
    %v2408 = vshll.u32 2475754826, %v2402
    %v2409 = vshrl.u32 2131351028, %v2403
    %v2410 = vor.u32 %v2408, %v2409
    %v2411 = vshll.u32 2131351028, %v2402
    %v2412 = vshrl.u32 2102212464, %v2403
    %v2413 = vor.u32 %v2411, %v2412
    %v2414 = vshll.u32 2102212464, %v2402
    %v2415 = vshrl.u32 920167782, %v2403
    %v2416 = vor.u32 %v2414, %v2415
    %v2417 = vshll.u32 920167782, %v2402
    %v2418 = vshrl.u32 1326507024, %v2403
    %v2419 = vor.u32 %v2417, %v2418
    %vm2420 = vcmp.lt.s32.totalorder %v2401, 1
    %vm2421 = vcmp.lt.s32.totalorder %v2401, 2
    %vm2422 = vcmp.lt.s32.totalorder %v2401, 3
    %vm2423 = vcmp.lt.s32.totalorder %v2401, 4
    %v2424 = vsel %vm2420, %v2404, %v2407
    %v2425 = vsel %vm2423, %v2413, 2102212464
    %v2426 = vsel %vm2422, %v2410, %v2425
    %v2427 = vsel %vm2421, %v2424, %v2426
    %v2428 = vsel %vm2420, %v2407, %v2410
    %v2429 = vsel %vm2423, %v2416, 920167782
    %v2430 = vsel %vm2422, %v2413, %v2429
    %v2431 = vsel %vm2421, %v2428, %v2430
    %v2432 = vsel %vm2420, %v2410, %v2413
    %v2433 = vsel %vm2423, %v2419, 1326507024
    %v2434 = vsel %vm2422, %v2416, %v2433
    %v2435 = vsel %vm2421, %v2432, %v2434
    %v2436 = vshll.u32 %v2396, 8
    %v2437 = vmul.u32.u64.compose %v2436, %v2435
    %v2438 = vextract.low.u32 %v2437
    %v2439 = vextract.high.u32 %v2437
    %v2440 = vmul.u32.u64.compose %v2436, %v2431
    %v2441 = vextract.low.u32 %v2440
    %v2442 = vextract.high.u32 %v2440
    %v2443 = vmul.u32 %v2436, %v2427
    %v2444 = vadd.s32 %v2439, %v2441
    %vm2445 = vc.u32 %v2439, %v2441
    %v2446 = vadd.s32 %v2442, 1
    %v2447 = vsel %vm2445, %v2446, %v2442
    %v2448 = vadd.s32 %v2443, %v2447
    %v2449 = vadd.s32 %v2448, 536870912
    %v2450 = vshrl.u32 %v2449, 30
    %v2451 = vshll.u32 %v2450, 30
    %v2452 = vsub.s32 %v2448, %v2451
    %vm2453 = vcmp.lt.s32.totalorder %v2452, 0
    %v2454 = vsub.s32 0, %v2452
    %v2455 = vsel %vm2453, %v2454, %v2452
    %v2456 = vclz %v2455
    %v2457 = vsub.s32 %v2456, 2
    %vm2458 = vcmp.gt.s32.totalorder 0, %v2457
    %v2459 = vsel %vm2458, 0, %v2457
    %v2460 = vsub.s32 32, %v2459
    %v2461 = vshll.u32 %v2452, %v2459
    %v2462 = vshrl.u32 %v2444, %v2460
    %v2463 = vor.u32 %v2461, %v2462
    %v2464 = vsub.s32 4294967266, %v2459
    %v2465 = vadd.s32 %v2464, 127
    %v2466 = vshll.u32 %v2465, 23
    %v2467 = vor.u32 4788187, %v2466
    %v2468 = vand.u32 2147483647, %v2467
    %v2470 = vcvt.s32.f32 %v2463
    %v2471 = vmul.f32 %v2470, %v2468
    %v2472 = vxor.u32 %v2471, 2147483648
    %v2473 = vsel %vm2390, %v2472, %v2471
    %v2474 = vsub.s32 4, %v2450
    %v2475 = vsel %vm2390, %v2474, %v2450
    %v2476 = vsel %vm2389, %v193, %v2473
    %v2477 = vsel %vm2389, 0, %v2475
    %v2478 = vcosq.f32.pop %v2476
    %v2479 = vsinq.f32.pop %v2476
    %vm2480 = vweird.f32 %v193
    %v2481 = vadd.s32 %v2477, 3
    %v2482 = vand.u32 %v2481, 3
    %vm2483 = vcmp.lt.s32.totalorder %v2482, 2
    %vm2484 = vcmp.eq.s32.totalorder %v2482, 0
    %v2485 = vxor.u32 %v2479, 2147483648
    %v2486 = vsel %vm2484, %v2478, %v2485
    %vm2487 = vcmp.eq.s32.totalorder %v2482, 2
    %v2488 = vxor.u32 %v2478, 2147483648
    %v2489 = vsel %vm2487, %v2488, %v2479
    %v2490 = vsel %vm2483, %v2486, %v2489
    %v2491 = vsel %vm2480, nan, %v2490
    %v2492 = vand.u32 2147483647, %v194
    %vm2493 = vcmp.le.f32.partialorder %v2492, 0.7853982
    %vm2494 = vcmp.lt.s32.totalorder %v194, 0
    %v2495 = vand.u32 %v194, 2139095040
    %v2496 = vshrl.u32 %v2495, 23
    %v2497 = vsub.s32 %v2496, 127
    %v2498 = vand.u32 2147483647, %v194
    %v2499 = vand.u32 %v2498, 8388607
    %v2500 = vor.u32 %v2499, 8388608
    %v2501 = vsub.s32 0, %v2500
    %v2502 = vadd.s32 %v2497, 1
    %vm2503 = vcmp.gt.s32.totalorder %v2502, 0
    %v2504 = vsel %vm2503, %v2502, 0
    %v2505 = vshrl.u32 %v2504, 5
    %v2506 = vand.u32 %v2504, 31
    %v2507 = vsub.s32 32, %v2506
    %v2508 = vshrl.u32 683565275, %v2507
    %v2509 = vshll.u32 683565275, %v2506
    %v2510 = vshrl.u32 2475754826, %v2507
    %v2511 = vor.u32 %v2509, %v2510
    %v2512 = vshll.u32 2475754826, %v2506
    %v2513 = vshrl.u32 2131351028, %v2507
    %v2514 = vor.u32 %v2512, %v2513
    %v2515 = vshll.u32 2131351028, %v2506
    %v2516 = vshrl.u32 2102212464, %v2507
    %v2517 = vor.u32 %v2515, %v2516
    %v2518 = vshll.u32 2102212464, %v2506
    %v2519 = vshrl.u32 920167782, %v2507
    %v2520 = vor.u32 %v2518, %v2519
    %v2521 = vshll.u32 920167782, %v2506
    %v2522 = vshrl.u32 1326507024, %v2507
    %v2523 = vor.u32 %v2521, %v2522
    %vm2524 = vcmp.lt.s32.totalorder %v2505, 1
    %vm2525 = vcmp.lt.s32.totalorder %v2505, 2
    %vm2526 = vcmp.lt.s32.totalorder %v2505, 3
    %vm2527 = vcmp.lt.s32.totalorder %v2505, 4
    %v2528 = vsel %vm2524, %v2508, %v2511
    %v2529 = vsel %vm2527, %v2517, 2102212464
    %v2530 = vsel %vm2526, %v2514, %v2529
    %v2531 = vsel %vm2525, %v2528, %v2530
    %v2532 = vsel %vm2524, %v2511, %v2514
    %v2533 = vsel %vm2527, %v2520, 920167782
    %v2534 = vsel %vm2526, %v2517, %v2533
    %v2535 = vsel %vm2525, %v2532, %v2534
    %v2536 = vsel %vm2524, %v2514, %v2517
    %v2537 = vsel %vm2527, %v2523, 1326507024
    %v2538 = vsel %vm2526, %v2520, %v2537
    %v2539 = vsel %vm2525, %v2536, %v2538
    %v2540 = vshll.u32 %v2500, 8
    %v2541 = vmul.u32.u64.compose %v2540, %v2539
    %v2542 = vextract.low.u32 %v2541
    %v2543 = vextract.high.u32 %v2541
    %v2544 = vmul.u32.u64.compose %v2540, %v2535
    %v2545 = vextract.low.u32 %v2544
    %v2546 = vextract.high.u32 %v2544
    %v2547 = vmul.u32 %v2540, %v2531
    %v2548 = vadd.s32 %v2543, %v2545
    %vm2549 = vc.u32 %v2543, %v2545
    %v2550 = vadd.s32 %v2546, 1
    %v2551 = vsel %vm2549, %v2550, %v2546
    %v2552 = vadd.s32 %v2547, %v2551
    %v2553 = vadd.s32 %v2552, 536870912
    %v2554 = vshrl.u32 %v2553, 30
    %v2555 = vshll.u32 %v2554, 30
    %v2556 = vsub.s32 %v2552, %v2555
    %vm2557 = vcmp.lt.s32.totalorder %v2556, 0
    %v2558 = vsub.s32 0, %v2556
    %v2559 = vsel %vm2557, %v2558, %v2556
    %v2560 = vclz %v2559
    %v2561 = vsub.s32 %v2560, 2
    %vm2562 = vcmp.gt.s32.totalorder 0, %v2561
    %v2563 = vsel %vm2562, 0, %v2561
    %v2564 = vsub.s32 32, %v2563
    %v2565 = vshll.u32 %v2556, %v2563
    %v2566 = vshrl.u32 %v2548, %v2564
    %v2567 = vor.u32 %v2565, %v2566
    %v2568 = vsub.s32 4294967266, %v2563
    %v2569 = vadd.s32 %v2568, 127
    %v2570 = vshll.u32 %v2569, 23
    %v2571 = vor.u32 4788187, %v2570
    %v2572 = vand.u32 2147483647, %v2571
    %v2574 = vcvt.s32.f32 %v2567
    %v2575 = vmul.f32 %v2574, %v2572
    %v2576 = vxor.u32 %v2575, 2147483648
    %v2577 = vsel %vm2494, %v2576, %v2575
    %v2578 = vsub.s32 4, %v2554
    %v2579 = vsel %vm2494, %v2578, %v2554
    %v2580 = vsel %vm2493, %v194, %v2577
    %v2581 = vsel %vm2493, 0, %v2579
    %v2582 = vcosq.f32.pop %v2580
    %v2583 = vsinq.f32.pop %v2580
    %vm2584 = vweird.f32 %v194
    %v2585 = vadd.s32 %v2581, 3
    %v2586 = vand.u32 %v2585, 3
    %vm2587 = vcmp.lt.s32.totalorder %v2586, 2
    %vm2588 = vcmp.eq.s32.totalorder %v2586, 0
    %v2589 = vxor.u32 %v2583, 2147483648
    %v2590 = vsel %vm2588, %v2582, %v2589
    %vm2591 = vcmp.eq.s32.totalorder %v2586, 2
    %v2592 = vxor.u32 %v2582, 2147483648
    %v2593 = vsel %vm2591, %v2592, %v2583
    %v2594 = vsel %vm2587, %v2590, %v2593
    %v2595 = vsel %vm2584, nan, %v2594
    %v2596 = vand.u32 2147483647, %v195
    %vm2597 = vcmp.le.f32.partialorder %v2596, 0.7853982
    %vm2598 = vcmp.lt.s32.totalorder %v195, 0
    %v2599 = vand.u32 %v195, 2139095040
    %v2600 = vshrl.u32 %v2599, 23
    %v2601 = vsub.s32 %v2600, 127
    %v2602 = vand.u32 2147483647, %v195
    %v2603 = vand.u32 %v2602, 8388607
    %v2604 = vor.u32 %v2603, 8388608
    %v2605 = vsub.s32 0, %v2604
    %v2606 = vadd.s32 %v2601, 1
    %vm2607 = vcmp.gt.s32.totalorder %v2606, 0
    %v2608 = vsel %vm2607, %v2606, 0
    %v2609 = vshrl.u32 %v2608, 5
    %v2610 = vand.u32 %v2608, 31
    %v2611 = vsub.s32 32, %v2610
    %v2612 = vshrl.u32 683565275, %v2611
    %v2613 = vshll.u32 683565275, %v2610
    %v2614 = vshrl.u32 2475754826, %v2611
    %v2615 = vor.u32 %v2613, %v2614
    %v2616 = vshll.u32 2475754826, %v2610
    %v2617 = vshrl.u32 2131351028, %v2611
    %v2618 = vor.u32 %v2616, %v2617
    %v2619 = vshll.u32 2131351028, %v2610
    %v2620 = vshrl.u32 2102212464, %v2611
    %v2621 = vor.u32 %v2619, %v2620
    %v2622 = vshll.u32 2102212464, %v2610
    %v2623 = vshrl.u32 920167782, %v2611
    %v2624 = vor.u32 %v2622, %v2623
    %v2625 = vshll.u32 920167782, %v2610
    %v2626 = vshrl.u32 1326507024, %v2611
    %v2627 = vor.u32 %v2625, %v2626
    %vm2628 = vcmp.lt.s32.totalorder %v2609, 1
    %vm2629 = vcmp.lt.s32.totalorder %v2609, 2
    %vm2630 = vcmp.lt.s32.totalorder %v2609, 3
    %vm2631 = vcmp.lt.s32.totalorder %v2609, 4
    %v2632 = vsel %vm2628, %v2612, %v2615
    %v2633 = vsel %vm2631, %v2621, 2102212464
    %v2634 = vsel %vm2630, %v2618, %v2633
    %v2635 = vsel %vm2629, %v2632, %v2634
    %v2636 = vsel %vm2628, %v2615, %v2618
    %v2637 = vsel %vm2631, %v2624, 920167782
    %v2638 = vsel %vm2630, %v2621, %v2637
    %v2639 = vsel %vm2629, %v2636, %v2638
    %v2640 = vsel %vm2628, %v2618, %v2621
    %v2641 = vsel %vm2631, %v2627, 1326507024
    %v2642 = vsel %vm2630, %v2624, %v2641
    %v2643 = vsel %vm2629, %v2640, %v2642
    %v2644 = vshll.u32 %v2604, 8
    %v2645 = vmul.u32.u64.compose %v2644, %v2643
    %v2646 = vextract.low.u32 %v2645
    %v2647 = vextract.high.u32 %v2645
    %v2648 = vmul.u32.u64.compose %v2644, %v2639
    %v2649 = vextract.low.u32 %v2648
    %v2650 = vextract.high.u32 %v2648
    %v2651 = vmul.u32 %v2644, %v2635
    %v2652 = vadd.s32 %v2647, %v2649
    %vm2653 = vc.u32 %v2647, %v2649
    %v2654 = vadd.s32 %v2650, 1
    %v2655 = vsel %vm2653, %v2654, %v2650
    %v2656 = vadd.s32 %v2651, %v2655
    %v2657 = vadd.s32 %v2656, 536870912
    %v2658 = vshrl.u32 %v2657, 30
    %v2659 = vshll.u32 %v2658, 30
    %v2660 = vsub.s32 %v2656, %v2659
    %vm2661 = vcmp.lt.s32.totalorder %v2660, 0
    %v2662 = vsub.s32 0, %v2660
    %v2663 = vsel %vm2661, %v2662, %v2660
    %v2664 = vclz %v2663
    %v2665 = vsub.s32 %v2664, 2
    %vm2666 = vcmp.gt.s32.totalorder 0, %v2665
    %v2667 = vsel %vm2666, 0, %v2665
    %v2668 = vsub.s32 32, %v2667
    %v2669 = vshll.u32 %v2660, %v2667
    %v2670 = vshrl.u32 %v2652, %v2668
    %v2671 = vor.u32 %v2669, %v2670
    %v2672 = vsub.s32 4294967266, %v2667
    %v2673 = vadd.s32 %v2672, 127
    %v2674 = vshll.u32 %v2673, 23
    %v2675 = vor.u32 4788187, %v2674
    %v2676 = vand.u32 2147483647, %v2675
    %v2678 = vcvt.s32.f32 %v2671
    %v2679 = vmul.f32 %v2678, %v2676
    %v2680 = vxor.u32 %v2679, 2147483648
    %v2681 = vsel %vm2598, %v2680, %v2679
    %v2682 = vsub.s32 4, %v2658
    %v2683 = vsel %vm2598, %v2682, %v2658
    %v2684 = vsel %vm2597, %v195, %v2681
    %v2685 = vsel %vm2597, 0, %v2683
    %v2686 = vcosq.f32.pop %v2684
    %v2687 = vsinq.f32.pop %v2684
    %vm2688 = vweird.f32 %v195
    %v2689 = vadd.s32 %v2685, 3
    %v2690 = vand.u32 %v2689, 3
    %vm2691 = vcmp.lt.s32.totalorder %v2690, 2
    %vm2692 = vcmp.eq.s32.totalorder %v2690, 0
    %v2693 = vxor.u32 %v2687, 2147483648
    %v2694 = vsel %vm2692, %v2686, %v2693
    %vm2695 = vcmp.eq.s32.totalorder %v2690, 2
    %v2696 = vxor.u32 %v2686, 2147483648
    %v2697 = vsel %vm2695, %v2696, %v2687
    %v2698 = vsel %vm2691, %v2694, %v2697
    %v2699 = vsel %vm2688, nan, %v2698
    %v2700 = vand.u32 2147483647, %v196
    %vm2701 = vcmp.le.f32.partialorder %v2700, 0.7853982
    %vm2702 = vcmp.lt.s32.totalorder %v196, 0
    %v2703 = vand.u32 %v196, 2139095040
    %v2704 = vshrl.u32 %v2703, 23
    %v2705 = vsub.s32 %v2704, 127
    %v2706 = vand.u32 2147483647, %v196
    %v2707 = vand.u32 %v2706, 8388607
    %v2708 = vor.u32 %v2707, 8388608
    %v2709 = vsub.s32 0, %v2708
    %v2710 = vadd.s32 %v2705, 1
    %vm2711 = vcmp.gt.s32.totalorder %v2710, 0
    %v2712 = vsel %vm2711, %v2710, 0
    %v2713 = vshrl.u32 %v2712, 5
    %v2714 = vand.u32 %v2712, 31
    %v2715 = vsub.s32 32, %v2714
    %v2716 = vshrl.u32 683565275, %v2715
    %v2717 = vshll.u32 683565275, %v2714
    %v2718 = vshrl.u32 2475754826, %v2715
    %v2719 = vor.u32 %v2717, %v2718
    %v2720 = vshll.u32 2475754826, %v2714
    %v2721 = vshrl.u32 2131351028, %v2715
    %v2722 = vor.u32 %v2720, %v2721
    %v2723 = vshll.u32 2131351028, %v2714
    %v2724 = vshrl.u32 2102212464, %v2715
    %v2725 = vor.u32 %v2723, %v2724
    %v2726 = vshll.u32 2102212464, %v2714
    %v2727 = vshrl.u32 920167782, %v2715
    %v2728 = vor.u32 %v2726, %v2727
    %v2729 = vshll.u32 920167782, %v2714
    %v2730 = vshrl.u32 1326507024, %v2715
    %v2731 = vor.u32 %v2729, %v2730
    %vm2732 = vcmp.lt.s32.totalorder %v2713, 1
    %vm2733 = vcmp.lt.s32.totalorder %v2713, 2
    %vm2734 = vcmp.lt.s32.totalorder %v2713, 3
    %vm2735 = vcmp.lt.s32.totalorder %v2713, 4
    %v2736 = vsel %vm2732, %v2716, %v2719
    %v2737 = vsel %vm2735, %v2725, 2102212464
    %v2738 = vsel %vm2734, %v2722, %v2737
    %v2739 = vsel %vm2733, %v2736, %v2738
    %v2740 = vsel %vm2732, %v2719, %v2722
    %v2741 = vsel %vm2735, %v2728, 920167782
    %v2742 = vsel %vm2734, %v2725, %v2741
    %v2743 = vsel %vm2733, %v2740, %v2742
    %v2744 = vsel %vm2732, %v2722, %v2725
    %v2745 = vsel %vm2735, %v2731, 1326507024
    %v2746 = vsel %vm2734, %v2728, %v2745
    %v2747 = vsel %vm2733, %v2744, %v2746
    %v2748 = vshll.u32 %v2708, 8
    %v2749 = vmul.u32.u64.compose %v2748, %v2747
    %v2750 = vextract.low.u32 %v2749
    %v2751 = vextract.high.u32 %v2749
    %v2752 = vmul.u32.u64.compose %v2748, %v2743
    %v2753 = vextract.low.u32 %v2752
    %v2754 = vextract.high.u32 %v2752
    %v2755 = vmul.u32 %v2748, %v2739
    %v2756 = vadd.s32 %v2751, %v2753
    %vm2757 = vc.u32 %v2751, %v2753
    %v2758 = vadd.s32 %v2754, 1
    %v2759 = vsel %vm2757, %v2758, %v2754
    %v2760 = vadd.s32 %v2755, %v2759
    %v2761 = vadd.s32 %v2760, 536870912
    %v2762 = vshrl.u32 %v2761, 30
    %v2763 = vshll.u32 %v2762, 30
    %v2764 = vsub.s32 %v2760, %v2763
    %vm2765 = vcmp.lt.s32.totalorder %v2764, 0
    %v2766 = vsub.s32 0, %v2764
    %v2767 = vsel %vm2765, %v2766, %v2764
    %v2768 = vclz %v2767
    %v2769 = vsub.s32 %v2768, 2
    %vm2770 = vcmp.gt.s32.totalorder 0, %v2769
    %v2771 = vsel %vm2770, 0, %v2769
    %v2772 = vsub.s32 32, %v2771
    %v2773 = vshll.u32 %v2764, %v2771
    %v2774 = vshrl.u32 %v2756, %v2772
    %v2775 = vor.u32 %v2773, %v2774
    %v2776 = vsub.s32 4294967266, %v2771
    %v2777 = vadd.s32 %v2776, 127
    %v2778 = vshll.u32 %v2777, 23
    %v2779 = vor.u32 4788187, %v2778
    %v2780 = vand.u32 2147483647, %v2779
    %v2782 = vcvt.s32.f32 %v2775
    %v2783 = vmul.f32 %v2782, %v2780
    %v2784 = vxor.u32 %v2783, 2147483648
    %v2785 = vsel %vm2702, %v2784, %v2783
    %v2786 = vsub.s32 4, %v2762
    %v2787 = vsel %vm2702, %v2786, %v2762
    %v2788 = vsel %vm2701, %v196, %v2785
    %v2789 = vsel %vm2701, 0, %v2787
    %v2790 = vcosq.f32.pop %v2788
    %v2791 = vsinq.f32.pop %v2788
    %vm2792 = vweird.f32 %v196
    %v2793 = vadd.s32 %v2789, 3
    %v2794 = vand.u32 %v2793, 3
    %vm2795 = vcmp.lt.s32.totalorder %v2794, 2
    %vm2796 = vcmp.eq.s32.totalorder %v2794, 0
    %v2797 = vxor.u32 %v2791, 2147483648
    %v2798 = vsel %vm2796, %v2790, %v2797
    %vm2799 = vcmp.eq.s32.totalorder %v2794, 2
    %v2800 = vxor.u32 %v2790, 2147483648
    %v2801 = vsel %vm2799, %v2800, %v2791
    %v2802 = vsel %vm2795, %v2798, %v2801
    %v2803 = vsel %vm2792, nan, %v2802
    %v2804 = vand.u32 2147483647, %v197
    %vm2805 = vcmp.le.f32.partialorder %v2804, 0.7853982
    %vm2806 = vcmp.lt.s32.totalorder %v197, 0
    %v2807 = vand.u32 %v197, 2139095040
    %v2808 = vshrl.u32 %v2807, 23
    %v2809 = vsub.s32 %v2808, 127
    %v2810 = vand.u32 2147483647, %v197
    %v2811 = vand.u32 %v2810, 8388607
    %v2812 = vor.u32 %v2811, 8388608
    %v2813 = vsub.s32 0, %v2812
    %v2814 = vadd.s32 %v2809, 1
    %vm2815 = vcmp.gt.s32.totalorder %v2814, 0
    %v2816 = vsel %vm2815, %v2814, 0
    %v2817 = vshrl.u32 %v2816, 5
    %v2818 = vand.u32 %v2816, 31
    %v2819 = vsub.s32 32, %v2818
    %v2820 = vshrl.u32 683565275, %v2819
    %v2821 = vshll.u32 683565275, %v2818
    %v2822 = vshrl.u32 2475754826, %v2819
    %v2823 = vor.u32 %v2821, %v2822
    %v2824 = vshll.u32 2475754826, %v2818
    %v2825 = vshrl.u32 2131351028, %v2819
    %v2826 = vor.u32 %v2824, %v2825
    %v2827 = vshll.u32 2131351028, %v2818
    %v2828 = vshrl.u32 2102212464, %v2819
    %v2829 = vor.u32 %v2827, %v2828
    %v2830 = vshll.u32 2102212464, %v2818
    %v2831 = vshrl.u32 920167782, %v2819
    %v2832 = vor.u32 %v2830, %v2831
    %v2833 = vshll.u32 920167782, %v2818
    %v2834 = vshrl.u32 1326507024, %v2819
    %v2835 = vor.u32 %v2833, %v2834
    %vm2836 = vcmp.lt.s32.totalorder %v2817, 1
    %vm2837 = vcmp.lt.s32.totalorder %v2817, 2
    %vm2838 = vcmp.lt.s32.totalorder %v2817, 3
    %vm2839 = vcmp.lt.s32.totalorder %v2817, 4
    %v2840 = vsel %vm2836, %v2820, %v2823
    %v2841 = vsel %vm2839, %v2829, 2102212464
    %v2842 = vsel %vm2838, %v2826, %v2841
    %v2843 = vsel %vm2837, %v2840, %v2842
    %v2844 = vsel %vm2836, %v2823, %v2826
    %v2845 = vsel %vm2839, %v2832, 920167782
    %v2846 = vsel %vm2838, %v2829, %v2845
    %v2847 = vsel %vm2837, %v2844, %v2846
    %v2848 = vsel %vm2836, %v2826, %v2829
    %v2849 = vsel %vm2839, %v2835, 1326507024
    %v2850 = vsel %vm2838, %v2832, %v2849
    %v2851 = vsel %vm2837, %v2848, %v2850
    %v2852 = vshll.u32 %v2812, 8
    %v2853 = vmul.u32.u64.compose %v2852, %v2851
    %v2854 = vextract.low.u32 %v2853
    %v2855 = vextract.high.u32 %v2853
    %v2856 = vmul.u32.u64.compose %v2852, %v2847
    %v2857 = vextract.low.u32 %v2856
    %v2858 = vextract.high.u32 %v2856
    %v2859 = vmul.u32 %v2852, %v2843
    %v2860 = vadd.s32 %v2855, %v2857
    %vm2861 = vc.u32 %v2855, %v2857
    %v2862 = vadd.s32 %v2858, 1
    %v2863 = vsel %vm2861, %v2862, %v2858
    %v2864 = vadd.s32 %v2859, %v2863
    %v2865 = vadd.s32 %v2864, 536870912
    %v2866 = vshrl.u32 %v2865, 30
    %v2867 = vshll.u32 %v2866, 30
    %v2868 = vsub.s32 %v2864, %v2867
    %vm2869 = vcmp.lt.s32.totalorder %v2868, 0
    %v2870 = vsub.s32 0, %v2868
    %v2871 = vsel %vm2869, %v2870, %v2868
    %v2872 = vclz %v2871
    %v2873 = vsub.s32 %v2872, 2
    %vm2874 = vcmp.gt.s32.totalorder 0, %v2873
    %v2875 = vsel %vm2874, 0, %v2873
    %v2876 = vsub.s32 32, %v2875
    %v2877 = vshll.u32 %v2868, %v2875
    %v2878 = vshrl.u32 %v2860, %v2876
    %v2879 = vor.u32 %v2877, %v2878
    %v2880 = vsub.s32 4294967266, %v2875
    %v2881 = vadd.s32 %v2880, 127
    %v2882 = vshll.u32 %v2881, 23
    %v2883 = vor.u32 4788187, %v2882
    %v2884 = vand.u32 2147483647, %v2883
    %v2886 = vcvt.s32.f32 %v2879
    %v2887 = vmul.f32 %v2886, %v2884
    %v2888 = vxor.u32 %v2887, 2147483648
    %v2889 = vsel %vm2806, %v2888, %v2887
    %v2890 = vsub.s32 4, %v2866
    %v2891 = vsel %vm2806, %v2890, %v2866
    %v2892 = vsel %vm2805, %v197, %v2889
    %v2893 = vsel %vm2805, 0, %v2891
    %v2894 = vcosq.f32.pop %v2892
    %v2895 = vsinq.f32.pop %v2892
    %vm2896 = vweird.f32 %v197
    %v2897 = vadd.s32 %v2893, 3
    %v2898 = vand.u32 %v2897, 3
    %vm2899 = vcmp.lt.s32.totalorder %v2898, 2
    %vm2900 = vcmp.eq.s32.totalorder %v2898, 0
    %v2901 = vxor.u32 %v2895, 2147483648
    %v2902 = vsel %vm2900, %v2894, %v2901
    %vm2903 = vcmp.eq.s32.totalorder %v2898, 2
    %v2904 = vxor.u32 %v2894, 2147483648
    %v2905 = vsel %vm2903, %v2904, %v2895
    %v2906 = vsel %vm2899, %v2902, %v2905
    %v2907 = vsel %vm2896, nan, %v2906
    %v2908 = vand.u32 2147483647, %v198
    %vm2909 = vcmp.le.f32.partialorder %v2908, 0.7853982
    %vm2910 = vcmp.lt.s32.totalorder %v198, 0
    %v2911 = vand.u32 %v198, 2139095040
    %v2912 = vshrl.u32 %v2911, 23
    %v2913 = vsub.s32 %v2912, 127
    %v2914 = vand.u32 2147483647, %v198
    %v2915 = vand.u32 %v2914, 8388607
    %v2916 = vor.u32 %v2915, 8388608
    %v2917 = vsub.s32 0, %v2916
    %v2918 = vadd.s32 %v2913, 1
    %vm2919 = vcmp.gt.s32.totalorder %v2918, 0
    %v2920 = vsel %vm2919, %v2918, 0
    %v2921 = vshrl.u32 %v2920, 5
    %v2922 = vand.u32 %v2920, 31
    %v2923 = vsub.s32 32, %v2922
    %v2924 = vshrl.u32 683565275, %v2923
    %v2925 = vshll.u32 683565275, %v2922
    %v2926 = vshrl.u32 2475754826, %v2923
    %v2927 = vor.u32 %v2925, %v2926
    %v2928 = vshll.u32 2475754826, %v2922
    %v2929 = vshrl.u32 2131351028, %v2923
    %v2930 = vor.u32 %v2928, %v2929
    %v2931 = vshll.u32 2131351028, %v2922
    %v2932 = vshrl.u32 2102212464, %v2923
    %v2933 = vor.u32 %v2931, %v2932
    %v2934 = vshll.u32 2102212464, %v2922
    %v2935 = vshrl.u32 920167782, %v2923
    %v2936 = vor.u32 %v2934, %v2935
    %v2937 = vshll.u32 920167782, %v2922
    %v2938 = vshrl.u32 1326507024, %v2923
    %v2939 = vor.u32 %v2937, %v2938
    %vm2940 = vcmp.lt.s32.totalorder %v2921, 1
    %vm2941 = vcmp.lt.s32.totalorder %v2921, 2
    %vm2942 = vcmp.lt.s32.totalorder %v2921, 3
    %vm2943 = vcmp.lt.s32.totalorder %v2921, 4
    %v2944 = vsel %vm2940, %v2924, %v2927
    %v2945 = vsel %vm2943, %v2933, 2102212464
    %v2946 = vsel %vm2942, %v2930, %v2945
    %v2947 = vsel %vm2941, %v2944, %v2946
    %v2948 = vsel %vm2940, %v2927, %v2930
    %v2949 = vsel %vm2943, %v2936, 920167782
    %v2950 = vsel %vm2942, %v2933, %v2949
    %v2951 = vsel %vm2941, %v2948, %v2950
    %v2952 = vsel %vm2940, %v2930, %v2933
    %v2953 = vsel %vm2943, %v2939, 1326507024
    %v2954 = vsel %vm2942, %v2936, %v2953
    %v2955 = vsel %vm2941, %v2952, %v2954
    %v2956 = vshll.u32 %v2916, 8
    %v2957 = vmul.u32.u64.compose %v2956, %v2955
    %v2958 = vextract.low.u32 %v2957
    %v2959 = vextract.high.u32 %v2957
    %v2960 = vmul.u32.u64.compose %v2956, %v2951
    %v2961 = vextract.low.u32 %v2960
    %v2962 = vextract.high.u32 %v2960
    %v2963 = vmul.u32 %v2956, %v2947
    %v2964 = vadd.s32 %v2959, %v2961
    %vm2965 = vc.u32 %v2959, %v2961
    %v2966 = vadd.s32 %v2962, 1
    %v2967 = vsel %vm2965, %v2966, %v2962
    %v2968 = vadd.s32 %v2963, %v2967
    %v2969 = vadd.s32 %v2968, 536870912
    %v2970 = vshrl.u32 %v2969, 30
    %v2971 = vshll.u32 %v2970, 30
    %v2972 = vsub.s32 %v2968, %v2971
    %vm2973 = vcmp.lt.s32.totalorder %v2972, 0
    %v2974 = vsub.s32 0, %v2972
    %v2975 = vsel %vm2973, %v2974, %v2972
    %v2976 = vclz %v2975
    %v2977 = vsub.s32 %v2976, 2
    %vm2978 = vcmp.gt.s32.totalorder 0, %v2977
    %v2979 = vsel %vm2978, 0, %v2977
    %v2980 = vsub.s32 32, %v2979
    %v2981 = vshll.u32 %v2972, %v2979
    %v2982 = vshrl.u32 %v2964, %v2980
    %v2983 = vor.u32 %v2981, %v2982
    %v2984 = vsub.s32 4294967266, %v2979
    %v2985 = vadd.s32 %v2984, 127
    %v2986 = vshll.u32 %v2985, 23
    %v2987 = vor.u32 4788187, %v2986
    %v2988 = vand.u32 2147483647, %v2987
    %v2990 = vcvt.s32.f32 %v2983
    %v2991 = vmul.f32 %v2990, %v2988
    %v2992 = vxor.u32 %v2991, 2147483648
    %v2993 = vsel %vm2910, %v2992, %v2991
    %v2994 = vsub.s32 4, %v2970
    %v2995 = vsel %vm2910, %v2994, %v2970
    %v2996 = vsel %vm2909, %v198, %v2993
    %v2997 = vsel %vm2909, 0, %v2995
    %v2998 = vcosq.f32.pop %v2996
    %v2999 = vsinq.f32.pop %v2996
    %vm3000 = vweird.f32 %v198
    %v3001 = vadd.s32 %v2997, 3
    %v3002 = vand.u32 %v3001, 3
    %vm3003 = vcmp.lt.s32.totalorder %v3002, 2
    %vm3004 = vcmp.eq.s32.totalorder %v3002, 0
    %v3005 = vxor.u32 %v2999, 2147483648
    %v3006 = vsel %vm3004, %v2998, %v3005
    %vm3007 = vcmp.eq.s32.totalorder %v3002, 2
    %v3008 = vxor.u32 %v2998, 2147483648
    %v3009 = vsel %vm3007, %v3008, %v2999
    %v3010 = vsel %vm3003, %v3006, %v3009
    %v3011 = vsel %vm3000, nan, %v3010
    %v3012 = vand.u32 2147483647, %v199
    %vm3013 = vcmp.le.f32.partialorder %v3012, 0.7853982
    %vm3014 = vcmp.lt.s32.totalorder %v199, 0
    %v3015 = vand.u32 %v199, 2139095040
    %v3016 = vshrl.u32 %v3015, 23
    %v3017 = vsub.s32 %v3016, 127
    %v3018 = vand.u32 2147483647, %v199
    %v3019 = vand.u32 %v3018, 8388607
    %v3020 = vor.u32 %v3019, 8388608
    %v3021 = vsub.s32 0, %v3020
    %v3022 = vadd.s32 %v3017, 1
    %vm3023 = vcmp.gt.s32.totalorder %v3022, 0
    %v3024 = vsel %vm3023, %v3022, 0
    %v3025 = vshrl.u32 %v3024, 5
    %v3026 = vand.u32 %v3024, 31
    %v3027 = vsub.s32 32, %v3026
    %v3028 = vshrl.u32 683565275, %v3027
    %v3029 = vshll.u32 683565275, %v3026
    %v3030 = vshrl.u32 2475754826, %v3027
    %v3031 = vor.u32 %v3029, %v3030
    %v3032 = vshll.u32 2475754826, %v3026
    %v3033 = vshrl.u32 2131351028, %v3027
    %v3034 = vor.u32 %v3032, %v3033
    %v3035 = vshll.u32 2131351028, %v3026
    %v3036 = vshrl.u32 2102212464, %v3027
    %v3037 = vor.u32 %v3035, %v3036
    %v3038 = vshll.u32 2102212464, %v3026
    %v3039 = vshrl.u32 920167782, %v3027
    %v3040 = vor.u32 %v3038, %v3039
    %v3041 = vshll.u32 920167782, %v3026
    %v3042 = vshrl.u32 1326507024, %v3027
    %v3043 = vor.u32 %v3041, %v3042
    %vm3044 = vcmp.lt.s32.totalorder %v3025, 1
    %vm3045 = vcmp.lt.s32.totalorder %v3025, 2
    %vm3046 = vcmp.lt.s32.totalorder %v3025, 3
    %vm3047 = vcmp.lt.s32.totalorder %v3025, 4
    %v3048 = vsel %vm3044, %v3028, %v3031
    %v3049 = vsel %vm3047, %v3037, 2102212464
    %v3050 = vsel %vm3046, %v3034, %v3049
    %v3051 = vsel %vm3045, %v3048, %v3050
    %v3052 = vsel %vm3044, %v3031, %v3034
    %v3053 = vsel %vm3047, %v3040, 920167782
    %v3054 = vsel %vm3046, %v3037, %v3053
    %v3055 = vsel %vm3045, %v3052, %v3054
    %v3056 = vsel %vm3044, %v3034, %v3037
    %v3057 = vsel %vm3047, %v3043, 1326507024
    %v3058 = vsel %vm3046, %v3040, %v3057
    %v3059 = vsel %vm3045, %v3056, %v3058
    %v3060 = vshll.u32 %v3020, 8
    %v3061 = vmul.u32.u64.compose %v3060, %v3059
    %v3062 = vextract.low.u32 %v3061
    %v3063 = vextract.high.u32 %v3061
    %v3064 = vmul.u32.u64.compose %v3060, %v3055
    %v3065 = vextract.low.u32 %v3064
    %v3066 = vextract.high.u32 %v3064
    %v3067 = vmul.u32 %v3060, %v3051
    %v3068 = vadd.s32 %v3063, %v3065
    %vm3069 = vc.u32 %v3063, %v3065
    %v3070 = vadd.s32 %v3066, 1
    %v3071 = vsel %vm3069, %v3070, %v3066
    %v3072 = vadd.s32 %v3067, %v3071
    %v3073 = vadd.s32 %v3072, 536870912
    %v3074 = vshrl.u32 %v3073, 30
    %v3075 = vshll.u32 %v3074, 30
    %v3076 = vsub.s32 %v3072, %v3075
    %vm3077 = vcmp.lt.s32.totalorder %v3076, 0
    %v3078 = vsub.s32 0, %v3076
    %v3079 = vsel %vm3077, %v3078, %v3076
    %v3080 = vclz %v3079
    %v3081 = vsub.s32 %v3080, 2
    %vm3082 = vcmp.gt.s32.totalorder 0, %v3081
    %v3083 = vsel %vm3082, 0, %v3081
    %v3084 = vsub.s32 32, %v3083
    %v3085 = vshll.u32 %v3076, %v3083
    %v3086 = vshrl.u32 %v3068, %v3084
    %v3087 = vor.u32 %v3085, %v3086
    %v3088 = vsub.s32 4294967266, %v3083
    %v3089 = vadd.s32 %v3088, 127
    %v3090 = vshll.u32 %v3089, 23
    %v3091 = vor.u32 4788187, %v3090
    %v3092 = vand.u32 2147483647, %v3091
    %v3094 = vcvt.s32.f32 %v3087
    %v3095 = vmul.f32 %v3094, %v3092
    %v3096 = vxor.u32 %v3095, 2147483648
    %v3097 = vsel %vm3014, %v3096, %v3095
    %v3098 = vsub.s32 4, %v3074
    %v3099 = vsel %vm3014, %v3098, %v3074
    %v3100 = vsel %vm3013, %v199, %v3097
    %v3101 = vsel %vm3013, 0, %v3099
    %v3102 = vcosq.f32.pop %v3100
    %v3103 = vsinq.f32.pop %v3100
    %vm3104 = vweird.f32 %v199
    %v3105 = vadd.s32 %v3101, 3
    %v3106 = vand.u32 %v3105, 3
    %vm3107 = vcmp.lt.s32.totalorder %v3106, 2
    %vm3108 = vcmp.eq.s32.totalorder %v3106, 0
    %v3109 = vxor.u32 %v3103, 2147483648
    %v3110 = vsel %vm3108, %v3102, %v3109
    %vm3111 = vcmp.eq.s32.totalorder %v3106, 2
    %v3112 = vxor.u32 %v3102, 2147483648
    %v3113 = vsel %vm3111, %v3112, %v3103
    %v3114 = vsel %vm3107, %v3110, %v3113
    %v3115 = vsel %vm3104, nan, %v3114
    %v3116 = vand.u32 2147483647, %v200
    %vm3117 = vcmp.le.f32.partialorder %v3116, 0.7853982
    %vm3118 = vcmp.lt.s32.totalorder %v200, 0
    %v3119 = vand.u32 %v200, 2139095040
    %v3120 = vshrl.u32 %v3119, 23
    %v3121 = vsub.s32 %v3120, 127
    %v3122 = vand.u32 2147483647, %v200
    %v3123 = vand.u32 %v3122, 8388607
    %v3124 = vor.u32 %v3123, 8388608
    %v3125 = vsub.s32 0, %v3124
    %v3126 = vadd.s32 %v3121, 1
    %vm3127 = vcmp.gt.s32.totalorder %v3126, 0
    %v3128 = vsel %vm3127, %v3126, 0
    %v3129 = vshrl.u32 %v3128, 5
    %v3130 = vand.u32 %v3128, 31
    %v3131 = vsub.s32 32, %v3130
    %v3132 = vshrl.u32 683565275, %v3131
    %v3133 = vshll.u32 683565275, %v3130
    %v3134 = vshrl.u32 2475754826, %v3131
    %v3135 = vor.u32 %v3133, %v3134
    %v3136 = vshll.u32 2475754826, %v3130
    %v3137 = vshrl.u32 2131351028, %v3131
    %v3138 = vor.u32 %v3136, %v3137
    %v3139 = vshll.u32 2131351028, %v3130
    %v3140 = vshrl.u32 2102212464, %v3131
    %v3141 = vor.u32 %v3139, %v3140
    %v3142 = vshll.u32 2102212464, %v3130
    %v3143 = vshrl.u32 920167782, %v3131
    %v3144 = vor.u32 %v3142, %v3143
    %v3145 = vshll.u32 920167782, %v3130
    %v3146 = vshrl.u32 1326507024, %v3131
    %v3147 = vor.u32 %v3145, %v3146
    %vm3148 = vcmp.lt.s32.totalorder %v3129, 1
    %vm3149 = vcmp.lt.s32.totalorder %v3129, 2
    %vm3150 = vcmp.lt.s32.totalorder %v3129, 3
    %vm3151 = vcmp.lt.s32.totalorder %v3129, 4
    %v3152 = vsel %vm3148, %v3132, %v3135
    %v3153 = vsel %vm3151, %v3141, 2102212464
    %v3154 = vsel %vm3150, %v3138, %v3153
    %v3155 = vsel %vm3149, %v3152, %v3154
    %v3156 = vsel %vm3148, %v3135, %v3138
    %v3157 = vsel %vm3151, %v3144, 920167782
    %v3158 = vsel %vm3150, %v3141, %v3157
    %v3159 = vsel %vm3149, %v3156, %v3158
    %v3160 = vsel %vm3148, %v3138, %v3141
    %v3161 = vsel %vm3151, %v3147, 1326507024
    %v3162 = vsel %vm3150, %v3144, %v3161
    %v3163 = vsel %vm3149, %v3160, %v3162
    %v3164 = vshll.u32 %v3124, 8
    %v3165 = vmul.u32.u64.compose %v3164, %v3163
    %v3166 = vextract.low.u32 %v3165
    %v3167 = vextract.high.u32 %v3165
    %v3168 = vmul.u32.u64.compose %v3164, %v3159
    %v3169 = vextract.low.u32 %v3168
    %v3170 = vextract.high.u32 %v3168
    %v3171 = vmul.u32 %v3164, %v3155
    %v3172 = vadd.s32 %v3167, %v3169
    %vm3173 = vc.u32 %v3167, %v3169
    %v3174 = vadd.s32 %v3170, 1
    %v3175 = vsel %vm3173, %v3174, %v3170
    %v3176 = vadd.s32 %v3171, %v3175
    %v3177 = vadd.s32 %v3176, 536870912
    %v3178 = vshrl.u32 %v3177, 30
    %v3179 = vshll.u32 %v3178, 30
    %v3180 = vsub.s32 %v3176, %v3179
    %vm3181 = vcmp.lt.s32.totalorder %v3180, 0
    %v3182 = vsub.s32 0, %v3180
    %v3183 = vsel %vm3181, %v3182, %v3180
    %v3184 = vclz %v3183
    %v3185 = vsub.s32 %v3184, 2
    %vm3186 = vcmp.gt.s32.totalorder 0, %v3185
    %v3187 = vsel %vm3186, 0, %v3185
    %v3188 = vsub.s32 32, %v3187
    %v3189 = vshll.u32 %v3180, %v3187
    %v3190 = vshrl.u32 %v3172, %v3188
    %v3191 = vor.u32 %v3189, %v3190
    %v3192 = vsub.s32 4294967266, %v3187
    %v3193 = vadd.s32 %v3192, 127
    %v3194 = vshll.u32 %v3193, 23
    %v3195 = vor.u32 4788187, %v3194
    %v3196 = vand.u32 2147483647, %v3195
    %v3198 = vcvt.s32.f32 %v3191
    %v3199 = vmul.f32 %v3198, %v3196
    %v3200 = vxor.u32 %v3199, 2147483648
    %v3201 = vsel %vm3118, %v3200, %v3199
    %v3202 = vsub.s32 4, %v3178
    %v3203 = vsel %vm3118, %v3202, %v3178
    %v3204 = vsel %vm3117, %v200, %v3201
    %v3205 = vsel %vm3117, 0, %v3203
    %v3206 = vcosq.f32.pop %v3204
    %v3207 = vsinq.f32.pop %v3204
    %vm3208 = vweird.f32 %v200
    %v3209 = vadd.s32 %v3205, 3
    %v3210 = vand.u32 %v3209, 3
    %vm3211 = vcmp.lt.s32.totalorder %v3210, 2
    %vm3212 = vcmp.eq.s32.totalorder %v3210, 0
    %v3213 = vxor.u32 %v3207, 2147483648
    %v3214 = vsel %vm3212, %v3206, %v3213
    %vm3215 = vcmp.eq.s32.totalorder %v3210, 2
    %v3216 = vxor.u32 %v3206, 2147483648
    %v3217 = vsel %vm3215, %v3216, %v3207
    %v3218 = vsel %vm3211, %v3214, %v3217
    %v3219 = vsel %vm3208, nan, %v3218
    %v3220 = vand.u32 2147483647, %v201
    %vm3221 = vcmp.le.f32.partialorder %v3220, 0.7853982
    %vm3222 = vcmp.lt.s32.totalorder %v201, 0
    %v3223 = vand.u32 %v201, 2139095040
    %v3224 = vshrl.u32 %v3223, 23
    %v3225 = vsub.s32 %v3224, 127
    %v3226 = vand.u32 2147483647, %v201
    %v3227 = vand.u32 %v3226, 8388607
    %v3228 = vor.u32 %v3227, 8388608
    %v3229 = vsub.s32 0, %v3228
    %v3230 = vadd.s32 %v3225, 1
    %vm3231 = vcmp.gt.s32.totalorder %v3230, 0
    %v3232 = vsel %vm3231, %v3230, 0
    %v3233 = vshrl.u32 %v3232, 5
    %v3234 = vand.u32 %v3232, 31
    %v3235 = vsub.s32 32, %v3234
    %v3236 = vshrl.u32 683565275, %v3235
    %v3237 = vshll.u32 683565275, %v3234
    %v3238 = vshrl.u32 2475754826, %v3235
    %v3239 = vor.u32 %v3237, %v3238
    %v3240 = vshll.u32 2475754826, %v3234
    %v3241 = vshrl.u32 2131351028, %v3235
    %v3242 = vor.u32 %v3240, %v3241
    %v3243 = vshll.u32 2131351028, %v3234
    %v3244 = vshrl.u32 2102212464, %v3235
    %v3245 = vor.u32 %v3243, %v3244
    %v3246 = vshll.u32 2102212464, %v3234
    %v3247 = vshrl.u32 920167782, %v3235
    %v3248 = vor.u32 %v3246, %v3247
    %v3249 = vshll.u32 920167782, %v3234
    %v3250 = vshrl.u32 1326507024, %v3235
    %v3251 = vor.u32 %v3249, %v3250
    %vm3252 = vcmp.lt.s32.totalorder %v3233, 1
    %vm3253 = vcmp.lt.s32.totalorder %v3233, 2
    %vm3254 = vcmp.lt.s32.totalorder %v3233, 3
    %vm3255 = vcmp.lt.s32.totalorder %v3233, 4
    %v3256 = vsel %vm3252, %v3236, %v3239
    %v3257 = vsel %vm3255, %v3245, 2102212464
    %v3258 = vsel %vm3254, %v3242, %v3257
    %v3259 = vsel %vm3253, %v3256, %v3258
    %v3260 = vsel %vm3252, %v3239, %v3242
    %v3261 = vsel %vm3255, %v3248, 920167782
    %v3262 = vsel %vm3254, %v3245, %v3261
    %v3263 = vsel %vm3253, %v3260, %v3262
    %v3264 = vsel %vm3252, %v3242, %v3245
    %v3265 = vsel %vm3255, %v3251, 1326507024
    %v3266 = vsel %vm3254, %v3248, %v3265
    %v3267 = vsel %vm3253, %v3264, %v3266
    %v3268 = vshll.u32 %v3228, 8
    %v3269 = vmul.u32.u64.compose %v3268, %v3267
    %v3270 = vextract.low.u32 %v3269
    %v3271 = vextract.high.u32 %v3269
    %v3272 = vmul.u32.u64.compose %v3268, %v3263
    %v3273 = vextract.low.u32 %v3272
    %v3274 = vextract.high.u32 %v3272
    %v3275 = vmul.u32 %v3268, %v3259
    %v3276 = vadd.s32 %v3271, %v3273
    %vm3277 = vc.u32 %v3271, %v3273
    %v3278 = vadd.s32 %v3274, 1
    %v3279 = vsel %vm3277, %v3278, %v3274
    %v3280 = vadd.s32 %v3275, %v3279
    %v3281 = vadd.s32 %v3280, 536870912
    %v3282 = vshrl.u32 %v3281, 30
    %v3283 = vshll.u32 %v3282, 30
    %v3284 = vsub.s32 %v3280, %v3283
    %vm3285 = vcmp.lt.s32.totalorder %v3284, 0
    %v3286 = vsub.s32 0, %v3284
    %v3287 = vsel %vm3285, %v3286, %v3284
    %v3288 = vclz %v3287
    %v3289 = vsub.s32 %v3288, 2
    %vm3290 = vcmp.gt.s32.totalorder 0, %v3289
    %v3291 = vsel %vm3290, 0, %v3289
    %v3292 = vsub.s32 32, %v3291
    %v3293 = vshll.u32 %v3284, %v3291
    %v3294 = vshrl.u32 %v3276, %v3292
    %v3295 = vor.u32 %v3293, %v3294
    %v3296 = vsub.s32 4294967266, %v3291
    %v3297 = vadd.s32 %v3296, 127
    %v3298 = vshll.u32 %v3297, 23
    %v3299 = vor.u32 4788187, %v3298
    %v3300 = vand.u32 2147483647, %v3299
    %v3302 = vcvt.s32.f32 %v3295
    %v3303 = vmul.f32 %v3302, %v3300
    %v3304 = vxor.u32 %v3303, 2147483648
    %v3305 = vsel %vm3222, %v3304, %v3303
    %v3306 = vsub.s32 4, %v3282
    %v3307 = vsel %vm3222, %v3306, %v3282
    %v3308 = vsel %vm3221, %v201, %v3305
    %v3309 = vsel %vm3221, 0, %v3307
    %v3310 = vcosq.f32.pop %v3308
    %v3311 = vsinq.f32.pop %v3308
    %vm3312 = vweird.f32 %v201
    %v3313 = vadd.s32 %v3309, 3
    %v3314 = vand.u32 %v3313, 3
    %vm3315 = vcmp.lt.s32.totalorder %v3314, 2
    %vm3316 = vcmp.eq.s32.totalorder %v3314, 0
    %v3317 = vxor.u32 %v3311, 2147483648
    %v3318 = vsel %vm3316, %v3310, %v3317
    %vm3319 = vcmp.eq.s32.totalorder %v3314, 2
    %v3320 = vxor.u32 %v3310, 2147483648
    %v3321 = vsel %vm3319, %v3320, %v3311
    %v3322 = vsel %vm3315, %v3318, %v3321
    %v3323 = vsel %vm3312, nan, %v3322
    %v3324 = vand.u32 2147483647, %v202
    %vm3325 = vcmp.le.f32.partialorder %v3324, 0.7853982
    %vm3326 = vcmp.lt.s32.totalorder %v202, 0
    %v3327 = vand.u32 %v202, 2139095040
    %v3328 = vshrl.u32 %v3327, 23
    %v3329 = vsub.s32 %v3328, 127
    %v3330 = vand.u32 2147483647, %v202
    %v3331 = vand.u32 %v3330, 8388607
    %v3332 = vor.u32 %v3331, 8388608
    %v3333 = vsub.s32 0, %v3332
    %v3334 = vadd.s32 %v3329, 1
    %vm3335 = vcmp.gt.s32.totalorder %v3334, 0
    %v3336 = vsel %vm3335, %v3334, 0
    %v3337 = vshrl.u32 %v3336, 5
    %v3338 = vand.u32 %v3336, 31
    %v3339 = vsub.s32 32, %v3338
    %v3340 = vshrl.u32 683565275, %v3339
    %v3341 = vshll.u32 683565275, %v3338
    %v3342 = vshrl.u32 2475754826, %v3339
    %v3343 = vor.u32 %v3341, %v3342
    %v3344 = vshll.u32 2475754826, %v3338
    %v3345 = vshrl.u32 2131351028, %v3339
    %v3346 = vor.u32 %v3344, %v3345
    %v3347 = vshll.u32 2131351028, %v3338
    %v3348 = vshrl.u32 2102212464, %v3339
    %v3349 = vor.u32 %v3347, %v3348
    %v3350 = vshll.u32 2102212464, %v3338
    %v3351 = vshrl.u32 920167782, %v3339
    %v3352 = vor.u32 %v3350, %v3351
    %v3353 = vshll.u32 920167782, %v3338
    %v3354 = vshrl.u32 1326507024, %v3339
    %v3355 = vor.u32 %v3353, %v3354
    %vm3356 = vcmp.lt.s32.totalorder %v3337, 1
    %vm3357 = vcmp.lt.s32.totalorder %v3337, 2
    %vm3358 = vcmp.lt.s32.totalorder %v3337, 3
    %vm3359 = vcmp.lt.s32.totalorder %v3337, 4
    %v3360 = vsel %vm3356, %v3340, %v3343
    %v3361 = vsel %vm3359, %v3349, 2102212464
    %v3362 = vsel %vm3358, %v3346, %v3361
    %v3363 = vsel %vm3357, %v3360, %v3362
    %v3364 = vsel %vm3356, %v3343, %v3346
    %v3365 = vsel %vm3359, %v3352, 920167782
    %v3366 = vsel %vm3358, %v3349, %v3365
    %v3367 = vsel %vm3357, %v3364, %v3366
    %v3368 = vsel %vm3356, %v3346, %v3349
    %v3369 = vsel %vm3359, %v3355, 1326507024
    %v3370 = vsel %vm3358, %v3352, %v3369
    %v3371 = vsel %vm3357, %v3368, %v3370
    %v3372 = vshll.u32 %v3332, 8
    %v3373 = vmul.u32.u64.compose %v3372, %v3371
    %v3374 = vextract.low.u32 %v3373
    %v3375 = vextract.high.u32 %v3373
    %v3376 = vmul.u32.u64.compose %v3372, %v3367
    %v3377 = vextract.low.u32 %v3376
    %v3378 = vextract.high.u32 %v3376
    %v3379 = vmul.u32 %v3372, %v3363
    %v3380 = vadd.s32 %v3375, %v3377
    %vm3381 = vc.u32 %v3375, %v3377
    %v3382 = vadd.s32 %v3378, 1
    %v3383 = vsel %vm3381, %v3382, %v3378
    %v3384 = vadd.s32 %v3379, %v3383
    %v3385 = vadd.s32 %v3384, 536870912
    %v3386 = vshrl.u32 %v3385, 30
    %v3387 = vshll.u32 %v3386, 30
    %v3388 = vsub.s32 %v3384, %v3387
    %vm3389 = vcmp.lt.s32.totalorder %v3388, 0
    %v3390 = vsub.s32 0, %v3388
    %v3391 = vsel %vm3389, %v3390, %v3388
    %v3392 = vclz %v3391
    %v3393 = vsub.s32 %v3392, 2
    %vm3394 = vcmp.gt.s32.totalorder 0, %v3393
    %v3395 = vsel %vm3394, 0, %v3393
    %v3396 = vsub.s32 32, %v3395
    %v3397 = vshll.u32 %v3388, %v3395
    %v3398 = vshrl.u32 %v3380, %v3396
    %v3399 = vor.u32 %v3397, %v3398
    %v3400 = vsub.s32 4294967266, %v3395
    %v3401 = vadd.s32 %v3400, 127
    %v3402 = vshll.u32 %v3401, 23
    %v3403 = vor.u32 4788187, %v3402
    %v3404 = vand.u32 2147483647, %v3403
    %v3406 = vcvt.s32.f32 %v3399
    %v3407 = vmul.f32 %v3406, %v3404
    %v3408 = vxor.u32 %v3407, 2147483648
    %v3409 = vsel %vm3326, %v3408, %v3407
    %v3410 = vsub.s32 4, %v3386
    %v3411 = vsel %vm3326, %v3410, %v3386
    %v3412 = vsel %vm3325, %v202, %v3409
    %v3413 = vsel %vm3325, 0, %v3411
    %v3414 = vcosq.f32.pop %v3412
    %v3415 = vsinq.f32.pop %v3412
    %vm3416 = vweird.f32 %v202
    %v3417 = vadd.s32 %v3413, 3
    %v3418 = vand.u32 %v3417, 3
    %vm3419 = vcmp.lt.s32.totalorder %v3418, 2
    %vm3420 = vcmp.eq.s32.totalorder %v3418, 0
    %v3421 = vxor.u32 %v3415, 2147483648
    %v3422 = vsel %vm3420, %v3414, %v3421
    %vm3423 = vcmp.eq.s32.totalorder %v3418, 2
    %v3424 = vxor.u32 %v3414, 2147483648
    %v3425 = vsel %vm3423, %v3424, %v3415
    %v3426 = vsel %vm3419, %v3422, %v3425
    %v3427 = vsel %vm3416, nan, %v3426
    %v3428 = vand.u32 2147483647, %v203
    %vm3429 = vcmp.le.f32.partialorder %v3428, 0.7853982
    %vm3430 = vcmp.lt.s32.totalorder %v203, 0
    %v3431 = vand.u32 %v203, 2139095040
    %v3432 = vshrl.u32 %v3431, 23
    %v3433 = vsub.s32 %v3432, 127
    %v3434 = vand.u32 2147483647, %v203
    %v3435 = vand.u32 %v3434, 8388607
    %v3436 = vor.u32 %v3435, 8388608
    %v3437 = vsub.s32 0, %v3436
    %v3438 = vadd.s32 %v3433, 1
    %vm3439 = vcmp.gt.s32.totalorder %v3438, 0
    %v3440 = vsel %vm3439, %v3438, 0
    %v3441 = vshrl.u32 %v3440, 5
    %v3442 = vand.u32 %v3440, 31
    %v3443 = vsub.s32 32, %v3442
    %v3444 = vshrl.u32 683565275, %v3443
    %v3445 = vshll.u32 683565275, %v3442
    %v3446 = vshrl.u32 2475754826, %v3443
    %v3447 = vor.u32 %v3445, %v3446
    %v3448 = vshll.u32 2475754826, %v3442
    %v3449 = vshrl.u32 2131351028, %v3443
    %v3450 = vor.u32 %v3448, %v3449
    %v3451 = vshll.u32 2131351028, %v3442
    %v3452 = vshrl.u32 2102212464, %v3443
    %v3453 = vor.u32 %v3451, %v3452
    %v3454 = vshll.u32 2102212464, %v3442
    %v3455 = vshrl.u32 920167782, %v3443
    %v3456 = vor.u32 %v3454, %v3455
    %v3457 = vshll.u32 920167782, %v3442
    %v3458 = vshrl.u32 1326507024, %v3443
    %v3459 = vor.u32 %v3457, %v3458
    %vm3460 = vcmp.lt.s32.totalorder %v3441, 1
    %vm3461 = vcmp.lt.s32.totalorder %v3441, 2
    %vm3462 = vcmp.lt.s32.totalorder %v3441, 3
    %vm3463 = vcmp.lt.s32.totalorder %v3441, 4
    %v3464 = vsel %vm3460, %v3444, %v3447
    %v3465 = vsel %vm3463, %v3453, 2102212464
    %v3466 = vsel %vm3462, %v3450, %v3465
    %v3467 = vsel %vm3461, %v3464, %v3466
    %v3468 = vsel %vm3460, %v3447, %v3450
    %v3469 = vsel %vm3463, %v3456, 920167782
    %v3470 = vsel %vm3462, %v3453, %v3469
    %v3471 = vsel %vm3461, %v3468, %v3470
    %v3472 = vsel %vm3460, %v3450, %v3453
    %v3473 = vsel %vm3463, %v3459, 1326507024
    %v3474 = vsel %vm3462, %v3456, %v3473
    %v3475 = vsel %vm3461, %v3472, %v3474
    %v3476 = vshll.u32 %v3436, 8
    %v3477 = vmul.u32.u64.compose %v3476, %v3475
    %v3478 = vextract.low.u32 %v3477
    %v3479 = vextract.high.u32 %v3477
    %v3480 = vmul.u32.u64.compose %v3476, %v3471
    %v3481 = vextract.low.u32 %v3480
    %v3482 = vextract.high.u32 %v3480
    %v3483 = vmul.u32 %v3476, %v3467
    %v3484 = vadd.s32 %v3479, %v3481
    %vm3485 = vc.u32 %v3479, %v3481
    %v3486 = vadd.s32 %v3482, 1
    %v3487 = vsel %vm3485, %v3486, %v3482
    %v3488 = vadd.s32 %v3483, %v3487
    %v3489 = vadd.s32 %v3488, 536870912
    %v3490 = vshrl.u32 %v3489, 30
    %v3491 = vshll.u32 %v3490, 30
    %v3492 = vsub.s32 %v3488, %v3491
    %vm3493 = vcmp.lt.s32.totalorder %v3492, 0
    %v3494 = vsub.s32 0, %v3492
    %v3495 = vsel %vm3493, %v3494, %v3492
    %v3496 = vclz %v3495
    %v3497 = vsub.s32 %v3496, 2
    %vm3498 = vcmp.gt.s32.totalorder 0, %v3497
    %v3499 = vsel %vm3498, 0, %v3497
    %v3500 = vsub.s32 32, %v3499
    %v3501 = vshll.u32 %v3492, %v3499
    %v3502 = vshrl.u32 %v3484, %v3500
    %v3503 = vor.u32 %v3501, %v3502
    %v3504 = vsub.s32 4294967266, %v3499
    %v3505 = vadd.s32 %v3504, 127
    %v3506 = vshll.u32 %v3505, 23
    %v3507 = vor.u32 4788187, %v3506
    %v3508 = vand.u32 2147483647, %v3507
    %v3510 = vcvt.s32.f32 %v3503
    %v3511 = vmul.f32 %v3510, %v3508
    %v3512 = vxor.u32 %v3511, 2147483648
    %v3513 = vsel %vm3430, %v3512, %v3511
    %v3514 = vsub.s32 4, %v3490
    %v3515 = vsel %vm3430, %v3514, %v3490
    %v3516 = vsel %vm3429, %v203, %v3513
    %v3517 = vsel %vm3429, 0, %v3515
    %v3518 = vcosq.f32.pop %v3516
    %v3519 = vsinq.f32.pop %v3516
    %vm3520 = vweird.f32 %v203
    %v3521 = vadd.s32 %v3517, 3
    %v3522 = vand.u32 %v3521, 3
    %vm3523 = vcmp.lt.s32.totalorder %v3522, 2
    %vm3524 = vcmp.eq.s32.totalorder %v3522, 0
    %v3525 = vxor.u32 %v3519, 2147483648
    %v3526 = vsel %vm3524, %v3518, %v3525
    %vm3527 = vcmp.eq.s32.totalorder %v3522, 2
    %v3528 = vxor.u32 %v3518, 2147483648
    %v3529 = vsel %vm3527, %v3528, %v3519
    %v3530 = vsel %vm3523, %v3526, %v3529
    %v3531 = vsel %vm3520, nan, %v3530
    %3532 = vst [vmem:[#allocation2] sm:$0xff] %v307
    %3533 = vst [vmem:[#allocation2 + $0x8] sm:$0xff] %v411
    %3534 = vst [vmem:[#allocation2 + $0x10] sm:$0xff] %v515
    %3535 = vst [vmem:[#allocation2 + $0x18] sm:$0xff] %v619
    %3536 = vst [vmem:[#allocation2 + $0x20] sm:$0xff] %v723
    %3537 = vst [vmem:[#allocation2 + $0x28] sm:$0xff] %v827
    %3538 = vst [vmem:[#allocation2 + $0x30] sm:$0xff] %v931
    %3539 = vst [vmem:[#allocation2 + $0x38] sm:$0xff] %v1035
    %3540 = vst [vmem:[#allocation2 + $0x40] sm:$0xff] %v1139
    %3541 = vst [vmem:[#allocation2 + $0x48] sm:$0xff] %v1243
    %3542 = vst [vmem:[#allocation2 + $0x50] sm:$0xff] %v1347
    %3543 = vst [vmem:[#allocation2 + $0x58] sm:$0xff] %v1451
    %3544 = vst [vmem:[#allocation2 + $0x60] sm:$0xff] %v1555
    %3545 = vst [vmem:[#allocation2 + $0x68] sm:$0xff] %v1659
    %3546 = vst [vmem:[#allocation2 + $0x70] sm:$0xff] %v1763
    %3547 = vst [vmem:[#allocation2 + $0x78] sm:$0xff] %v1867
    %3548 = vst [vmem:[#allocation2 + $0x100] sm:$0xff] %v1971
    %3549 = vst [vmem:[#allocation2 + $0x108] sm:$0xff] %v2075
    %3550 = vst [vmem:[#allocation2 + $0x110] sm:$0xff] %v2179
    %3551 = vst [vmem:[#allocation2 + $0x118] sm:$0xff] %v2283
    %3552 = vst [vmem:[#allocation2 + $0x120] sm:$0xff] %v2387
    %3553 = vst [vmem:[#allocation2 + $0x128] sm:$0xff] %v2491
    %3554 = vst [vmem:[#allocation2 + $0x130] sm:$0xff] %v2595
    %3555 = vst [vmem:[#allocation2 + $0x138] sm:$0xff] %v2699
    %3556 = vst [vmem:[#allocation2 + $0x140] sm:$0xff] %v2803
    %3557 = vst [vmem:[#allocation2 + $0x148] sm:$0xff] %v2907
    %3558 = vst [vmem:[#allocation2 + $0x150] sm:$0xff] %v3011
    %3559 = vst [vmem:[#allocation2 + $0x158] sm:$0xff] %v3115
    %3560 = vst [vmem:[#allocation2 + $0x160] sm:$0xff] %v3219
    %3561 = vst [vmem:[#allocation2 + $0x168] sm:$0xff] %v3323
    %3562 = vst [vmem:[#allocation2 + $0x170] sm:$0xff] %v3427
    %3563 = vst [vmem:[#allocation2 + $0x178] sm:$0xff] %v3531
    %v3566 = vlaneseq
    %v3567 = vshrl.u32 %v3566, 7
    %v3568 = vsub.s32 0, %v3567
    %v3569 = vrot.slane %v36, %v3568
    %v3570 = vlaneseq
    %v3571 = vshrl.u32 %v3570, 7
    %v3572 = vsub.s32 1, %v3571
    %v3573 = vrot.slane %v36, %v3572
    %v3574 = vlaneseq
    %v3575 = vshrl.u32 %v3574, 7
    %v3576 = vsub.s32 0, %v3575
    %v3577 = vrot.slane %v37, %v3576
    %v3578 = vlaneseq
    %v3579 = vshrl.u32 %v3578, 7
    %v3580 = vsub.s32 1, %v3579
    %v3581 = vrot.slane %v37, %v3580
    %v3586 = vmul.f32 %v3569, %v63
    %v3587 = vmul.f32 %v3573, %v63
    %v3588 = vmul.f32 %v3569, %v68
    %v3589 = vmul.f32 %v3573, %v68
    %v3590 = vmul.f32 %v3569, %v73
    %v3591 = vmul.f32 %v3573, %v73
    %v3592 = vmul.f32 %v3569, %v78
    %v3593 = vmul.f32 %v3573, %v78
    %v3594 = vmul.f32 %v3569, %v83
    %v3595 = vmul.f32 %v3573, %v83
    %v3596 = vmul.f32 %v3569, %v88
    %v3597 = vmul.f32 %v3573, %v88
    %v3598 = vmul.f32 %v3569, %v93
    %v3599 = vmul.f32 %v3573, %v93
    %v3600 = vmul.f32 %v3569, %v98
    %v3601 = vmul.f32 %v3573, %v98
    %v3602 = vmul.f32 %v3577, %v63
    %v3603 = vmul.f32 %v3581, %v63
    %v3604 = vmul.f32 %v3577, %v68
    %v3605 = vmul.f32 %v3581, %v68
    %v3606 = vmul.f32 %v3577, %v73
    %v3607 = vmul.f32 %v3581, %v73
    %v3608 = vmul.f32 %v3577, %v78
    %v3609 = vmul.f32 %v3581, %v78
    %v3610 = vmul.f32 %v3577, %v83
    %v3611 = vmul.f32 %v3581, %v83
    %v3612 = vmul.f32 %v3577, %v88
    %v3613 = vmul.f32 %v3581, %v88
    %v3614 = vmul.f32 %v3577, %v93
    %v3615 = vmul.f32 %v3581, %v93
    %v3616 = vmul.f32 %v3577, %v98
    %v3617 = vmul.f32 %v3581, %v98
    %v3618 = vadd.f32 %v3586, %v135
    %v3619 = vadd.f32 %v3587, %v135
    %v3620 = vadd.f32 %v3588, %v140
    %v3621 = vadd.f32 %v3589, %v140
    %v3622 = vadd.f32 %v3590, %v145
    %v3623 = vadd.f32 %v3591, %v145
    %v3624 = vadd.f32 %v3592, %v150
    %v3625 = vadd.f32 %v3593, %v150
    %v3626 = vadd.f32 %v3594, %v155
    %v3627 = vadd.f32 %v3595, %v155
    %v3628 = vadd.f32 %v3596, %v160
    %v3629 = vadd.f32 %v3597, %v160
    %v3630 = vadd.f32 %v3598, %v165
    %v3631 = vadd.f32 %v3599, %v165
    %v3632 = vadd.f32 %v3600, %v170
    %v3633 = vadd.f32 %v3601, %v170
    %v3634 = vadd.f32 %v3602, %v135
    %v3635 = vadd.f32 %v3603, %v135
    %v3636 = vadd.f32 %v3604, %v140
    %v3637 = vadd.f32 %v3605, %v140
    %v3638 = vadd.f32 %v3606, %v145
    %v3639 = vadd.f32 %v3607, %v145
    %v3640 = vadd.f32 %v3608, %v150
    %v3641 = vadd.f32 %v3609, %v150
    %v3642 = vadd.f32 %v3610, %v155
    %v3643 = vadd.f32 %v3611, %v155
    %v3644 = vadd.f32 %v3612, %v160
    %v3645 = vadd.f32 %v3613, %v160
    %v3646 = vadd.f32 %v3614, %v165
    %v3647 = vadd.f32 %v3615, %v165
    %v3648 = vadd.f32 %v3616, %v170
    %v3649 = vadd.f32 %v3617, %v170
    %v3650 = vand.u32 2147483647, %v3618
    %vm3651 = vcmp.le.f32.partialorder %v3650, 0.7853982
    %vm3652 = vcmp.lt.s32.totalorder %v3618, 0
    %v3653 = vand.u32 %v3618, 2139095040
    %v3654 = vshrl.u32 %v3653, 23
    %v3655 = vsub.s32 %v3654, 127
    %v3656 = vand.u32 2147483647, %v3618
    %v3657 = vand.u32 %v3656, 8388607
    %v3658 = vor.u32 %v3657, 8388608
    %v3659 = vsub.s32 0, %v3658
    %v3660 = vadd.s32 %v3655, 1
    %vm3661 = vcmp.gt.s32.totalorder %v3660, 0
    %v3662 = vsel %vm3661, %v3660, 0
    %v3663 = vshrl.u32 %v3662, 5
    %v3664 = vand.u32 %v3662, 31
    %v3665 = vsub.s32 32, %v3664
    %v3666 = vshrl.u32 683565275, %v3665
    %v3667 = vshll.u32 683565275, %v3664
    %v3668 = vshrl.u32 2475754826, %v3665
    %v3669 = vor.u32 %v3667, %v3668
    %v3670 = vshll.u32 2475754826, %v3664
    %v3671 = vshrl.u32 2131351028, %v3665
    %v3672 = vor.u32 %v3670, %v3671
    %v3673 = vshll.u32 2131351028, %v3664
    %v3674 = vshrl.u32 2102212464, %v3665
    %v3675 = vor.u32 %v3673, %v3674
    %v3676 = vshll.u32 2102212464, %v3664
    %v3677 = vshrl.u32 920167782, %v3665
    %v3678 = vor.u32 %v3676, %v3677
    %v3679 = vshll.u32 920167782, %v3664
    %v3680 = vshrl.u32 1326507024, %v3665
    %v3681 = vor.u32 %v3679, %v3680
    %vm3682 = vcmp.lt.s32.totalorder %v3663, 1
    %vm3683 = vcmp.lt.s32.totalorder %v3663, 2
    %vm3684 = vcmp.lt.s32.totalorder %v3663, 3
    %vm3685 = vcmp.lt.s32.totalorder %v3663, 4
    %v3686 = vsel %vm3682, %v3666, %v3669
    %v3687 = vsel %vm3685, %v3675, 2102212464
    %v3688 = vsel %vm3684, %v3672, %v3687
    %v3689 = vsel %vm3683, %v3686, %v3688
    %v3690 = vsel %vm3682, %v3669, %v3672
    %v3691 = vsel %vm3685, %v3678, 920167782
    %v3692 = vsel %vm3684, %v3675, %v3691
    %v3693 = vsel %vm3683, %v3690, %v3692
    %v3694 = vsel %vm3682, %v3672, %v3675
    %v3695 = vsel %vm3685, %v3681, 1326507024
    %v3696 = vsel %vm3684, %v3678, %v3695
    %v3697 = vsel %vm3683, %v3694, %v3696
    %v3698 = vshll.u32 %v3658, 8
    %v3699 = vmul.u32.u64.compose %v3698, %v3697
    %v3700 = vextract.low.u32 %v3699
    %v3701 = vextract.high.u32 %v3699
    %v3702 = vmul.u32.u64.compose %v3698, %v3693
    %v3703 = vextract.low.u32 %v3702
    %v3704 = vextract.high.u32 %v3702
    %v3705 = vmul.u32 %v3698, %v3689
    %v3706 = vadd.s32 %v3701, %v3703
    %vm3707 = vc.u32 %v3701, %v3703
    %v3708 = vadd.s32 %v3704, 1
    %v3709 = vsel %vm3707, %v3708, %v3704
    %v3710 = vadd.s32 %v3705, %v3709
    %v3711 = vadd.s32 %v3710, 536870912
    %v3712 = vshrl.u32 %v3711, 30
    %v3713 = vshll.u32 %v3712, 30
    %v3714 = vsub.s32 %v3710, %v3713
    %vm3715 = vcmp.lt.s32.totalorder %v3714, 0
    %v3716 = vsub.s32 0, %v3714
    %v3717 = vsel %vm3715, %v3716, %v3714
    %v3718 = vclz %v3717
    %v3719 = vsub.s32 %v3718, 2
    %vm3720 = vcmp.gt.s32.totalorder 0, %v3719
    %v3721 = vsel %vm3720, 0, %v3719
    %v3722 = vsub.s32 32, %v3721
    %v3723 = vshll.u32 %v3714, %v3721
    %v3724 = vshrl.u32 %v3706, %v3722
    %v3725 = vor.u32 %v3723, %v3724
    %v3726 = vsub.s32 4294967266, %v3721
    %v3727 = vadd.s32 %v3726, 127
    %v3728 = vshll.u32 %v3727, 23
    %v3729 = vor.u32 4788187, %v3728
    %v3730 = vand.u32 2147483647, %v3729
    %v3732 = vcvt.s32.f32 %v3725
    %v3733 = vmul.f32 %v3732, %v3730
    %v3734 = vxor.u32 %v3733, 2147483648
    %v3735 = vsel %vm3652, %v3734, %v3733
    %v3736 = vsub.s32 4, %v3712
    %v3737 = vsel %vm3652, %v3736, %v3712
    %v3738 = vsel %vm3651, %v3618, %v3735
    %v3739 = vsel %vm3651, 0, %v3737
    %v3740 = vcosq.f32.pop %v3738
    %v3741 = vsinq.f32.pop %v3738
    %vm3742 = vweird.f32 %v3618
    %v3743 = vadd.s32 %v3739, 3
    %v3744 = vand.u32 %v3743, 3
    %vm3745 = vcmp.lt.s32.totalorder %v3744, 2
    %vm3746 = vcmp.eq.s32.totalorder %v3744, 0
    %v3747 = vxor.u32 %v3741, 2147483648
    %v3748 = vsel %vm3746, %v3740, %v3747
    %vm3749 = vcmp.eq.s32.totalorder %v3744, 2
    %v3750 = vxor.u32 %v3740, 2147483648
    %v3751 = vsel %vm3749, %v3750, %v3741
    %v3752 = vsel %vm3745, %v3748, %v3751
    %v3753 = vsel %vm3742, nan, %v3752
    %v3754 = vand.u32 2147483647, %v3619
    %vm3755 = vcmp.le.f32.partialorder %v3754, 0.7853982
    %vm3756 = vcmp.lt.s32.totalorder %v3619, 0
    %v3757 = vand.u32 %v3619, 2139095040
    %v3758 = vshrl.u32 %v3757, 23
    %v3759 = vsub.s32 %v3758, 127
    %v3760 = vand.u32 2147483647, %v3619
    %v3761 = vand.u32 %v3760, 8388607
    %v3762 = vor.u32 %v3761, 8388608
    %v3763 = vsub.s32 0, %v3762
    %v3764 = vadd.s32 %v3759, 1
    %vm3765 = vcmp.gt.s32.totalorder %v3764, 0
    %v3766 = vsel %vm3765, %v3764, 0
    %v3767 = vshrl.u32 %v3766, 5
    %v3768 = vand.u32 %v3766, 31
    %v3769 = vsub.s32 32, %v3768
    %v3770 = vshrl.u32 683565275, %v3769
    %v3771 = vshll.u32 683565275, %v3768
    %v3772 = vshrl.u32 2475754826, %v3769
    %v3773 = vor.u32 %v3771, %v3772
    %v3774 = vshll.u32 2475754826, %v3768
    %v3775 = vshrl.u32 2131351028, %v3769
    %v3776 = vor.u32 %v3774, %v3775
    %v3777 = vshll.u32 2131351028, %v3768
    %v3778 = vshrl.u32 2102212464, %v3769
    %v3779 = vor.u32 %v3777, %v3778
    %v3780 = vshll.u32 2102212464, %v3768
    %v3781 = vshrl.u32 920167782, %v3769
    %v3782 = vor.u32 %v3780, %v3781
    %v3783 = vshll.u32 920167782, %v3768
    %v3784 = vshrl.u32 1326507024, %v3769
    %v3785 = vor.u32 %v3783, %v3784
    %vm3786 = vcmp.lt.s32.totalorder %v3767, 1
    %vm3787 = vcmp.lt.s32.totalorder %v3767, 2
    %vm3788 = vcmp.lt.s32.totalorder %v3767, 3
    %vm3789 = vcmp.lt.s32.totalorder %v3767, 4
    %v3790 = vsel %vm3786, %v3770, %v3773
    %v3791 = vsel %vm3789, %v3779, 2102212464
    %v3792 = vsel %vm3788, %v3776, %v3791
    %v3793 = vsel %vm3787, %v3790, %v3792
    %v3794 = vsel %vm3786, %v3773, %v3776
    %v3795 = vsel %vm3789, %v3782, 920167782
    %v3796 = vsel %vm3788, %v3779, %v3795
    %v3797 = vsel %vm3787, %v3794, %v3796
    %v3798 = vsel %vm3786, %v3776, %v3779
    %v3799 = vsel %vm3789, %v3785, 1326507024
    %v3800 = vsel %vm3788, %v3782, %v3799
    %v3801 = vsel %vm3787, %v3798, %v3800
    %v3802 = vshll.u32 %v3762, 8
    %v3803 = vmul.u32.u64.compose %v3802, %v3801
    %v3804 = vextract.low.u32 %v3803
    %v3805 = vextract.high.u32 %v3803
    %v3806 = vmul.u32.u64.compose %v3802, %v3797
    %v3807 = vextract.low.u32 %v3806
    %v3808 = vextract.high.u32 %v3806
    %v3809 = vmul.u32 %v3802, %v3793
    %v3810 = vadd.s32 %v3805, %v3807
    %vm3811 = vc.u32 %v3805, %v3807
    %v3812 = vadd.s32 %v3808, 1
    %v3813 = vsel %vm3811, %v3812, %v3808
    %v3814 = vadd.s32 %v3809, %v3813
    %v3815 = vadd.s32 %v3814, 536870912
    %v3816 = vshrl.u32 %v3815, 30
    %v3817 = vshll.u32 %v3816, 30
    %v3818 = vsub.s32 %v3814, %v3817
    %vm3819 = vcmp.lt.s32.totalorder %v3818, 0
    %v3820 = vsub.s32 0, %v3818
    %v3821 = vsel %vm3819, %v3820, %v3818
    %v3822 = vclz %v3821
    %v3823 = vsub.s32 %v3822, 2
    %vm3824 = vcmp.gt.s32.totalorder 0, %v3823
    %v3825 = vsel %vm3824, 0, %v3823
    %v3826 = vsub.s32 32, %v3825
    %v3827 = vshll.u32 %v3818, %v3825
    %v3828 = vshrl.u32 %v3810, %v3826
    %v3829 = vor.u32 %v3827, %v3828
    %v3830 = vsub.s32 4294967266, %v3825
    %v3831 = vadd.s32 %v3830, 127
    %v3832 = vshll.u32 %v3831, 23
    %v3833 = vor.u32 4788187, %v3832
    %v3834 = vand.u32 2147483647, %v3833
    %v3836 = vcvt.s32.f32 %v3829
    %v3837 = vmul.f32 %v3836, %v3834
    %v3838 = vxor.u32 %v3837, 2147483648
    %v3839 = vsel %vm3756, %v3838, %v3837
    %v3840 = vsub.s32 4, %v3816
    %v3841 = vsel %vm3756, %v3840, %v3816
    %v3842 = vsel %vm3755, %v3619, %v3839
    %v3843 = vsel %vm3755, 0, %v3841
    %v3844 = vcosq.f32.pop %v3842
    %v3845 = vsinq.f32.pop %v3842
    %vm3846 = vweird.f32 %v3619
    %v3847 = vadd.s32 %v3843, 3
    %v3848 = vand.u32 %v3847, 3
    %vm3849 = vcmp.lt.s32.totalorder %v3848, 2
    %vm3850 = vcmp.eq.s32.totalorder %v3848, 0
    %v3851 = vxor.u32 %v3845, 2147483648
    %v3852 = vsel %vm3850, %v3844, %v3851
    %vm3853 = vcmp.eq.s32.totalorder %v3848, 2
    %v3854 = vxor.u32 %v3844, 2147483648
    %v3855 = vsel %vm3853, %v3854, %v3845
    %v3856 = vsel %vm3849, %v3852, %v3855
    %v3857 = vsel %vm3846, nan, %v3856
    %v3858 = vand.u32 2147483647, %v3620
    %vm3859 = vcmp.le.f32.partialorder %v3858, 0.7853982
    %vm3860 = vcmp.lt.s32.totalorder %v3620, 0
    %v3861 = vand.u32 %v3620, 2139095040
    %v3862 = vshrl.u32 %v3861, 23
    %v3863 = vsub.s32 %v3862, 127
    %v3864 = vand.u32 2147483647, %v3620
    %v3865 = vand.u32 %v3864, 8388607
    %v3866 = vor.u32 %v3865, 8388608
    %v3867 = vsub.s32 0, %v3866
    %v3868 = vadd.s32 %v3863, 1
    %vm3869 = vcmp.gt.s32.totalorder %v3868, 0
    %v3870 = vsel %vm3869, %v3868, 0
    %v3871 = vshrl.u32 %v3870, 5
    %v3872 = vand.u32 %v3870, 31
    %v3873 = vsub.s32 32, %v3872
    %v3874 = vshrl.u32 683565275, %v3873
    %v3875 = vshll.u32 683565275, %v3872
    %v3876 = vshrl.u32 2475754826, %v3873
    %v3877 = vor.u32 %v3875, %v3876
    %v3878 = vshll.u32 2475754826, %v3872
    %v3879 = vshrl.u32 2131351028, %v3873
    %v3880 = vor.u32 %v3878, %v3879
    %v3881 = vshll.u32 2131351028, %v3872
    %v3882 = vshrl.u32 2102212464, %v3873
    %v3883 = vor.u32 %v3881, %v3882
    %v3884 = vshll.u32 2102212464, %v3872
    %v3885 = vshrl.u32 920167782, %v3873
    %v3886 = vor.u32 %v3884, %v3885
    %v3887 = vshll.u32 920167782, %v3872
    %v3888 = vshrl.u32 1326507024, %v3873
    %v3889 = vor.u32 %v3887, %v3888
    %vm3890 = vcmp.lt.s32.totalorder %v3871, 1
    %vm3891 = vcmp.lt.s32.totalorder %v3871, 2
    %vm3892 = vcmp.lt.s32.totalorder %v3871, 3
    %vm3893 = vcmp.lt.s32.totalorder %v3871, 4
    %v3894 = vsel %vm3890, %v3874, %v3877
    %v3895 = vsel %vm3893, %v3883, 2102212464
    %v3896 = vsel %vm3892, %v3880, %v3895
    %v3897 = vsel %vm3891, %v3894, %v3896
    %v3898 = vsel %vm3890, %v3877, %v3880
    %v3899 = vsel %vm3893, %v3886, 920167782
    %v3900 = vsel %vm3892, %v3883, %v3899
    %v3901 = vsel %vm3891, %v3898, %v3900
    %v3902 = vsel %vm3890, %v3880, %v3883
    %v3903 = vsel %vm3893, %v3889, 1326507024
    %v3904 = vsel %vm3892, %v3886, %v3903
    %v3905 = vsel %vm3891, %v3902, %v3904
    %v3906 = vshll.u32 %v3866, 8
    %v3907 = vmul.u32.u64.compose %v3906, %v3905
    %v3908 = vextract.low.u32 %v3907
    %v3909 = vextract.high.u32 %v3907
    %v3910 = vmul.u32.u64.compose %v3906, %v3901
    %v3911 = vextract.low.u32 %v3910
    %v3912 = vextract.high.u32 %v3910
    %v3913 = vmul.u32 %v3906, %v3897
    %v3914 = vadd.s32 %v3909, %v3911
    %vm3915 = vc.u32 %v3909, %v3911
    %v3916 = vadd.s32 %v3912, 1
    %v3917 = vsel %vm3915, %v3916, %v3912
    %v3918 = vadd.s32 %v3913, %v3917
    %v3919 = vadd.s32 %v3918, 536870912
    %v3920 = vshrl.u32 %v3919, 30
    %v3921 = vshll.u32 %v3920, 30
    %v3922 = vsub.s32 %v3918, %v3921
    %vm3923 = vcmp.lt.s32.totalorder %v3922, 0
    %v3924 = vsub.s32 0, %v3922
    %v3925 = vsel %vm3923, %v3924, %v3922
    %v3926 = vclz %v3925
    %v3927 = vsub.s32 %v3926, 2
    %vm3928 = vcmp.gt.s32.totalorder 0, %v3927
    %v3929 = vsel %vm3928, 0, %v3927
    %v3930 = vsub.s32 32, %v3929
    %v3931 = vshll.u32 %v3922, %v3929
    %v3932 = vshrl.u32 %v3914, %v3930
    %v3933 = vor.u32 %v3931, %v3932
    %v3934 = vsub.s32 4294967266, %v3929
    %v3935 = vadd.s32 %v3934, 127
    %v3936 = vshll.u32 %v3935, 23
    %v3937 = vor.u32 4788187, %v3936
    %v3938 = vand.u32 2147483647, %v3937
    %v3940 = vcvt.s32.f32 %v3933
    %v3941 = vmul.f32 %v3940, %v3938
    %v3942 = vxor.u32 %v3941, 2147483648
    %v3943 = vsel %vm3860, %v3942, %v3941
    %v3944 = vsub.s32 4, %v3920
    %v3945 = vsel %vm3860, %v3944, %v3920
    %v3946 = vsel %vm3859, %v3620, %v3943
    %v3947 = vsel %vm3859, 0, %v3945
    %v3948 = vcosq.f32.pop %v3946
    %v3949 = vsinq.f32.pop %v3946
    %vm3950 = vweird.f32 %v3620
    %v3951 = vadd.s32 %v3947, 3
    %v3952 = vand.u32 %v3951, 3
    %vm3953 = vcmp.lt.s32.totalorder %v3952, 2
    %vm3954 = vcmp.eq.s32.totalorder %v3952, 0
    %v3955 = vxor.u32 %v3949, 2147483648
    %v3956 = vsel %vm3954, %v3948, %v3955
    %vm3957 = vcmp.eq.s32.totalorder %v3952, 2
    %v3958 = vxor.u32 %v3948, 2147483648
    %v3959 = vsel %vm3957, %v3958, %v3949
    %v3960 = vsel %vm3953, %v3956, %v3959
    %v3961 = vsel %vm3950, nan, %v3960
    %v3962 = vand.u32 2147483647, %v3621
    %vm3963 = vcmp.le.f32.partialorder %v3962, 0.7853982
    %vm3964 = vcmp.lt.s32.totalorder %v3621, 0
    %v3965 = vand.u32 %v3621, 2139095040
    %v3966 = vshrl.u32 %v3965, 23
    %v3967 = vsub.s32 %v3966, 127
    %v3968 = vand.u32 2147483647, %v3621
    %v3969 = vand.u32 %v3968, 8388607
    %v3970 = vor.u32 %v3969, 8388608
    %v3971 = vsub.s32 0, %v3970
    %v3972 = vadd.s32 %v3967, 1
    %vm3973 = vcmp.gt.s32.totalorder %v3972, 0
    %v3974 = vsel %vm3973, %v3972, 0
    %v3975 = vshrl.u32 %v3974, 5
    %v3976 = vand.u32 %v3974, 31
    %v3977 = vsub.s32 32, %v3976
    %v3978 = vshrl.u32 683565275, %v3977
    %v3979 = vshll.u32 683565275, %v3976
    %v3980 = vshrl.u32 2475754826, %v3977
    %v3981 = vor.u32 %v3979, %v3980
    %v3982 = vshll.u32 2475754826, %v3976
    %v3983 = vshrl.u32 2131351028, %v3977
    %v3984 = vor.u32 %v3982, %v3983
    %v3985 = vshll.u32 2131351028, %v3976
    %v3986 = vshrl.u32 2102212464, %v3977
    %v3987 = vor.u32 %v3985, %v3986
    %v3988 = vshll.u32 2102212464, %v3976
    %v3989 = vshrl.u32 920167782, %v3977
    %v3990 = vor.u32 %v3988, %v3989
    %v3991 = vshll.u32 920167782, %v3976
    %v3992 = vshrl.u32 1326507024, %v3977
    %v3993 = vor.u32 %v3991, %v3992
    %vm3994 = vcmp.lt.s32.totalorder %v3975, 1
    %vm3995 = vcmp.lt.s32.totalorder %v3975, 2
    %vm3996 = vcmp.lt.s32.totalorder %v3975, 3
    %vm3997 = vcmp.lt.s32.totalorder %v3975, 4
    %v3998 = vsel %vm3994, %v3978, %v3981
    %v3999 = vsel %vm3997, %v3987, 2102212464
    %v4000 = vsel %vm3996, %v3984, %v3999
    %v4001 = vsel %vm3995, %v3998, %v4000
    %v4002 = vsel %vm3994, %v3981, %v3984
    %v4003 = vsel %vm3997, %v3990, 920167782
    %v4004 = vsel %vm3996, %v3987, %v4003
    %v4005 = vsel %vm3995, %v4002, %v4004
    %v4006 = vsel %vm3994, %v3984, %v3987
    %v4007 = vsel %vm3997, %v3993, 1326507024
    %v4008 = vsel %vm3996, %v3990, %v4007
    %v4009 = vsel %vm3995, %v4006, %v4008
    %v4010 = vshll.u32 %v3970, 8
    %v4011 = vmul.u32.u64.compose %v4010, %v4009
    %v4012 = vextract.low.u32 %v4011
    %v4013 = vextract.high.u32 %v4011
    %v4014 = vmul.u32.u64.compose %v4010, %v4005
    %v4015 = vextract.low.u32 %v4014
    %v4016 = vextract.high.u32 %v4014
    %v4017 = vmul.u32 %v4010, %v4001
    %v4018 = vadd.s32 %v4013, %v4015
    %vm4019 = vc.u32 %v4013, %v4015
    %v4020 = vadd.s32 %v4016, 1
    %v4021 = vsel %vm4019, %v4020, %v4016
    %v4022 = vadd.s32 %v4017, %v4021
    %v4023 = vadd.s32 %v4022, 536870912
    %v4024 = vshrl.u32 %v4023, 30
    %v4025 = vshll.u32 %v4024, 30
    %v4026 = vsub.s32 %v4022, %v4025
    %vm4027 = vcmp.lt.s32.totalorder %v4026, 0
    %v4028 = vsub.s32 0, %v4026
    %v4029 = vsel %vm4027, %v4028, %v4026
    %v4030 = vclz %v4029
    %v4031 = vsub.s32 %v4030, 2
    %vm4032 = vcmp.gt.s32.totalorder 0, %v4031
    %v4033 = vsel %vm4032, 0, %v4031
    %v4034 = vsub.s32 32, %v4033
    %v4035 = vshll.u32 %v4026, %v4033
    %v4036 = vshrl.u32 %v4018, %v4034
    %v4037 = vor.u32 %v4035, %v4036
    %v4038 = vsub.s32 4294967266, %v4033
    %v4039 = vadd.s32 %v4038, 127
    %v4040 = vshll.u32 %v4039, 23
    %v4041 = vor.u32 4788187, %v4040
    %v4042 = vand.u32 2147483647, %v4041
    %v4044 = vcvt.s32.f32 %v4037
    %v4045 = vmul.f32 %v4044, %v4042
    %v4046 = vxor.u32 %v4045, 2147483648
    %v4047 = vsel %vm3964, %v4046, %v4045
    %v4048 = vsub.s32 4, %v4024
    %v4049 = vsel %vm3964, %v4048, %v4024
    %v4050 = vsel %vm3963, %v3621, %v4047
    %v4051 = vsel %vm3963, 0, %v4049
    %v4052 = vcosq.f32.pop %v4050
    %v4053 = vsinq.f32.pop %v4050
    %vm4054 = vweird.f32 %v3621
    %v4055 = vadd.s32 %v4051, 3
    %v4056 = vand.u32 %v4055, 3
    %vm4057 = vcmp.lt.s32.totalorder %v4056, 2
    %vm4058 = vcmp.eq.s32.totalorder %v4056, 0
    %v4059 = vxor.u32 %v4053, 2147483648
    %v4060 = vsel %vm4058, %v4052, %v4059
    %vm4061 = vcmp.eq.s32.totalorder %v4056, 2
    %v4062 = vxor.u32 %v4052, 2147483648
    %v4063 = vsel %vm4061, %v4062, %v4053
    %v4064 = vsel %vm4057, %v4060, %v4063
    %v4065 = vsel %vm4054, nan, %v4064
    %v4066 = vand.u32 2147483647, %v3622
    %vm4067 = vcmp.le.f32.partialorder %v4066, 0.7853982
    %vm4068 = vcmp.lt.s32.totalorder %v3622, 0
    %v4069 = vand.u32 %v3622, 2139095040
    %v4070 = vshrl.u32 %v4069, 23
    %v4071 = vsub.s32 %v4070, 127
    %v4072 = vand.u32 2147483647, %v3622
    %v4073 = vand.u32 %v4072, 8388607
    %v4074 = vor.u32 %v4073, 8388608
    %v4075 = vsub.s32 0, %v4074
    %v4076 = vadd.s32 %v4071, 1
    %vm4077 = vcmp.gt.s32.totalorder %v4076, 0
    %v4078 = vsel %vm4077, %v4076, 0
    %v4079 = vshrl.u32 %v4078, 5
    %v4080 = vand.u32 %v4078, 31
    %v4081 = vsub.s32 32, %v4080
    %v4082 = vshrl.u32 683565275, %v4081
    %v4083 = vshll.u32 683565275, %v4080
    %v4084 = vshrl.u32 2475754826, %v4081
    %v4085 = vor.u32 %v4083, %v4084
    %v4086 = vshll.u32 2475754826, %v4080
    %v4087 = vshrl.u32 2131351028, %v4081
    %v4088 = vor.u32 %v4086, %v4087
    %v4089 = vshll.u32 2131351028, %v4080
    %v4090 = vshrl.u32 2102212464, %v4081
    %v4091 = vor.u32 %v4089, %v4090
    %v4092 = vshll.u32 2102212464, %v4080
    %v4093 = vshrl.u32 920167782, %v4081
    %v4094 = vor.u32 %v4092, %v4093
    %v4095 = vshll.u32 920167782, %v4080
    %v4096 = vshrl.u32 1326507024, %v4081
    %v4097 = vor.u32 %v4095, %v4096
    %vm4098 = vcmp.lt.s32.totalorder %v4079, 1
    %vm4099 = vcmp.lt.s32.totalorder %v4079, 2
    %vm4100 = vcmp.lt.s32.totalorder %v4079, 3
    %vm4101 = vcmp.lt.s32.totalorder %v4079, 4
    %v4102 = vsel %vm4098, %v4082, %v4085
    %v4103 = vsel %vm4101, %v4091, 2102212464
    %v4104 = vsel %vm4100, %v4088, %v4103
    %v4105 = vsel %vm4099, %v4102, %v4104
    %v4106 = vsel %vm4098, %v4085, %v4088
    %v4107 = vsel %vm4101, %v4094, 920167782
    %v4108 = vsel %vm4100, %v4091, %v4107
    %v4109 = vsel %vm4099, %v4106, %v4108
    %v4110 = vsel %vm4098, %v4088, %v4091
    %v4111 = vsel %vm4101, %v4097, 1326507024
    %v4112 = vsel %vm4100, %v4094, %v4111
    %v4113 = vsel %vm4099, %v4110, %v4112
    %v4114 = vshll.u32 %v4074, 8
    %v4115 = vmul.u32.u64.compose %v4114, %v4113
    %v4116 = vextract.low.u32 %v4115
    %v4117 = vextract.high.u32 %v4115
    %v4118 = vmul.u32.u64.compose %v4114, %v4109
    %v4119 = vextract.low.u32 %v4118
    %v4120 = vextract.high.u32 %v4118
    %v4121 = vmul.u32 %v4114, %v4105
    %v4122 = vadd.s32 %v4117, %v4119
    %vm4123 = vc.u32 %v4117, %v4119
    %v4124 = vadd.s32 %v4120, 1
    %v4125 = vsel %vm4123, %v4124, %v4120
    %v4126 = vadd.s32 %v4121, %v4125
    %v4127 = vadd.s32 %v4126, 536870912
    %v4128 = vshrl.u32 %v4127, 30
    %v4129 = vshll.u32 %v4128, 30
    %v4130 = vsub.s32 %v4126, %v4129
    %vm4131 = vcmp.lt.s32.totalorder %v4130, 0
    %v4132 = vsub.s32 0, %v4130
    %v4133 = vsel %vm4131, %v4132, %v4130
    %v4134 = vclz %v4133
    %v4135 = vsub.s32 %v4134, 2
    %vm4136 = vcmp.gt.s32.totalorder 0, %v4135
    %v4137 = vsel %vm4136, 0, %v4135
    %v4138 = vsub.s32 32, %v4137
    %v4139 = vshll.u32 %v4130, %v4137
    %v4140 = vshrl.u32 %v4122, %v4138
    %v4141 = vor.u32 %v4139, %v4140
    %v4142 = vsub.s32 4294967266, %v4137
    %v4143 = vadd.s32 %v4142, 127
    %v4144 = vshll.u32 %v4143, 23
    %v4145 = vor.u32 4788187, %v4144
    %v4146 = vand.u32 2147483647, %v4145
    %v4148 = vcvt.s32.f32 %v4141
    %v4149 = vmul.f32 %v4148, %v4146
    %v4150 = vxor.u32 %v4149, 2147483648
    %v4151 = vsel %vm4068, %v4150, %v4149
    %v4152 = vsub.s32 4, %v4128
    %v4153 = vsel %vm4068, %v4152, %v4128
    %v4154 = vsel %vm4067, %v3622, %v4151
    %v4155 = vsel %vm4067, 0, %v4153
    %v4156 = vcosq.f32.pop %v4154
    %v4157 = vsinq.f32.pop %v4154
    %vm4158 = vweird.f32 %v3622
    %v4159 = vadd.s32 %v4155, 3
    %v4160 = vand.u32 %v4159, 3
    %vm4161 = vcmp.lt.s32.totalorder %v4160, 2
    %vm4162 = vcmp.eq.s32.totalorder %v4160, 0
    %v4163 = vxor.u32 %v4157, 2147483648
    %v4164 = vsel %vm4162, %v4156, %v4163
    %vm4165 = vcmp.eq.s32.totalorder %v4160, 2
    %v4166 = vxor.u32 %v4156, 2147483648
    %v4167 = vsel %vm4165, %v4166, %v4157
    %v4168 = vsel %vm4161, %v4164, %v4167
    %v4169 = vsel %vm4158, nan, %v4168
    %v4170 = vand.u32 2147483647, %v3623
    %vm4171 = vcmp.le.f32.partialorder %v4170, 0.7853982
    %vm4172 = vcmp.lt.s32.totalorder %v3623, 0
    %v4173 = vand.u32 %v3623, 2139095040
    %v4174 = vshrl.u32 %v4173, 23
    %v4175 = vsub.s32 %v4174, 127
    %v4176 = vand.u32 2147483647, %v3623
    %v4177 = vand.u32 %v4176, 8388607
    %v4178 = vor.u32 %v4177, 8388608
    %v4179 = vsub.s32 0, %v4178
    %v4180 = vadd.s32 %v4175, 1
    %vm4181 = vcmp.gt.s32.totalorder %v4180, 0
    %v4182 = vsel %vm4181, %v4180, 0
    %v4183 = vshrl.u32 %v4182, 5
    %v4184 = vand.u32 %v4182, 31
    %v4185 = vsub.s32 32, %v4184
    %v4186 = vshrl.u32 683565275, %v4185
    %v4187 = vshll.u32 683565275, %v4184
    %v4188 = vshrl.u32 2475754826, %v4185
    %v4189 = vor.u32 %v4187, %v4188
    %v4190 = vshll.u32 2475754826, %v4184
    %v4191 = vshrl.u32 2131351028, %v4185
    %v4192 = vor.u32 %v4190, %v4191
    %v4193 = vshll.u32 2131351028, %v4184
    %v4194 = vshrl.u32 2102212464, %v4185
    %v4195 = vor.u32 %v4193, %v4194
    %v4196 = vshll.u32 2102212464, %v4184
    %v4197 = vshrl.u32 920167782, %v4185
    %v4198 = vor.u32 %v4196, %v4197
    %v4199 = vshll.u32 920167782, %v4184
    %v4200 = vshrl.u32 1326507024, %v4185
    %v4201 = vor.u32 %v4199, %v4200
    %vm4202 = vcmp.lt.s32.totalorder %v4183, 1
    %vm4203 = vcmp.lt.s32.totalorder %v4183, 2
    %vm4204 = vcmp.lt.s32.totalorder %v4183, 3
    %vm4205 = vcmp.lt.s32.totalorder %v4183, 4
    %v4206 = vsel %vm4202, %v4186, %v4189
    %v4207 = vsel %vm4205, %v4195, 2102212464
    %v4208 = vsel %vm4204, %v4192, %v4207
    %v4209 = vsel %vm4203, %v4206, %v4208
    %v4210 = vsel %vm4202, %v4189, %v4192
    %v4211 = vsel %vm4205, %v4198, 920167782
    %v4212 = vsel %vm4204, %v4195, %v4211
    %v4213 = vsel %vm4203, %v4210, %v4212
    %v4214 = vsel %vm4202, %v4192, %v4195
    %v4215 = vsel %vm4205, %v4201, 1326507024
    %v4216 = vsel %vm4204, %v4198, %v4215
    %v4217 = vsel %vm4203, %v4214, %v4216
    %v4218 = vshll.u32 %v4178, 8
    %v4219 = vmul.u32.u64.compose %v4218, %v4217
    %v4220 = vextract.low.u32 %v4219
    %v4221 = vextract.high.u32 %v4219
    %v4222 = vmul.u32.u64.compose %v4218, %v4213
    %v4223 = vextract.low.u32 %v4222
    %v4224 = vextract.high.u32 %v4222
    %v4225 = vmul.u32 %v4218, %v4209
    %v4226 = vadd.s32 %v4221, %v4223
    %vm4227 = vc.u32 %v4221, %v4223
    %v4228 = vadd.s32 %v4224, 1
    %v4229 = vsel %vm4227, %v4228, %v4224
    %v4230 = vadd.s32 %v4225, %v4229
    %v4231 = vadd.s32 %v4230, 536870912
    %v4232 = vshrl.u32 %v4231, 30
    %v4233 = vshll.u32 %v4232, 30
    %v4234 = vsub.s32 %v4230, %v4233
    %vm4235 = vcmp.lt.s32.totalorder %v4234, 0
    %v4236 = vsub.s32 0, %v4234
    %v4237 = vsel %vm4235, %v4236, %v4234
    %v4238 = vclz %v4237
    %v4239 = vsub.s32 %v4238, 2
    %vm4240 = vcmp.gt.s32.totalorder 0, %v4239
    %v4241 = vsel %vm4240, 0, %v4239
    %v4242 = vsub.s32 32, %v4241
    %v4243 = vshll.u32 %v4234, %v4241
    %v4244 = vshrl.u32 %v4226, %v4242
    %v4245 = vor.u32 %v4243, %v4244
    %v4246 = vsub.s32 4294967266, %v4241
    %v4247 = vadd.s32 %v4246, 127
    %v4248 = vshll.u32 %v4247, 23
    %v4249 = vor.u32 4788187, %v4248
    %v4250 = vand.u32 2147483647, %v4249
    %v4252 = vcvt.s32.f32 %v4245
    %v4253 = vmul.f32 %v4252, %v4250
    %v4254 = vxor.u32 %v4253, 2147483648
    %v4255 = vsel %vm4172, %v4254, %v4253
    %v4256 = vsub.s32 4, %v4232
    %v4257 = vsel %vm4172, %v4256, %v4232
    %v4258 = vsel %vm4171, %v3623, %v4255
    %v4259 = vsel %vm4171, 0, %v4257
    %v4260 = vcosq.f32.pop %v4258
    %v4261 = vsinq.f32.pop %v4258
    %vm4262 = vweird.f32 %v3623
    %v4263 = vadd.s32 %v4259, 3
    %v4264 = vand.u32 %v4263, 3
    %vm4265 = vcmp.lt.s32.totalorder %v4264, 2
    %vm4266 = vcmp.eq.s32.totalorder %v4264, 0
    %v4267 = vxor.u32 %v4261, 2147483648
    %v4268 = vsel %vm4266, %v4260, %v4267
    %vm4269 = vcmp.eq.s32.totalorder %v4264, 2
    %v4270 = vxor.u32 %v4260, 2147483648
    %v4271 = vsel %vm4269, %v4270, %v4261
    %v4272 = vsel %vm4265, %v4268, %v4271
    %v4273 = vsel %vm4262, nan, %v4272
    %v4274 = vand.u32 2147483647, %v3624
    %vm4275 = vcmp.le.f32.partialorder %v4274, 0.7853982
    %vm4276 = vcmp.lt.s32.totalorder %v3624, 0
    %v4277 = vand.u32 %v3624, 2139095040
    %v4278 = vshrl.u32 %v4277, 23
    %v4279 = vsub.s32 %v4278, 127
    %v4280 = vand.u32 2147483647, %v3624
    %v4281 = vand.u32 %v4280, 8388607
    %v4282 = vor.u32 %v4281, 8388608
    %v4283 = vsub.s32 0, %v4282
    %v4284 = vadd.s32 %v4279, 1
    %vm4285 = vcmp.gt.s32.totalorder %v4284, 0
    %v4286 = vsel %vm4285, %v4284, 0
    %v4287 = vshrl.u32 %v4286, 5
    %v4288 = vand.u32 %v4286, 31
    %v4289 = vsub.s32 32, %v4288
    %v4290 = vshrl.u32 683565275, %v4289
    %v4291 = vshll.u32 683565275, %v4288
    %v4292 = vshrl.u32 2475754826, %v4289
    %v4293 = vor.u32 %v4291, %v4292
    %v4294 = vshll.u32 2475754826, %v4288
    %v4295 = vshrl.u32 2131351028, %v4289
    %v4296 = vor.u32 %v4294, %v4295
    %v4297 = vshll.u32 2131351028, %v4288
    %v4298 = vshrl.u32 2102212464, %v4289
    %v4299 = vor.u32 %v4297, %v4298
    %v4300 = vshll.u32 2102212464, %v4288
    %v4301 = vshrl.u32 920167782, %v4289
    %v4302 = vor.u32 %v4300, %v4301
    %v4303 = vshll.u32 920167782, %v4288
    %v4304 = vshrl.u32 1326507024, %v4289
    %v4305 = vor.u32 %v4303, %v4304
    %vm4306 = vcmp.lt.s32.totalorder %v4287, 1
    %vm4307 = vcmp.lt.s32.totalorder %v4287, 2
    %vm4308 = vcmp.lt.s32.totalorder %v4287, 3
    %vm4309 = vcmp.lt.s32.totalorder %v4287, 4
    %v4310 = vsel %vm4306, %v4290, %v4293
    %v4311 = vsel %vm4309, %v4299, 2102212464
    %v4312 = vsel %vm4308, %v4296, %v4311
    %v4313 = vsel %vm4307, %v4310, %v4312
    %v4314 = vsel %vm4306, %v4293, %v4296
    %v4315 = vsel %vm4309, %v4302, 920167782
    %v4316 = vsel %vm4308, %v4299, %v4315
    %v4317 = vsel %vm4307, %v4314, %v4316
    %v4318 = vsel %vm4306, %v4296, %v4299
    %v4319 = vsel %vm4309, %v4305, 1326507024
    %v4320 = vsel %vm4308, %v4302, %v4319
    %v4321 = vsel %vm4307, %v4318, %v4320
    %v4322 = vshll.u32 %v4282, 8
    %v4323 = vmul.u32.u64.compose %v4322, %v4321
    %v4324 = vextract.low.u32 %v4323
    %v4325 = vextract.high.u32 %v4323
    %v4326 = vmul.u32.u64.compose %v4322, %v4317
    %v4327 = vextract.low.u32 %v4326
    %v4328 = vextract.high.u32 %v4326
    %v4329 = vmul.u32 %v4322, %v4313
    %v4330 = vadd.s32 %v4325, %v4327
    %vm4331 = vc.u32 %v4325, %v4327
    %v4332 = vadd.s32 %v4328, 1
    %v4333 = vsel %vm4331, %v4332, %v4328
    %v4334 = vadd.s32 %v4329, %v4333
    %v4335 = vadd.s32 %v4334, 536870912
    %v4336 = vshrl.u32 %v4335, 30
    %v4337 = vshll.u32 %v4336, 30
    %v4338 = vsub.s32 %v4334, %v4337
    %vm4339 = vcmp.lt.s32.totalorder %v4338, 0
    %v4340 = vsub.s32 0, %v4338
    %v4341 = vsel %vm4339, %v4340, %v4338
    %v4342 = vclz %v4341
    %v4343 = vsub.s32 %v4342, 2
    %vm4344 = vcmp.gt.s32.totalorder 0, %v4343
    %v4345 = vsel %vm4344, 0, %v4343
    %v4346 = vsub.s32 32, %v4345
    %v4347 = vshll.u32 %v4338, %v4345
    %v4348 = vshrl.u32 %v4330, %v4346
    %v4349 = vor.u32 %v4347, %v4348
    %v4350 = vsub.s32 4294967266, %v4345
    %v4351 = vadd.s32 %v4350, 127
    %v4352 = vshll.u32 %v4351, 23
    %v4353 = vor.u32 4788187, %v4352
    %v4354 = vand.u32 2147483647, %v4353
    %v4356 = vcvt.s32.f32 %v4349
    %v4357 = vmul.f32 %v4356, %v4354
    %v4358 = vxor.u32 %v4357, 2147483648
    %v4359 = vsel %vm4276, %v4358, %v4357
    %v4360 = vsub.s32 4, %v4336
    %v4361 = vsel %vm4276, %v4360, %v4336
    %v4362 = vsel %vm4275, %v3624, %v4359
    %v4363 = vsel %vm4275, 0, %v4361
    %v4364 = vcosq.f32.pop %v4362
    %v4365 = vsinq.f32.pop %v4362
    %vm4366 = vweird.f32 %v3624
    %v4367 = vadd.s32 %v4363, 3
    %v4368 = vand.u32 %v4367, 3
    %vm4369 = vcmp.lt.s32.totalorder %v4368, 2
    %vm4370 = vcmp.eq.s32.totalorder %v4368, 0
    %v4371 = vxor.u32 %v4365, 2147483648
    %v4372 = vsel %vm4370, %v4364, %v4371
    %vm4373 = vcmp.eq.s32.totalorder %v4368, 2
    %v4374 = vxor.u32 %v4364, 2147483648
    %v4375 = vsel %vm4373, %v4374, %v4365
    %v4376 = vsel %vm4369, %v4372, %v4375
    %v4377 = vsel %vm4366, nan, %v4376
    %v4378 = vand.u32 2147483647, %v3625
    %vm4379 = vcmp.le.f32.partialorder %v4378, 0.7853982
    %vm4380 = vcmp.lt.s32.totalorder %v3625, 0
    %v4381 = vand.u32 %v3625, 2139095040
    %v4382 = vshrl.u32 %v4381, 23
    %v4383 = vsub.s32 %v4382, 127
    %v4384 = vand.u32 2147483647, %v3625
    %v4385 = vand.u32 %v4384, 8388607
    %v4386 = vor.u32 %v4385, 8388608
    %v4387 = vsub.s32 0, %v4386
    %v4388 = vadd.s32 %v4383, 1
    %vm4389 = vcmp.gt.s32.totalorder %v4388, 0
    %v4390 = vsel %vm4389, %v4388, 0
    %v4391 = vshrl.u32 %v4390, 5
    %v4392 = vand.u32 %v4390, 31
    %v4393 = vsub.s32 32, %v4392
    %v4394 = vshrl.u32 683565275, %v4393
    %v4395 = vshll.u32 683565275, %v4392
    %v4396 = vshrl.u32 2475754826, %v4393
    %v4397 = vor.u32 %v4395, %v4396
    %v4398 = vshll.u32 2475754826, %v4392
    %v4399 = vshrl.u32 2131351028, %v4393
    %v4400 = vor.u32 %v4398, %v4399
    %v4401 = vshll.u32 2131351028, %v4392
    %v4402 = vshrl.u32 2102212464, %v4393
    %v4403 = vor.u32 %v4401, %v4402
    %v4404 = vshll.u32 2102212464, %v4392
    %v4405 = vshrl.u32 920167782, %v4393
    %v4406 = vor.u32 %v4404, %v4405
    %v4407 = vshll.u32 920167782, %v4392
    %v4408 = vshrl.u32 1326507024, %v4393
    %v4409 = vor.u32 %v4407, %v4408
    %vm4410 = vcmp.lt.s32.totalorder %v4391, 1
    %vm4411 = vcmp.lt.s32.totalorder %v4391, 2
    %vm4412 = vcmp.lt.s32.totalorder %v4391, 3
    %vm4413 = vcmp.lt.s32.totalorder %v4391, 4
    %v4414 = vsel %vm4410, %v4394, %v4397
    %v4415 = vsel %vm4413, %v4403, 2102212464
    %v4416 = vsel %vm4412, %v4400, %v4415
    %v4417 = vsel %vm4411, %v4414, %v4416
    %v4418 = vsel %vm4410, %v4397, %v4400
    %v4419 = vsel %vm4413, %v4406, 920167782
    %v4420 = vsel %vm4412, %v4403, %v4419
    %v4421 = vsel %vm4411, %v4418, %v4420
    %v4422 = vsel %vm4410, %v4400, %v4403
    %v4423 = vsel %vm4413, %v4409, 1326507024
    %v4424 = vsel %vm4412, %v4406, %v4423
    %v4425 = vsel %vm4411, %v4422, %v4424
    %v4426 = vshll.u32 %v4386, 8
    %v4427 = vmul.u32.u64.compose %v4426, %v4425
    %v4428 = vextract.low.u32 %v4427
    %v4429 = vextract.high.u32 %v4427
    %v4430 = vmul.u32.u64.compose %v4426, %v4421
    %v4431 = vextract.low.u32 %v4430
    %v4432 = vextract.high.u32 %v4430
    %v4433 = vmul.u32 %v4426, %v4417
    %v4434 = vadd.s32 %v4429, %v4431
    %vm4435 = vc.u32 %v4429, %v4431
    %v4436 = vadd.s32 %v4432, 1
    %v4437 = vsel %vm4435, %v4436, %v4432
    %v4438 = vadd.s32 %v4433, %v4437
    %v4439 = vadd.s32 %v4438, 536870912
    %v4440 = vshrl.u32 %v4439, 30
    %v4441 = vshll.u32 %v4440, 30
    %v4442 = vsub.s32 %v4438, %v4441
    %vm4443 = vcmp.lt.s32.totalorder %v4442, 0
    %v4444 = vsub.s32 0, %v4442
    %v4445 = vsel %vm4443, %v4444, %v4442
    %v4446 = vclz %v4445
    %v4447 = vsub.s32 %v4446, 2
    %vm4448 = vcmp.gt.s32.totalorder 0, %v4447
    %v4449 = vsel %vm4448, 0, %v4447
    %v4450 = vsub.s32 32, %v4449
    %v4451 = vshll.u32 %v4442, %v4449
    %v4452 = vshrl.u32 %v4434, %v4450
    %v4453 = vor.u32 %v4451, %v4452
    %v4454 = vsub.s32 4294967266, %v4449
    %v4455 = vadd.s32 %v4454, 127
    %v4456 = vshll.u32 %v4455, 23
    %v4457 = vor.u32 4788187, %v4456
    %v4458 = vand.u32 2147483647, %v4457
    %v4460 = vcvt.s32.f32 %v4453
    %v4461 = vmul.f32 %v4460, %v4458
    %v4462 = vxor.u32 %v4461, 2147483648
    %v4463 = vsel %vm4380, %v4462, %v4461
    %v4464 = vsub.s32 4, %v4440
    %v4465 = vsel %vm4380, %v4464, %v4440
    %v4466 = vsel %vm4379, %v3625, %v4463
    %v4467 = vsel %vm4379, 0, %v4465
    %v4468 = vcosq.f32.pop %v4466
    %v4469 = vsinq.f32.pop %v4466
    %vm4470 = vweird.f32 %v3625
    %v4471 = vadd.s32 %v4467, 3
    %v4472 = vand.u32 %v4471, 3
    %vm4473 = vcmp.lt.s32.totalorder %v4472, 2
    %vm4474 = vcmp.eq.s32.totalorder %v4472, 0
    %v4475 = vxor.u32 %v4469, 2147483648
    %v4476 = vsel %vm4474, %v4468, %v4475
    %vm4477 = vcmp.eq.s32.totalorder %v4472, 2
    %v4478 = vxor.u32 %v4468, 2147483648
    %v4479 = vsel %vm4477, %v4478, %v4469
    %v4480 = vsel %vm4473, %v4476, %v4479
    %v4481 = vsel %vm4470, nan, %v4480
    %v4482 = vand.u32 2147483647, %v3626
    %vm4483 = vcmp.le.f32.partialorder %v4482, 0.7853982
    %vm4484 = vcmp.lt.s32.totalorder %v3626, 0
    %v4485 = vand.u32 %v3626, 2139095040
    %v4486 = vshrl.u32 %v4485, 23
    %v4487 = vsub.s32 %v4486, 127
    %v4488 = vand.u32 2147483647, %v3626
    %v4489 = vand.u32 %v4488, 8388607
    %v4490 = vor.u32 %v4489, 8388608
    %v4491 = vsub.s32 0, %v4490
    %v4492 = vadd.s32 %v4487, 1
    %vm4493 = vcmp.gt.s32.totalorder %v4492, 0
    %v4494 = vsel %vm4493, %v4492, 0
    %v4495 = vshrl.u32 %v4494, 5
    %v4496 = vand.u32 %v4494, 31
    %v4497 = vsub.s32 32, %v4496
    %v4498 = vshrl.u32 683565275, %v4497
    %v4499 = vshll.u32 683565275, %v4496
    %v4500 = vshrl.u32 2475754826, %v4497
    %v4501 = vor.u32 %v4499, %v4500
    %v4502 = vshll.u32 2475754826, %v4496
    %v4503 = vshrl.u32 2131351028, %v4497
    %v4504 = vor.u32 %v4502, %v4503
    %v4505 = vshll.u32 2131351028, %v4496
    %v4506 = vshrl.u32 2102212464, %v4497
    %v4507 = vor.u32 %v4505, %v4506
    %v4508 = vshll.u32 2102212464, %v4496
    %v4509 = vshrl.u32 920167782, %v4497
    %v4510 = vor.u32 %v4508, %v4509
    %v4511 = vshll.u32 920167782, %v4496
    %v4512 = vshrl.u32 1326507024, %v4497
    %v4513 = vor.u32 %v4511, %v4512
    %vm4514 = vcmp.lt.s32.totalorder %v4495, 1
    %vm4515 = vcmp.lt.s32.totalorder %v4495, 2
    %vm4516 = vcmp.lt.s32.totalorder %v4495, 3
    %vm4517 = vcmp.lt.s32.totalorder %v4495, 4
    %v4518 = vsel %vm4514, %v4498, %v4501
    %v4519 = vsel %vm4517, %v4507, 2102212464
    %v4520 = vsel %vm4516, %v4504, %v4519
    %v4521 = vsel %vm4515, %v4518, %v4520
    %v4522 = vsel %vm4514, %v4501, %v4504
    %v4523 = vsel %vm4517, %v4510, 920167782
    %v4524 = vsel %vm4516, %v4507, %v4523
    %v4525 = vsel %vm4515, %v4522, %v4524
    %v4526 = vsel %vm4514, %v4504, %v4507
    %v4527 = vsel %vm4517, %v4513, 1326507024
    %v4528 = vsel %vm4516, %v4510, %v4527
    %v4529 = vsel %vm4515, %v4526, %v4528
    %v4530 = vshll.u32 %v4490, 8
    %v4531 = vmul.u32.u64.compose %v4530, %v4529
    %v4532 = vextract.low.u32 %v4531
    %v4533 = vextract.high.u32 %v4531
    %v4534 = vmul.u32.u64.compose %v4530, %v4525
    %v4535 = vextract.low.u32 %v4534
    %v4536 = vextract.high.u32 %v4534
    %v4537 = vmul.u32 %v4530, %v4521
    %v4538 = vadd.s32 %v4533, %v4535
    %vm4539 = vc.u32 %v4533, %v4535
    %v4540 = vadd.s32 %v4536, 1
    %v4541 = vsel %vm4539, %v4540, %v4536
    %v4542 = vadd.s32 %v4537, %v4541
    %v4543 = vadd.s32 %v4542, 536870912
    %v4544 = vshrl.u32 %v4543, 30
    %v4545 = vshll.u32 %v4544, 30
    %v4546 = vsub.s32 %v4542, %v4545
    %vm4547 = vcmp.lt.s32.totalorder %v4546, 0
    %v4548 = vsub.s32 0, %v4546
    %v4549 = vsel %vm4547, %v4548, %v4546
    %v4550 = vclz %v4549
    %v4551 = vsub.s32 %v4550, 2
    %vm4552 = vcmp.gt.s32.totalorder 0, %v4551
    %v4553 = vsel %vm4552, 0, %v4551
    %v4554 = vsub.s32 32, %v4553
    %v4555 = vshll.u32 %v4546, %v4553
    %v4556 = vshrl.u32 %v4538, %v4554
    %v4557 = vor.u32 %v4555, %v4556
    %v4558 = vsub.s32 4294967266, %v4553
    %v4559 = vadd.s32 %v4558, 127
    %v4560 = vshll.u32 %v4559, 23
    %v4561 = vor.u32 4788187, %v4560
    %v4562 = vand.u32 2147483647, %v4561
    %v4564 = vcvt.s32.f32 %v4557
    %v4565 = vmul.f32 %v4564, %v4562
    %v4566 = vxor.u32 %v4565, 2147483648
    %v4567 = vsel %vm4484, %v4566, %v4565
    %v4568 = vsub.s32 4, %v4544
    %v4569 = vsel %vm4484, %v4568, %v4544
    %v4570 = vsel %vm4483, %v3626, %v4567
    %v4571 = vsel %vm4483, 0, %v4569
    %v4572 = vcosq.f32.pop %v4570
    %v4573 = vsinq.f32.pop %v4570
    %vm4574 = vweird.f32 %v3626
    %v4575 = vadd.s32 %v4571, 3
    %v4576 = vand.u32 %v4575, 3
    %vm4577 = vcmp.lt.s32.totalorder %v4576, 2
    %vm4578 = vcmp.eq.s32.totalorder %v4576, 0
    %v4579 = vxor.u32 %v4573, 2147483648
    %v4580 = vsel %vm4578, %v4572, %v4579
    %vm4581 = vcmp.eq.s32.totalorder %v4576, 2
    %v4582 = vxor.u32 %v4572, 2147483648
    %v4583 = vsel %vm4581, %v4582, %v4573
    %v4584 = vsel %vm4577, %v4580, %v4583
    %v4585 = vsel %vm4574, nan, %v4584
    %v4586 = vand.u32 2147483647, %v3627
    %vm4587 = vcmp.le.f32.partialorder %v4586, 0.7853982
    %vm4588 = vcmp.lt.s32.totalorder %v3627, 0
    %v4589 = vand.u32 %v3627, 2139095040
    %v4590 = vshrl.u32 %v4589, 23
    %v4591 = vsub.s32 %v4590, 127
    %v4592 = vand.u32 2147483647, %v3627
    %v4593 = vand.u32 %v4592, 8388607
    %v4594 = vor.u32 %v4593, 8388608
    %v4595 = vsub.s32 0, %v4594
    %v4596 = vadd.s32 %v4591, 1
    %vm4597 = vcmp.gt.s32.totalorder %v4596, 0
    %v4598 = vsel %vm4597, %v4596, 0
    %v4599 = vshrl.u32 %v4598, 5
    %v4600 = vand.u32 %v4598, 31
    %v4601 = vsub.s32 32, %v4600
    %v4602 = vshrl.u32 683565275, %v4601
    %v4603 = vshll.u32 683565275, %v4600
    %v4604 = vshrl.u32 2475754826, %v4601
    %v4605 = vor.u32 %v4603, %v4604
    %v4606 = vshll.u32 2475754826, %v4600
    %v4607 = vshrl.u32 2131351028, %v4601
    %v4608 = vor.u32 %v4606, %v4607
    %v4609 = vshll.u32 2131351028, %v4600
    %v4610 = vshrl.u32 2102212464, %v4601
    %v4611 = vor.u32 %v4609, %v4610
    %v4612 = vshll.u32 2102212464, %v4600
    %v4613 = vshrl.u32 920167782, %v4601
    %v4614 = vor.u32 %v4612, %v4613
    %v4615 = vshll.u32 920167782, %v4600
    %v4616 = vshrl.u32 1326507024, %v4601
    %v4617 = vor.u32 %v4615, %v4616
    %vm4618 = vcmp.lt.s32.totalorder %v4599, 1
    %vm4619 = vcmp.lt.s32.totalorder %v4599, 2
    %vm4620 = vcmp.lt.s32.totalorder %v4599, 3
    %vm4621 = vcmp.lt.s32.totalorder %v4599, 4
    %v4622 = vsel %vm4618, %v4602, %v4605
    %v4623 = vsel %vm4621, %v4611, 2102212464
    %v4624 = vsel %vm4620, %v4608, %v4623
    %v4625 = vsel %vm4619, %v4622, %v4624
    %v4626 = vsel %vm4618, %v4605, %v4608
    %v4627 = vsel %vm4621, %v4614, 920167782
    %v4628 = vsel %vm4620, %v4611, %v4627
    %v4629 = vsel %vm4619, %v4626, %v4628
    %v4630 = vsel %vm4618, %v4608, %v4611
    %v4631 = vsel %vm4621, %v4617, 1326507024
    %v4632 = vsel %vm4620, %v4614, %v4631
    %v4633 = vsel %vm4619, %v4630, %v4632
    %v4634 = vshll.u32 %v4594, 8
    %v4635 = vmul.u32.u64.compose %v4634, %v4633
    %v4636 = vextract.low.u32 %v4635
    %v4637 = vextract.high.u32 %v4635
    %v4638 = vmul.u32.u64.compose %v4634, %v4629
    %v4639 = vextract.low.u32 %v4638
    %v4640 = vextract.high.u32 %v4638
    %v4641 = vmul.u32 %v4634, %v4625
    %v4642 = vadd.s32 %v4637, %v4639
    %vm4643 = vc.u32 %v4637, %v4639
    %v4644 = vadd.s32 %v4640, 1
    %v4645 = vsel %vm4643, %v4644, %v4640
    %v4646 = vadd.s32 %v4641, %v4645
    %v4647 = vadd.s32 %v4646, 536870912
    %v4648 = vshrl.u32 %v4647, 30
    %v4649 = vshll.u32 %v4648, 30
    %v4650 = vsub.s32 %v4646, %v4649
    %vm4651 = vcmp.lt.s32.totalorder %v4650, 0
    %v4652 = vsub.s32 0, %v4650
    %v4653 = vsel %vm4651, %v4652, %v4650
    %v4654 = vclz %v4653
    %v4655 = vsub.s32 %v4654, 2
    %vm4656 = vcmp.gt.s32.totalorder 0, %v4655
    %v4657 = vsel %vm4656, 0, %v4655
    %v4658 = vsub.s32 32, %v4657
    %v4659 = vshll.u32 %v4650, %v4657
    %v4660 = vshrl.u32 %v4642, %v4658
    %v4661 = vor.u32 %v4659, %v4660
    %v4662 = vsub.s32 4294967266, %v4657
    %v4663 = vadd.s32 %v4662, 127
    %v4664 = vshll.u32 %v4663, 23
    %v4665 = vor.u32 4788187, %v4664
    %v4666 = vand.u32 2147483647, %v4665
    %v4668 = vcvt.s32.f32 %v4661
    %v4669 = vmul.f32 %v4668, %v4666
    %v4670 = vxor.u32 %v4669, 2147483648
    %v4671 = vsel %vm4588, %v4670, %v4669
    %v4672 = vsub.s32 4, %v4648
    %v4673 = vsel %vm4588, %v4672, %v4648
    %v4674 = vsel %vm4587, %v3627, %v4671
    %v4675 = vsel %vm4587, 0, %v4673
    %v4676 = vcosq.f32.pop %v4674
    %v4677 = vsinq.f32.pop %v4674
    %vm4678 = vweird.f32 %v3627
    %v4679 = vadd.s32 %v4675, 3
    %v4680 = vand.u32 %v4679, 3
    %vm4681 = vcmp.lt.s32.totalorder %v4680, 2
    %vm4682 = vcmp.eq.s32.totalorder %v4680, 0
    %v4683 = vxor.u32 %v4677, 2147483648
    %v4684 = vsel %vm4682, %v4676, %v4683
    %vm4685 = vcmp.eq.s32.totalorder %v4680, 2
    %v4686 = vxor.u32 %v4676, 2147483648
    %v4687 = vsel %vm4685, %v4686, %v4677
    %v4688 = vsel %vm4681, %v4684, %v4687
    %v4689 = vsel %vm4678, nan, %v4688
    %v4690 = vand.u32 2147483647, %v3628
    %vm4691 = vcmp.le.f32.partialorder %v4690, 0.7853982
    %vm4692 = vcmp.lt.s32.totalorder %v3628, 0
    %v4693 = vand.u32 %v3628, 2139095040
    %v4694 = vshrl.u32 %v4693, 23
    %v4695 = vsub.s32 %v4694, 127
    %v4696 = vand.u32 2147483647, %v3628
    %v4697 = vand.u32 %v4696, 8388607
    %v4698 = vor.u32 %v4697, 8388608
    %v4699 = vsub.s32 0, %v4698
    %v4700 = vadd.s32 %v4695, 1
    %vm4701 = vcmp.gt.s32.totalorder %v4700, 0
    %v4702 = vsel %vm4701, %v4700, 0
    %v4703 = vshrl.u32 %v4702, 5
    %v4704 = vand.u32 %v4702, 31
    %v4705 = vsub.s32 32, %v4704
    %v4706 = vshrl.u32 683565275, %v4705
    %v4707 = vshll.u32 683565275, %v4704
    %v4708 = vshrl.u32 2475754826, %v4705
    %v4709 = vor.u32 %v4707, %v4708
    %v4710 = vshll.u32 2475754826, %v4704
    %v4711 = vshrl.u32 2131351028, %v4705
    %v4712 = vor.u32 %v4710, %v4711
    %v4713 = vshll.u32 2131351028, %v4704
    %v4714 = vshrl.u32 2102212464, %v4705
    %v4715 = vor.u32 %v4713, %v4714
    %v4716 = vshll.u32 2102212464, %v4704
    %v4717 = vshrl.u32 920167782, %v4705
    %v4718 = vor.u32 %v4716, %v4717
    %v4719 = vshll.u32 920167782, %v4704
    %v4720 = vshrl.u32 1326507024, %v4705
    %v4721 = vor.u32 %v4719, %v4720
    %vm4722 = vcmp.lt.s32.totalorder %v4703, 1
    %vm4723 = vcmp.lt.s32.totalorder %v4703, 2
    %vm4724 = vcmp.lt.s32.totalorder %v4703, 3
    %vm4725 = vcmp.lt.s32.totalorder %v4703, 4
    %v4726 = vsel %vm4722, %v4706, %v4709
    %v4727 = vsel %vm4725, %v4715, 2102212464
    %v4728 = vsel %vm4724, %v4712, %v4727
    %v4729 = vsel %vm4723, %v4726, %v4728
    %v4730 = vsel %vm4722, %v4709, %v4712
    %v4731 = vsel %vm4725, %v4718, 920167782
    %v4732 = vsel %vm4724, %v4715, %v4731
    %v4733 = vsel %vm4723, %v4730, %v4732
    %v4734 = vsel %vm4722, %v4712, %v4715
    %v4735 = vsel %vm4725, %v4721, 1326507024
    %v4736 = vsel %vm4724, %v4718, %v4735
    %v4737 = vsel %vm4723, %v4734, %v4736
    %v4738 = vshll.u32 %v4698, 8
    %v4739 = vmul.u32.u64.compose %v4738, %v4737
    %v4740 = vextract.low.u32 %v4739
    %v4741 = vextract.high.u32 %v4739
    %v4742 = vmul.u32.u64.compose %v4738, %v4733
    %v4743 = vextract.low.u32 %v4742
    %v4744 = vextract.high.u32 %v4742
    %v4745 = vmul.u32 %v4738, %v4729
    %v4746 = vadd.s32 %v4741, %v4743
    %vm4747 = vc.u32 %v4741, %v4743
    %v4748 = vadd.s32 %v4744, 1
    %v4749 = vsel %vm4747, %v4748, %v4744
    %v4750 = vadd.s32 %v4745, %v4749
    %v4751 = vadd.s32 %v4750, 536870912
    %v4752 = vshrl.u32 %v4751, 30
    %v4753 = vshll.u32 %v4752, 30
    %v4754 = vsub.s32 %v4750, %v4753
    %vm4755 = vcmp.lt.s32.totalorder %v4754, 0
    %v4756 = vsub.s32 0, %v4754
    %v4757 = vsel %vm4755, %v4756, %v4754
    %v4758 = vclz %v4757
    %v4759 = vsub.s32 %v4758, 2
    %vm4760 = vcmp.gt.s32.totalorder 0, %v4759
    %v4761 = vsel %vm4760, 0, %v4759
    %v4762 = vsub.s32 32, %v4761
    %v4763 = vshll.u32 %v4754, %v4761
    %v4764 = vshrl.u32 %v4746, %v4762
    %v4765 = vor.u32 %v4763, %v4764
    %v4766 = vsub.s32 4294967266, %v4761
    %v4767 = vadd.s32 %v4766, 127
    %v4768 = vshll.u32 %v4767, 23
    %v4769 = vor.u32 4788187, %v4768
    %v4770 = vand.u32 2147483647, %v4769
    %v4772 = vcvt.s32.f32 %v4765
    %v4773 = vmul.f32 %v4772, %v4770
    %v4774 = vxor.u32 %v4773, 2147483648
    %v4775 = vsel %vm4692, %v4774, %v4773
    %v4776 = vsub.s32 4, %v4752
    %v4777 = vsel %vm4692, %v4776, %v4752
    %v4778 = vsel %vm4691, %v3628, %v4775
    %v4779 = vsel %vm4691, 0, %v4777
    %v4780 = vcosq.f32.pop %v4778
    %v4781 = vsinq.f32.pop %v4778
    %vm4782 = vweird.f32 %v3628
    %v4783 = vadd.s32 %v4779, 3
    %v4784 = vand.u32 %v4783, 3
    %vm4785 = vcmp.lt.s32.totalorder %v4784, 2
    %vm4786 = vcmp.eq.s32.totalorder %v4784, 0
    %v4787 = vxor.u32 %v4781, 2147483648
    %v4788 = vsel %vm4786, %v4780, %v4787
    %vm4789 = vcmp.eq.s32.totalorder %v4784, 2
    %v4790 = vxor.u32 %v4780, 2147483648
    %v4791 = vsel %vm4789, %v4790, %v4781
    %v4792 = vsel %vm4785, %v4788, %v4791
    %v4793 = vsel %vm4782, nan, %v4792
    %v4794 = vand.u32 2147483647, %v3629
    %vm4795 = vcmp.le.f32.partialorder %v4794, 0.7853982
    %vm4796 = vcmp.lt.s32.totalorder %v3629, 0
    %v4797 = vand.u32 %v3629, 2139095040
    %v4798 = vshrl.u32 %v4797, 23
    %v4799 = vsub.s32 %v4798, 127
    %v4800 = vand.u32 2147483647, %v3629
    %v4801 = vand.u32 %v4800, 8388607
    %v4802 = vor.u32 %v4801, 8388608
    %v4803 = vsub.s32 0, %v4802
    %v4804 = vadd.s32 %v4799, 1
    %vm4805 = vcmp.gt.s32.totalorder %v4804, 0
    %v4806 = vsel %vm4805, %v4804, 0
    %v4807 = vshrl.u32 %v4806, 5
    %v4808 = vand.u32 %v4806, 31
    %v4809 = vsub.s32 32, %v4808
    %v4810 = vshrl.u32 683565275, %v4809
    %v4811 = vshll.u32 683565275, %v4808
    %v4812 = vshrl.u32 2475754826, %v4809
    %v4813 = vor.u32 %v4811, %v4812
    %v4814 = vshll.u32 2475754826, %v4808
    %v4815 = vshrl.u32 2131351028, %v4809
    %v4816 = vor.u32 %v4814, %v4815
    %v4817 = vshll.u32 2131351028, %v4808
    %v4818 = vshrl.u32 2102212464, %v4809
    %v4819 = vor.u32 %v4817, %v4818
    %v4820 = vshll.u32 2102212464, %v4808
    %v4821 = vshrl.u32 920167782, %v4809
    %v4822 = vor.u32 %v4820, %v4821
    %v4823 = vshll.u32 920167782, %v4808
    %v4824 = vshrl.u32 1326507024, %v4809
    %v4825 = vor.u32 %v4823, %v4824
    %vm4826 = vcmp.lt.s32.totalorder %v4807, 1
    %vm4827 = vcmp.lt.s32.totalorder %v4807, 2
    %vm4828 = vcmp.lt.s32.totalorder %v4807, 3
    %vm4829 = vcmp.lt.s32.totalorder %v4807, 4
    %v4830 = vsel %vm4826, %v4810, %v4813
    %v4831 = vsel %vm4829, %v4819, 2102212464
    %v4832 = vsel %vm4828, %v4816, %v4831
    %v4833 = vsel %vm4827, %v4830, %v4832
    %v4834 = vsel %vm4826, %v4813, %v4816
    %v4835 = vsel %vm4829, %v4822, 920167782
    %v4836 = vsel %vm4828, %v4819, %v4835
    %v4837 = vsel %vm4827, %v4834, %v4836
    %v4838 = vsel %vm4826, %v4816, %v4819
    %v4839 = vsel %vm4829, %v4825, 1326507024
    %v4840 = vsel %vm4828, %v4822, %v4839
    %v4841 = vsel %vm4827, %v4838, %v4840
    %v4842 = vshll.u32 %v4802, 8
    %v4843 = vmul.u32.u64.compose %v4842, %v4841
    %v4844 = vextract.low.u32 %v4843
    %v4845 = vextract.high.u32 %v4843
    %v4846 = vmul.u32.u64.compose %v4842, %v4837
    %v4847 = vextract.low.u32 %v4846
    %v4848 = vextract.high.u32 %v4846
    %v4849 = vmul.u32 %v4842, %v4833
    %v4850 = vadd.s32 %v4845, %v4847
    %vm4851 = vc.u32 %v4845, %v4847
    %v4852 = vadd.s32 %v4848, 1
    %v4853 = vsel %vm4851, %v4852, %v4848
    %v4854 = vadd.s32 %v4849, %v4853
    %v4855 = vadd.s32 %v4854, 536870912
    %v4856 = vshrl.u32 %v4855, 30
    %v4857 = vshll.u32 %v4856, 30
    %v4858 = vsub.s32 %v4854, %v4857
    %vm4859 = vcmp.lt.s32.totalorder %v4858, 0
    %v4860 = vsub.s32 0, %v4858
    %v4861 = vsel %vm4859, %v4860, %v4858
    %v4862 = vclz %v4861
    %v4863 = vsub.s32 %v4862, 2
    %vm4864 = vcmp.gt.s32.totalorder 0, %v4863
    %v4865 = vsel %vm4864, 0, %v4863
    %v4866 = vsub.s32 32, %v4865
    %v4867 = vshll.u32 %v4858, %v4865
    %v4868 = vshrl.u32 %v4850, %v4866
    %v4869 = vor.u32 %v4867, %v4868
    %v4870 = vsub.s32 4294967266, %v4865
    %v4871 = vadd.s32 %v4870, 127
    %v4872 = vshll.u32 %v4871, 23
    %v4873 = vor.u32 4788187, %v4872
    %v4874 = vand.u32 2147483647, %v4873
    %v4876 = vcvt.s32.f32 %v4869
    %v4877 = vmul.f32 %v4876, %v4874
    %v4878 = vxor.u32 %v4877, 2147483648
    %v4879 = vsel %vm4796, %v4878, %v4877
    %v4880 = vsub.s32 4, %v4856
    %v4881 = vsel %vm4796, %v4880, %v4856
    %v4882 = vsel %vm4795, %v3629, %v4879
    %v4883 = vsel %vm4795, 0, %v4881
    %v4884 = vcosq.f32.pop %v4882
    %v4885 = vsinq.f32.pop %v4882
    %vm4886 = vweird.f32 %v3629
    %v4887 = vadd.s32 %v4883, 3
    %v4888 = vand.u32 %v4887, 3
    %vm4889 = vcmp.lt.s32.totalorder %v4888, 2
    %vm4890 = vcmp.eq.s32.totalorder %v4888, 0
    %v4891 = vxor.u32 %v4885, 2147483648
    %v4892 = vsel %vm4890, %v4884, %v4891
    %vm4893 = vcmp.eq.s32.totalorder %v4888, 2
    %v4894 = vxor.u32 %v4884, 2147483648
    %v4895 = vsel %vm4893, %v4894, %v4885
    %v4896 = vsel %vm4889, %v4892, %v4895
    %v4897 = vsel %vm4886, nan, %v4896
    %v4898 = vand.u32 2147483647, %v3630
    %vm4899 = vcmp.le.f32.partialorder %v4898, 0.7853982
    %vm4900 = vcmp.lt.s32.totalorder %v3630, 0
    %v4901 = vand.u32 %v3630, 2139095040
    %v4902 = vshrl.u32 %v4901, 23
    %v4903 = vsub.s32 %v4902, 127
    %v4904 = vand.u32 2147483647, %v3630
    %v4905 = vand.u32 %v4904, 8388607
    %v4906 = vor.u32 %v4905, 8388608
    %v4907 = vsub.s32 0, %v4906
    %v4908 = vadd.s32 %v4903, 1
    %vm4909 = vcmp.gt.s32.totalorder %v4908, 0
    %v4910 = vsel %vm4909, %v4908, 0
    %v4911 = vshrl.u32 %v4910, 5
    %v4912 = vand.u32 %v4910, 31
    %v4913 = vsub.s32 32, %v4912
    %v4914 = vshrl.u32 683565275, %v4913
    %v4915 = vshll.u32 683565275, %v4912
    %v4916 = vshrl.u32 2475754826, %v4913
    %v4917 = vor.u32 %v4915, %v4916
    %v4918 = vshll.u32 2475754826, %v4912
    %v4919 = vshrl.u32 2131351028, %v4913
    %v4920 = vor.u32 %v4918, %v4919
    %v4921 = vshll.u32 2131351028, %v4912
    %v4922 = vshrl.u32 2102212464, %v4913
    %v4923 = vor.u32 %v4921, %v4922
    %v4924 = vshll.u32 2102212464, %v4912
    %v4925 = vshrl.u32 920167782, %v4913
    %v4926 = vor.u32 %v4924, %v4925
    %v4927 = vshll.u32 920167782, %v4912
    %v4928 = vshrl.u32 1326507024, %v4913
    %v4929 = vor.u32 %v4927, %v4928
    %vm4930 = vcmp.lt.s32.totalorder %v4911, 1
    %vm4931 = vcmp.lt.s32.totalorder %v4911, 2
    %vm4932 = vcmp.lt.s32.totalorder %v4911, 3
    %vm4933 = vcmp.lt.s32.totalorder %v4911, 4
    %v4934 = vsel %vm4930, %v4914, %v4917
    %v4935 = vsel %vm4933, %v4923, 2102212464
    %v4936 = vsel %vm4932, %v4920, %v4935
    %v4937 = vsel %vm4931, %v4934, %v4936
    %v4938 = vsel %vm4930, %v4917, %v4920
    %v4939 = vsel %vm4933, %v4926, 920167782
    %v4940 = vsel %vm4932, %v4923, %v4939
    %v4941 = vsel %vm4931, %v4938, %v4940
    %v4942 = vsel %vm4930, %v4920, %v4923
    %v4943 = vsel %vm4933, %v4929, 1326507024
    %v4944 = vsel %vm4932, %v4926, %v4943
    %v4945 = vsel %vm4931, %v4942, %v4944
    %v4946 = vshll.u32 %v4906, 8
    %v4947 = vmul.u32.u64.compose %v4946, %v4945
    %v4948 = vextract.low.u32 %v4947
    %v4949 = vextract.high.u32 %v4947
    %v4950 = vmul.u32.u64.compose %v4946, %v4941
    %v4951 = vextract.low.u32 %v4950
    %v4952 = vextract.high.u32 %v4950
    %v4953 = vmul.u32 %v4946, %v4937
    %v4954 = vadd.s32 %v4949, %v4951
    %vm4955 = vc.u32 %v4949, %v4951
    %v4956 = vadd.s32 %v4952, 1
    %v4957 = vsel %vm4955, %v4956, %v4952
    %v4958 = vadd.s32 %v4953, %v4957
    %v4959 = vadd.s32 %v4958, 536870912
    %v4960 = vshrl.u32 %v4959, 30
    %v4961 = vshll.u32 %v4960, 30
    %v4962 = vsub.s32 %v4958, %v4961
    %vm4963 = vcmp.lt.s32.totalorder %v4962, 0
    %v4964 = vsub.s32 0, %v4962
    %v4965 = vsel %vm4963, %v4964, %v4962
    %v4966 = vclz %v4965
    %v4967 = vsub.s32 %v4966, 2
    %vm4968 = vcmp.gt.s32.totalorder 0, %v4967
    %v4969 = vsel %vm4968, 0, %v4967
    %v4970 = vsub.s32 32, %v4969
    %v4971 = vshll.u32 %v4962, %v4969
    %v4972 = vshrl.u32 %v4954, %v4970
    %v4973 = vor.u32 %v4971, %v4972
    %v4974 = vsub.s32 4294967266, %v4969
    %v4975 = vadd.s32 %v4974, 127
    %v4976 = vshll.u32 %v4975, 23
    %v4977 = vor.u32 4788187, %v4976
    %v4978 = vand.u32 2147483647, %v4977
    %v4980 = vcvt.s32.f32 %v4973
    %v4981 = vmul.f32 %v4980, %v4978
    %v4982 = vxor.u32 %v4981, 2147483648
    %v4983 = vsel %vm4900, %v4982, %v4981
    %v4984 = vsub.s32 4, %v4960
    %v4985 = vsel %vm4900, %v4984, %v4960
    %v4986 = vsel %vm4899, %v3630, %v4983
    %v4987 = vsel %vm4899, 0, %v4985
    %v4988 = vcosq.f32.pop %v4986
    %v4989 = vsinq.f32.pop %v4986
    %vm4990 = vweird.f32 %v3630
    %v4991 = vadd.s32 %v4987, 3
    %v4992 = vand.u32 %v4991, 3
    %vm4993 = vcmp.lt.s32.totalorder %v4992, 2
    %vm4994 = vcmp.eq.s32.totalorder %v4992, 0
    %v4995 = vxor.u32 %v4989, 2147483648
    %v4996 = vsel %vm4994, %v4988, %v4995
    %vm4997 = vcmp.eq.s32.totalorder %v4992, 2
    %v4998 = vxor.u32 %v4988, 2147483648
    %v4999 = vsel %vm4997, %v4998, %v4989
    %v5000 = vsel %vm4993, %v4996, %v4999
    %v5001 = vsel %vm4990, nan, %v5000
    %v5002 = vand.u32 2147483647, %v3631
    %vm5003 = vcmp.le.f32.partialorder %v5002, 0.7853982
    %vm5004 = vcmp.lt.s32.totalorder %v3631, 0
    %v5005 = vand.u32 %v3631, 2139095040
    %v5006 = vshrl.u32 %v5005, 23
    %v5007 = vsub.s32 %v5006, 127
    %v5008 = vand.u32 2147483647, %v3631
    %v5009 = vand.u32 %v5008, 8388607
    %v5010 = vor.u32 %v5009, 8388608
    %v5011 = vsub.s32 0, %v5010
    %v5012 = vadd.s32 %v5007, 1
    %vm5013 = vcmp.gt.s32.totalorder %v5012, 0
    %v5014 = vsel %vm5013, %v5012, 0
    %v5015 = vshrl.u32 %v5014, 5
    %v5016 = vand.u32 %v5014, 31
    %v5017 = vsub.s32 32, %v5016
    %v5018 = vshrl.u32 683565275, %v5017
    %v5019 = vshll.u32 683565275, %v5016
    %v5020 = vshrl.u32 2475754826, %v5017
    %v5021 = vor.u32 %v5019, %v5020
    %v5022 = vshll.u32 2475754826, %v5016
    %v5023 = vshrl.u32 2131351028, %v5017
    %v5024 = vor.u32 %v5022, %v5023
    %v5025 = vshll.u32 2131351028, %v5016
    %v5026 = vshrl.u32 2102212464, %v5017
    %v5027 = vor.u32 %v5025, %v5026
    %v5028 = vshll.u32 2102212464, %v5016
    %v5029 = vshrl.u32 920167782, %v5017
    %v5030 = vor.u32 %v5028, %v5029
    %v5031 = vshll.u32 920167782, %v5016
    %v5032 = vshrl.u32 1326507024, %v5017
    %v5033 = vor.u32 %v5031, %v5032
    %vm5034 = vcmp.lt.s32.totalorder %v5015, 1
    %vm5035 = vcmp.lt.s32.totalorder %v5015, 2
    %vm5036 = vcmp.lt.s32.totalorder %v5015, 3
    %vm5037 = vcmp.lt.s32.totalorder %v5015, 4
    %v5038 = vsel %vm5034, %v5018, %v5021
    %v5039 = vsel %vm5037, %v5027, 2102212464
    %v5040 = vsel %vm5036, %v5024, %v5039
    %v5041 = vsel %vm5035, %v5038, %v5040
    %v5042 = vsel %vm5034, %v5021, %v5024
    %v5043 = vsel %vm5037, %v5030, 920167782
    %v5044 = vsel %vm5036, %v5027, %v5043
    %v5045 = vsel %vm5035, %v5042, %v5044
    %v5046 = vsel %vm5034, %v5024, %v5027
    %v5047 = vsel %vm5037, %v5033, 1326507024
    %v5048 = vsel %vm5036, %v5030, %v5047
    %v5049 = vsel %vm5035, %v5046, %v5048
    %v5050 = vshll.u32 %v5010, 8
    %v5051 = vmul.u32.u64.compose %v5050, %v5049
    %v5052 = vextract.low.u32 %v5051
    %v5053 = vextract.high.u32 %v5051
    %v5054 = vmul.u32.u64.compose %v5050, %v5045
    %v5055 = vextract.low.u32 %v5054
    %v5056 = vextract.high.u32 %v5054
    %v5057 = vmul.u32 %v5050, %v5041
    %v5058 = vadd.s32 %v5053, %v5055
    %vm5059 = vc.u32 %v5053, %v5055
    %v5060 = vadd.s32 %v5056, 1
    %v5061 = vsel %vm5059, %v5060, %v5056
    %v5062 = vadd.s32 %v5057, %v5061
    %v5063 = vadd.s32 %v5062, 536870912
    %v5064 = vshrl.u32 %v5063, 30
    %v5065 = vshll.u32 %v5064, 30
    %v5066 = vsub.s32 %v5062, %v5065
    %vm5067 = vcmp.lt.s32.totalorder %v5066, 0
    %v5068 = vsub.s32 0, %v5066
    %v5069 = vsel %vm5067, %v5068, %v5066
    %v5070 = vclz %v5069
    %v5071 = vsub.s32 %v5070, 2
    %vm5072 = vcmp.gt.s32.totalorder 0, %v5071
    %v5073 = vsel %vm5072, 0, %v5071
    %v5074 = vsub.s32 32, %v5073
    %v5075 = vshll.u32 %v5066, %v5073
    %v5076 = vshrl.u32 %v5058, %v5074
    %v5077 = vor.u32 %v5075, %v5076
    %v5078 = vsub.s32 4294967266, %v5073
    %v5079 = vadd.s32 %v5078, 127
    %v5080 = vshll.u32 %v5079, 23
    %v5081 = vor.u32 4788187, %v5080
    %v5082 = vand.u32 2147483647, %v5081
    %v5084 = vcvt.s32.f32 %v5077
    %v5085 = vmul.f32 %v5084, %v5082
    %v5086 = vxor.u32 %v5085, 2147483648
    %v5087 = vsel %vm5004, %v5086, %v5085
    %v5088 = vsub.s32 4, %v5064
    %v5089 = vsel %vm5004, %v5088, %v5064
    %v5090 = vsel %vm5003, %v3631, %v5087
    %v5091 = vsel %vm5003, 0, %v5089
    %v5092 = vcosq.f32.pop %v5090
    %v5093 = vsinq.f32.pop %v5090
    %vm5094 = vweird.f32 %v3631
    %v5095 = vadd.s32 %v5091, 3
    %v5096 = vand.u32 %v5095, 3
    %vm5097 = vcmp.lt.s32.totalorder %v5096, 2
    %vm5098 = vcmp.eq.s32.totalorder %v5096, 0
    %v5099 = vxor.u32 %v5093, 2147483648
    %v5100 = vsel %vm5098, %v5092, %v5099
    %vm5101 = vcmp.eq.s32.totalorder %v5096, 2
    %v5102 = vxor.u32 %v5092, 2147483648
    %v5103 = vsel %vm5101, %v5102, %v5093
    %v5104 = vsel %vm5097, %v5100, %v5103
    %v5105 = vsel %vm5094, nan, %v5104
    %v5106 = vand.u32 2147483647, %v3632
    %vm5107 = vcmp.le.f32.partialorder %v5106, 0.7853982
    %vm5108 = vcmp.lt.s32.totalorder %v3632, 0
    %v5109 = vand.u32 %v3632, 2139095040
    %v5110 = vshrl.u32 %v5109, 23
    %v5111 = vsub.s32 %v5110, 127
    %v5112 = vand.u32 2147483647, %v3632
    %v5113 = vand.u32 %v5112, 8388607
    %v5114 = vor.u32 %v5113, 8388608
    %v5115 = vsub.s32 0, %v5114
    %v5116 = vadd.s32 %v5111, 1
    %vm5117 = vcmp.gt.s32.totalorder %v5116, 0
    %v5118 = vsel %vm5117, %v5116, 0
    %v5119 = vshrl.u32 %v5118, 5
    %v5120 = vand.u32 %v5118, 31
    %v5121 = vsub.s32 32, %v5120
    %v5122 = vshrl.u32 683565275, %v5121
    %v5123 = vshll.u32 683565275, %v5120
    %v5124 = vshrl.u32 2475754826, %v5121
    %v5125 = vor.u32 %v5123, %v5124
    %v5126 = vshll.u32 2475754826, %v5120
    %v5127 = vshrl.u32 2131351028, %v5121
    %v5128 = vor.u32 %v5126, %v5127
    %v5129 = vshll.u32 2131351028, %v5120
    %v5130 = vshrl.u32 2102212464, %v5121
    %v5131 = vor.u32 %v5129, %v5130
    %v5132 = vshll.u32 2102212464, %v5120
    %v5133 = vshrl.u32 920167782, %v5121
    %v5134 = vor.u32 %v5132, %v5133
    %v5135 = vshll.u32 920167782, %v5120
    %v5136 = vshrl.u32 1326507024, %v5121
    %v5137 = vor.u32 %v5135, %v5136
    %vm5138 = vcmp.lt.s32.totalorder %v5119, 1
    %vm5139 = vcmp.lt.s32.totalorder %v5119, 2
    %vm5140 = vcmp.lt.s32.totalorder %v5119, 3
    %vm5141 = vcmp.lt.s32.totalorder %v5119, 4
    %v5142 = vsel %vm5138, %v5122, %v5125
    %v5143 = vsel %vm5141, %v5131, 2102212464
    %v5144 = vsel %vm5140, %v5128, %v5143
    %v5145 = vsel %vm5139, %v5142, %v5144
    %v5146 = vsel %vm5138, %v5125, %v5128
    %v5147 = vsel %vm5141, %v5134, 920167782
    %v5148 = vsel %vm5140, %v5131, %v5147
    %v5149 = vsel %vm5139, %v5146, %v5148
    %v5150 = vsel %vm5138, %v5128, %v5131
    %v5151 = vsel %vm5141, %v5137, 1326507024
    %v5152 = vsel %vm5140, %v5134, %v5151
    %v5153 = vsel %vm5139, %v5150, %v5152
    %v5154 = vshll.u32 %v5114, 8
    %v5155 = vmul.u32.u64.compose %v5154, %v5153
    %v5156 = vextract.low.u32 %v5155
    %v5157 = vextract.high.u32 %v5155
    %v5158 = vmul.u32.u64.compose %v5154, %v5149
    %v5159 = vextract.low.u32 %v5158
    %v5160 = vextract.high.u32 %v5158
    %v5161 = vmul.u32 %v5154, %v5145
    %v5162 = vadd.s32 %v5157, %v5159
    %vm5163 = vc.u32 %v5157, %v5159
    %v5164 = vadd.s32 %v5160, 1
    %v5165 = vsel %vm5163, %v5164, %v5160
    %v5166 = vadd.s32 %v5161, %v5165
    %v5167 = vadd.s32 %v5166, 536870912
    %v5168 = vshrl.u32 %v5167, 30
    %v5169 = vshll.u32 %v5168, 30
    %v5170 = vsub.s32 %v5166, %v5169
    %vm5171 = vcmp.lt.s32.totalorder %v5170, 0
    %v5172 = vsub.s32 0, %v5170
    %v5173 = vsel %vm5171, %v5172, %v5170
    %v5174 = vclz %v5173
    %v5175 = vsub.s32 %v5174, 2
    %vm5176 = vcmp.gt.s32.totalorder 0, %v5175
    %v5177 = vsel %vm5176, 0, %v5175
    %v5178 = vsub.s32 32, %v5177
    %v5179 = vshll.u32 %v5170, %v5177
    %v5180 = vshrl.u32 %v5162, %v5178
    %v5181 = vor.u32 %v5179, %v5180
    %v5182 = vsub.s32 4294967266, %v5177
    %v5183 = vadd.s32 %v5182, 127
    %v5184 = vshll.u32 %v5183, 23
    %v5185 = vor.u32 4788187, %v5184
    %v5186 = vand.u32 2147483647, %v5185
    %v5188 = vcvt.s32.f32 %v5181
    %v5189 = vmul.f32 %v5188, %v5186
    %v5190 = vxor.u32 %v5189, 2147483648
    %v5191 = vsel %vm5108, %v5190, %v5189
    %v5192 = vsub.s32 4, %v5168
    %v5193 = vsel %vm5108, %v5192, %v5168
    %v5194 = vsel %vm5107, %v3632, %v5191
    %v5195 = vsel %vm5107, 0, %v5193
    %v5196 = vcosq.f32.pop %v5194
    %v5197 = vsinq.f32.pop %v5194
    %vm5198 = vweird.f32 %v3632
    %v5199 = vadd.s32 %v5195, 3
    %v5200 = vand.u32 %v5199, 3
    %vm5201 = vcmp.lt.s32.totalorder %v5200, 2
    %vm5202 = vcmp.eq.s32.totalorder %v5200, 0
    %v5203 = vxor.u32 %v5197, 2147483648
    %v5204 = vsel %vm5202, %v5196, %v5203
    %vm5205 = vcmp.eq.s32.totalorder %v5200, 2
    %v5206 = vxor.u32 %v5196, 2147483648
    %v5207 = vsel %vm5205, %v5206, %v5197
    %v5208 = vsel %vm5201, %v5204, %v5207
    %v5209 = vsel %vm5198, nan, %v5208
    %v5210 = vand.u32 2147483647, %v3633
    %vm5211 = vcmp.le.f32.partialorder %v5210, 0.7853982
    %vm5212 = vcmp.lt.s32.totalorder %v3633, 0
    %v5213 = vand.u32 %v3633, 2139095040
    %v5214 = vshrl.u32 %v5213, 23
    %v5215 = vsub.s32 %v5214, 127
    %v5216 = vand.u32 2147483647, %v3633
    %v5217 = vand.u32 %v5216, 8388607
    %v5218 = vor.u32 %v5217, 8388608
    %v5219 = vsub.s32 0, %v5218
    %v5220 = vadd.s32 %v5215, 1
    %vm5221 = vcmp.gt.s32.totalorder %v5220, 0
    %v5222 = vsel %vm5221, %v5220, 0
    %v5223 = vshrl.u32 %v5222, 5
    %v5224 = vand.u32 %v5222, 31
    %v5225 = vsub.s32 32, %v5224
    %v5226 = vshrl.u32 683565275, %v5225
    %v5227 = vshll.u32 683565275, %v5224
    %v5228 = vshrl.u32 2475754826, %v5225
    %v5229 = vor.u32 %v5227, %v5228
    %v5230 = vshll.u32 2475754826, %v5224
    %v5231 = vshrl.u32 2131351028, %v5225
    %v5232 = vor.u32 %v5230, %v5231
    %v5233 = vshll.u32 2131351028, %v5224
    %v5234 = vshrl.u32 2102212464, %v5225
    %v5235 = vor.u32 %v5233, %v5234
    %v5236 = vshll.u32 2102212464, %v5224
    %v5237 = vshrl.u32 920167782, %v5225
    %v5238 = vor.u32 %v5236, %v5237
    %v5239 = vshll.u32 920167782, %v5224
    %v5240 = vshrl.u32 1326507024, %v5225
    %v5241 = vor.u32 %v5239, %v5240
    %vm5242 = vcmp.lt.s32.totalorder %v5223, 1
    %vm5243 = vcmp.lt.s32.totalorder %v5223, 2
    %vm5244 = vcmp.lt.s32.totalorder %v5223, 3
    %vm5245 = vcmp.lt.s32.totalorder %v5223, 4
    %v5246 = vsel %vm5242, %v5226, %v5229
    %v5247 = vsel %vm5245, %v5235, 2102212464
    %v5248 = vsel %vm5244, %v5232, %v5247
    %v5249 = vsel %vm5243, %v5246, %v5248
    %v5250 = vsel %vm5242, %v5229, %v5232
    %v5251 = vsel %vm5245, %v5238, 920167782
    %v5252 = vsel %vm5244, %v5235, %v5251
    %v5253 = vsel %vm5243, %v5250, %v5252
    %v5254 = vsel %vm5242, %v5232, %v5235
    %v5255 = vsel %vm5245, %v5241, 1326507024
    %v5256 = vsel %vm5244, %v5238, %v5255
    %v5257 = vsel %vm5243, %v5254, %v5256
    %v5258 = vshll.u32 %v5218, 8
    %v5259 = vmul.u32.u64.compose %v5258, %v5257
    %v5260 = vextract.low.u32 %v5259
    %v5261 = vextract.high.u32 %v5259
    %v5262 = vmul.u32.u64.compose %v5258, %v5253
    %v5263 = vextract.low.u32 %v5262
    %v5264 = vextract.high.u32 %v5262
    %v5265 = vmul.u32 %v5258, %v5249
    %v5266 = vadd.s32 %v5261, %v5263
    %vm5267 = vc.u32 %v5261, %v5263
    %v5268 = vadd.s32 %v5264, 1
    %v5269 = vsel %vm5267, %v5268, %v5264
    %v5270 = vadd.s32 %v5265, %v5269
    %v5271 = vadd.s32 %v5270, 536870912
    %v5272 = vshrl.u32 %v5271, 30
    %v5273 = vshll.u32 %v5272, 30
    %v5274 = vsub.s32 %v5270, %v5273
    %vm5275 = vcmp.lt.s32.totalorder %v5274, 0
    %v5276 = vsub.s32 0, %v5274
    %v5277 = vsel %vm5275, %v5276, %v5274
    %v5278 = vclz %v5277
    %v5279 = vsub.s32 %v5278, 2
    %vm5280 = vcmp.gt.s32.totalorder 0, %v5279
    %v5281 = vsel %vm5280, 0, %v5279
    %v5282 = vsub.s32 32, %v5281
    %v5283 = vshll.u32 %v5274, %v5281
    %v5284 = vshrl.u32 %v5266, %v5282
    %v5285 = vor.u32 %v5283, %v5284
    %v5286 = vsub.s32 4294967266, %v5281
    %v5287 = vadd.s32 %v5286, 127
    %v5288 = vshll.u32 %v5287, 23
    %v5289 = vor.u32 4788187, %v5288
    %v5290 = vand.u32 2147483647, %v5289
    %v5292 = vcvt.s32.f32 %v5285
    %v5293 = vmul.f32 %v5292, %v5290
    %v5294 = vxor.u32 %v5293, 2147483648
    %v5295 = vsel %vm5212, %v5294, %v5293
    %v5296 = vsub.s32 4, %v5272
    %v5297 = vsel %vm5212, %v5296, %v5272
    %v5298 = vsel %vm5211, %v3633, %v5295
    %v5299 = vsel %vm5211, 0, %v5297
    %v5300 = vcosq.f32.pop %v5298
    %v5301 = vsinq.f32.pop %v5298
    %vm5302 = vweird.f32 %v3633
    %v5303 = vadd.s32 %v5299, 3
    %v5304 = vand.u32 %v5303, 3
    %vm5305 = vcmp.lt.s32.totalorder %v5304, 2
    %vm5306 = vcmp.eq.s32.totalorder %v5304, 0
    %v5307 = vxor.u32 %v5301, 2147483648
    %v5308 = vsel %vm5306, %v5300, %v5307
    %vm5309 = vcmp.eq.s32.totalorder %v5304, 2
    %v5310 = vxor.u32 %v5300, 2147483648
    %v5311 = vsel %vm5309, %v5310, %v5301
    %v5312 = vsel %vm5305, %v5308, %v5311
    %v5313 = vsel %vm5302, nan, %v5312
    %v5314 = vand.u32 2147483647, %v3634
    %vm5315 = vcmp.le.f32.partialorder %v5314, 0.7853982
    %vm5316 = vcmp.lt.s32.totalorder %v3634, 0
    %v5317 = vand.u32 %v3634, 2139095040
    %v5318 = vshrl.u32 %v5317, 23
    %v5319 = vsub.s32 %v5318, 127
    %v5320 = vand.u32 2147483647, %v3634
    %v5321 = vand.u32 %v5320, 8388607
    %v5322 = vor.u32 %v5321, 8388608
    %v5323 = vsub.s32 0, %v5322
    %v5324 = vadd.s32 %v5319, 1
    %vm5325 = vcmp.gt.s32.totalorder %v5324, 0
    %v5326 = vsel %vm5325, %v5324, 0
    %v5327 = vshrl.u32 %v5326, 5
    %v5328 = vand.u32 %v5326, 31
    %v5329 = vsub.s32 32, %v5328
    %v5330 = vshrl.u32 683565275, %v5329
    %v5331 = vshll.u32 683565275, %v5328
    %v5332 = vshrl.u32 2475754826, %v5329
    %v5333 = vor.u32 %v5331, %v5332
    %v5334 = vshll.u32 2475754826, %v5328
    %v5335 = vshrl.u32 2131351028, %v5329
    %v5336 = vor.u32 %v5334, %v5335
    %v5337 = vshll.u32 2131351028, %v5328
    %v5338 = vshrl.u32 2102212464, %v5329
    %v5339 = vor.u32 %v5337, %v5338
    %v5340 = vshll.u32 2102212464, %v5328
    %v5341 = vshrl.u32 920167782, %v5329
    %v5342 = vor.u32 %v5340, %v5341
    %v5343 = vshll.u32 920167782, %v5328
    %v5344 = vshrl.u32 1326507024, %v5329
    %v5345 = vor.u32 %v5343, %v5344
    %vm5346 = vcmp.lt.s32.totalorder %v5327, 1
    %vm5347 = vcmp.lt.s32.totalorder %v5327, 2
    %vm5348 = vcmp.lt.s32.totalorder %v5327, 3
    %vm5349 = vcmp.lt.s32.totalorder %v5327, 4
    %v5350 = vsel %vm5346, %v5330, %v5333
    %v5351 = vsel %vm5349, %v5339, 2102212464
    %v5352 = vsel %vm5348, %v5336, %v5351
    %v5353 = vsel %vm5347, %v5350, %v5352
    %v5354 = vsel %vm5346, %v5333, %v5336
    %v5355 = vsel %vm5349, %v5342, 920167782
    %v5356 = vsel %vm5348, %v5339, %v5355
    %v5357 = vsel %vm5347, %v5354, %v5356
    %v5358 = vsel %vm5346, %v5336, %v5339
    %v5359 = vsel %vm5349, %v5345, 1326507024
    %v5360 = vsel %vm5348, %v5342, %v5359
    %v5361 = vsel %vm5347, %v5358, %v5360
    %v5362 = vshll.u32 %v5322, 8
    %v5363 = vmul.u32.u64.compose %v5362, %v5361
    %v5364 = vextract.low.u32 %v5363
    %v5365 = vextract.high.u32 %v5363
    %v5366 = vmul.u32.u64.compose %v5362, %v5357
    %v5367 = vextract.low.u32 %v5366
    %v5368 = vextract.high.u32 %v5366
    %v5369 = vmul.u32 %v5362, %v5353
    %v5370 = vadd.s32 %v5365, %v5367
    %vm5371 = vc.u32 %v5365, %v5367
    %v5372 = vadd.s32 %v5368, 1
    %v5373 = vsel %vm5371, %v5372, %v5368
    %v5374 = vadd.s32 %v5369, %v5373
    %v5375 = vadd.s32 %v5374, 536870912
    %v5376 = vshrl.u32 %v5375, 30
    %v5377 = vshll.u32 %v5376, 30
    %v5378 = vsub.s32 %v5374, %v5377
    %vm5379 = vcmp.lt.s32.totalorder %v5378, 0
    %v5380 = vsub.s32 0, %v5378
    %v5381 = vsel %vm5379, %v5380, %v5378
    %v5382 = vclz %v5381
    %v5383 = vsub.s32 %v5382, 2
    %vm5384 = vcmp.gt.s32.totalorder 0, %v5383
    %v5385 = vsel %vm5384, 0, %v5383
    %v5386 = vsub.s32 32, %v5385
    %v5387 = vshll.u32 %v5378, %v5385
    %v5388 = vshrl.u32 %v5370, %v5386
    %v5389 = vor.u32 %v5387, %v5388
    %v5390 = vsub.s32 4294967266, %v5385
    %v5391 = vadd.s32 %v5390, 127
    %v5392 = vshll.u32 %v5391, 23
    %v5393 = vor.u32 4788187, %v5392
    %v5394 = vand.u32 2147483647, %v5393
    %v5396 = vcvt.s32.f32 %v5389
    %v5397 = vmul.f32 %v5396, %v5394
    %v5398 = vxor.u32 %v5397, 2147483648
    %v5399 = vsel %vm5316, %v5398, %v5397
    %v5400 = vsub.s32 4, %v5376
    %v5401 = vsel %vm5316, %v5400, %v5376
    %v5402 = vsel %vm5315, %v3634, %v5399
    %v5403 = vsel %vm5315, 0, %v5401
    %v5404 = vcosq.f32.pop %v5402
    %v5405 = vsinq.f32.pop %v5402
    %vm5406 = vweird.f32 %v3634
    %v5407 = vadd.s32 %v5403, 3
    %v5408 = vand.u32 %v5407, 3
    %vm5409 = vcmp.lt.s32.totalorder %v5408, 2
    %vm5410 = vcmp.eq.s32.totalorder %v5408, 0
    %v5411 = vxor.u32 %v5405, 2147483648
    %v5412 = vsel %vm5410, %v5404, %v5411
    %vm5413 = vcmp.eq.s32.totalorder %v5408, 2
    %v5414 = vxor.u32 %v5404, 2147483648
    %v5415 = vsel %vm5413, %v5414, %v5405
    %v5416 = vsel %vm5409, %v5412, %v5415
    %v5417 = vsel %vm5406, nan, %v5416
    %v5418 = vand.u32 2147483647, %v3635
    %vm5419 = vcmp.le.f32.partialorder %v5418, 0.7853982
    %vm5420 = vcmp.lt.s32.totalorder %v3635, 0
    %v5421 = vand.u32 %v3635, 2139095040
    %v5422 = vshrl.u32 %v5421, 23
    %v5423 = vsub.s32 %v5422, 127
    %v5424 = vand.u32 2147483647, %v3635
    %v5425 = vand.u32 %v5424, 8388607
    %v5426 = vor.u32 %v5425, 8388608
    %v5427 = vsub.s32 0, %v5426
    %v5428 = vadd.s32 %v5423, 1
    %vm5429 = vcmp.gt.s32.totalorder %v5428, 0
    %v5430 = vsel %vm5429, %v5428, 0
    %v5431 = vshrl.u32 %v5430, 5
    %v5432 = vand.u32 %v5430, 31
    %v5433 = vsub.s32 32, %v5432
    %v5434 = vshrl.u32 683565275, %v5433
    %v5435 = vshll.u32 683565275, %v5432
    %v5436 = vshrl.u32 2475754826, %v5433
    %v5437 = vor.u32 %v5435, %v5436
    %v5438 = vshll.u32 2475754826, %v5432
    %v5439 = vshrl.u32 2131351028, %v5433
    %v5440 = vor.u32 %v5438, %v5439
    %v5441 = vshll.u32 2131351028, %v5432
    %v5442 = vshrl.u32 2102212464, %v5433
    %v5443 = vor.u32 %v5441, %v5442
    %v5444 = vshll.u32 2102212464, %v5432
    %v5445 = vshrl.u32 920167782, %v5433
    %v5446 = vor.u32 %v5444, %v5445
    %v5447 = vshll.u32 920167782, %v5432
    %v5448 = vshrl.u32 1326507024, %v5433
    %v5449 = vor.u32 %v5447, %v5448
    %vm5450 = vcmp.lt.s32.totalorder %v5431, 1
    %vm5451 = vcmp.lt.s32.totalorder %v5431, 2
    %vm5452 = vcmp.lt.s32.totalorder %v5431, 3
    %vm5453 = vcmp.lt.s32.totalorder %v5431, 4
    %v5454 = vsel %vm5450, %v5434, %v5437
    %v5455 = vsel %vm5453, %v5443, 2102212464
    %v5456 = vsel %vm5452, %v5440, %v5455
    %v5457 = vsel %vm5451, %v5454, %v5456
    %v5458 = vsel %vm5450, %v5437, %v5440
    %v5459 = vsel %vm5453, %v5446, 920167782
    %v5460 = vsel %vm5452, %v5443, %v5459
    %v5461 = vsel %vm5451, %v5458, %v5460
    %v5462 = vsel %vm5450, %v5440, %v5443
    %v5463 = vsel %vm5453, %v5449, 1326507024
    %v5464 = vsel %vm5452, %v5446, %v5463
    %v5465 = vsel %vm5451, %v5462, %v5464
    %v5466 = vshll.u32 %v5426, 8
    %v5467 = vmul.u32.u64.compose %v5466, %v5465
    %v5468 = vextract.low.u32 %v5467
    %v5469 = vextract.high.u32 %v5467
    %v5470 = vmul.u32.u64.compose %v5466, %v5461
    %v5471 = vextract.low.u32 %v5470
    %v5472 = vextract.high.u32 %v5470
    %v5473 = vmul.u32 %v5466, %v5457
    %v5474 = vadd.s32 %v5469, %v5471
    %vm5475 = vc.u32 %v5469, %v5471
    %v5476 = vadd.s32 %v5472, 1
    %v5477 = vsel %vm5475, %v5476, %v5472
    %v5478 = vadd.s32 %v5473, %v5477
    %v5479 = vadd.s32 %v5478, 536870912
    %v5480 = vshrl.u32 %v5479, 30
    %v5481 = vshll.u32 %v5480, 30
    %v5482 = vsub.s32 %v5478, %v5481
    %vm5483 = vcmp.lt.s32.totalorder %v5482, 0
    %v5484 = vsub.s32 0, %v5482
    %v5485 = vsel %vm5483, %v5484, %v5482
    %v5486 = vclz %v5485
    %v5487 = vsub.s32 %v5486, 2
    %vm5488 = vcmp.gt.s32.totalorder 0, %v5487
    %v5489 = vsel %vm5488, 0, %v5487
    %v5490 = vsub.s32 32, %v5489
    %v5491 = vshll.u32 %v5482, %v5489
    %v5492 = vshrl.u32 %v5474, %v5490
    %v5493 = vor.u32 %v5491, %v5492
    %v5494 = vsub.s32 4294967266, %v5489
    %v5495 = vadd.s32 %v5494, 127
    %v5496 = vshll.u32 %v5495, 23
    %v5497 = vor.u32 4788187, %v5496
    %v5498 = vand.u32 2147483647, %v5497
    %v5500 = vcvt.s32.f32 %v5493
    %v5501 = vmul.f32 %v5500, %v5498
    %v5502 = vxor.u32 %v5501, 2147483648
    %v5503 = vsel %vm5420, %v5502, %v5501
    %v5504 = vsub.s32 4, %v5480
    %v5505 = vsel %vm5420, %v5504, %v5480
    %v5506 = vsel %vm5419, %v3635, %v5503
    %v5507 = vsel %vm5419, 0, %v5505
    %v5508 = vcosq.f32.pop %v5506
    %v5509 = vsinq.f32.pop %v5506
    %vm5510 = vweird.f32 %v3635
    %v5511 = vadd.s32 %v5507, 3
    %v5512 = vand.u32 %v5511, 3
    %vm5513 = vcmp.lt.s32.totalorder %v5512, 2
    %vm5514 = vcmp.eq.s32.totalorder %v5512, 0
    %v5515 = vxor.u32 %v5509, 2147483648
    %v5516 = vsel %vm5514, %v5508, %v5515
    %vm5517 = vcmp.eq.s32.totalorder %v5512, 2
    %v5518 = vxor.u32 %v5508, 2147483648
    %v5519 = vsel %vm5517, %v5518, %v5509
    %v5520 = vsel %vm5513, %v5516, %v5519
    %v5521 = vsel %vm5510, nan, %v5520
    %v5522 = vand.u32 2147483647, %v3636
    %vm5523 = vcmp.le.f32.partialorder %v5522, 0.7853982
    %vm5524 = vcmp.lt.s32.totalorder %v3636, 0
    %v5525 = vand.u32 %v3636, 2139095040
    %v5526 = vshrl.u32 %v5525, 23
    %v5527 = vsub.s32 %v5526, 127
    %v5528 = vand.u32 2147483647, %v3636
    %v5529 = vand.u32 %v5528, 8388607
    %v5530 = vor.u32 %v5529, 8388608
    %v5531 = vsub.s32 0, %v5530
    %v5532 = vadd.s32 %v5527, 1
    %vm5533 = vcmp.gt.s32.totalorder %v5532, 0
    %v5534 = vsel %vm5533, %v5532, 0
    %v5535 = vshrl.u32 %v5534, 5
    %v5536 = vand.u32 %v5534, 31
    %v5537 = vsub.s32 32, %v5536
    %v5538 = vshrl.u32 683565275, %v5537
    %v5539 = vshll.u32 683565275, %v5536
    %v5540 = vshrl.u32 2475754826, %v5537
    %v5541 = vor.u32 %v5539, %v5540
    %v5542 = vshll.u32 2475754826, %v5536
    %v5543 = vshrl.u32 2131351028, %v5537
    %v5544 = vor.u32 %v5542, %v5543
    %v5545 = vshll.u32 2131351028, %v5536
    %v5546 = vshrl.u32 2102212464, %v5537
    %v5547 = vor.u32 %v5545, %v5546
    %v5548 = vshll.u32 2102212464, %v5536
    %v5549 = vshrl.u32 920167782, %v5537
    %v5550 = vor.u32 %v5548, %v5549
    %v5551 = vshll.u32 920167782, %v5536
    %v5552 = vshrl.u32 1326507024, %v5537
    %v5553 = vor.u32 %v5551, %v5552
    %vm5554 = vcmp.lt.s32.totalorder %v5535, 1
    %vm5555 = vcmp.lt.s32.totalorder %v5535, 2
    %vm5556 = vcmp.lt.s32.totalorder %v5535, 3
    %vm5557 = vcmp.lt.s32.totalorder %v5535, 4
    %v5558 = vsel %vm5554, %v5538, %v5541
    %v5559 = vsel %vm5557, %v5547, 2102212464
    %v5560 = vsel %vm5556, %v5544, %v5559
    %v5561 = vsel %vm5555, %v5558, %v5560
    %v5562 = vsel %vm5554, %v5541, %v5544
    %v5563 = vsel %vm5557, %v5550, 920167782
    %v5564 = vsel %vm5556, %v5547, %v5563
    %v5565 = vsel %vm5555, %v5562, %v5564
    %v5566 = vsel %vm5554, %v5544, %v5547
    %v5567 = vsel %vm5557, %v5553, 1326507024
    %v5568 = vsel %vm5556, %v5550, %v5567
    %v5569 = vsel %vm5555, %v5566, %v5568
    %v5570 = vshll.u32 %v5530, 8
    %v5571 = vmul.u32.u64.compose %v5570, %v5569
    %v5572 = vextract.low.u32 %v5571
    %v5573 = vextract.high.u32 %v5571
    %v5574 = vmul.u32.u64.compose %v5570, %v5565
    %v5575 = vextract.low.u32 %v5574
    %v5576 = vextract.high.u32 %v5574
    %v5577 = vmul.u32 %v5570, %v5561
    %v5578 = vadd.s32 %v5573, %v5575
    %vm5579 = vc.u32 %v5573, %v5575
    %v5580 = vadd.s32 %v5576, 1
    %v5581 = vsel %vm5579, %v5580, %v5576
    %v5582 = vadd.s32 %v5577, %v5581
    %v5583 = vadd.s32 %v5582, 536870912
    %v5584 = vshrl.u32 %v5583, 30
    %v5585 = vshll.u32 %v5584, 30
    %v5586 = vsub.s32 %v5582, %v5585
    %vm5587 = vcmp.lt.s32.totalorder %v5586, 0
    %v5588 = vsub.s32 0, %v5586
    %v5589 = vsel %vm5587, %v5588, %v5586
    %v5590 = vclz %v5589
    %v5591 = vsub.s32 %v5590, 2
    %vm5592 = vcmp.gt.s32.totalorder 0, %v5591
    %v5593 = vsel %vm5592, 0, %v5591
    %v5594 = vsub.s32 32, %v5593
    %v5595 = vshll.u32 %v5586, %v5593
    %v5596 = vshrl.u32 %v5578, %v5594
    %v5597 = vor.u32 %v5595, %v5596
    %v5598 = vsub.s32 4294967266, %v5593
    %v5599 = vadd.s32 %v5598, 127
    %v5600 = vshll.u32 %v5599, 23
    %v5601 = vor.u32 4788187, %v5600
    %v5602 = vand.u32 2147483647, %v5601
    %v5604 = vcvt.s32.f32 %v5597
    %v5605 = vmul.f32 %v5604, %v5602
    %v5606 = vxor.u32 %v5605, 2147483648
    %v5607 = vsel %vm5524, %v5606, %v5605
    %v5608 = vsub.s32 4, %v5584
    %v5609 = vsel %vm5524, %v5608, %v5584
    %v5610 = vsel %vm5523, %v3636, %v5607
    %v5611 = vsel %vm5523, 0, %v5609
    %v5612 = vcosq.f32.pop %v5610
    %v5613 = vsinq.f32.pop %v5610
    %vm5614 = vweird.f32 %v3636
    %v5615 = vadd.s32 %v5611, 3
    %v5616 = vand.u32 %v5615, 3
    %vm5617 = vcmp.lt.s32.totalorder %v5616, 2
    %vm5618 = vcmp.eq.s32.totalorder %v5616, 0
    %v5619 = vxor.u32 %v5613, 2147483648
    %v5620 = vsel %vm5618, %v5612, %v5619
    %vm5621 = vcmp.eq.s32.totalorder %v5616, 2
    %v5622 = vxor.u32 %v5612, 2147483648
    %v5623 = vsel %vm5621, %v5622, %v5613
    %v5624 = vsel %vm5617, %v5620, %v5623
    %v5625 = vsel %vm5614, nan, %v5624
    %v5626 = vand.u32 2147483647, %v3637
    %vm5627 = vcmp.le.f32.partialorder %v5626, 0.7853982
    %vm5628 = vcmp.lt.s32.totalorder %v3637, 0
    %v5629 = vand.u32 %v3637, 2139095040
    %v5630 = vshrl.u32 %v5629, 23
    %v5631 = vsub.s32 %v5630, 127
    %v5632 = vand.u32 2147483647, %v3637
    %v5633 = vand.u32 %v5632, 8388607
    %v5634 = vor.u32 %v5633, 8388608
    %v5635 = vsub.s32 0, %v5634
    %v5636 = vadd.s32 %v5631, 1
    %vm5637 = vcmp.gt.s32.totalorder %v5636, 0
    %v5638 = vsel %vm5637, %v5636, 0
    %v5639 = vshrl.u32 %v5638, 5
    %v5640 = vand.u32 %v5638, 31
    %v5641 = vsub.s32 32, %v5640
    %v5642 = vshrl.u32 683565275, %v5641
    %v5643 = vshll.u32 683565275, %v5640
    %v5644 = vshrl.u32 2475754826, %v5641
    %v5645 = vor.u32 %v5643, %v5644
    %v5646 = vshll.u32 2475754826, %v5640
    %v5647 = vshrl.u32 2131351028, %v5641
    %v5648 = vor.u32 %v5646, %v5647
    %v5649 = vshll.u32 2131351028, %v5640
    %v5650 = vshrl.u32 2102212464, %v5641
    %v5651 = vor.u32 %v5649, %v5650
    %v5652 = vshll.u32 2102212464, %v5640
    %v5653 = vshrl.u32 920167782, %v5641
    %v5654 = vor.u32 %v5652, %v5653
    %v5655 = vshll.u32 920167782, %v5640
    %v5656 = vshrl.u32 1326507024, %v5641
    %v5657 = vor.u32 %v5655, %v5656
    %vm5658 = vcmp.lt.s32.totalorder %v5639, 1
    %vm5659 = vcmp.lt.s32.totalorder %v5639, 2
    %vm5660 = vcmp.lt.s32.totalorder %v5639, 3
    %vm5661 = vcmp.lt.s32.totalorder %v5639, 4
    %v5662 = vsel %vm5658, %v5642, %v5645
    %v5663 = vsel %vm5661, %v5651, 2102212464
    %v5664 = vsel %vm5660, %v5648, %v5663
    %v5665 = vsel %vm5659, %v5662, %v5664
    %v5666 = vsel %vm5658, %v5645, %v5648
    %v5667 = vsel %vm5661, %v5654, 920167782
    %v5668 = vsel %vm5660, %v5651, %v5667
    %v5669 = vsel %vm5659, %v5666, %v5668
    %v5670 = vsel %vm5658, %v5648, %v5651
    %v5671 = vsel %vm5661, %v5657, 1326507024
    %v5672 = vsel %vm5660, %v5654, %v5671
    %v5673 = vsel %vm5659, %v5670, %v5672
    %v5674 = vshll.u32 %v5634, 8
    %v5675 = vmul.u32.u64.compose %v5674, %v5673
    %v5676 = vextract.low.u32 %v5675
    %v5677 = vextract.high.u32 %v5675
    %v5678 = vmul.u32.u64.compose %v5674, %v5669
    %v5679 = vextract.low.u32 %v5678
    %v5680 = vextract.high.u32 %v5678
    %v5681 = vmul.u32 %v5674, %v5665
    %v5682 = vadd.s32 %v5677, %v5679
    %vm5683 = vc.u32 %v5677, %v5679
    %v5684 = vadd.s32 %v5680, 1
    %v5685 = vsel %vm5683, %v5684, %v5680
    %v5686 = vadd.s32 %v5681, %v5685
    %v5687 = vadd.s32 %v5686, 536870912
    %v5688 = vshrl.u32 %v5687, 30
    %v5689 = vshll.u32 %v5688, 30
    %v5690 = vsub.s32 %v5686, %v5689
    %vm5691 = vcmp.lt.s32.totalorder %v5690, 0
    %v5692 = vsub.s32 0, %v5690
    %v5693 = vsel %vm5691, %v5692, %v5690
    %v5694 = vclz %v5693
    %v5695 = vsub.s32 %v5694, 2
    %vm5696 = vcmp.gt.s32.totalorder 0, %v5695
    %v5697 = vsel %vm5696, 0, %v5695
    %v5698 = vsub.s32 32, %v5697
    %v5699 = vshll.u32 %v5690, %v5697
    %v5700 = vshrl.u32 %v5682, %v5698
    %v5701 = vor.u32 %v5699, %v5700
    %v5702 = vsub.s32 4294967266, %v5697
    %v5703 = vadd.s32 %v5702, 127
    %v5704 = vshll.u32 %v5703, 23
    %v5705 = vor.u32 4788187, %v5704
    %v5706 = vand.u32 2147483647, %v5705
    %v5708 = vcvt.s32.f32 %v5701
    %v5709 = vmul.f32 %v5708, %v5706
    %v5710 = vxor.u32 %v5709, 2147483648
    %v5711 = vsel %vm5628, %v5710, %v5709
    %v5712 = vsub.s32 4, %v5688
    %v5713 = vsel %vm5628, %v5712, %v5688
    %v5714 = vsel %vm5627, %v3637, %v5711
    %v5715 = vsel %vm5627, 0, %v5713
    %v5716 = vcosq.f32.pop %v5714
    %v5717 = vsinq.f32.pop %v5714
    %vm5718 = vweird.f32 %v3637
    %v5719 = vadd.s32 %v5715, 3
    %v5720 = vand.u32 %v5719, 3
    %vm5721 = vcmp.lt.s32.totalorder %v5720, 2
    %vm5722 = vcmp.eq.s32.totalorder %v5720, 0
    %v5723 = vxor.u32 %v5717, 2147483648
    %v5724 = vsel %vm5722, %v5716, %v5723
    %vm5725 = vcmp.eq.s32.totalorder %v5720, 2
    %v5726 = vxor.u32 %v5716, 2147483648
    %v5727 = vsel %vm5725, %v5726, %v5717
    %v5728 = vsel %vm5721, %v5724, %v5727
    %v5729 = vsel %vm5718, nan, %v5728
    %v5730 = vand.u32 2147483647, %v3638
    %vm5731 = vcmp.le.f32.partialorder %v5730, 0.7853982
    %vm5732 = vcmp.lt.s32.totalorder %v3638, 0
    %v5733 = vand.u32 %v3638, 2139095040
    %v5734 = vshrl.u32 %v5733, 23
    %v5735 = vsub.s32 %v5734, 127
    %v5736 = vand.u32 2147483647, %v3638
    %v5737 = vand.u32 %v5736, 8388607
    %v5738 = vor.u32 %v5737, 8388608
    %v5739 = vsub.s32 0, %v5738
    %v5740 = vadd.s32 %v5735, 1
    %vm5741 = vcmp.gt.s32.totalorder %v5740, 0
    %v5742 = vsel %vm5741, %v5740, 0
    %v5743 = vshrl.u32 %v5742, 5
    %v5744 = vand.u32 %v5742, 31
    %v5745 = vsub.s32 32, %v5744
    %v5746 = vshrl.u32 683565275, %v5745
    %v5747 = vshll.u32 683565275, %v5744
    %v5748 = vshrl.u32 2475754826, %v5745
    %v5749 = vor.u32 %v5747, %v5748
    %v5750 = vshll.u32 2475754826, %v5744
    %v5751 = vshrl.u32 2131351028, %v5745
    %v5752 = vor.u32 %v5750, %v5751
    %v5753 = vshll.u32 2131351028, %v5744
    %v5754 = vshrl.u32 2102212464, %v5745
    %v5755 = vor.u32 %v5753, %v5754
    %v5756 = vshll.u32 2102212464, %v5744
    %v5757 = vshrl.u32 920167782, %v5745
    %v5758 = vor.u32 %v5756, %v5757
    %v5759 = vshll.u32 920167782, %v5744
    %v5760 = vshrl.u32 1326507024, %v5745
    %v5761 = vor.u32 %v5759, %v5760
    %vm5762 = vcmp.lt.s32.totalorder %v5743, 1
    %vm5763 = vcmp.lt.s32.totalorder %v5743, 2
    %vm5764 = vcmp.lt.s32.totalorder %v5743, 3
    %vm5765 = vcmp.lt.s32.totalorder %v5743, 4
    %v5766 = vsel %vm5762, %v5746, %v5749
    %v5767 = vsel %vm5765, %v5755, 2102212464
    %v5768 = vsel %vm5764, %v5752, %v5767
    %v5769 = vsel %vm5763, %v5766, %v5768
    %v5770 = vsel %vm5762, %v5749, %v5752
    %v5771 = vsel %vm5765, %v5758, 920167782
    %v5772 = vsel %vm5764, %v5755, %v5771
    %v5773 = vsel %vm5763, %v5770, %v5772
    %v5774 = vsel %vm5762, %v5752, %v5755
    %v5775 = vsel %vm5765, %v5761, 1326507024
    %v5776 = vsel %vm5764, %v5758, %v5775
    %v5777 = vsel %vm5763, %v5774, %v5776
    %v5778 = vshll.u32 %v5738, 8
    %v5779 = vmul.u32.u64.compose %v5778, %v5777
    %v5780 = vextract.low.u32 %v5779
    %v5781 = vextract.high.u32 %v5779
    %v5782 = vmul.u32.u64.compose %v5778, %v5773
    %v5783 = vextract.low.u32 %v5782
    %v5784 = vextract.high.u32 %v5782
    %v5785 = vmul.u32 %v5778, %v5769
    %v5786 = vadd.s32 %v5781, %v5783
    %vm5787 = vc.u32 %v5781, %v5783
    %v5788 = vadd.s32 %v5784, 1
    %v5789 = vsel %vm5787, %v5788, %v5784
    %v5790 = vadd.s32 %v5785, %v5789
    %v5791 = vadd.s32 %v5790, 536870912
    %v5792 = vshrl.u32 %v5791, 30
    %v5793 = vshll.u32 %v5792, 30
    %v5794 = vsub.s32 %v5790, %v5793
    %vm5795 = vcmp.lt.s32.totalorder %v5794, 0
    %v5796 = vsub.s32 0, %v5794
    %v5797 = vsel %vm5795, %v5796, %v5794
    %v5798 = vclz %v5797
    %v5799 = vsub.s32 %v5798, 2
    %vm5800 = vcmp.gt.s32.totalorder 0, %v5799
    %v5801 = vsel %vm5800, 0, %v5799
    %v5802 = vsub.s32 32, %v5801
    %v5803 = vshll.u32 %v5794, %v5801
    %v5804 = vshrl.u32 %v5786, %v5802
    %v5805 = vor.u32 %v5803, %v5804
    %v5806 = vsub.s32 4294967266, %v5801
    %v5807 = vadd.s32 %v5806, 127
    %v5808 = vshll.u32 %v5807, 23
    %v5809 = vor.u32 4788187, %v5808
    %v5810 = vand.u32 2147483647, %v5809
    %v5812 = vcvt.s32.f32 %v5805
    %v5813 = vmul.f32 %v5812, %v5810
    %v5814 = vxor.u32 %v5813, 2147483648
    %v5815 = vsel %vm5732, %v5814, %v5813
    %v5816 = vsub.s32 4, %v5792
    %v5817 = vsel %vm5732, %v5816, %v5792
    %v5818 = vsel %vm5731, %v3638, %v5815
    %v5819 = vsel %vm5731, 0, %v5817
    %v5820 = vcosq.f32.pop %v5818
    %v5821 = vsinq.f32.pop %v5818
    %vm5822 = vweird.f32 %v3638
    %v5823 = vadd.s32 %v5819, 3
    %v5824 = vand.u32 %v5823, 3
    %vm5825 = vcmp.lt.s32.totalorder %v5824, 2
    %vm5826 = vcmp.eq.s32.totalorder %v5824, 0
    %v5827 = vxor.u32 %v5821, 2147483648
    %v5828 = vsel %vm5826, %v5820, %v5827
    %vm5829 = vcmp.eq.s32.totalorder %v5824, 2
    %v5830 = vxor.u32 %v5820, 2147483648
    %v5831 = vsel %vm5829, %v5830, %v5821
    %v5832 = vsel %vm5825, %v5828, %v5831
    %v5833 = vsel %vm5822, nan, %v5832
    %v5834 = vand.u32 2147483647, %v3639
    %vm5835 = vcmp.le.f32.partialorder %v5834, 0.7853982
    %vm5836 = vcmp.lt.s32.totalorder %v3639, 0
    %v5837 = vand.u32 %v3639, 2139095040
    %v5838 = vshrl.u32 %v5837, 23
    %v5839 = vsub.s32 %v5838, 127
    %v5840 = vand.u32 2147483647, %v3639
    %v5841 = vand.u32 %v5840, 8388607
    %v5842 = vor.u32 %v5841, 8388608
    %v5843 = vsub.s32 0, %v5842
    %v5844 = vadd.s32 %v5839, 1
    %vm5845 = vcmp.gt.s32.totalorder %v5844, 0
    %v5846 = vsel %vm5845, %v5844, 0
    %v5847 = vshrl.u32 %v5846, 5
    %v5848 = vand.u32 %v5846, 31
    %v5849 = vsub.s32 32, %v5848
    %v5850 = vshrl.u32 683565275, %v5849
    %v5851 = vshll.u32 683565275, %v5848
    %v5852 = vshrl.u32 2475754826, %v5849
    %v5853 = vor.u32 %v5851, %v5852
    %v5854 = vshll.u32 2475754826, %v5848
    %v5855 = vshrl.u32 2131351028, %v5849
    %v5856 = vor.u32 %v5854, %v5855
    %v5857 = vshll.u32 2131351028, %v5848
    %v5858 = vshrl.u32 2102212464, %v5849
    %v5859 = vor.u32 %v5857, %v5858
    %v5860 = vshll.u32 2102212464, %v5848
    %v5861 = vshrl.u32 920167782, %v5849
    %v5862 = vor.u32 %v5860, %v5861
    %v5863 = vshll.u32 920167782, %v5848
    %v5864 = vshrl.u32 1326507024, %v5849
    %v5865 = vor.u32 %v5863, %v5864
    %vm5866 = vcmp.lt.s32.totalorder %v5847, 1
    %vm5867 = vcmp.lt.s32.totalorder %v5847, 2
    %vm5868 = vcmp.lt.s32.totalorder %v5847, 3
    %vm5869 = vcmp.lt.s32.totalorder %v5847, 4
    %v5870 = vsel %vm5866, %v5850, %v5853
    %v5871 = vsel %vm5869, %v5859, 2102212464
    %v5872 = vsel %vm5868, %v5856, %v5871
    %v5873 = vsel %vm5867, %v5870, %v5872
    %v5874 = vsel %vm5866, %v5853, %v5856
    %v5875 = vsel %vm5869, %v5862, 920167782
    %v5876 = vsel %vm5868, %v5859, %v5875
    %v5877 = vsel %vm5867, %v5874, %v5876
    %v5878 = vsel %vm5866, %v5856, %v5859
    %v5879 = vsel %vm5869, %v5865, 1326507024
    %v5880 = vsel %vm5868, %v5862, %v5879
    %v5881 = vsel %vm5867, %v5878, %v5880
    %v5882 = vshll.u32 %v5842, 8
    %v5883 = vmul.u32.u64.compose %v5882, %v5881
    %v5884 = vextract.low.u32 %v5883
    %v5885 = vextract.high.u32 %v5883
    %v5886 = vmul.u32.u64.compose %v5882, %v5877
    %v5887 = vextract.low.u32 %v5886
    %v5888 = vextract.high.u32 %v5886
    %v5889 = vmul.u32 %v5882, %v5873
    %v5890 = vadd.s32 %v5885, %v5887
    %vm5891 = vc.u32 %v5885, %v5887
    %v5892 = vadd.s32 %v5888, 1
    %v5893 = vsel %vm5891, %v5892, %v5888
    %v5894 = vadd.s32 %v5889, %v5893
    %v5895 = vadd.s32 %v5894, 536870912
    %v5896 = vshrl.u32 %v5895, 30
    %v5897 = vshll.u32 %v5896, 30
    %v5898 = vsub.s32 %v5894, %v5897
    %vm5899 = vcmp.lt.s32.totalorder %v5898, 0
    %v5900 = vsub.s32 0, %v5898
    %v5901 = vsel %vm5899, %v5900, %v5898
    %v5902 = vclz %v5901
    %v5903 = vsub.s32 %v5902, 2
    %vm5904 = vcmp.gt.s32.totalorder 0, %v5903
    %v5905 = vsel %vm5904, 0, %v5903
    %v5906 = vsub.s32 32, %v5905
    %v5907 = vshll.u32 %v5898, %v5905
    %v5908 = vshrl.u32 %v5890, %v5906
    %v5909 = vor.u32 %v5907, %v5908
    %v5910 = vsub.s32 4294967266, %v5905
    %v5911 = vadd.s32 %v5910, 127
    %v5912 = vshll.u32 %v5911, 23
    %v5913 = vor.u32 4788187, %v5912
    %v5914 = vand.u32 2147483647, %v5913
    %v5916 = vcvt.s32.f32 %v5909
    %v5917 = vmul.f32 %v5916, %v5914
    %v5918 = vxor.u32 %v5917, 2147483648
    %v5919 = vsel %vm5836, %v5918, %v5917
    %v5920 = vsub.s32 4, %v5896
    %v5921 = vsel %vm5836, %v5920, %v5896
    %v5922 = vsel %vm5835, %v3639, %v5919
    %v5923 = vsel %vm5835, 0, %v5921
    %v5924 = vcosq.f32.pop %v5922
    %v5925 = vsinq.f32.pop %v5922
    %vm5926 = vweird.f32 %v3639
    %v5927 = vadd.s32 %v5923, 3
    %v5928 = vand.u32 %v5927, 3
    %vm5929 = vcmp.lt.s32.totalorder %v5928, 2
    %vm5930 = vcmp.eq.s32.totalorder %v5928, 0
    %v5931 = vxor.u32 %v5925, 2147483648
    %v5932 = vsel %vm5930, %v5924, %v5931
    %vm5933 = vcmp.eq.s32.totalorder %v5928, 2
    %v5934 = vxor.u32 %v5924, 2147483648
    %v5935 = vsel %vm5933, %v5934, %v5925
    %v5936 = vsel %vm5929, %v5932, %v5935
    %v5937 = vsel %vm5926, nan, %v5936
    %v5938 = vand.u32 2147483647, %v3640
    %vm5939 = vcmp.le.f32.partialorder %v5938, 0.7853982
    %vm5940 = vcmp.lt.s32.totalorder %v3640, 0
    %v5941 = vand.u32 %v3640, 2139095040
    %v5942 = vshrl.u32 %v5941, 23
    %v5943 = vsub.s32 %v5942, 127
    %v5944 = vand.u32 2147483647, %v3640
    %v5945 = vand.u32 %v5944, 8388607
    %v5946 = vor.u32 %v5945, 8388608
    %v5947 = vsub.s32 0, %v5946
    %v5948 = vadd.s32 %v5943, 1
    %vm5949 = vcmp.gt.s32.totalorder %v5948, 0
    %v5950 = vsel %vm5949, %v5948, 0
    %v5951 = vshrl.u32 %v5950, 5
    %v5952 = vand.u32 %v5950, 31
    %v5953 = vsub.s32 32, %v5952
    %v5954 = vshrl.u32 683565275, %v5953
    %v5955 = vshll.u32 683565275, %v5952
    %v5956 = vshrl.u32 2475754826, %v5953
    %v5957 = vor.u32 %v5955, %v5956
    %v5958 = vshll.u32 2475754826, %v5952
    %v5959 = vshrl.u32 2131351028, %v5953
    %v5960 = vor.u32 %v5958, %v5959
    %v5961 = vshll.u32 2131351028, %v5952
    %v5962 = vshrl.u32 2102212464, %v5953
    %v5963 = vor.u32 %v5961, %v5962
    %v5964 = vshll.u32 2102212464, %v5952
    %v5965 = vshrl.u32 920167782, %v5953
    %v5966 = vor.u32 %v5964, %v5965
    %v5967 = vshll.u32 920167782, %v5952
    %v5968 = vshrl.u32 1326507024, %v5953
    %v5969 = vor.u32 %v5967, %v5968
    %vm5970 = vcmp.lt.s32.totalorder %v5951, 1
    %vm5971 = vcmp.lt.s32.totalorder %v5951, 2
    %vm5972 = vcmp.lt.s32.totalorder %v5951, 3
    %vm5973 = vcmp.lt.s32.totalorder %v5951, 4
    %v5974 = vsel %vm5970, %v5954, %v5957
    %v5975 = vsel %vm5973, %v5963, 2102212464
    %v5976 = vsel %vm5972, %v5960, %v5975
    %v5977 = vsel %vm5971, %v5974, %v5976
    %v5978 = vsel %vm5970, %v5957, %v5960
    %v5979 = vsel %vm5973, %v5966, 920167782
    %v5980 = vsel %vm5972, %v5963, %v5979
    %v5981 = vsel %vm5971, %v5978, %v5980
    %v5982 = vsel %vm5970, %v5960, %v5963
    %v5983 = vsel %vm5973, %v5969, 1326507024
    %v5984 = vsel %vm5972, %v5966, %v5983
    %v5985 = vsel %vm5971, %v5982, %v5984
    %v5986 = vshll.u32 %v5946, 8
    %v5987 = vmul.u32.u64.compose %v5986, %v5985
    %v5988 = vextract.low.u32 %v5987
    %v5989 = vextract.high.u32 %v5987
    %v5990 = vmul.u32.u64.compose %v5986, %v5981
    %v5991 = vextract.low.u32 %v5990
    %v5992 = vextract.high.u32 %v5990
    %v5993 = vmul.u32 %v5986, %v5977
    %v5994 = vadd.s32 %v5989, %v5991
    %vm5995 = vc.u32 %v5989, %v5991
    %v5996 = vadd.s32 %v5992, 1
    %v5997 = vsel %vm5995, %v5996, %v5992
    %v5998 = vadd.s32 %v5993, %v5997
    %v5999 = vadd.s32 %v5998, 536870912
    %v6000 = vshrl.u32 %v5999, 30
    %v6001 = vshll.u32 %v6000, 30
    %v6002 = vsub.s32 %v5998, %v6001
    %vm6003 = vcmp.lt.s32.totalorder %v6002, 0
    %v6004 = vsub.s32 0, %v6002
    %v6005 = vsel %vm6003, %v6004, %v6002
    %v6006 = vclz %v6005
    %v6007 = vsub.s32 %v6006, 2
    %vm6008 = vcmp.gt.s32.totalorder 0, %v6007
    %v6009 = vsel %vm6008, 0, %v6007
    %v6010 = vsub.s32 32, %v6009
    %v6011 = vshll.u32 %v6002, %v6009
    %v6012 = vshrl.u32 %v5994, %v6010
    %v6013 = vor.u32 %v6011, %v6012
    %v6014 = vsub.s32 4294967266, %v6009
    %v6015 = vadd.s32 %v6014, 127
    %v6016 = vshll.u32 %v6015, 23
    %v6017 = vor.u32 4788187, %v6016
    %v6018 = vand.u32 2147483647, %v6017
    %v6020 = vcvt.s32.f32 %v6013
    %v6021 = vmul.f32 %v6020, %v6018
    %v6022 = vxor.u32 %v6021, 2147483648
    %v6023 = vsel %vm5940, %v6022, %v6021
    %v6024 = vsub.s32 4, %v6000
    %v6025 = vsel %vm5940, %v6024, %v6000
    %v6026 = vsel %vm5939, %v3640, %v6023
    %v6027 = vsel %vm5939, 0, %v6025
    %v6028 = vcosq.f32.pop %v6026
    %v6029 = vsinq.f32.pop %v6026
    %vm6030 = vweird.f32 %v3640
    %v6031 = vadd.s32 %v6027, 3
    %v6032 = vand.u32 %v6031, 3
    %vm6033 = vcmp.lt.s32.totalorder %v6032, 2
    %vm6034 = vcmp.eq.s32.totalorder %v6032, 0
    %v6035 = vxor.u32 %v6029, 2147483648
    %v6036 = vsel %vm6034, %v6028, %v6035
    %vm6037 = vcmp.eq.s32.totalorder %v6032, 2
    %v6038 = vxor.u32 %v6028, 2147483648
    %v6039 = vsel %vm6037, %v6038, %v6029
    %v6040 = vsel %vm6033, %v6036, %v6039
    %v6041 = vsel %vm6030, nan, %v6040
    %v6042 = vand.u32 2147483647, %v3641
    %vm6043 = vcmp.le.f32.partialorder %v6042, 0.7853982
    %vm6044 = vcmp.lt.s32.totalorder %v3641, 0
    %v6045 = vand.u32 %v3641, 2139095040
    %v6046 = vshrl.u32 %v6045, 23
    %v6047 = vsub.s32 %v6046, 127
    %v6048 = vand.u32 2147483647, %v3641
    %v6049 = vand.u32 %v6048, 8388607
    %v6050 = vor.u32 %v6049, 8388608
    %v6051 = vsub.s32 0, %v6050
    %v6052 = vadd.s32 %v6047, 1
    %vm6053 = vcmp.gt.s32.totalorder %v6052, 0
    %v6054 = vsel %vm6053, %v6052, 0
    %v6055 = vshrl.u32 %v6054, 5
    %v6056 = vand.u32 %v6054, 31
    %v6057 = vsub.s32 32, %v6056
    %v6058 = vshrl.u32 683565275, %v6057
    %v6059 = vshll.u32 683565275, %v6056
    %v6060 = vshrl.u32 2475754826, %v6057
    %v6061 = vor.u32 %v6059, %v6060
    %v6062 = vshll.u32 2475754826, %v6056
    %v6063 = vshrl.u32 2131351028, %v6057
    %v6064 = vor.u32 %v6062, %v6063
    %v6065 = vshll.u32 2131351028, %v6056
    %v6066 = vshrl.u32 2102212464, %v6057
    %v6067 = vor.u32 %v6065, %v6066
    %v6068 = vshll.u32 2102212464, %v6056
    %v6069 = vshrl.u32 920167782, %v6057
    %v6070 = vor.u32 %v6068, %v6069
    %v6071 = vshll.u32 920167782, %v6056
    %v6072 = vshrl.u32 1326507024, %v6057
    %v6073 = vor.u32 %v6071, %v6072
    %vm6074 = vcmp.lt.s32.totalorder %v6055, 1
    %vm6075 = vcmp.lt.s32.totalorder %v6055, 2
    %vm6076 = vcmp.lt.s32.totalorder %v6055, 3
    %vm6077 = vcmp.lt.s32.totalorder %v6055, 4
    %v6078 = vsel %vm6074, %v6058, %v6061
    %v6079 = vsel %vm6077, %v6067, 2102212464
    %v6080 = vsel %vm6076, %v6064, %v6079
    %v6081 = vsel %vm6075, %v6078, %v6080
    %v6082 = vsel %vm6074, %v6061, %v6064
    %v6083 = vsel %vm6077, %v6070, 920167782
    %v6084 = vsel %vm6076, %v6067, %v6083
    %v6085 = vsel %vm6075, %v6082, %v6084
    %v6086 = vsel %vm6074, %v6064, %v6067
    %v6087 = vsel %vm6077, %v6073, 1326507024
    %v6088 = vsel %vm6076, %v6070, %v6087
    %v6089 = vsel %vm6075, %v6086, %v6088
    %v6090 = vshll.u32 %v6050, 8
    %v6091 = vmul.u32.u64.compose %v6090, %v6089
    %v6092 = vextract.low.u32 %v6091
    %v6093 = vextract.high.u32 %v6091
    %v6094 = vmul.u32.u64.compose %v6090, %v6085
    %v6095 = vextract.low.u32 %v6094
    %v6096 = vextract.high.u32 %v6094
    %v6097 = vmul.u32 %v6090, %v6081
    %v6098 = vadd.s32 %v6093, %v6095
    %vm6099 = vc.u32 %v6093, %v6095
    %v6100 = vadd.s32 %v6096, 1
    %v6101 = vsel %vm6099, %v6100, %v6096
    %v6102 = vadd.s32 %v6097, %v6101
    %v6103 = vadd.s32 %v6102, 536870912
    %v6104 = vshrl.u32 %v6103, 30
    %v6105 = vshll.u32 %v6104, 30
    %v6106 = vsub.s32 %v6102, %v6105
    %vm6107 = vcmp.lt.s32.totalorder %v6106, 0
    %v6108 = vsub.s32 0, %v6106
    %v6109 = vsel %vm6107, %v6108, %v6106
    %v6110 = vclz %v6109
    %v6111 = vsub.s32 %v6110, 2
    %vm6112 = vcmp.gt.s32.totalorder 0, %v6111
    %v6113 = vsel %vm6112, 0, %v6111
    %v6114 = vsub.s32 32, %v6113
    %v6115 = vshll.u32 %v6106, %v6113
    %v6116 = vshrl.u32 %v6098, %v6114
    %v6117 = vor.u32 %v6115, %v6116
    %v6118 = vsub.s32 4294967266, %v6113
    %v6119 = vadd.s32 %v6118, 127
    %v6120 = vshll.u32 %v6119, 23
    %v6121 = vor.u32 4788187, %v6120
    %v6122 = vand.u32 2147483647, %v6121
    %v6124 = vcvt.s32.f32 %v6117
    %v6125 = vmul.f32 %v6124, %v6122
    %v6126 = vxor.u32 %v6125, 2147483648
    %v6127 = vsel %vm6044, %v6126, %v6125
    %v6128 = vsub.s32 4, %v6104
    %v6129 = vsel %vm6044, %v6128, %v6104
    %v6130 = vsel %vm6043, %v3641, %v6127
    %v6131 = vsel %vm6043, 0, %v6129
    %v6132 = vcosq.f32.pop %v6130
    %v6133 = vsinq.f32.pop %v6130
    %vm6134 = vweird.f32 %v3641
    %v6135 = vadd.s32 %v6131, 3
    %v6136 = vand.u32 %v6135, 3
    %vm6137 = vcmp.lt.s32.totalorder %v6136, 2
    %vm6138 = vcmp.eq.s32.totalorder %v6136, 0
    %v6139 = vxor.u32 %v6133, 2147483648
    %v6140 = vsel %vm6138, %v6132, %v6139
    %vm6141 = vcmp.eq.s32.totalorder %v6136, 2
    %v6142 = vxor.u32 %v6132, 2147483648
    %v6143 = vsel %vm6141, %v6142, %v6133
    %v6144 = vsel %vm6137, %v6140, %v6143
    %v6145 = vsel %vm6134, nan, %v6144
    %v6146 = vand.u32 2147483647, %v3642
    %vm6147 = vcmp.le.f32.partialorder %v6146, 0.7853982
    %vm6148 = vcmp.lt.s32.totalorder %v3642, 0
    %v6149 = vand.u32 %v3642, 2139095040
    %v6150 = vshrl.u32 %v6149, 23
    %v6151 = vsub.s32 %v6150, 127
    %v6152 = vand.u32 2147483647, %v3642
    %v6153 = vand.u32 %v6152, 8388607
    %v6154 = vor.u32 %v6153, 8388608
    %v6155 = vsub.s32 0, %v6154
    %v6156 = vadd.s32 %v6151, 1
    %vm6157 = vcmp.gt.s32.totalorder %v6156, 0
    %v6158 = vsel %vm6157, %v6156, 0
    %v6159 = vshrl.u32 %v6158, 5
    %v6160 = vand.u32 %v6158, 31
    %v6161 = vsub.s32 32, %v6160
    %v6162 = vshrl.u32 683565275, %v6161
    %v6163 = vshll.u32 683565275, %v6160
    %v6164 = vshrl.u32 2475754826, %v6161
    %v6165 = vor.u32 %v6163, %v6164
    %v6166 = vshll.u32 2475754826, %v6160
    %v6167 = vshrl.u32 2131351028, %v6161
    %v6168 = vor.u32 %v6166, %v6167
    %v6169 = vshll.u32 2131351028, %v6160
    %v6170 = vshrl.u32 2102212464, %v6161
    %v6171 = vor.u32 %v6169, %v6170
    %v6172 = vshll.u32 2102212464, %v6160
    %v6173 = vshrl.u32 920167782, %v6161
    %v6174 = vor.u32 %v6172, %v6173
    %v6175 = vshll.u32 920167782, %v6160
    %v6176 = vshrl.u32 1326507024, %v6161
    %v6177 = vor.u32 %v6175, %v6176
    %vm6178 = vcmp.lt.s32.totalorder %v6159, 1
    %vm6179 = vcmp.lt.s32.totalorder %v6159, 2
    %vm6180 = vcmp.lt.s32.totalorder %v6159, 3
    %vm6181 = vcmp.lt.s32.totalorder %v6159, 4
    %v6182 = vsel %vm6178, %v6162, %v6165
    %v6183 = vsel %vm6181, %v6171, 2102212464
    %v6184 = vsel %vm6180, %v6168, %v6183
    %v6185 = vsel %vm6179, %v6182, %v6184
    %v6186 = vsel %vm6178, %v6165, %v6168
    %v6187 = vsel %vm6181, %v6174, 920167782
    %v6188 = vsel %vm6180, %v6171, %v6187
    %v6189 = vsel %vm6179, %v6186, %v6188
    %v6190 = vsel %vm6178, %v6168, %v6171
    %v6191 = vsel %vm6181, %v6177, 1326507024
    %v6192 = vsel %vm6180, %v6174, %v6191
    %v6193 = vsel %vm6179, %v6190, %v6192
    %v6194 = vshll.u32 %v6154, 8
    %v6195 = vmul.u32.u64.compose %v6194, %v6193
    %v6196 = vextract.low.u32 %v6195
    %v6197 = vextract.high.u32 %v6195
    %v6198 = vmul.u32.u64.compose %v6194, %v6189
    %v6199 = vextract.low.u32 %v6198
    %v6200 = vextract.high.u32 %v6198
    %v6201 = vmul.u32 %v6194, %v6185
    %v6202 = vadd.s32 %v6197, %v6199
    %vm6203 = vc.u32 %v6197, %v6199
    %v6204 = vadd.s32 %v6200, 1
    %v6205 = vsel %vm6203, %v6204, %v6200
    %v6206 = vadd.s32 %v6201, %v6205
    %v6207 = vadd.s32 %v6206, 536870912
    %v6208 = vshrl.u32 %v6207, 30
    %v6209 = vshll.u32 %v6208, 30
    %v6210 = vsub.s32 %v6206, %v6209
    %vm6211 = vcmp.lt.s32.totalorder %v6210, 0
    %v6212 = vsub.s32 0, %v6210
    %v6213 = vsel %vm6211, %v6212, %v6210
    %v6214 = vclz %v6213
    %v6215 = vsub.s32 %v6214, 2
    %vm6216 = vcmp.gt.s32.totalorder 0, %v6215
    %v6217 = vsel %vm6216, 0, %v6215
    %v6218 = vsub.s32 32, %v6217
    %v6219 = vshll.u32 %v6210, %v6217
    %v6220 = vshrl.u32 %v6202, %v6218
    %v6221 = vor.u32 %v6219, %v6220
    %v6222 = vsub.s32 4294967266, %v6217
    %v6223 = vadd.s32 %v6222, 127
    %v6224 = vshll.u32 %v6223, 23
    %v6225 = vor.u32 4788187, %v6224
    %v6226 = vand.u32 2147483647, %v6225
    %v6228 = vcvt.s32.f32 %v6221
    %v6229 = vmul.f32 %v6228, %v6226
    %v6230 = vxor.u32 %v6229, 2147483648
    %v6231 = vsel %vm6148, %v6230, %v6229
    %v6232 = vsub.s32 4, %v6208
    %v6233 = vsel %vm6148, %v6232, %v6208
    %v6234 = vsel %vm6147, %v3642, %v6231
    %v6235 = vsel %vm6147, 0, %v6233
    %v6236 = vcosq.f32.pop %v6234
    %v6237 = vsinq.f32.pop %v6234
    %vm6238 = vweird.f32 %v3642
    %v6239 = vadd.s32 %v6235, 3
    %v6240 = vand.u32 %v6239, 3
    %vm6241 = vcmp.lt.s32.totalorder %v6240, 2
    %vm6242 = vcmp.eq.s32.totalorder %v6240, 0
    %v6243 = vxor.u32 %v6237, 2147483648
    %v6244 = vsel %vm6242, %v6236, %v6243
    %vm6245 = vcmp.eq.s32.totalorder %v6240, 2
    %v6246 = vxor.u32 %v6236, 2147483648
    %v6247 = vsel %vm6245, %v6246, %v6237
    %v6248 = vsel %vm6241, %v6244, %v6247
    %v6249 = vsel %vm6238, nan, %v6248
    %v6250 = vand.u32 2147483647, %v3643
    %vm6251 = vcmp.le.f32.partialorder %v6250, 0.7853982
    %vm6252 = vcmp.lt.s32.totalorder %v3643, 0
    %v6253 = vand.u32 %v3643, 2139095040
    %v6254 = vshrl.u32 %v6253, 23
    %v6255 = vsub.s32 %v6254, 127
    %v6256 = vand.u32 2147483647, %v3643
    %v6257 = vand.u32 %v6256, 8388607
    %v6258 = vor.u32 %v6257, 8388608
    %v6259 = vsub.s32 0, %v6258
    %v6260 = vadd.s32 %v6255, 1
    %vm6261 = vcmp.gt.s32.totalorder %v6260, 0
    %v6262 = vsel %vm6261, %v6260, 0
    %v6263 = vshrl.u32 %v6262, 5
    %v6264 = vand.u32 %v6262, 31
    %v6265 = vsub.s32 32, %v6264
    %v6266 = vshrl.u32 683565275, %v6265
    %v6267 = vshll.u32 683565275, %v6264
    %v6268 = vshrl.u32 2475754826, %v6265
    %v6269 = vor.u32 %v6267, %v6268
    %v6270 = vshll.u32 2475754826, %v6264
    %v6271 = vshrl.u32 2131351028, %v6265
    %v6272 = vor.u32 %v6270, %v6271
    %v6273 = vshll.u32 2131351028, %v6264
    %v6274 = vshrl.u32 2102212464, %v6265
    %v6275 = vor.u32 %v6273, %v6274
    %v6276 = vshll.u32 2102212464, %v6264
    %v6277 = vshrl.u32 920167782, %v6265
    %v6278 = vor.u32 %v6276, %v6277
    %v6279 = vshll.u32 920167782, %v6264
    %v6280 = vshrl.u32 1326507024, %v6265
    %v6281 = vor.u32 %v6279, %v6280
    %vm6282 = vcmp.lt.s32.totalorder %v6263, 1
    %vm6283 = vcmp.lt.s32.totalorder %v6263, 2
    %vm6284 = vcmp.lt.s32.totalorder %v6263, 3
    %vm6285 = vcmp.lt.s32.totalorder %v6263, 4
    %v6286 = vsel %vm6282, %v6266, %v6269
    %v6287 = vsel %vm6285, %v6275, 2102212464
    %v6288 = vsel %vm6284, %v6272, %v6287
    %v6289 = vsel %vm6283, %v6286, %v6288
    %v6290 = vsel %vm6282, %v6269, %v6272
    %v6291 = vsel %vm6285, %v6278, 920167782
    %v6292 = vsel %vm6284, %v6275, %v6291
    %v6293 = vsel %vm6283, %v6290, %v6292
    %v6294 = vsel %vm6282, %v6272, %v6275
    %v6295 = vsel %vm6285, %v6281, 1326507024
    %v6296 = vsel %vm6284, %v6278, %v6295
    %v6297 = vsel %vm6283, %v6294, %v6296
    %v6298 = vshll.u32 %v6258, 8
    %v6299 = vmul.u32.u64.compose %v6298, %v6297
    %v6300 = vextract.low.u32 %v6299
    %v6301 = vextract.high.u32 %v6299
    %v6302 = vmul.u32.u64.compose %v6298, %v6293
    %v6303 = vextract.low.u32 %v6302
    %v6304 = vextract.high.u32 %v6302
    %v6305 = vmul.u32 %v6298, %v6289
    %v6306 = vadd.s32 %v6301, %v6303
    %vm6307 = vc.u32 %v6301, %v6303
    %v6308 = vadd.s32 %v6304, 1
    %v6309 = vsel %vm6307, %v6308, %v6304
    %v6310 = vadd.s32 %v6305, %v6309
    %v6311 = vadd.s32 %v6310, 536870912
    %v6312 = vshrl.u32 %v6311, 30
    %v6313 = vshll.u32 %v6312, 30
    %v6314 = vsub.s32 %v6310, %v6313
    %vm6315 = vcmp.lt.s32.totalorder %v6314, 0
    %v6316 = vsub.s32 0, %v6314
    %v6317 = vsel %vm6315, %v6316, %v6314
    %v6318 = vclz %v6317
    %v6319 = vsub.s32 %v6318, 2
    %vm6320 = vcmp.gt.s32.totalorder 0, %v6319
    %v6321 = vsel %vm6320, 0, %v6319
    %v6322 = vsub.s32 32, %v6321
    %v6323 = vshll.u32 %v6314, %v6321
    %v6324 = vshrl.u32 %v6306, %v6322
    %v6325 = vor.u32 %v6323, %v6324
    %v6326 = vsub.s32 4294967266, %v6321
    %v6327 = vadd.s32 %v6326, 127
    %v6328 = vshll.u32 %v6327, 23
    %v6329 = vor.u32 4788187, %v6328
    %v6330 = vand.u32 2147483647, %v6329
    %v6332 = vcvt.s32.f32 %v6325
    %v6333 = vmul.f32 %v6332, %v6330
    %v6334 = vxor.u32 %v6333, 2147483648
    %v6335 = vsel %vm6252, %v6334, %v6333
    %v6336 = vsub.s32 4, %v6312
    %v6337 = vsel %vm6252, %v6336, %v6312
    %v6338 = vsel %vm6251, %v3643, %v6335
    %v6339 = vsel %vm6251, 0, %v6337
    %v6340 = vcosq.f32.pop %v6338
    %v6341 = vsinq.f32.pop %v6338
    %vm6342 = vweird.f32 %v3643
    %v6343 = vadd.s32 %v6339, 3
    %v6344 = vand.u32 %v6343, 3
    %vm6345 = vcmp.lt.s32.totalorder %v6344, 2
    %vm6346 = vcmp.eq.s32.totalorder %v6344, 0
    %v6347 = vxor.u32 %v6341, 2147483648
    %v6348 = vsel %vm6346, %v6340, %v6347
    %vm6349 = vcmp.eq.s32.totalorder %v6344, 2
    %v6350 = vxor.u32 %v6340, 2147483648
    %v6351 = vsel %vm6349, %v6350, %v6341
    %v6352 = vsel %vm6345, %v6348, %v6351
    %v6353 = vsel %vm6342, nan, %v6352
    %v6354 = vand.u32 2147483647, %v3644
    %vm6355 = vcmp.le.f32.partialorder %v6354, 0.7853982
    %vm6356 = vcmp.lt.s32.totalorder %v3644, 0
    %v6357 = vand.u32 %v3644, 2139095040
    %v6358 = vshrl.u32 %v6357, 23
    %v6359 = vsub.s32 %v6358, 127
    %v6360 = vand.u32 2147483647, %v3644
    %v6361 = vand.u32 %v6360, 8388607
    %v6362 = vor.u32 %v6361, 8388608
    %v6363 = vsub.s32 0, %v6362
    %v6364 = vadd.s32 %v6359, 1
    %vm6365 = vcmp.gt.s32.totalorder %v6364, 0
    %v6366 = vsel %vm6365, %v6364, 0
    %v6367 = vshrl.u32 %v6366, 5
    %v6368 = vand.u32 %v6366, 31
    %v6369 = vsub.s32 32, %v6368
    %v6370 = vshrl.u32 683565275, %v6369
    %v6371 = vshll.u32 683565275, %v6368
    %v6372 = vshrl.u32 2475754826, %v6369
    %v6373 = vor.u32 %v6371, %v6372
    %v6374 = vshll.u32 2475754826, %v6368
    %v6375 = vshrl.u32 2131351028, %v6369
    %v6376 = vor.u32 %v6374, %v6375
    %v6377 = vshll.u32 2131351028, %v6368
    %v6378 = vshrl.u32 2102212464, %v6369
    %v6379 = vor.u32 %v6377, %v6378
    %v6380 = vshll.u32 2102212464, %v6368
    %v6381 = vshrl.u32 920167782, %v6369
    %v6382 = vor.u32 %v6380, %v6381
    %v6383 = vshll.u32 920167782, %v6368
    %v6384 = vshrl.u32 1326507024, %v6369
    %v6385 = vor.u32 %v6383, %v6384
    %vm6386 = vcmp.lt.s32.totalorder %v6367, 1
    %vm6387 = vcmp.lt.s32.totalorder %v6367, 2
    %vm6388 = vcmp.lt.s32.totalorder %v6367, 3
    %vm6389 = vcmp.lt.s32.totalorder %v6367, 4
    %v6390 = vsel %vm6386, %v6370, %v6373
    %v6391 = vsel %vm6389, %v6379, 2102212464
    %v6392 = vsel %vm6388, %v6376, %v6391
    %v6393 = vsel %vm6387, %v6390, %v6392
    %v6394 = vsel %vm6386, %v6373, %v6376
    %v6395 = vsel %vm6389, %v6382, 920167782
    %v6396 = vsel %vm6388, %v6379, %v6395
    %v6397 = vsel %vm6387, %v6394, %v6396
    %v6398 = vsel %vm6386, %v6376, %v6379
    %v6399 = vsel %vm6389, %v6385, 1326507024
    %v6400 = vsel %vm6388, %v6382, %v6399
    %v6401 = vsel %vm6387, %v6398, %v6400
    %v6402 = vshll.u32 %v6362, 8
    %v6403 = vmul.u32.u64.compose %v6402, %v6401
    %v6404 = vextract.low.u32 %v6403
    %v6405 = vextract.high.u32 %v6403
    %v6406 = vmul.u32.u64.compose %v6402, %v6397
    %v6407 = vextract.low.u32 %v6406
    %v6408 = vextract.high.u32 %v6406
    %v6409 = vmul.u32 %v6402, %v6393
    %v6410 = vadd.s32 %v6405, %v6407
    %vm6411 = vc.u32 %v6405, %v6407
    %v6412 = vadd.s32 %v6408, 1
    %v6413 = vsel %vm6411, %v6412, %v6408
    %v6414 = vadd.s32 %v6409, %v6413
    %v6415 = vadd.s32 %v6414, 536870912
    %v6416 = vshrl.u32 %v6415, 30
    %v6417 = vshll.u32 %v6416, 30
    %v6418 = vsub.s32 %v6414, %v6417
    %vm6419 = vcmp.lt.s32.totalorder %v6418, 0
    %v6420 = vsub.s32 0, %v6418
    %v6421 = vsel %vm6419, %v6420, %v6418
    %v6422 = vclz %v6421
    %v6423 = vsub.s32 %v6422, 2
    %vm6424 = vcmp.gt.s32.totalorder 0, %v6423
    %v6425 = vsel %vm6424, 0, %v6423
    %v6426 = vsub.s32 32, %v6425
    %v6427 = vshll.u32 %v6418, %v6425
    %v6428 = vshrl.u32 %v6410, %v6426
    %v6429 = vor.u32 %v6427, %v6428
    %v6430 = vsub.s32 4294967266, %v6425
    %v6431 = vadd.s32 %v6430, 127
    %v6432 = vshll.u32 %v6431, 23
    %v6433 = vor.u32 4788187, %v6432
    %v6434 = vand.u32 2147483647, %v6433
    %v6436 = vcvt.s32.f32 %v6429
    %v6437 = vmul.f32 %v6436, %v6434
    %v6438 = vxor.u32 %v6437, 2147483648
    %v6439 = vsel %vm6356, %v6438, %v6437
    %v6440 = vsub.s32 4, %v6416
    %v6441 = vsel %vm6356, %v6440, %v6416
    %v6442 = vsel %vm6355, %v3644, %v6439
    %v6443 = vsel %vm6355, 0, %v6441
    %v6444 = vcosq.f32.pop %v6442
    %v6445 = vsinq.f32.pop %v6442
    %vm6446 = vweird.f32 %v3644
    %v6447 = vadd.s32 %v6443, 3
    %v6448 = vand.u32 %v6447, 3
    %vm6449 = vcmp.lt.s32.totalorder %v6448, 2
    %vm6450 = vcmp.eq.s32.totalorder %v6448, 0
    %v6451 = vxor.u32 %v6445, 2147483648
    %v6452 = vsel %vm6450, %v6444, %v6451
    %vm6453 = vcmp.eq.s32.totalorder %v6448, 2
    %v6454 = vxor.u32 %v6444, 2147483648
    %v6455 = vsel %vm6453, %v6454, %v6445
    %v6456 = vsel %vm6449, %v6452, %v6455
    %v6457 = vsel %vm6446, nan, %v6456
    %v6458 = vand.u32 2147483647, %v3645
    %vm6459 = vcmp.le.f32.partialorder %v6458, 0.7853982
    %vm6460 = vcmp.lt.s32.totalorder %v3645, 0
    %v6461 = vand.u32 %v3645, 2139095040
    %v6462 = vshrl.u32 %v6461, 23
    %v6463 = vsub.s32 %v6462, 127
    %v6464 = vand.u32 2147483647, %v3645
    %v6465 = vand.u32 %v6464, 8388607
    %v6466 = vor.u32 %v6465, 8388608
    %v6467 = vsub.s32 0, %v6466
    %v6468 = vadd.s32 %v6463, 1
    %vm6469 = vcmp.gt.s32.totalorder %v6468, 0
    %v6470 = vsel %vm6469, %v6468, 0
    %v6471 = vshrl.u32 %v6470, 5
    %v6472 = vand.u32 %v6470, 31
    %v6473 = vsub.s32 32, %v6472
    %v6474 = vshrl.u32 683565275, %v6473
    %v6475 = vshll.u32 683565275, %v6472
    %v6476 = vshrl.u32 2475754826, %v6473
    %v6477 = vor.u32 %v6475, %v6476
    %v6478 = vshll.u32 2475754826, %v6472
    %v6479 = vshrl.u32 2131351028, %v6473
    %v6480 = vor.u32 %v6478, %v6479
    %v6481 = vshll.u32 2131351028, %v6472
    %v6482 = vshrl.u32 2102212464, %v6473
    %v6483 = vor.u32 %v6481, %v6482
    %v6484 = vshll.u32 2102212464, %v6472
    %v6485 = vshrl.u32 920167782, %v6473
    %v6486 = vor.u32 %v6484, %v6485
    %v6487 = vshll.u32 920167782, %v6472
    %v6488 = vshrl.u32 1326507024, %v6473
    %v6489 = vor.u32 %v6487, %v6488
    %vm6490 = vcmp.lt.s32.totalorder %v6471, 1
    %vm6491 = vcmp.lt.s32.totalorder %v6471, 2
    %vm6492 = vcmp.lt.s32.totalorder %v6471, 3
    %vm6493 = vcmp.lt.s32.totalorder %v6471, 4
    %v6494 = vsel %vm6490, %v6474, %v6477
    %v6495 = vsel %vm6493, %v6483, 2102212464
    %v6496 = vsel %vm6492, %v6480, %v6495
    %v6497 = vsel %vm6491, %v6494, %v6496
    %v6498 = vsel %vm6490, %v6477, %v6480
    %v6499 = vsel %vm6493, %v6486, 920167782
    %v6500 = vsel %vm6492, %v6483, %v6499
    %v6501 = vsel %vm6491, %v6498, %v6500
    %v6502 = vsel %vm6490, %v6480, %v6483
    %v6503 = vsel %vm6493, %v6489, 1326507024
    %v6504 = vsel %vm6492, %v6486, %v6503
    %v6505 = vsel %vm6491, %v6502, %v6504
    %v6506 = vshll.u32 %v6466, 8
    %v6507 = vmul.u32.u64.compose %v6506, %v6505
    %v6508 = vextract.low.u32 %v6507
    %v6509 = vextract.high.u32 %v6507
    %v6510 = vmul.u32.u64.compose %v6506, %v6501
    %v6511 = vextract.low.u32 %v6510
    %v6512 = vextract.high.u32 %v6510
    %v6513 = vmul.u32 %v6506, %v6497
    %v6514 = vadd.s32 %v6509, %v6511
    %vm6515 = vc.u32 %v6509, %v6511
    %v6516 = vadd.s32 %v6512, 1
    %v6517 = vsel %vm6515, %v6516, %v6512
    %v6518 = vadd.s32 %v6513, %v6517
    %v6519 = vadd.s32 %v6518, 536870912
    %v6520 = vshrl.u32 %v6519, 30
    %v6521 = vshll.u32 %v6520, 30
    %v6522 = vsub.s32 %v6518, %v6521
    %vm6523 = vcmp.lt.s32.totalorder %v6522, 0
    %v6524 = vsub.s32 0, %v6522
    %v6525 = vsel %vm6523, %v6524, %v6522
    %v6526 = vclz %v6525
    %v6527 = vsub.s32 %v6526, 2
    %vm6528 = vcmp.gt.s32.totalorder 0, %v6527
    %v6529 = vsel %vm6528, 0, %v6527
    %v6530 = vsub.s32 32, %v6529
    %v6531 = vshll.u32 %v6522, %v6529
    %v6532 = vshrl.u32 %v6514, %v6530
    %v6533 = vor.u32 %v6531, %v6532
    %v6534 = vsub.s32 4294967266, %v6529
    %v6535 = vadd.s32 %v6534, 127
    %v6536 = vshll.u32 %v6535, 23
    %v6537 = vor.u32 4788187, %v6536
    %v6538 = vand.u32 2147483647, %v6537
    %v6540 = vcvt.s32.f32 %v6533
    %v6541 = vmul.f32 %v6540, %v6538
    %v6542 = vxor.u32 %v6541, 2147483648
    %v6543 = vsel %vm6460, %v6542, %v6541
    %v6544 = vsub.s32 4, %v6520
    %v6545 = vsel %vm6460, %v6544, %v6520
    %v6546 = vsel %vm6459, %v3645, %v6543
    %v6547 = vsel %vm6459, 0, %v6545
    %v6548 = vcosq.f32.pop %v6546
    %v6549 = vsinq.f32.pop %v6546
    %vm6550 = vweird.f32 %v3645
    %v6551 = vadd.s32 %v6547, 3
    %v6552 = vand.u32 %v6551, 3
    %vm6553 = vcmp.lt.s32.totalorder %v6552, 2
    %vm6554 = vcmp.eq.s32.totalorder %v6552, 0
    %v6555 = vxor.u32 %v6549, 2147483648
    %v6556 = vsel %vm6554, %v6548, %v6555
    %vm6557 = vcmp.eq.s32.totalorder %v6552, 2
    %v6558 = vxor.u32 %v6548, 2147483648
    %v6559 = vsel %vm6557, %v6558, %v6549
    %v6560 = vsel %vm6553, %v6556, %v6559
    %v6561 = vsel %vm6550, nan, %v6560
    %v6562 = vand.u32 2147483647, %v3646
    %vm6563 = vcmp.le.f32.partialorder %v6562, 0.7853982
    %vm6564 = vcmp.lt.s32.totalorder %v3646, 0
    %v6565 = vand.u32 %v3646, 2139095040
    %v6566 = vshrl.u32 %v6565, 23
    %v6567 = vsub.s32 %v6566, 127
    %v6568 = vand.u32 2147483647, %v3646
    %v6569 = vand.u32 %v6568, 8388607
    %v6570 = vor.u32 %v6569, 8388608
    %v6571 = vsub.s32 0, %v6570
    %v6572 = vadd.s32 %v6567, 1
    %vm6573 = vcmp.gt.s32.totalorder %v6572, 0
    %v6574 = vsel %vm6573, %v6572, 0
    %v6575 = vshrl.u32 %v6574, 5
    %v6576 = vand.u32 %v6574, 31
    %v6577 = vsub.s32 32, %v6576
    %v6578 = vshrl.u32 683565275, %v6577
    %v6579 = vshll.u32 683565275, %v6576
    %v6580 = vshrl.u32 2475754826, %v6577
    %v6581 = vor.u32 %v6579, %v6580
    %v6582 = vshll.u32 2475754826, %v6576
    %v6583 = vshrl.u32 2131351028, %v6577
    %v6584 = vor.u32 %v6582, %v6583
    %v6585 = vshll.u32 2131351028, %v6576
    %v6586 = vshrl.u32 2102212464, %v6577
    %v6587 = vor.u32 %v6585, %v6586
    %v6588 = vshll.u32 2102212464, %v6576
    %v6589 = vshrl.u32 920167782, %v6577
    %v6590 = vor.u32 %v6588, %v6589
    %v6591 = vshll.u32 920167782, %v6576
    %v6592 = vshrl.u32 1326507024, %v6577
    %v6593 = vor.u32 %v6591, %v6592
    %vm6594 = vcmp.lt.s32.totalorder %v6575, 1
    %vm6595 = vcmp.lt.s32.totalorder %v6575, 2
    %vm6596 = vcmp.lt.s32.totalorder %v6575, 3
    %vm6597 = vcmp.lt.s32.totalorder %v6575, 4
    %v6598 = vsel %vm6594, %v6578, %v6581
    %v6599 = vsel %vm6597, %v6587, 2102212464
    %v6600 = vsel %vm6596, %v6584, %v6599
    %v6601 = vsel %vm6595, %v6598, %v6600
    %v6602 = vsel %vm6594, %v6581, %v6584
    %v6603 = vsel %vm6597, %v6590, 920167782
    %v6604 = vsel %vm6596, %v6587, %v6603
    %v6605 = vsel %vm6595, %v6602, %v6604
    %v6606 = vsel %vm6594, %v6584, %v6587
    %v6607 = vsel %vm6597, %v6593, 1326507024
    %v6608 = vsel %vm6596, %v6590, %v6607
    %v6609 = vsel %vm6595, %v6606, %v6608
    %v6610 = vshll.u32 %v6570, 8
    %v6611 = vmul.u32.u64.compose %v6610, %v6609
    %v6612 = vextract.low.u32 %v6611
    %v6613 = vextract.high.u32 %v6611
    %v6614 = vmul.u32.u64.compose %v6610, %v6605
    %v6615 = vextract.low.u32 %v6614
    %v6616 = vextract.high.u32 %v6614
    %v6617 = vmul.u32 %v6610, %v6601
    %v6618 = vadd.s32 %v6613, %v6615
    %vm6619 = vc.u32 %v6613, %v6615
    %v6620 = vadd.s32 %v6616, 1
    %v6621 = vsel %vm6619, %v6620, %v6616
    %v6622 = vadd.s32 %v6617, %v6621
    %v6623 = vadd.s32 %v6622, 536870912
    %v6624 = vshrl.u32 %v6623, 30
    %v6625 = vshll.u32 %v6624, 30
    %v6626 = vsub.s32 %v6622, %v6625
    %vm6627 = vcmp.lt.s32.totalorder %v6626, 0
    %v6628 = vsub.s32 0, %v6626
    %v6629 = vsel %vm6627, %v6628, %v6626
    %v6630 = vclz %v6629
    %v6631 = vsub.s32 %v6630, 2
    %vm6632 = vcmp.gt.s32.totalorder 0, %v6631
    %v6633 = vsel %vm6632, 0, %v6631
    %v6634 = vsub.s32 32, %v6633
    %v6635 = vshll.u32 %v6626, %v6633
    %v6636 = vshrl.u32 %v6618, %v6634
    %v6637 = vor.u32 %v6635, %v6636
    %v6638 = vsub.s32 4294967266, %v6633
    %v6639 = vadd.s32 %v6638, 127
    %v6640 = vshll.u32 %v6639, 23
    %v6641 = vor.u32 4788187, %v6640
    %v6642 = vand.u32 2147483647, %v6641
    %v6644 = vcvt.s32.f32 %v6637
    %v6645 = vmul.f32 %v6644, %v6642
    %v6646 = vxor.u32 %v6645, 2147483648
    %v6647 = vsel %vm6564, %v6646, %v6645
    %v6648 = vsub.s32 4, %v6624
    %v6649 = vsel %vm6564, %v6648, %v6624
    %v6650 = vsel %vm6563, %v3646, %v6647
    %v6651 = vsel %vm6563, 0, %v6649
    %v6652 = vcosq.f32.pop %v6650
    %v6653 = vsinq.f32.pop %v6650
    %vm6654 = vweird.f32 %v3646
    %v6655 = vadd.s32 %v6651, 3
    %v6656 = vand.u32 %v6655, 3
    %vm6657 = vcmp.lt.s32.totalorder %v6656, 2
    %vm6658 = vcmp.eq.s32.totalorder %v6656, 0
    %v6659 = vxor.u32 %v6653, 2147483648
    %v6660 = vsel %vm6658, %v6652, %v6659
    %vm6661 = vcmp.eq.s32.totalorder %v6656, 2
    %v6662 = vxor.u32 %v6652, 2147483648
    %v6663 = vsel %vm6661, %v6662, %v6653
    %v6664 = vsel %vm6657, %v6660, %v6663
    %v6665 = vsel %vm6654, nan, %v6664
    %v6666 = vand.u32 2147483647, %v3647
    %vm6667 = vcmp.le.f32.partialorder %v6666, 0.7853982
    %vm6668 = vcmp.lt.s32.totalorder %v3647, 0
    %v6669 = vand.u32 %v3647, 2139095040
    %v6670 = vshrl.u32 %v6669, 23
    %v6671 = vsub.s32 %v6670, 127
    %v6672 = vand.u32 2147483647, %v3647
    %v6673 = vand.u32 %v6672, 8388607
    %v6674 = vor.u32 %v6673, 8388608
    %v6675 = vsub.s32 0, %v6674
    %v6676 = vadd.s32 %v6671, 1
    %vm6677 = vcmp.gt.s32.totalorder %v6676, 0
    %v6678 = vsel %vm6677, %v6676, 0
    %v6679 = vshrl.u32 %v6678, 5
    %v6680 = vand.u32 %v6678, 31
    %v6681 = vsub.s32 32, %v6680
    %v6682 = vshrl.u32 683565275, %v6681
    %v6683 = vshll.u32 683565275, %v6680
    %v6684 = vshrl.u32 2475754826, %v6681
    %v6685 = vor.u32 %v6683, %v6684
    %v6686 = vshll.u32 2475754826, %v6680
    %v6687 = vshrl.u32 2131351028, %v6681
    %v6688 = vor.u32 %v6686, %v6687
    %v6689 = vshll.u32 2131351028, %v6680
    %v6690 = vshrl.u32 2102212464, %v6681
    %v6691 = vor.u32 %v6689, %v6690
    %v6692 = vshll.u32 2102212464, %v6680
    %v6693 = vshrl.u32 920167782, %v6681
    %v6694 = vor.u32 %v6692, %v6693
    %v6695 = vshll.u32 920167782, %v6680
    %v6696 = vshrl.u32 1326507024, %v6681
    %v6697 = vor.u32 %v6695, %v6696
    %vm6698 = vcmp.lt.s32.totalorder %v6679, 1
    %vm6699 = vcmp.lt.s32.totalorder %v6679, 2
    %vm6700 = vcmp.lt.s32.totalorder %v6679, 3
    %vm6701 = vcmp.lt.s32.totalorder %v6679, 4
    %v6702 = vsel %vm6698, %v6682, %v6685
    %v6703 = vsel %vm6701, %v6691, 2102212464
    %v6704 = vsel %vm6700, %v6688, %v6703
    %v6705 = vsel %vm6699, %v6702, %v6704
    %v6706 = vsel %vm6698, %v6685, %v6688
    %v6707 = vsel %vm6701, %v6694, 920167782
    %v6708 = vsel %vm6700, %v6691, %v6707
    %v6709 = vsel %vm6699, %v6706, %v6708
    %v6710 = vsel %vm6698, %v6688, %v6691
    %v6711 = vsel %vm6701, %v6697, 1326507024
    %v6712 = vsel %vm6700, %v6694, %v6711
    %v6713 = vsel %vm6699, %v6710, %v6712
    %v6714 = vshll.u32 %v6674, 8
    %v6715 = vmul.u32.u64.compose %v6714, %v6713
    %v6716 = vextract.low.u32 %v6715
    %v6717 = vextract.high.u32 %v6715
    %v6718 = vmul.u32.u64.compose %v6714, %v6709
    %v6719 = vextract.low.u32 %v6718
    %v6720 = vextract.high.u32 %v6718
    %v6721 = vmul.u32 %v6714, %v6705
    %v6722 = vadd.s32 %v6717, %v6719
    %vm6723 = vc.u32 %v6717, %v6719
    %v6724 = vadd.s32 %v6720, 1
    %v6725 = vsel %vm6723, %v6724, %v6720
    %v6726 = vadd.s32 %v6721, %v6725
    %v6727 = vadd.s32 %v6726, 536870912
    %v6728 = vshrl.u32 %v6727, 30
    %v6729 = vshll.u32 %v6728, 30
    %v6730 = vsub.s32 %v6726, %v6729
    %vm6731 = vcmp.lt.s32.totalorder %v6730, 0
    %v6732 = vsub.s32 0, %v6730
    %v6733 = vsel %vm6731, %v6732, %v6730
    %v6734 = vclz %v6733
    %v6735 = vsub.s32 %v6734, 2
    %vm6736 = vcmp.gt.s32.totalorder 0, %v6735
    %v6737 = vsel %vm6736, 0, %v6735
    %v6738 = vsub.s32 32, %v6737
    %v6739 = vshll.u32 %v6730, %v6737
    %v6740 = vshrl.u32 %v6722, %v6738
    %v6741 = vor.u32 %v6739, %v6740
    %v6742 = vsub.s32 4294967266, %v6737
    %v6743 = vadd.s32 %v6742, 127
    %v6744 = vshll.u32 %v6743, 23
    %v6745 = vor.u32 4788187, %v6744
    %v6746 = vand.u32 2147483647, %v6745
    %v6748 = vcvt.s32.f32 %v6741
    %v6749 = vmul.f32 %v6748, %v6746
    %v6750 = vxor.u32 %v6749, 2147483648
    %v6751 = vsel %vm6668, %v6750, %v6749
    %v6752 = vsub.s32 4, %v6728
    %v6753 = vsel %vm6668, %v6752, %v6728
    %v6754 = vsel %vm6667, %v3647, %v6751
    %v6755 = vsel %vm6667, 0, %v6753
    %v6756 = vcosq.f32.pop %v6754
    %v6757 = vsinq.f32.pop %v6754
    %vm6758 = vweird.f32 %v3647
    %v6759 = vadd.s32 %v6755, 3
    %v6760 = vand.u32 %v6759, 3
    %vm6761 = vcmp.lt.s32.totalorder %v6760, 2
    %vm6762 = vcmp.eq.s32.totalorder %v6760, 0
    %v6763 = vxor.u32 %v6757, 2147483648
    %v6764 = vsel %vm6762, %v6756, %v6763
    %vm6765 = vcmp.eq.s32.totalorder %v6760, 2
    %v6766 = vxor.u32 %v6756, 2147483648
    %v6767 = vsel %vm6765, %v6766, %v6757
    %v6768 = vsel %vm6761, %v6764, %v6767
    %v6769 = vsel %vm6758, nan, %v6768
    %v6770 = vand.u32 2147483647, %v3648
    %vm6771 = vcmp.le.f32.partialorder %v6770, 0.7853982
    %vm6772 = vcmp.lt.s32.totalorder %v3648, 0
    %v6773 = vand.u32 %v3648, 2139095040
    %v6774 = vshrl.u32 %v6773, 23
    %v6775 = vsub.s32 %v6774, 127
    %v6776 = vand.u32 2147483647, %v3648
    %v6777 = vand.u32 %v6776, 8388607
    %v6778 = vor.u32 %v6777, 8388608
    %v6779 = vsub.s32 0, %v6778
    %v6780 = vadd.s32 %v6775, 1
    %vm6781 = vcmp.gt.s32.totalorder %v6780, 0
    %v6782 = vsel %vm6781, %v6780, 0
    %v6783 = vshrl.u32 %v6782, 5
    %v6784 = vand.u32 %v6782, 31
    %v6785 = vsub.s32 32, %v6784
    %v6786 = vshrl.u32 683565275, %v6785
    %v6787 = vshll.u32 683565275, %v6784
    %v6788 = vshrl.u32 2475754826, %v6785
    %v6789 = vor.u32 %v6787, %v6788
    %v6790 = vshll.u32 2475754826, %v6784
    %v6791 = vshrl.u32 2131351028, %v6785
    %v6792 = vor.u32 %v6790, %v6791
    %v6793 = vshll.u32 2131351028, %v6784
    %v6794 = vshrl.u32 2102212464, %v6785
    %v6795 = vor.u32 %v6793, %v6794
    %v6796 = vshll.u32 2102212464, %v6784
    %v6797 = vshrl.u32 920167782, %v6785
    %v6798 = vor.u32 %v6796, %v6797
    %v6799 = vshll.u32 920167782, %v6784
    %v6800 = vshrl.u32 1326507024, %v6785
    %v6801 = vor.u32 %v6799, %v6800
    %vm6802 = vcmp.lt.s32.totalorder %v6783, 1
    %vm6803 = vcmp.lt.s32.totalorder %v6783, 2
    %vm6804 = vcmp.lt.s32.totalorder %v6783, 3
    %vm6805 = vcmp.lt.s32.totalorder %v6783, 4
    %v6806 = vsel %vm6802, %v6786, %v6789
    %v6807 = vsel %vm6805, %v6795, 2102212464
    %v6808 = vsel %vm6804, %v6792, %v6807
    %v6809 = vsel %vm6803, %v6806, %v6808
    %v6810 = vsel %vm6802, %v6789, %v6792
    %v6811 = vsel %vm6805, %v6798, 920167782
    %v6812 = vsel %vm6804, %v6795, %v6811
    %v6813 = vsel %vm6803, %v6810, %v6812
    %v6814 = vsel %vm6802, %v6792, %v6795
    %v6815 = vsel %vm6805, %v6801, 1326507024
    %v6816 = vsel %vm6804, %v6798, %v6815
    %v6817 = vsel %vm6803, %v6814, %v6816
    %v6818 = vshll.u32 %v6778, 8
    %v6819 = vmul.u32.u64.compose %v6818, %v6817
    %v6820 = vextract.low.u32 %v6819
    %v6821 = vextract.high.u32 %v6819
    %v6822 = vmul.u32.u64.compose %v6818, %v6813
    %v6823 = vextract.low.u32 %v6822
    %v6824 = vextract.high.u32 %v6822
    %v6825 = vmul.u32 %v6818, %v6809
    %v6826 = vadd.s32 %v6821, %v6823
    %vm6827 = vc.u32 %v6821, %v6823
    %v6828 = vadd.s32 %v6824, 1
    %v6829 = vsel %vm6827, %v6828, %v6824
    %v6830 = vadd.s32 %v6825, %v6829
    %v6831 = vadd.s32 %v6830, 536870912
    %v6832 = vshrl.u32 %v6831, 30
    %v6833 = vshll.u32 %v6832, 30
    %v6834 = vsub.s32 %v6830, %v6833
    %vm6835 = vcmp.lt.s32.totalorder %v6834, 0
    %v6836 = vsub.s32 0, %v6834
    %v6837 = vsel %vm6835, %v6836, %v6834
    %v6838 = vclz %v6837
    %v6839 = vsub.s32 %v6838, 2
    %vm6840 = vcmp.gt.s32.totalorder 0, %v6839
    %v6841 = vsel %vm6840, 0, %v6839
    %v6842 = vsub.s32 32, %v6841
    %v6843 = vshll.u32 %v6834, %v6841
    %v6844 = vshrl.u32 %v6826, %v6842
    %v6845 = vor.u32 %v6843, %v6844
    %v6846 = vsub.s32 4294967266, %v6841
    %v6847 = vadd.s32 %v6846, 127
    %v6848 = vshll.u32 %v6847, 23
    %v6849 = vor.u32 4788187, %v6848
    %v6850 = vand.u32 2147483647, %v6849
    %v6852 = vcvt.s32.f32 %v6845
    %v6853 = vmul.f32 %v6852, %v6850
    %v6854 = vxor.u32 %v6853, 2147483648
    %v6855 = vsel %vm6772, %v6854, %v6853
    %v6856 = vsub.s32 4, %v6832
    %v6857 = vsel %vm6772, %v6856, %v6832
    %v6858 = vsel %vm6771, %v3648, %v6855
    %v6859 = vsel %vm6771, 0, %v6857
    %v6860 = vcosq.f32.pop %v6858
    %v6861 = vsinq.f32.pop %v6858
    %vm6862 = vweird.f32 %v3648
    %v6863 = vadd.s32 %v6859, 3
    %v6864 = vand.u32 %v6863, 3
    %vm6865 = vcmp.lt.s32.totalorder %v6864, 2
    %vm6866 = vcmp.eq.s32.totalorder %v6864, 0
    %v6867 = vxor.u32 %v6861, 2147483648
    %v6868 = vsel %vm6866, %v6860, %v6867
    %vm6869 = vcmp.eq.s32.totalorder %v6864, 2
    %v6870 = vxor.u32 %v6860, 2147483648
    %v6871 = vsel %vm6869, %v6870, %v6861
    %v6872 = vsel %vm6865, %v6868, %v6871
    %v6873 = vsel %vm6862, nan, %v6872
    %v6874 = vand.u32 2147483647, %v3649
    %vm6875 = vcmp.le.f32.partialorder %v6874, 0.7853982
    %vm6876 = vcmp.lt.s32.totalorder %v3649, 0
    %v6877 = vand.u32 %v3649, 2139095040
    %v6878 = vshrl.u32 %v6877, 23
    %v6879 = vsub.s32 %v6878, 127
    %v6880 = vand.u32 2147483647, %v3649
    %v6881 = vand.u32 %v6880, 8388607
    %v6882 = vor.u32 %v6881, 8388608
    %v6883 = vsub.s32 0, %v6882
    %v6884 = vadd.s32 %v6879, 1
    %vm6885 = vcmp.gt.s32.totalorder %v6884, 0
    %v6886 = vsel %vm6885, %v6884, 0
    %v6887 = vshrl.u32 %v6886, 5
    %v6888 = vand.u32 %v6886, 31
    %v6889 = vsub.s32 32, %v6888
    %v6890 = vshrl.u32 683565275, %v6889
    %v6891 = vshll.u32 683565275, %v6888
    %v6892 = vshrl.u32 2475754826, %v6889
    %v6893 = vor.u32 %v6891, %v6892
    %v6894 = vshll.u32 2475754826, %v6888
    %v6895 = vshrl.u32 2131351028, %v6889
    %v6896 = vor.u32 %v6894, %v6895
    %v6897 = vshll.u32 2131351028, %v6888
    %v6898 = vshrl.u32 2102212464, %v6889
    %v6899 = vor.u32 %v6897, %v6898
    %v6900 = vshll.u32 2102212464, %v6888
    %v6901 = vshrl.u32 920167782, %v6889
    %v6902 = vor.u32 %v6900, %v6901
    %v6903 = vshll.u32 920167782, %v6888
    %v6904 = vshrl.u32 1326507024, %v6889
    %v6905 = vor.u32 %v6903, %v6904
    %vm6906 = vcmp.lt.s32.totalorder %v6887, 1
    %vm6907 = vcmp.lt.s32.totalorder %v6887, 2
    %vm6908 = vcmp.lt.s32.totalorder %v6887, 3
    %vm6909 = vcmp.lt.s32.totalorder %v6887, 4
    %v6910 = vsel %vm6906, %v6890, %v6893
    %v6911 = vsel %vm6909, %v6899, 2102212464
    %v6912 = vsel %vm6908, %v6896, %v6911
    %v6913 = vsel %vm6907, %v6910, %v6912
    %v6914 = vsel %vm6906, %v6893, %v6896
    %v6915 = vsel %vm6909, %v6902, 920167782
    %v6916 = vsel %vm6908, %v6899, %v6915
    %v6917 = vsel %vm6907, %v6914, %v6916
    %v6918 = vsel %vm6906, %v6896, %v6899
    %v6919 = vsel %vm6909, %v6905, 1326507024
    %v6920 = vsel %vm6908, %v6902, %v6919
    %v6921 = vsel %vm6907, %v6918, %v6920
    %v6922 = vshll.u32 %v6882, 8
    %v6923 = vmul.u32.u64.compose %v6922, %v6921
    %v6924 = vextract.low.u32 %v6923
    %v6925 = vextract.high.u32 %v6923
    %v6926 = vmul.u32.u64.compose %v6922, %v6917
    %v6927 = vextract.low.u32 %v6926
    %v6928 = vextract.high.u32 %v6926
    %v6929 = vmul.u32 %v6922, %v6913
    %v6930 = vadd.s32 %v6925, %v6927
    %vm6931 = vc.u32 %v6925, %v6927
    %v6932 = vadd.s32 %v6928, 1
    %v6933 = vsel %vm6931, %v6932, %v6928
    %v6934 = vadd.s32 %v6929, %v6933
    %v6935 = vadd.s32 %v6934, 536870912
    %v6936 = vshrl.u32 %v6935, 30
    %v6937 = vshll.u32 %v6936, 30
    %v6938 = vsub.s32 %v6934, %v6937
    %vm6939 = vcmp.lt.s32.totalorder %v6938, 0
    %v6940 = vsub.s32 0, %v6938
    %v6941 = vsel %vm6939, %v6940, %v6938
    %v6942 = vclz %v6941
    %v6943 = vsub.s32 %v6942, 2
    %vm6944 = vcmp.gt.s32.totalorder 0, %v6943
    %v6945 = vsel %vm6944, 0, %v6943
    %v6946 = vsub.s32 32, %v6945
    %v6947 = vshll.u32 %v6938, %v6945
    %v6948 = vshrl.u32 %v6930, %v6946
    %v6949 = vor.u32 %v6947, %v6948
    %v6950 = vsub.s32 4294967266, %v6945
    %v6951 = vadd.s32 %v6950, 127
    %v6952 = vshll.u32 %v6951, 23
    %v6953 = vor.u32 4788187, %v6952
    %v6954 = vand.u32 2147483647, %v6953
    %v6956 = vcvt.s32.f32 %v6949
    %v6957 = vmul.f32 %v6956, %v6954
    %v6958 = vxor.u32 %v6957, 2147483648
    %v6959 = vsel %vm6876, %v6958, %v6957
    %v6960 = vsub.s32 4, %v6936
    %v6961 = vsel %vm6876, %v6960, %v6936
    %v6962 = vsel %vm6875, %v3649, %v6959
    %v6963 = vsel %vm6875, 0, %v6961
    %v6964 = vcosq.f32.pop %v6962
    %v6965 = vsinq.f32.pop %v6962
    %vm6966 = vweird.f32 %v3649
    %v6967 = vadd.s32 %v6963, 3
    %v6968 = vand.u32 %v6967, 3
    %vm6969 = vcmp.lt.s32.totalorder %v6968, 2
    %vm6970 = vcmp.eq.s32.totalorder %v6968, 0
    %v6971 = vxor.u32 %v6965, 2147483648
    %v6972 = vsel %vm6970, %v6964, %v6971
    %vm6973 = vcmp.eq.s32.totalorder %v6968, 2
    %v6974 = vxor.u32 %v6964, 2147483648
    %v6975 = vsel %vm6973, %v6974, %v6965
    %v6976 = vsel %vm6969, %v6972, %v6975
    %v6977 = vsel %vm6966, nan, %v6976
    %6978 = vst [vmem:[#allocation2 + $0x80] sm:$0xff] %v3753
    %6979 = vst [vmem:[#allocation2 + $0x88] sm:$0xff] %v3857
    %6980 = vst [vmem:[#allocation2 + $0x90] sm:$0xff] %v3961
    %6981 = vst [vmem:[#allocation2 + $0x98] sm:$0xff] %v4065
    %6982 = vst [vmem:[#allocation2 + $0xa0] sm:$0xff] %v4169
    %6983 = vst [vmem:[#allocation2 + $0xa8] sm:$0xff] %v4273
    %6984 = vst [vmem:[#allocation2 + $0xb0] sm:$0xff] %v4377
    %6985 = vst [vmem:[#allocation2 + $0xb8] sm:$0xff] %v4481
    %6986 = vst [vmem:[#allocation2 + $0xc0] sm:$0xff] %v4585
    %6987 = vst [vmem:[#allocation2 + $0xc8] sm:$0xff] %v4689
    %6988 = vst [vmem:[#allocation2 + $0xd0] sm:$0xff] %v4793
    %6989 = vst [vmem:[#allocation2 + $0xd8] sm:$0xff] %v4897
    %6990 = vst [vmem:[#allocation2 + $0xe0] sm:$0xff] %v5001
    %6991 = vst [vmem:[#allocation2 + $0xe8] sm:$0xff] %v5105
    %6992 = vst [vmem:[#allocation2 + $0xf0] sm:$0xff] %v5209
    %6993 = vst [vmem:[#allocation2 + $0xf8] sm:$0xff] %v5313
    %6994 = vst [vmem:[#allocation2 + $0x180] sm:$0xff] %v5417
    %6995 = vst [vmem:[#allocation2 + $0x188] sm:$0xff] %v5521
    %6996 = vst [vmem:[#allocation2 + $0x190] sm:$0xff] %v5625
    %6997 = vst [vmem:[#allocation2 + $0x198] sm:$0xff] %v5729
    %6998 = vst [vmem:[#allocation2 + $0x1a0] sm:$0xff] %v5833
    %6999 = vst [vmem:[#allocation2 + $0x1a8] sm:$0xff] %v5937
    %7000 = vst [vmem:[#allocation2 + $0x1b0] sm:$0xff] %v6041
    %7001 = vst [vmem:[#allocation2 + $0x1b8] sm:$0xff] %v6145
    %7002 = vst [vmem:[#allocation2 + $0x1c0] sm:$0xff] %v6249
    %7003 = vst [vmem:[#allocation2 + $0x1c8] sm:$0xff] %v6353
    %7004 = vst [vmem:[#allocation2 + $0x1d0] sm:$0xff] %v6457
    %7005 = vst [vmem:[#allocation2 + $0x1d8] sm:$0xff] %v6561
    %7006 = vst [vmem:[#allocation2 + $0x1e0] sm:$0xff] %v6665
    %7007 = vst [vmem:[#allocation2 + $0x1e8] sm:$0xff] %v6769
    %7008 = vst [vmem:[#allocation2 + $0x1f0] sm:$0xff] %v6873
    %7009 = vst [vmem:[#allocation2 + $0x1f8] sm:$0xff] %v6977
    // Predicated region
    $region18: #{tpu_custom_call.1} parent=1 // pred_check
      _
    $region19: #{tpu_custom_call.1} parent=1 // pred_check_branch
      %7011 = sbr.rel (0) target = $region21
    $region20: #{tpu_custom_call.1} parent=1 // pred_region
      %s7013 = ssub.s32 8192, 8192
      %7014 = vsyncadd [#allocation3], %s7013
      %s7015 = sshll.u32 [#allocation2], 4
      %s7016 = int_to_ptr.vmem [resolvable:$true] %s7015
      %7021 = dma.vmem_to_hbm [thread:$0]  %s7016, 8192, %s4, [#allocation3], 256, 256, 16
    $region21: #{tpu_custom_call.1} parent=1 // pred_fallthru
      _
    // Predicated region
    $region22: #{tpu_custom_call.1} parent=1 // pred_check
      _
    $region23: #{tpu_custom_call.1} parent=1 // pred_check_branch
      %7023 = sbr.rel (0) target = $region25
    $region24: #{tpu_custom_call.1} parent=1 // pred_region
      %7024 = dma.done [#allocation3], 8192
    $region25: #{tpu_custom_call.1} parent=1 // pred_fallthru
      _
    %7025 = vsyncpa [#allocation3], 1

</llo_original>
